<compile_context>
chip_gen: v6e
topology: v6e:2x2x1
jax: 0.10.0
libtpu: 0.0.40
codegen_flags: <defaults>
</compile_context>

<pallas_src>
import math

import jax
import jax.numpy as jnp
from jax import lax
from jax.experimental import pallas as pl
from jax.experimental.pallas import tpu as pltpu

# ----------------------------- configuration ---------------------------------
D_MODEL = 128
D_FF = 256
N_HEADS = 4
D_K = D_MODEL // N_HEADS
KERNEL_SIZE = 7          # cov_kernel_size (odd, "same" padding)
FFN_SCALE = 0.5
LN_EPS = 1e-5
BN_EPS = 1e-5
NEG_INF = -1e9           # used instead of -inf for masked_fill (avoids NaN rows)


# ----------------------------- small helpers ---------------------------------
def _layer_norm(x, gamma, beta):
    """LayerNorm over last dim (f32); gamma/beta are (1, D)."""
    mean = jnp.mean(x, axis=-1, keepdims=True)
    var = jnp.mean(jnp.square(x - mean), axis=-1, keepdims=True)
    return (x - mean) * lax.rsqrt(var + LN_EPS) * gamma + beta


def _rep_spec(shape):
    """BlockSpec for a parameter replicated across the batch grid."""
    n = len(shape)
    return pl.BlockSpec(tuple(shape), lambda b, _n=n: (0,) * _n)


def _cost_estimate(B, T, D, F, with_attn):
    H, K = N_HEADS, D // N_HEADS
    mmf = lambda rows, k, n: 2 * rows * k * n
    ffn = mmf(T, D, 2 * F) + mmf(T, F, D)
    attn = mmf(T, D, 3 * D) + H * 3 * mmf(T, K, T) + mmf(T, D, D)
    conv = mmf(T, D, 2 * D) + 2 * T * KERNEL_SIZE * D + mmf(T, D, D)
    flops = B * (2 * ffn + attn + conv)
    transcendentals = B * (H * T * T + T * (2 * F + 3 * D))
    weight_bytes = 2 * (2 * (D * 2 * F + F * D) + 3 * D * D + D * D + 2 * D * D + D * D)
    weight_bytes += 4 * (24 * D + 4 * F + KERNEL_SIZE * D)
    io_bytes = B * T * D * 4 * 2 + B * T * 4 + T * D * 2
    if with_attn:
        io_bytes += B * H * T * T * 2
    return pl.CostEstimate(flops=flops, transcendentals=transcendentals,
                           bytes_accessed=io_bytes + weight_bytes)


# --------------------------- fused block kernel -------------------------------
def _conformer_block_kernel(
    # activations
    x_ref, mask_ref, pos_ref,
    # macaron (pre) FFN
    f1_g, f1_b, f1_w1, f1_b1, f1_w2, f1_b2,
    # rel-pos MHA
    a_g, a_b, a_wqkv, a_bqkv, a_u, a_v, a_wo, a_bo,
    # conv module
    c_g, c_b, c_w1, c_b1, c_wdw, c_bdw, c_bns, c_bnt, c_w2, c_b2,
    # post FFN
    g1_g, g1_b, g1_w1, g1_b1, g1_w2, g1_b2,
    # final LN
    fn_g, fn_b,
    # outputs
    o_ref, attnw_ref=None,
):
    T, D = x_ref.shape
    H = N_HEADS
    K = D // H

    def mm(a, b_):  # a @ b_, bf16 operands, f32 accumulation (native MXU)
        return jnp.dot(a.astype(jnp.bfloat16), b_.astype(jnp.bfloat16),
                       preferred_element_type=jnp.float32)

    def mm_t(a, b_):  # a @ b_.T, bf16 operands, f32 accumulation
        return lax.dot_general(a.astype(jnp.bfloat16), b_.astype(jnp.bfloat16),
                               (((1,), (1,)), ((), ())),
                               preferred_element_type=jnp.float32)

    def ffn(xv, ln_g, ln_b, w1, b1, w2, b2):
        F = w1.shape[1] // 2
        h = _layer_norm(xv, ln_g[...], ln_b[...])
        hg = mm(h, w1[...]) + b1[...]                  # single fused (D, 2F) matmul
        glu = hg[:, :F] * jax.nn.sigmoid(hg[:, F:])    # 128-aligned lane slices (free)
        return xv + mm(glu, w2[...]) + b2[...]         # ffn_scale folded into w2/b2

    x = x_ref[...]                                     # (T, D) f32 residual stream

    # ------------------ macaron FFN: x = x + 0.5 * FFN(LN(x)) ------------------
    x = ffn(x, f1_g, f1_b, f1_w1, f1_b1, f1_w2, f1_b2)

    # --------------- relative-positional multi-head self-attention -------------
    hn = _layer_norm(x, a_g[...], a_b[...])
    qkv = mm(hn, a_wqkv[...]) + a_bqkv[...]            # (T, 3D); q pre-scaled by 1/sqrt(K)
    pos_p = pos_ref[...]                               # (T, D) bf16, lane-dense
    u = a_u[...]                                       # (1, D), pre-scaled
    vb = a_v[...]                                      # (1, D), pre-scaled

    key_bias = jnp.where(mask_ref[...] > 0.0, 0.0, NEG_INF)           # (1, T) additive mask
    row_id = lax.broadcasted_iota(jnp.int32, (T, T), 0)
    col_id = lax.broadcasted_iota(jnp.int32, (T, T), 1)
    lower_mask = col_id <= row_id                                     # bool, reused per head
    upper_f = (col_id >= row_id + 2).astype(jnp.float32)              # 0/1, reused per head

    ctx_heads = []
    for h in range(H):
        q_h = qkv[:, h * K:(h + 1) * K]                               # (T, K)
        k_h = qkv[:, D + h * K: D + (h + 1) * K]
        v_h = qkv[:, 2 * D + h * K: 2 * D + (h + 1) * K]
        p_h = pos_p[:, h * K:(h + 1) * K]

        ac = mm_t(q_h + u[:, h * K:(h + 1) * K], k_h)                 # (T, T)
        bd = mm_t(q_h + vb[:, h * K:(h + 1) * K], p_h)                # (T, T), un-shifted

        # legacy (Transformer-XL) rel_shift, entirely in VMEM:
        #   skew[t, j] = bd[t, (j - t - 1) mod T]  -> one strided XLU roll
        #   out[t, j<=t] = skew[t, j]; out[t, t+1] = 0; out[t, j>=t+2] = skew[t+1, j]
        skew = pltpu.roll(bd, shift=1, axis=1, stride=1, stride_axis=0)
        skew_up = pltpu.roll(skew, shift=T - 1, axis=0)               # skew_up[t] = skew[t+1]
        bd_shift = jnp.where(lower_mask, skew, skew_up * upper_f)     # 1 select + 1 mul

        s = ac + bd_shift + key_bias                                  # masked_fill (additive)
        s = s - jnp.max(s, axis=-1, keepdims=True)
        e = jnp.exp(s)
        probs = e * pl.reciprocal(jnp.sum(e, axis=-1, keepdims=True), approx=True)
        if attnw_ref is not None:
            attnw_ref[h] = probs.astype(attnw_ref.dtype)
        ctx_heads.append(mm(probs, v_h))                              # (T, K)

    ctx = jnp.concatenate(ctx_heads, axis=-1)                         # (T, D) lane-contiguous
    x = x + mm(ctx, a_wo[...]) + a_bo[...]                            # single full-width W_o

    # -------------------------- conformer conv module --------------------------
    # TODO(synk): the time-padding mask is not applied inside the conv module;
    #             padded frames would leak through the depthwise conv otherwise.
    hn = _layer_norm(x, c_g[...], c_b[...])
    hg = mm(hn, c_w1[...]) + c_b1[...]                                # fused (D, 2D) pw-1
    g = hg[:, :D] * jax.nn.sigmoid(hg[:, D:])                         # GLU, (T, D)

    KS = c_wdw.shape[0]
    pad = (KS - 1) // 2
    wdw = c_wdw[...]                                                  # (KS, D)
    t_idx = lax.broadcasted_iota(jnp.int32, (T, 1), 0)
    acc = g * wdw[pad:pad + 1, :]                                     # centre tap
    for kk in range(KS):                                              # depthwise conv, "same"
        off = kk - pad
        if off == 0 or abs(off) >= T:
            continue
        sh = pltpu.roll(g, shift=(-off) % T, axis=0)                  # sublane roll (XLU)
        valid = (t_idx < T - off) if off > 0 else (t_idx >= -off)     # zero-pad boundary
        acc = acc + jnp.where(valid, sh, 0.0) * wdw[kk:kk + 1, :]
    acc = acc + c_bdw[...]
    bn = acc * c_bns[...] + c_bnt[...]                                # folded inference BN
    sw = bn * jax.nn.sigmoid(bn)                                      # Swish
    x = x + mm(sw, c_w2[...]) + c_b2[...]

    # ------------------ post FFN: x = x + 0.5 * FFN(LN(x)) ---------------------
    x = ffn(x, g1_g, g1_b, g1_w1, g1_b1, g1_w2, g1_b2)

    # ------------------------------ final LayerNorm ----------------------------
    o_ref[...] = _layer_norm(x, fn_g[...], fn_b[...])


# --------------------------- wrapper / param folding ---------------------------
def conformer_block_forward(x, mask, pos, params, return_attn_weights=False):
    B, T, D = x.shape
    H, F = N_HEADS, D_FF
    K = D // H
    s = 1.0 / math.sqrt(K)
    bf = jnp.bfloat16

    pf, mp, cp, qf, fp = (params["pre_ffn"], params["mha"], params["conv"],
                          params["post_ffn"], params["final"])

    def ffn_prepped(p):
        return [p["ln_g"], p["ln_b"],
                p["w1"].astype(bf), p["b1"],
                (FFN_SCALE * p["w2"]).astype(bf), FFN_SCALE * p["b2"]]   # scale folded

    # --- attention: fold 1/sqrt(d_k) into q projection + pos biases, lane-dense pos,
    #     hoist the batch-invariant pos @ wpos projection out of the grid ---
    wqkv, bqkv = mp["wqkv"], mp["bqkv"]
    wqkv_s = jnp.concatenate([wqkv[:, :D] * s, wqkv[:, D:]], axis=1).astype(bf)
    bqkv_s = jnp.concatenate([bqkv[:, :D] * s, bqkv[:, D:]], axis=1)
    u_s = (mp["pos_bias_u"] * s).reshape(1, D)
    v_s = (mp["pos_bias_v"] * s).reshape(1, D)
    pos_proj = (pos[0] @ mp["wpos"]).astype(bf)                          # (T, D) lane-dense

    # --- conv: fold inference BatchNorm into scale/shift ---
    bn_s = cp["bn_g"] * lax.rsqrt(cp["bn_v"] + BN_EPS)
    bn_t = cp["bn_b"] - cp["bn_m"] * bn_s

    mask3 = mask.reshape(B, 1, T).astype(jnp.float32)

    operands = [x, mask3, pos_proj]
    operands += ffn_prepped(pf)
    operands += [mp["ln_g"], mp["ln_b"], wqkv_s, bqkv_s, u_s, v_s,
                 mp["wo"].astype(bf), mp["bo"]]
    operands += [cp["ln_g"], cp["ln_b"], cp["w_pw1"].astype(bf), cp["b_pw1"],
                 cp["w_dw"], cp["b_dw"], bn_s, bn_t,
                 cp["w_pw2"].astype(bf), cp["b_pw2"]]
    operands += ffn_prepped(qf)
    operands += [fp["ln_g"], fp["ln_b"]]

    in_specs = [
        pl.BlockSpec((None, T, D), lambda b: (b, 0, 0)),      # x (per batch element)
        pl.BlockSpec((None, 1, T), lambda b: (b, 0, 0)),      # mask (per batch element)
    ] + [_rep_spec(a.shape) for a in operands[2:]]            # weights / pos replicated

    y_spec = pl.BlockSpec((None, T, D), lambda b: (b, 0, 0))
    cparams = pltpu.CompilerParams(dimension_semantics=("parallel",))
    cost = _cost_estimate(B, T, D, F, return_attn_weights)

    if return_attn_weights:
        out_shape = (jax.ShapeDtypeStruct((B, T, D), jnp.float32),
                     jax.ShapeDtypeStruct((B, H, T, T), jnp.bfloat16))   # bf16 dump
        out_specs = (y_spec, pl.BlockSpec((None, H, T, T), lambda b: (b, 0, 0, 0)))
        y, attn = pl.pallas_call(
            _conformer_block_kernel, out_shape=out_shape, grid=(B,),
            in_specs=in_specs, out_specs=out_specs, compiler_params=cparams,
            cost_estimate=cost,
        )(*operands)
        return y, {"slf_attn_weights": attn}
    y = pl.pallas_call(
        _conformer_block_kernel,
        out_shape=jax.ShapeDtypeStruct((B, T, D), jnp.float32), grid=(B,),
        in_specs=in_specs, out_specs=y_spec, compiler_params=cparams,
        cost_estimate=cost,
    )(*operands)
    return y, {"slf_attn_weights": None}


# --------------------------- pure-JAX reference (f32) --------------------------
def _ref_ln(x, g, b):
    m = jnp.mean(x, -1, keepdims=True)
    v = jnp.mean((x - m) ** 2, -1, keepdims=True)
    return (x - m) * lax.rsqrt(v + LN_EPS) * g + b


def _ref_ffn(x, p, scale):
    h = _ref_ln(x, p["ln_g"], p["ln_b"])
    h = h @ p["w1"] + p["b1"]
    h = h[..., :D_FF] * jax.nn.sigmoid(h[..., D_FF:])
    return x + scale * (h @ p["w2"] + p["b2"])


def legacy_rel_shift(x):
    B, H, T, P = x.shape
    zero_pad = jnp.zeros((B, H, T, 1), x.dtype)
    x_padded = jnp.concatenate([zero_pad, x], axis=-1)
    x_padded = x_padded.reshape(B, H, P + 1, T)
    return x_padded[:, :, 1:, :].reshape(B, H, T, P)


def _ref_mha(x, mask, pos, p):
    B, T, D = x.shape
    h = _ref_ln(x, p["ln_g"], p["ln_b"])
    qkv = h @ p["wqkv"] + p["bqkv"]
    q, k, v = qkv[..., :D], qkv[..., D:2 * D], qkv[..., 2 * D:]
    heads = lambda t: t.reshape(B, T, N_HEADS, D_K).transpose(0, 2, 1, 3)
    qh, kh, vh = heads(q), heads(k), heads(v)
    pp = (pos[0] @ p["wpos"]).reshape(T, N_HEADS, D_K).transpose(1, 0, 2)
    ac = jnp.einsum("bhtd,bhsd->bhts", qh + p["pos_bias_u"][None, :, None, :], kh)
    bd = jnp.einsum("bhtd,hsd->bhts", qh + p["pos_bias_v"][None, :, None, :], pp)
    bd = legacy_rel_shift(bd)
    s = (ac + bd) / math.sqrt(D_K)
    s = jnp.where(mask[:, None, None, :] > 0, s, NEG_INF)
    s = s - jnp.max(s, -1, keepdims=True)
    e = jnp.exp(s)
    probs = e / jnp.sum(e, -1, keepdims=True)
    ctx = jnp.einsum("bhts,bhsd->bhtd", probs, vh).transpose(0, 2, 1, 3).reshape(B, T, D)
    return x + (ctx @ p["wo"] + p["bo"]), probs


def _ref_conv(x, p):
    B, T, D = x.shape
    h = _ref_ln(x, p["ln_g"], p["ln_b"])
    h = h @ p["w_pw1"] + p["b_pw1"]
    h = h[..., :D] * jax.nn.sigmoid(h[..., D:])
    pad = (KERNEL_SIZE - 1) // 2
    hp = jnp.pad(h, ((0, 0), (pad, pad), (0, 0)))
    acc = jnp.zeros_like(h)
    for kk in range(KERNEL_SIZE):
        acc = acc + hp[:, kk:kk + T, :] * p["w_dw"][kk][None, None, :]
    acc = acc + p["b_dw"]
    bn = (acc - p["bn_m"]) * lax.rsqrt(p["bn_v"] + BN_EPS) * p["bn_g"] + p["bn_b"]
    sw = bn * jax.nn.sigmoid(bn)
    return x + (sw @ p["w_pw2"] + p["b_pw2"])


def ref_forward(x, mask, pos, params):
    x = _ref_ffn(x, params["pre_ffn"], FFN_SCALE)
    x, attn_w = _ref_mha(x, mask, pos, params["mha"])
    x = _ref_conv(x, params["conv"])
    x = _ref_ffn(x, params["post_ffn"], FFN_SCALE)
    x = _ref_ln(x, params["final"]["ln_g"], params["final"]["ln_b"])
    return x, attn_w


# ------------------------------ parameter init ---------------------------------
def init_params(key):
    keys = iter(jax.random.split(key, 32))
    lin = lambda k, din, dout: (jax.random.normal(k, (din, dout), jnp.float32) * 0.1)
    vec = lambda k, n: (jax.random.normal(k, (1, n), jnp.float32) * 0.1)
    ones = lambda n: jnp.ones((1, n), jnp.float32)
    zeros = lambda n: jnp.zeros((1, n), jnp.float32)

    def ffn_params():
        return dict(ln_g=ones(D_MODEL), ln_b=zeros(D_MODEL),
                    w1=lin(next(keys), D_MODEL, 2 * D_FF), b1=vec(next(keys), 2 * D_FF),
                    w2=lin(next(keys), D_FF, D_MODEL), b2=vec(next(keys), D_MODEL))

    params = dict(
        pre_ffn=ffn_params(),
        mha=dict(ln_g=ones(D_MODEL), ln_b=zeros(D_MODEL),
                 wqkv=lin(next(keys), D_MODEL, 3 * D_MODEL), bqkv=vec(next(keys), 3 * D_MODEL),
                 wpos=lin(next(keys), D_MODEL, D_MODEL),
                 pos_bias_u=jax.random.normal(next(keys), (N_HEADS, D_K), jnp.float32) * 0.1,
                 pos_bias_v=jax.random.normal(next(keys), (N_HEADS, D_K), jnp.float32) * 0.1,
                 wo=lin(next(keys), D_MODEL, D_MODEL), bo=vec(next(keys), D_MODEL)),
        conv=dict(ln_g=ones(D_MODEL), ln_b=zeros(D_MODEL),
                  w_pw1=lin(next(keys), D_MODEL, 2 * D_MODEL), b_pw1=vec(next(keys), 2 * D_MODEL),
                  w_dw=jax.random.normal(next(keys), (KERNEL_SIZE, D_MODEL), jnp.float32) * 0.1,
                  b_dw=vec(next(keys), D_MODEL),
                  bn_g=ones(D_MODEL), bn_b=zeros(D_MODEL),
                  bn_m=vec(next(keys), D_MODEL),
                  bn_v=jnp.abs(jax.random.normal(next(keys), (1, D_MODEL), jnp.float32)) * 0.2 + 0.9,
                  w_pw2=lin(next(keys), D_MODEL, D_MODEL), b_pw2=vec(next(keys), D_MODEL)),
        post_ffn=ffn_params(),
        final=dict(ln_g=ones(D_MODEL), ln_b=zeros(D_MODEL)),
    )
    return params


# ------------------------------------ main --------------------------------------
if __name__ == "__main__":
    key = jax.random.PRNGKey(0)
    kp, kx, kpos = jax.random.split(key, 3)
    params = init_params(kp)

    # Lane-dense demo: T and D are multiples of 128 so scores / attn dump are full-width.
    B, T = 2, 128
    x = jax.random.normal(kx, (B, T, D_MODEL), jnp.float32)
    valid_len = jnp.array([T, T - 32])                                  # partial mask on elem 1
    mask = (jnp.arange(T)[None, :] < valid_len[:, None]).astype(jnp.float32)
    pos = jax.random.normal(kpos, (1, T, D_MODEL), jnp.float32)         # relative pos encodings

    # Validation path (attention-weight dump on).
    fwd = jax.jit(lambda x_, m_, p_, prm: conformer_block_forward(x_, m_, p_, prm, True))
    y, aux = fwd(x, mask, pos, params)
    y = jax.block_until_ready(y)
    attn_w = jax.block_until_ready(aux["slf_attn_weights"]).astype(jnp.float32)

    # f32-accumulate reference (true module semantics) to catch accuracy regressions.
    with jax.default_matmul_precision("highest"):
        y_ref, attn_ref = ref_forward(x, mask, pos, params)
    err_y = float(jnp.max(jnp.abs(y - y_ref)))
    mean_y = float(jnp.mean(jnp.abs(y - y_ref)))
    err_a = float(jnp.max(jnp.abs(attn_w - attn_ref)))
    assert bool(jnp.all(jnp.isfinite(y))), "non-finite output"
    # bf16 matmul operands (f32 accumulation) + bf16 attn dump -> structural tolerances.
    assert err_y < 1.5e-1 and mean_y < 2e-2 and err_a < 5e-2, (err_y, mean_y, err_a)

    # Production path (default: no attention-weight dump).
    fwd_prod = jax.jit(lambda x_, m_, p_, prm: conformer_block_forward(x_, m_, p_, prm, False))
    y2, _ = fwd_prod(x, mask, pos, params)
    y2 = jax.block_until_ready(y2)
    assert float(jnp.max(jnp.abs(y2 - y))) < 1e-3

    print("KERNEL_OK")
</pallas_src>

<mosaic_0001>
module attributes {stable_mosaic.version = 11 : i64} {
  func.func @_conformer_block_kernel(%arg0: i32, %arg1: memref<1x128x128xf32, #tpu.memory_space<vmem>>, %arg2: memref<1x1x128xf32, #tpu.memory_space<vmem>>, %arg3: memref<128x128xbf16, #tpu.memory_space<vmem>>, %arg4: memref<1x128xf32, #tpu.memory_space<vmem>>, %arg5: memref<1x128xf32, #tpu.memory_space<vmem>>, %arg6: memref<128x512xbf16, #tpu.memory_space<vmem>>, %arg7: memref<1x512xf32, #tpu.memory_space<vmem>>, %arg8: memref<256x128xbf16, #tpu.memory_space<vmem>>, %arg9: memref<1x128xf32, #tpu.memory_space<vmem>>, %arg10: memref<1x128xf32, #tpu.memory_space<vmem>>, %arg11: memref<1x128xf32, #tpu.memory_space<vmem>>, %arg12: memref<128x384xbf16, #tpu.memory_space<vmem>>, %arg13: memref<1x384xf32, #tpu.memory_space<vmem>>, %arg14: memref<1x128xf32, #tpu.memory_space<vmem>>, %arg15: memref<1x128xf32, #tpu.memory_space<vmem>>, %arg16: memref<128x128xbf16, #tpu.memory_space<vmem>>, %arg17: memref<1x128xf32, #tpu.memory_space<vmem>>, %arg18: memref<1x128xf32, #tpu.memory_space<vmem>>, %arg19: memref<1x128xf32, #tpu.memory_space<vmem>>, %arg20: memref<128x256xbf16, #tpu.memory_space<vmem>>, %arg21: memref<1x256xf32, #tpu.memory_space<vmem>>, %arg22: memref<7x128xf32, #tpu.memory_space<vmem>>, %arg23: memref<1x128xf32, #tpu.memory_space<vmem>>, %arg24: memref<1x128xf32, #tpu.memory_space<vmem>>, %arg25: memref<1x128xf32, #tpu.memory_space<vmem>>, %arg26: memref<128x128xbf16, #tpu.memory_space<vmem>>, %arg27: memref<1x128xf32, #tpu.memory_space<vmem>>, %arg28: memref<1x128xf32, #tpu.memory_space<vmem>>, %arg29: memref<1x128xf32, #tpu.memory_space<vmem>>, %arg30: memref<128x512xbf16, #tpu.memory_space<vmem>>, %arg31: memref<1x512xf32, #tpu.memory_space<vmem>>, %arg32: memref<256x128xbf16, #tpu.memory_space<vmem>>, %arg33: memref<1x128xf32, #tpu.memory_space<vmem>>, %arg34: memref<1x128xf32, #tpu.memory_space<vmem>>, %arg35: memref<1x128xf32, #tpu.memory_space<vmem>>, %arg36: memref<1x128x128xf32, #tpu.memory_space<vmem>>, %arg37: memref<1x4x128x128xbf16, #tpu.memory_space<vmem>>) attributes {dimension_semantics = [#tpu.dimension_semantics<parallel>], iteration_bounds = array<i64: 2>, scalar_prefetch = 0 : i64, scratch_operands = 0 : i64, tpu.core_type = #tpu.core_type<tc>, window_params = [{transform_indices = @transform_0, window_bounds = array<i64: 1, 128, 128>}, {transform_indices = @transform_1, window_bounds = array<i64: 1, 1, 128>}, {pipeline_mode = #tpu.pipeline_mode<synchronous>, transform_indices = @transform_2, window_bounds = array<i64: 128, 128>}, {pipeline_mode = #tpu.pipeline_mode<synchronous>, transform_indices = @transform_3, window_bounds = array<i64: 1, 128>}, {pipeline_mode = #tpu.pipeline_mode<synchronous>, transform_indices = @transform_4, window_bounds = array<i64: 1, 128>}, {pipeline_mode = #tpu.pipeline_mode<synchronous>, transform_indices = @transform_5, window_bounds = array<i64: 128, 512>}, {pipeline_mode = #tpu.pipeline_mode<synchronous>, transform_indices = @transform_6, window_bounds = array<i64: 1, 512>}, {pipeline_mode = #tpu.pipeline_mode<synchronous>, transform_indices = @transform_7, window_bounds = array<i64: 256, 128>}, {pipeline_mode = #tpu.pipeline_mode<synchronous>, transform_indices = @transform_8, window_bounds = array<i64: 1, 128>}, {pipeline_mode = #tpu.pipeline_mode<synchronous>, transform_indices = @transform_9, window_bounds = array<i64: 1, 128>}, {pipeline_mode = #tpu.pipeline_mode<synchronous>, transform_indices = @transform_10, window_bounds = array<i64: 1, 128>}, {pipeline_mode = #tpu.pipeline_mode<synchronous>, transform_indices = @transform_11, window_bounds = array<i64: 128, 384>}, {pipeline_mode = #tpu.pipeline_mode<synchronous>, transform_indices = @transform_12, window_bounds = array<i64: 1, 384>}, {pipeline_mode = #tpu.pipeline_mode<synchronous>, transform_indices = @transform_13, window_bounds = array<i64: 1, 128>}, {pipeline_mode = #tpu.pipeline_mode<synchronous>, transform_indices = @transform_14, window_bounds = array<i64: 1, 128>}, {pipeline_mode = #tpu.pipeline_mode<synchronous>, transform_indices = @transform_15, window_bounds = array<i64: 128, 128>}, {pipeline_mode = #tpu.pipeline_mode<synchronous>, transform_indices = @transform_16, window_bounds = array<i64: 1, 128>}, {pipeline_mode = #tpu.pipeline_mode<synchronous>, transform_indices = @transform_17, window_bounds = array<i64: 1, 128>}, {pipeline_mode = #tpu.pipeline_mode<synchronous>, transform_indices = @transform_18, window_bounds = array<i64: 1, 128>}, {pipeline_mode = #tpu.pipeline_mode<synchronous>, transform_indices = @transform_19, window_bounds = array<i64: 128, 256>}, {pipeline_mode = #tpu.pipeline_mode<synchronous>, transform_indices = @transform_20, window_bounds = array<i64: 1, 256>}, {pipeline_mode = #tpu.pipeline_mode<synchronous>, transform_indices = @transform_21, window_bounds = array<i64: 7, 128>}, {pipeline_mode = #tpu.pipeline_mode<synchronous>, transform_indices = @transform_22, window_bounds = array<i64: 1, 128>}, {pipeline_mode = #tpu.pipeline_mode<synchronous>, transform_indices = @transform_23, window_bounds = array<i64: 1, 128>}, {pipeline_mode = #tpu.pipeline_mode<synchronous>, transform_indices = @transform_24, window_bounds = array<i64: 1, 128>}, {pipeline_mode = #tpu.pipeline_mode<synchronous>, transform_indices = @transform_25, window_bounds = array<i64: 128, 128>}, {pipeline_mode = #tpu.pipeline_mode<synchronous>, transform_indices = @transform_26, window_bounds = array<i64: 1, 128>}, {pipeline_mode = #tpu.pipeline_mode<synchronous>, transform_indices = @transform_27, window_bounds = array<i64: 1, 128>}, {pipeline_mode = #tpu.pipeline_mode<synchronous>, transform_indices = @transform_28, window_bounds = array<i64: 1, 128>}, {pipeline_mode = #tpu.pipeline_mode<synchronous>, transform_indices = @transform_29, window_bounds = array<i64: 128, 512>}, {pipeline_mode = #tpu.pipeline_mode<synchronous>, transform_indices = @transform_30, window_bounds = array<i64: 1, 512>}, {pipeline_mode = #tpu.pipeline_mode<synchronous>, transform_indices = @transform_31, window_bounds = array<i64: 256, 128>}, {pipeline_mode = #tpu.pipeline_mode<synchronous>, transform_indices = @transform_32, window_bounds = array<i64: 1, 128>}, {pipeline_mode = #tpu.pipeline_mode<synchronous>, transform_indices = @transform_33, window_bounds = array<i64: 1, 128>}, {pipeline_mode = #tpu.pipeline_mode<synchronous>, transform_indices = @transform_34, window_bounds = array<i64: 1, 128>}, {transform_indices = @transform_35, window_bounds = array<i64: 1, 128, 128>}, {transform_indices = @transform_36, window_bounds = array<i64: 1, 4, 128, 128>}]} {
    %c0 = arith.constant 0 : index
    %c0_0 = arith.constant 0 : index
    %c0_1 = arith.constant 0 : index
    %0 = vector.load %arg1[%c0, %c0_0, %c0_1] : memref<1x128x128xf32, #tpu.memory_space<vmem>>, vector<1x128x128xf32>
    %1 = vector.shape_cast %0 : vector<1x128x128xf32> to vector<128x128xf32>
    %c0_2 = arith.constant 0 : index
    %c0_3 = arith.constant 0 : index
    %2 = vector.load %arg4[%c0_2, %c0_3] : memref<1x128xf32, #tpu.memory_space<vmem>>, vector<1x128xf32>
    %c0_4 = arith.constant 0 : index
    %c0_5 = arith.constant 0 : index
    %3 = vector.load %arg5[%c0_4, %c0_5] : memref<1x128xf32, #tpu.memory_space<vmem>>, vector<1x128xf32>
    %cst = arith.constant dense<0.000000e+00> : vector<128xf32>
    %4 = vector.multi_reduction <add>, %1, %cst [1] : vector<128x128xf32> to vector<128xf32>
    %5 = vector.shape_cast %4 : vector<128xf32> to vector<128x1xf32>
    %cst_6 = arith.constant 1.280000e+02 : f32
    %6 = vector.broadcast %cst_6 : f32 to vector<128x1xf32>
    %7 = arith.divf %5, %6 : vector<128x1xf32>
    %8 = vector.broadcast %7 : vector<128x1xf32> to vector<128x128xf32>
    %9 = arith.subf %1, %8 : vector<128x128xf32>
    %10 = arith.mulf %9, %9 : vector<128x128xf32>
    %cst_7 = arith.constant dense<0.000000e+00> : vector<128xf32>
    %11 = vector.multi_reduction <add>, %10, %cst_7 [1] : vector<128x128xf32> to vector<128xf32>
    %12 = vector.shape_cast %11 : vector<128xf32> to vector<128x1xf32>
    %cst_8 = arith.constant 1.280000e+02 : f32
    %13 = vector.broadcast %cst_8 : f32 to vector<128x1xf32>
    %14 = arith.divf %12, %13 : vector<128x1xf32>
    %15 = vector.broadcast %7 : vector<128x1xf32> to vector<128x128xf32>
    %16 = arith.subf %1, %15 : vector<128x128xf32>
    %cst_9 = arith.constant 9.99999974E-6 : f32
    %17 = vector.broadcast %cst_9 : f32 to vector<128x1xf32>
    %18 = arith.addf %14, %17 : vector<128x1xf32>
    %19 = math.rsqrt %18 : vector<128x1xf32>
    %20 = vector.broadcast %19 : vector<128x1xf32> to vector<128x128xf32>
    %21 = arith.mulf %16, %20 : vector<128x128xf32>
    %22 = vector.broadcast %2 : vector<1x128xf32> to vector<128x128xf32>
    %23 = arith.mulf %21, %22 : vector<128x128xf32>
    %24 = vector.broadcast %3 : vector<1x128xf32> to vector<128x128xf32>
    %25 = arith.addf %23, %24 : vector<128x128xf32>
    %c0_10 = arith.constant 0 : index
    %c0_11 = arith.constant 0 : index
    %26 = vector.load %arg6[%c0_10, %c0_11] : memref<128x512xbf16, #tpu.memory_space<vmem>>, vector<128x512xbf16>
    %27 = arith.truncf %25 : vector<128x128xf32> to vector<128x128xbf16>
    %cst_12 = arith.constant dense<0.000000e+00> : vector<128x512xf32>
    %28 = tpu.matmul %27, %26, %cst_12 {dimension_numbers = #tpu.dot_dimension_numbers<[1], [0], [0], [1], [0, 0, 1, 1], [], []>} : vector<128x128xbf16>, vector<128x512xbf16>, vector<128x512xf32> -> vector<128x512xf32>
    %c0_13 = arith.constant 0 : index
    %c0_14 = arith.constant 0 : index
    %29 = vector.load %arg7[%c0_13, %c0_14] : memref<1x512xf32, #tpu.memory_space<vmem>>, vector<1x512xf32>
    %30 = vector.broadcast %29 : vector<1x512xf32> to vector<128x512xf32>
    %31 = arith.addf %28, %30 : vector<128x512xf32>
    %32 = vector.extract_strided_slice %31 {offsets = [0, 0], sizes = [128, 256], strides = [1, 1]} : vector<128x512xf32> to vector<128x256xf32>
    %33 = vector.extract_strided_slice %31 {offsets = [0, 256], sizes = [128, 256], strides = [1, 1]} : vector<128x512xf32> to vector<128x256xf32>
    %34 = arith.negf %33 : vector<128x256xf32>
    %35 = math.exp %34 : vector<128x256xf32>
    %cst_15 = arith.constant 1.000000e+00 : f32
    %36 = vector.broadcast %cst_15 : f32 to vector<128x256xf32>
    %37 = arith.addf %36, %35 : vector<128x256xf32>
    %38 = arith.divf %36, %37 : vector<128x256xf32>
    %39 = arith.mulf %32, %38 : vector<128x256xf32>
    %c0_16 = arith.constant 0 : index
    %c0_17 = arith.constant 0 : index
    %40 = vector.load %arg8[%c0_16, %c0_17] : memref<256x128xbf16, #tpu.memory_space<vmem>>, vector<256x128xbf16>
    %41 = arith.truncf %39 : vector<128x256xf32> to vector<128x256xbf16>
    %cst_18 = arith.constant dense<0.000000e+00> : vector<128x128xf32>
    %42 = tpu.matmul %41, %40, %cst_18 {dimension_numbers = #tpu.dot_dimension_numbers<[1], [0], [0], [1], [0, 0, 1, 1], [], []>} : vector<128x256xbf16>, vector<256x128xbf16>, vector<128x128xf32> -> vector<128x128xf32>
    %43 = arith.addf %1, %42 : vector<128x128xf32>
    %c0_19 = arith.constant 0 : index
    %c0_20 = arith.constant 0 : index
    %44 = vector.load %arg9[%c0_19, %c0_20] : memref<1x128xf32, #tpu.memory_space<vmem>>, vector<1x128xf32>
    %45 = vector.broadcast %44 : vector<1x128xf32> to vector<128x128xf32>
    %46 = arith.addf %43, %45 : vector<128x128xf32>
    %c0_21 = arith.constant 0 : index
    %c0_22 = arith.constant 0 : index
    %47 = vector.load %arg10[%c0_21, %c0_22] : memref<1x128xf32, #tpu.memory_space<vmem>>, vector<1x128xf32>
    %c0_23 = arith.constant 0 : index
    %c0_24 = arith.constant 0 : index
    %48 = vector.load %arg11[%c0_23, %c0_24] : memref<1x128xf32, #tpu.memory_space<vmem>>, vector<1x128xf32>
    %cst_25 = arith.constant dense<0.000000e+00> : vector<128xf32>
    %49 = vector.multi_reduction <add>, %46, %cst_25 [1] : vector<128x128xf32> to vector<128xf32>
    %50 = vector.shape_cast %49 : vector<128xf32> to vector<128x1xf32>
    %cst_26 = arith.constant 1.280000e+02 : f32
    %51 = vector.broadcast %cst_26 : f32 to vector<128x1xf32>
    %52 = arith.divf %50, %51 : vector<128x1xf32>
    %53 = vector.broadcast %52 : vector<128x1xf32> to vector<128x128xf32>
    %54 = arith.subf %46, %53 : vector<128x128xf32>
    %55 = arith.mulf %54, %54 : vector<128x128xf32>
    %cst_27 = arith.constant dense<0.000000e+00> : vector<128xf32>
    %56 = vector.multi_reduction <add>, %55, %cst_27 [1] : vector<128x128xf32> to vector<128xf32>
    %57 = vector.shape_cast %56 : vector<128xf32> to vector<128x1xf32>
    %cst_28 = arith.constant 1.280000e+02 : f32
    %58 = vector.broadcast %cst_28 : f32 to vector<128x1xf32>
    %59 = arith.divf %57, %58 : vector<128x1xf32>
    %60 = vector.broadcast %52 : vector<128x1xf32> to vector<128x128xf32>
    %61 = arith.subf %46, %60 : vector<128x128xf32>
    %cst_29 = arith.constant 9.99999974E-6 : f32
    %62 = vector.broadcast %cst_29 : f32 to vector<128x1xf32>
    %63 = arith.addf %59, %62 : vector<128x1xf32>
    %64 = math.rsqrt %63 : vector<128x1xf32>
    %65 = vector.broadcast %64 : vector<128x1xf32> to vector<128x128xf32>
    %66 = arith.mulf %61, %65 : vector<128x128xf32>
    %67 = vector.broadcast %47 : vector<1x128xf32> to vector<128x128xf32>
    %68 = arith.mulf %66, %67 : vector<128x128xf32>
    %69 = vector.broadcast %48 : vector<1x128xf32> to vector<128x128xf32>
    %70 = arith.addf %68, %69 : vector<128x128xf32>
    %c0_30 = arith.constant 0 : index
    %c0_31 = arith.constant 0 : index
    %71 = vector.load %arg12[%c0_30, %c0_31] : memref<128x384xbf16, #tpu.memory_space<vmem>>, vector<128x384xbf16>
    %72 = arith.truncf %70 : vector<128x128xf32> to vector<128x128xbf16>
    %cst_32 = arith.constant dense<0.000000e+00> : vector<128x384xf32>
    %73 = tpu.matmul %72, %71, %cst_32 {dimension_numbers = #tpu.dot_dimension_numbers<[1], [0], [0], [1], [0, 0, 1, 1], [], []>} : vector<128x128xbf16>, vector<128x384xbf16>, vector<128x384xf32> -> vector<128x384xf32>
    %c0_33 = arith.constant 0 : index
    %c0_34 = arith.constant 0 : index
    %74 = vector.load %arg13[%c0_33, %c0_34] : memref<1x384xf32, #tpu.memory_space<vmem>>, vector<1x384xf32>
    %75 = vector.broadcast %74 : vector<1x384xf32> to vector<128x384xf32>
    %76 = arith.addf %73, %75 : vector<128x384xf32>
    %c0_35 = arith.constant 0 : index
    %c0_36 = arith.constant 0 : index
    %77 = vector.load %arg3[%c0_35, %c0_36] : memref<128x128xbf16, #tpu.memory_space<vmem>>, vector<128x128xbf16>
    %c0_37 = arith.constant 0 : index
    %c0_38 = arith.constant 0 : index
    %78 = vector.load %arg14[%c0_37, %c0_38] : memref<1x128xf32, #tpu.memory_space<vmem>>, vector<1x128xf32>
    %c0_39 = arith.constant 0 : index
    %c0_40 = arith.constant 0 : index
    %79 = vector.load %arg15[%c0_39, %c0_40] : memref<1x128xf32, #tpu.memory_space<vmem>>, vector<1x128xf32>
    %c0_41 = arith.constant 0 : index
    %c0_42 = arith.constant 0 : index
    %c0_43 = arith.constant 0 : index
    %80 = vector.load %arg2[%c0_41, %c0_42, %c0_43] : memref<1x1x128xf32, #tpu.memory_space<vmem>>, vector<1x1x128xf32>
    %81 = vector.shape_cast %80 : vector<1x1x128xf32> to vector<1x128xf32>
    %cst_44 = arith.constant 0.000000e+00 : f32
    %82 = vector.broadcast %cst_44 : f32 to vector<1x128xf32>
    %83 = arith.cmpf ogt, %81, %82 : vector<1x128xf32>
    %cst_45 = arith.constant 0.000000e+00 : f32
    %cst_46 = arith.constant -1.000000e+09 : f32
    %84 = vector.broadcast %cst_45 : f32 to vector<1x128xf32>
    %85 = vector.broadcast %cst_46 : f32 to vector<1x128xf32>
    %86 = arith.select %83, %84, %85 : vector<1x128xi1>, vector<1x128xf32>
    %87 = tpu.iota {dimensions = array<i32: 0>} : vector<128x128xi32>
    %88 = tpu.iota {dimensions = array<i32: 1>} : vector<128x128xi32>
    %89 = arith.cmpi sle, %88, %87 : vector<128x128xi32>
    %c2_i32 = arith.constant 2 : i32
    %90 = vector.broadcast %c2_i32 : i32 to vector<128x128xi32>
    %91 = arith.addi %87, %90 : vector<128x128xi32>
    %92 = arith.cmpi sge, %88, %91 : vector<128x128xi32>
    %93 = arith.extui %92 : vector<128x128xi1> to vector<128x128xi32>
    %94 = arith.sitofp %93 : vector<128x128xi32> to vector<128x128xf32>
    %95 = vector.extract_strided_slice %76 {offsets = [0, 0], sizes = [128, 32], strides = [1, 1]} : vector<128x384xf32> to vector<128x32xf32>
    %96 = vector.extract_strided_slice %76 {offsets = [0, 128], sizes = [128, 32], strides = [1, 1]} : vector<128x384xf32> to vector<128x32xf32>
    %97 = vector.extract_strided_slice %76 {offsets = [0, 256], sizes = [128, 32], strides = [1, 1]} : vector<128x384xf32> to vector<128x32xf32>
    %98 = vector.extract_strided_slice %77 {offsets = [0, 0], sizes = [128, 32], strides = [1, 1]} : vector<128x128xbf16> to vector<128x32xbf16>
    %99 = vector.extract_strided_slice %78 {offsets = [0, 0], sizes = [1, 32], strides = [1, 1]} : vector<1x128xf32> to vector<1x32xf32>
    %100 = vector.broadcast %99 : vector<1x32xf32> to vector<128x32xf32>
    %101 = arith.addf %95, %100 : vector<128x32xf32>
    %102 = arith.truncf %101 : vector<128x32xf32> to vector<128x32xbf16>
    %103 = arith.truncf %96 : vector<128x32xf32> to vector<128x32xbf16>
    %cst_47 = arith.constant dense<0.000000e+00> : vector<128x128xf32>
    %104 = tpu.matmul %102, %103, %cst_47 {dimension_numbers = #tpu.dot_dimension_numbers<[1], [1], [0], [0], [0, 0, 1, 0], [], []>} : vector<128x32xbf16>, vector<128x32xbf16>, vector<128x128xf32> -> vector<128x128xf32>
    %105 = vector.extract_strided_slice %79 {offsets = [0, 0], sizes = [1, 32], strides = [1, 1]} : vector<1x128xf32> to vector<1x32xf32>
    %106 = vector.broadcast %105 : vector<1x32xf32> to vector<128x32xf32>
    %107 = arith.addf %95, %106 : vector<128x32xf32>
    %108 = arith.truncf %107 : vector<128x32xf32> to vector<128x32xbf16>
    %cst_48 = arith.constant dense<0.000000e+00> : vector<128x128xf32>
    %109 = tpu.matmul %108, %98, %cst_48 {dimension_numbers = #tpu.dot_dimension_numbers<[1], [1], [0], [0], [0, 0, 1, 0], [], []>} : vector<128x32xbf16>, vector<128x32xbf16>, vector<128x128xf32> -> vector<128x128xf32>
    %c1_i32 = arith.constant 1 : i32
    %110 = tpu.dynamic_rotate %109 by %c1_i32 dim 1 {stride = 1 : si32, stride_dimension = 0 : si32} : vector<128x128xf32>, i32 -> vector<128x128xf32>
    %c127_i32 = arith.constant 127 : i32
    %111 = tpu.dynamic_rotate %110 by %c127_i32 dim 0 : vector<128x128xf32>, i32 -> vector<128x128xf32>
    %112 = arith.mulf %111, %94 : vector<128x128xf32>
    %113 = arith.select %89, %110, %112 : vector<128x128xi1>, vector<128x128xf32>
    %114 = arith.addf %104, %113 : vector<128x128xf32>
    %115 = vector.broadcast %86 : vector<1x128xf32> to vector<128x128xf32>
    %116 = arith.addf %114, %115 : vector<128x128xf32>
    %cst_49 = arith.constant dense<0xFF800000> : vector<128xf32>
    %117 = vector.multi_reduction <maximumf>, %116, %cst_49 [1] : vector<128x128xf32> to vector<128xf32>
    %118 = vector.shape_cast %117 : vector<128xf32> to vector<128x1xf32>
    %119 = vector.broadcast %118 : vector<128x1xf32> to vector<128x128xf32>
    %120 = arith.subf %116, %119 : vector<128x128xf32>
    %121 = math.exp %120 : vector<128x128xf32>
    %cst_50 = arith.constant dense<0.000000e+00> : vector<128xf32>
    %122 = vector.multi_reduction <add>, %121, %cst_50 [1] : vector<128x128xf32> to vector<128xf32>
    %123 = vector.shape_cast %122 : vector<128xf32> to vector<128x1xf32>
    %124 = tpu.reciprocal %123 {approx = true} : vector<128x1xf32> -> vector<128x1xf32>
    %125 = vector.broadcast %124 : vector<128x1xf32> to vector<128x128xf32>
    %126 = arith.mulf %121, %125 : vector<128x128xf32>
    %127 = arith.truncf %126 : vector<128x128xf32> to vector<128x128xbf16>
    %c0_51 = arith.constant 0 : index
    %c0_52 = arith.constant 0 : index
    %c0_53 = arith.constant 0 : index
    %c0_54 = arith.constant 0 : index
    %128 = vector.load %arg37[%c0_51, %c0_52, %c0_53, %c0_54] : memref<1x4x128x128xbf16, #tpu.memory_space<vmem>>, vector<1x1x128x128xbf16>
    %129 = vector.shape_cast %128 : vector<1x1x128x128xbf16> to vector<128x128xbf16>
    %130 = vector.shape_cast %127 : vector<128x128xbf16> to vector<1x1x128x128xbf16>
    tpu.vector_store %arg37[%c0_51, %c0_52, %c0_53, %c0_54], %130 {strides = array<i32>} : memref<1x4x128x128xbf16, #tpu.memory_space<vmem>>, vector<1x1x128x128xbf16>,
    %131 = arith.truncf %126 : vector<128x128xf32> to vector<128x128xbf16>
    %132 = arith.truncf %97 : vector<128x32xf32> to vector<128x32xbf16>
    %cst_55 = arith.constant dense<0.000000e+00> : vector<128x32xf32>
    %133 = tpu.matmul %131, %132, %cst_55 {dimension_numbers = #tpu.dot_dimension_numbers<[1], [0], [0], [1], [0, 0, 1, 1], [], []>} : vector<128x128xbf16>, vector<128x32xbf16>, vector<128x32xf32> -> vector<128x32xf32>
    %134 = vector.extract_strided_slice %76 {offsets = [0, 32], sizes = [128, 32], strides = [1, 1]} : vector<128x384xf32> to vector<128x32xf32>
    %135 = vector.extract_strided_slice %76 {offsets = [0, 160], sizes = [128, 32], strides = [1, 1]} : vector<128x384xf32> to vector<128x32xf32>
    %136 = vector.extract_strided_slice %76 {offsets = [0, 288], sizes = [128, 32], strides = [1, 1]} : vector<128x384xf32> to vector<128x32xf32>
    %137 = vector.extract_strided_slice %77 {offsets = [0, 32], sizes = [128, 32], strides = [1, 1]} : vector<128x128xbf16> to vector<128x32xbf16>
    %138 = vector.extract_strided_slice %78 {offsets = [0, 32], sizes = [1, 32], strides = [1, 1]} : vector<1x128xf32> to vector<1x32xf32>
    %139 = vector.broadcast %138 : vector<1x32xf32> to vector<128x32xf32>
    %140 = arith.addf %134, %139 : vector<128x32xf32>
    %141 = arith.truncf %140 : vector<128x32xf32> to vector<128x32xbf16>
    %142 = arith.truncf %135 : vector<128x32xf32> to vector<128x32xbf16>
    %cst_56 = arith.constant dense<0.000000e+00> : vector<128x128xf32>
    %143 = tpu.matmul %141, %142, %cst_56 {dimension_numbers = #tpu.dot_dimension_numbers<[1], [1], [0], [0], [0, 0, 1, 0], [], []>} : vector<128x32xbf16>, vector<128x32xbf16>, vector<128x128xf32> -> vector<128x128xf32>
    %144 = vector.extract_strided_slice %79 {offsets = [0, 32], sizes = [1, 32], strides = [1, 1]} : vector<1x128xf32> to vector<1x32xf32>
    %145 = vector.broadcast %144 : vector<1x32xf32> to vector<128x32xf32>
    %146 = arith.addf %134, %145 : vector<128x32xf32>
    %147 = arith.truncf %146 : vector<128x32xf32> to vector<128x32xbf16>
    %cst_57 = arith.constant dense<0.000000e+00> : vector<128x128xf32>
    %148 = tpu.matmul %147, %137, %cst_57 {dimension_numbers = #tpu.dot_dimension_numbers<[1], [1], [0], [0], [0, 0, 1, 0], [], []>} : vector<128x32xbf16>, vector<128x32xbf16>, vector<128x128xf32> -> vector<128x128xf32>
    %c1_i32_58 = arith.constant 1 : i32
    %149 = tpu.dynamic_rotate %148 by %c1_i32_58 dim 1 {stride = 1 : si32, stride_dimension = 0 : si32} : vector<128x128xf32>, i32 -> vector<128x128xf32>
    %c127_i32_59 = arith.constant 127 : i32
    %150 = tpu.dynamic_rotate %149 by %c127_i32_59 dim 0 : vector<128x128xf32>, i32 -> vector<128x128xf32>
    %151 = arith.mulf %150, %94 : vector<128x128xf32>
    %152 = arith.select %89, %149, %151 : vector<128x128xi1>, vector<128x128xf32>
    %153 = arith.addf %143, %152 : vector<128x128xf32>
    %154 = vector.broadcast %86 : vector<1x128xf32> to vector<128x128xf32>
    %155 = arith.addf %153, %154 : vector<128x128xf32>
    %cst_60 = arith.constant dense<0xFF800000> : vector<128xf32>
    %156 = vector.multi_reduction <maximumf>, %155, %cst_60 [1] : vector<128x128xf32> to vector<128xf32>
    %157 = vector.shape_cast %156 : vector<128xf32> to vector<128x1xf32>
    %158 = vector.broadcast %157 : vector<128x1xf32> to vector<128x128xf32>
    %159 = arith.subf %155, %158 : vector<128x128xf32>
    %160 = math.exp %159 : vector<128x128xf32>
    %cst_61 = arith.constant dense<0.000000e+00> : vector<128xf32>
    %161 = vector.multi_reduction <add>, %160, %cst_61 [1] : vector<128x128xf32> to vector<128xf32>
    %162 = vector.shape_cast %161 : vector<128xf32> to vector<128x1xf32>
    %163 = tpu.reciprocal %162 {approx = true} : vector<128x1xf32> -> vector<128x1xf32>
    %164 = vector.broadcast %163 : vector<128x1xf32> to vector<128x128xf32>
    %165 = arith.mulf %160, %164 : vector<128x128xf32>
    %166 = arith.truncf %165 : vector<128x128xf32> to vector<128x128xbf16>
    %c0_62 = arith.constant 0 : index
    %c1 = arith.constant 1 : index
    %c0_63 = arith.constant 0 : index
    %c0_64 = arith.constant 0 : index
    %167 = vector.load %arg37[%c0_62, %c1, %c0_63, %c0_64] : memref<1x4x128x128xbf16, #tpu.memory_space<vmem>>, vector<1x1x128x128xbf16>
    %168 = vector.shape_cast %167 : vector<1x1x128x128xbf16> to vector<128x128xbf16>
    %169 = vector.shape_cast %166 : vector<128x128xbf16> to vector<1x1x128x128xbf16>
    tpu.vector_store %arg37[%c0_62, %c1, %c0_63, %c0_64], %169 {strides = array<i32>} : memref<1x4x128x128xbf16, #tpu.memory_space<vmem>>, vector<1x1x128x128xbf16>,
    %170 = arith.truncf %165 : vector<128x128xf32> to vector<128x128xbf16>
    %171 = arith.truncf %136 : vector<128x32xf32> to vector<128x32xbf16>
    %cst_65 = arith.constant dense<0.000000e+00> : vector<128x32xf32>
    %172 = tpu.matmul %170, %171, %cst_65 {dimension_numbers = #tpu.dot_dimension_numbers<[1], [0], [0], [1], [0, 0, 1, 1], [], []>} : vector<128x128xbf16>, vector<128x32xbf16>, vector<128x32xf32> -> vector<128x32xf32>
    %173 = vector.extract_strided_slice %76 {offsets = [0, 64], sizes = [128, 32], strides = [1, 1]} : vector<128x384xf32> to vector<128x32xf32>
    %174 = vector.extract_strided_slice %76 {offsets = [0, 192], sizes = [128, 32], strides = [1, 1]} : vector<128x384xf32> to vector<128x32xf32>
    %175 = vector.extract_strided_slice %76 {offsets = [0, 320], sizes = [128, 32], strides = [1, 1]} : vector<128x384xf32> to vector<128x32xf32>
    %176 = vector.extract_strided_slice %77 {offsets = [0, 64], sizes = [128, 32], strides = [1, 1]} : vector<128x128xbf16> to vector<128x32xbf16>
    %177 = vector.extract_strided_slice %78 {offsets = [0, 64], sizes = [1, 32], strides = [1, 1]} : vector<1x128xf32> to vector<1x32xf32>
    %178 = vector.broadcast %177 : vector<1x32xf32> to vector<128x32xf32>
    %179 = arith.addf %173, %178 : vector<128x32xf32>
    %180 = arith.truncf %179 : vector<128x32xf32> to vector<128x32xbf16>
    %181 = arith.truncf %174 : vector<128x32xf32> to vector<128x32xbf16>
    %cst_66 = arith.constant dense<0.000000e+00> : vector<128x128xf32>
    %182 = tpu.matmul %180, %181, %cst_66 {dimension_numbers = #tpu.dot_dimension_numbers<[1], [1], [0], [0], [0, 0, 1, 0], [], []>} : vector<128x32xbf16>, vector<128x32xbf16>, vector<128x128xf32> -> vector<128x128xf32>
    %183 = vector.extract_strided_slice %79 {offsets = [0, 64], sizes = [1, 32], strides = [1, 1]} : vector<1x128xf32> to vector<1x32xf32>
    %184 = vector.broadcast %183 : vector<1x32xf32> to vector<128x32xf32>
    %185 = arith.addf %173, %184 : vector<128x32xf32>
    %186 = arith.truncf %185 : vector<128x32xf32> to vector<128x32xbf16>
    %cst_67 = arith.constant dense<0.000000e+00> : vector<128x128xf32>
    %187 = tpu.matmul %186, %176, %cst_67 {dimension_numbers = #tpu.dot_dimension_numbers<[1], [1], [0], [0], [0, 0, 1, 0], [], []>} : vector<128x32xbf16>, vector<128x32xbf16>, vector<128x128xf32> -> vector<128x128xf32>
    %c1_i32_68 = arith.constant 1 : i32
    %188 = tpu.dynamic_rotate %187 by %c1_i32_68 dim 1 {stride = 1 : si32, stride_dimension = 0 : si32} : vector<128x128xf32>, i32 -> vector<128x128xf32>
    %c127_i32_69 = arith.constant 127 : i32
    %189 = tpu.dynamic_rotate %188 by %c127_i32_69 dim 0 : vector<128x128xf32>, i32 -> vector<128x128xf32>
    %190 = arith.mulf %189, %94 : vector<128x128xf32>
    %191 = arith.select %89, %188, %190 : vector<128x128xi1>, vector<128x128xf32>
    %192 = arith.addf %182, %191 : vector<128x128xf32>
    %193 = vector.broadcast %86 : vector<1x128xf32> to vector<128x128xf32>
    %194 = arith.addf %192, %193 : vector<128x128xf32>
    %cst_70 = arith.constant dense<0xFF800000> : vector<128xf32>
    %195 = vector.multi_reduction <maximumf>, %194, %cst_70 [1] : vector<128x128xf32> to vector<128xf32>
    %196 = vector.shape_cast %195 : vector<128xf32> to vector<128x1xf32>
    %197 = vector.broadcast %196 : vector<128x1xf32> to vector<128x128xf32>
    %198 = arith.subf %194, %197 : vector<128x128xf32>
    %199 = math.exp %198 : vector<128x128xf32>
    %cst_71 = arith.constant dense<0.000000e+00> : vector<128xf32>
    %200 = vector.multi_reduction <add>, %199, %cst_71 [1] : vector<128x128xf32> to vector<128xf32>
    %201 = vector.shape_cast %200 : vector<128xf32> to vector<128x1xf32>
    %202 = tpu.reciprocal %201 {approx = true} : vector<128x1xf32> -> vector<128x1xf32>
    %203 = vector.broadcast %202 : vector<128x1xf32> to vector<128x128xf32>
    %204 = arith.mulf %199, %203 : vector<128x128xf32>
    %205 = arith.truncf %204 : vector<128x128xf32> to vector<128x128xbf16>
    %c0_72 = arith.constant 0 : index
    %c2 = arith.constant 2 : index
    %c0_73 = arith.constant 0 : index
    %c0_74 = arith.constant 0 : index
    %206 = vector.load %arg37[%c0_72, %c2, %c0_73, %c0_74] : memref<1x4x128x128xbf16, #tpu.memory_space<vmem>>, vector<1x1x128x128xbf16>
    %207 = vector.shape_cast %206 : vector<1x1x128x128xbf16> to vector<128x128xbf16>
    %208 = vector.shape_cast %205 : vector<128x128xbf16> to vector<1x1x128x128xbf16>
    tpu.vector_store %arg37[%c0_72, %c2, %c0_73, %c0_74], %208 {strides = array<i32>} : memref<1x4x128x128xbf16, #tpu.memory_space<vmem>>, vector<1x1x128x128xbf16>,
    %209 = arith.truncf %204 : vector<128x128xf32> to vector<128x128xbf16>
    %210 = arith.truncf %175 : vector<128x32xf32> to vector<128x32xbf16>
    %cst_75 = arith.constant dense<0.000000e+00> : vector<128x32xf32>
    %211 = tpu.matmul %209, %210, %cst_75 {dimension_numbers = #tpu.dot_dimension_numbers<[1], [0], [0], [1], [0, 0, 1, 1], [], []>} : vector<128x128xbf16>, vector<128x32xbf16>, vector<128x32xf32> -> vector<128x32xf32>
    %212 = vector.extract_strided_slice %76 {offsets = [0, 96], sizes = [128, 32], strides = [1, 1]} : vector<128x384xf32> to vector<128x32xf32>
    %213 = vector.extract_strided_slice %76 {offsets = [0, 224], sizes = [128, 32], strides = [1, 1]} : vector<128x384xf32> to vector<128x32xf32>
    %214 = vector.extract_strided_slice %76 {offsets = [0, 352], sizes = [128, 32], strides = [1, 1]} : vector<128x384xf32> to vector<128x32xf32>
    %215 = vector.extract_strided_slice %77 {offsets = [0, 96], sizes = [128, 32], strides = [1, 1]} : vector<128x128xbf16> to vector<128x32xbf16>
    %216 = vector.extract_strided_slice %78 {offsets = [0, 96], sizes = [1, 32], strides = [1, 1]} : vector<1x128xf32> to vector<1x32xf32>
    %217 = vector.broadcast %216 : vector<1x32xf32> to vector<128x32xf32>
    %218 = arith.addf %212, %217 : vector<128x32xf32>
    %219 = arith.truncf %218 : vector<128x32xf32> to vector<128x32xbf16>
    %220 = arith.truncf %213 : vector<128x32xf32> to vector<128x32xbf16>
    %cst_76 = arith.constant dense<0.000000e+00> : vector<128x128xf32>
    %221 = tpu.matmul %219, %220, %cst_76 {dimension_numbers = #tpu.dot_dimension_numbers<[1], [1], [0], [0], [0, 0, 1, 0], [], []>} : vector<128x32xbf16>, vector<128x32xbf16>, vector<128x128xf32> -> vector<128x128xf32>
    %222 = vector.extract_strided_slice %79 {offsets = [0, 96], sizes = [1, 32], strides = [1, 1]} : vector<1x128xf32> to vector<1x32xf32>
    %223 = vector.broadcast %222 : vector<1x32xf32> to vector<128x32xf32>
    %224 = arith.addf %212, %223 : vector<128x32xf32>
    %225 = arith.truncf %224 : vector<128x32xf32> to vector<128x32xbf16>
    %cst_77 = arith.constant dense<0.000000e+00> : vector<128x128xf32>
    %226 = tpu.matmul %225, %215, %cst_77 {dimension_numbers = #tpu.dot_dimension_numbers<[1], [1], [0], [0], [0, 0, 1, 0], [], []>} : vector<128x32xbf16>, vector<128x32xbf16>, vector<128x128xf32> -> vector<128x128xf32>
    %c1_i32_78 = arith.constant 1 : i32
    %227 = tpu.dynamic_rotate %226 by %c1_i32_78 dim 1 {stride = 1 : si32, stride_dimension = 0 : si32} : vector<128x128xf32>, i32 -> vector<128x128xf32>
    %c127_i32_79 = arith.constant 127 : i32
    %228 = tpu.dynamic_rotate %227 by %c127_i32_79 dim 0 : vector<128x128xf32>, i32 -> vector<128x128xf32>
    %229 = arith.mulf %228, %94 : vector<128x128xf32>
    %230 = arith.select %89, %227, %229 : vector<128x128xi1>, vector<128x128xf32>
    %231 = arith.addf %221, %230 : vector<128x128xf32>
    %232 = vector.broadcast %86 : vector<1x128xf32> to vector<128x128xf32>
    %233 = arith.addf %231, %232 : vector<128x128xf32>
    %cst_80 = arith.constant dense<0xFF800000> : vector<128xf32>
    %234 = vector.multi_reduction <maximumf>, %233, %cst_80 [1] : vector<128x128xf32> to vector<128xf32>
    %235 = vector.shape_cast %234 : vector<128xf32> to vector<128x1xf32>
    %236 = vector.broadcast %235 : vector<128x1xf32> to vector<128x128xf32>
    %237 = arith.subf %233, %236 : vector<128x128xf32>
    %238 = math.exp %237 : vector<128x128xf32>
    %cst_81 = arith.constant dense<0.000000e+00> : vector<128xf32>
    %239 = vector.multi_reduction <add>, %238, %cst_81 [1] : vector<128x128xf32> to vector<128xf32>
    %240 = vector.shape_cast %239 : vector<128xf32> to vector<128x1xf32>
    %241 = tpu.reciprocal %240 {approx = true} : vector<128x1xf32> -> vector<128x1xf32>
    %242 = vector.broadcast %241 : vector<128x1xf32> to vector<128x128xf32>
    %243 = arith.mulf %238, %242 : vector<128x128xf32>
    %244 = arith.truncf %243 : vector<128x128xf32> to vector<128x128xbf16>
    %c0_82 = arith.constant 0 : index
    %c3 = arith.constant 3 : index
    %c0_83 = arith.constant 0 : index
    %c0_84 = arith.constant 0 : index
    %245 = vector.load %arg37[%c0_82, %c3, %c0_83, %c0_84] : memref<1x4x128x128xbf16, #tpu.memory_space<vmem>>, vector<1x1x128x128xbf16>
    %246 = vector.shape_cast %245 : vector<1x1x128x128xbf16> to vector<128x128xbf16>
    %247 = vector.shape_cast %244 : vector<128x128xbf16> to vector<1x1x128x128xbf16>
    tpu.vector_store %arg37[%c0_82, %c3, %c0_83, %c0_84], %247 {strides = array<i32>} : memref<1x4x128x128xbf16, #tpu.memory_space<vmem>>, vector<1x1x128x128xbf16>,
    %248 = arith.truncf %243 : vector<128x128xf32> to vector<128x128xbf16>
    %249 = arith.truncf %214 : vector<128x32xf32> to vector<128x32xbf16>
    %cst_85 = arith.constant dense<0.000000e+00> : vector<128x32xf32>
    %250 = tpu.matmul %248, %249, %cst_85 {dimension_numbers = #tpu.dot_dimension_numbers<[1], [0], [0], [1], [0, 0, 1, 1], [], []>} : vector<128x128xbf16>, vector<128x32xbf16>, vector<128x32xf32> -> vector<128x32xf32>
    %251 = tpu.concatenate %133, %172, %211, %250 in 1 : vector<128x32xf32>, vector<128x32xf32>, vector<128x32xf32>, vector<128x32xf32> -> vector<128x128xf32>
    %c0_86 = arith.constant 0 : index
    %c0_87 = arith.constant 0 : index
    %252 = vector.load %arg16[%c0_86, %c0_87] : memref<128x128xbf16, #tpu.memory_space<vmem>>, vector<128x128xbf16>
    %253 = arith.truncf %251 : vector<128x128xf32> to vector<128x128xbf16>
    %cst_88 = arith.constant dense<0.000000e+00> : vector<128x128xf32>
    %254 = tpu.matmul %253, %252, %cst_88 {dimension_numbers = #tpu.dot_dimension_numbers<[1], [0], [0], [1], [0, 0, 1, 1], [], []>} : vector<128x128xbf16>, vector<128x128xbf16>, vector<128x128xf32> -> vector<128x128xf32>
    %255 = arith.addf %46, %254 : vector<128x128xf32>
    %c0_89 = arith.constant 0 : index
    %c0_90 = arith.constant 0 : index
    %256 = vector.load %arg17[%c0_89, %c0_90] : memref<1x128xf32, #tpu.memory_space<vmem>>, vector<1x128xf32>
    %257 = vector.broadcast %256 : vector<1x128xf32> to vector<128x128xf32>
    %258 = arith.addf %255, %257 : vector<128x128xf32>
    %c0_91 = arith.constant 0 : index
    %c0_92 = arith.constant 0 : index
    %259 = vector.load %arg18[%c0_91, %c0_92] : memref<1x128xf32, #tpu.memory_space<vmem>>, vector<1x128xf32>
    %c0_93 = arith.constant 0 : index
    %c0_94 = arith.constant 0 : index
    %260 = vector.load %arg19[%c0_93, %c0_94] : memref<1x128xf32, #tpu.memory_space<vmem>>, vector<1x128xf32>
    %cst_95 = arith.constant dense<0.000000e+00> : vector<128xf32>
    %261 = vector.multi_reduction <add>, %258, %cst_95 [1] : vector<128x128xf32> to vector<128xf32>
    %262 = vector.shape_cast %261 : vector<128xf32> to vector<128x1xf32>
    %cst_96 = arith.constant 1.280000e+02 : f32
    %263 = vector.broadcast %cst_96 : f32 to vector<128x1xf32>
    %264 = arith.divf %262, %263 : vector<128x1xf32>
    %265 = vector.broadcast %264 : vector<128x1xf32> to vector<128x128xf32>
    %266 = arith.subf %258, %265 : vector<128x128xf32>
    %267 = arith.mulf %266, %266 : vector<128x128xf32>
    %cst_97 = arith.constant dense<0.000000e+00> : vector<128xf32>
    %268 = vector.multi_reduction <add>, %267, %cst_97 [1] : vector<128x128xf32> to vector<128xf32>
    %269 = vector.shape_cast %268 : vector<128xf32> to vector<128x1xf32>
    %cst_98 = arith.constant 1.280000e+02 : f32
    %270 = vector.broadcast %cst_98 : f32 to vector<128x1xf32>
    %271 = arith.divf %269, %270 : vector<128x1xf32>
    %272 = vector.broadcast %264 : vector<128x1xf32> to vector<128x128xf32>
    %273 = arith.subf %258, %272 : vector<128x128xf32>
    %cst_99 = arith.constant 9.99999974E-6 : f32
    %274 = vector.broadcast %cst_99 : f32 to vector<128x1xf32>
    %275 = arith.addf %271, %274 : vector<128x1xf32>
    %276 = math.rsqrt %275 : vector<128x1xf32>
    %277 = vector.broadcast %276 : vector<128x1xf32> to vector<128x128xf32>
    %278 = arith.mulf %273, %277 : vector<128x128xf32>
    %279 = vector.broadcast %259 : vector<1x128xf32> to vector<128x128xf32>
    %280 = arith.mulf %278, %279 : vector<128x128xf32>
    %281 = vector.broadcast %260 : vector<1x128xf32> to vector<128x128xf32>
    %282 = arith.addf %280, %281 : vector<128x128xf32>
    %c0_100 = arith.constant 0 : index
    %c0_101 = arith.constant 0 : index
    %283 = vector.load %arg20[%c0_100, %c0_101] : memref<128x256xbf16, #tpu.memory_space<vmem>>, vector<128x256xbf16>
    %284 = arith.truncf %282 : vector<128x128xf32> to vector<128x128xbf16>
    %cst_102 = arith.constant dense<0.000000e+00> : vector<128x256xf32>
    %285 = tpu.matmul %284, %283, %cst_102 {dimension_numbers = #tpu.dot_dimension_numbers<[1], [0], [0], [1], [0, 0, 1, 1], [], []>} : vector<128x128xbf16>, vector<128x256xbf16>, vector<128x256xf32> -> vector<128x256xf32>
    %c0_103 = arith.constant 0 : index
    %c0_104 = arith.constant 0 : index
    %286 = vector.load %arg21[%c0_103, %c0_104] : memref<1x256xf32, #tpu.memory_space<vmem>>, vector<1x256xf32>
    %287 = vector.broadcast %286 : vector<1x256xf32> to vector<128x256xf32>
    %288 = arith.addf %285, %287 : vector<128x256xf32>
    %289 = vector.extract_strided_slice %288 {offsets = [0, 0], sizes = [128, 128], strides = [1, 1]} : vector<128x256xf32> to vector<128x128xf32>
    %290 = vector.extract_strided_slice %288 {offsets = [0, 128], sizes = [128, 128], strides = [1, 1]} : vector<128x256xf32> to vector<128x128xf32>
    %291 = arith.negf %290 : vector<128x128xf32>
    %292 = math.exp %291 : vector<128x128xf32>
    %cst_105 = arith.constant 1.000000e+00 : f32
    %293 = vector.broadcast %cst_105 : f32 to vector<128x128xf32>
    %294 = arith.addf %293, %292 : vector<128x128xf32>
    %295 = arith.divf %293, %294 : vector<128x128xf32>
    %296 = arith.mulf %289, %295 : vector<128x128xf32>
    %c0_106 = arith.constant 0 : index
    %c0_107 = arith.constant 0 : index
    %297 = vector.load %arg22[%c0_106, %c0_107] : memref<7x128xf32, #tpu.memory_space<vmem>>, vector<7x128xf32>
    %298 = tpu.iota {dimensions = array<i32: 0>} : vector<128x1xi32>
    %299 = vector.extract_strided_slice %297 {offsets = [3, 0], sizes = [1, 128], strides = [1, 1]} : vector<7x128xf32> to vector<1x128xf32>
    %300 = vector.broadcast %299 : vector<1x128xf32> to vector<128x128xf32>
    %301 = arith.mulf %296, %300 : vector<128x128xf32>
    %c3_i32 = arith.constant 3 : i32
    %302 = tpu.dynamic_rotate %296 by %c3_i32 dim 0 : vector<128x128xf32>, i32 -> vector<128x128xf32>
    %c3_i32_108 = arith.constant 3 : i32
    %303 = vector.broadcast %c3_i32_108 : i32 to vector<128x1xi32>
    %304 = arith.cmpi sge, %298, %303 : vector<128x1xi32>
    %cst_109 = arith.constant 0.000000e+00 : f32
    %305 = vector.shape_cast %304 : vector<128x1xi1> to vector<128x1xi1>
    %306 = vector.broadcast %305 : vector<128x1xi1> to vector<128x128xi1>
    %307 = vector.broadcast %cst_109 : f32 to vector<128x128xf32>
    %308 = arith.select %306, %302, %307 : vector<128x128xi1>, vector<128x128xf32>
    %309 = vector.extract_strided_slice %297 {offsets = [0, 0], sizes = [1, 128], strides = [1, 1]} : vector<7x128xf32> to vector<1x128xf32>
    %310 = vector.broadcast %309 : vector<1x128xf32> to vector<128x128xf32>
    %311 = arith.mulf %308, %310 : vector<128x128xf32>
    %312 = arith.addf %301, %311 : vector<128x128xf32>
    %c2_i32_110 = arith.constant 2 : i32
    %313 = tpu.dynamic_rotate %296 by %c2_i32_110 dim 0 : vector<128x128xf32>, i32 -> vector<128x128xf32>
    %c2_i32_111 = arith.constant 2 : i32
    %314 = vector.broadcast %c2_i32_111 : i32 to vector<128x1xi32>
    %315 = arith.cmpi sge, %298, %314 : vector<128x1xi32>
    %cst_112 = arith.constant 0.000000e+00 : f32
    %316 = vector.shape_cast %315 : vector<128x1xi1> to vector<128x1xi1>
    %317 = vector.broadcast %316 : vector<128x1xi1> to vector<128x128xi1>
    %318 = vector.broadcast %cst_112 : f32 to vector<128x128xf32>
    %319 = arith.select %317, %313, %318 : vector<128x128xi1>, vector<128x128xf32>
    %320 = vector.extract_strided_slice %297 {offsets = [1, 0], sizes = [1, 128], strides = [1, 1]} : vector<7x128xf32> to vector<1x128xf32>
    %321 = vector.broadcast %320 : vector<1x128xf32> to vector<128x128xf32>
    %322 = arith.mulf %319, %321 : vector<128x128xf32>
    %323 = arith.addf %312, %322 : vector<128x128xf32>
    %c1_i32_113 = arith.constant 1 : i32
    %324 = tpu.dynamic_rotate %296 by %c1_i32_113 dim 0 : vector<128x128xf32>, i32 -> vector<128x128xf32>
    %c1_i32_114 = arith.constant 1 : i32
    %325 = vector.broadcast %c1_i32_114 : i32 to vector<128x1xi32>
    %326 = arith.cmpi sge, %298, %325 : vector<128x1xi32>
    %cst_115 = arith.constant 0.000000e+00 : f32
    %327 = vector.shape_cast %326 : vector<128x1xi1> to vector<128x1xi1>
    %328 = vector.broadcast %327 : vector<128x1xi1> to vector<128x128xi1>
    %329 = vector.broadcast %cst_115 : f32 to vector<128x128xf32>
    %330 = arith.select %328, %324, %329 : vector<128x128xi1>, vector<128x128xf32>
    %331 = vector.extract_strided_slice %297 {offsets = [2, 0], sizes = [1, 128], strides = [1, 1]} : vector<7x128xf32> to vector<1x128xf32>
    %332 = vector.broadcast %331 : vector<1x128xf32> to vector<128x128xf32>
    %333 = arith.mulf %330, %332 : vector<128x128xf32>
    %334 = arith.addf %323, %333 : vector<128x128xf32>
    %c127_i32_116 = arith.constant 127 : i32
    %335 = tpu.dynamic_rotate %296 by %c127_i32_116 dim 0 : vector<128x128xf32>, i32 -> vector<128x128xf32>
    %c127_i32_117 = arith.constant 127 : i32
    %336 = vector.broadcast %c127_i32_117 : i32 to vector<128x1xi32>
    %337 = arith.cmpi slt, %298, %336 : vector<128x1xi32>
    %cst_118 = arith.constant 0.000000e+00 : f32
    %338 = vector.shape_cast %337 : vector<128x1xi1> to vector<128x1xi1>
    %339 = vector.broadcast %338 : vector<128x1xi1> to vector<128x128xi1>
    %340 = vector.broadcast %cst_118 : f32 to vector<128x128xf32>
    %341 = arith.select %339, %335, %340 : vector<128x128xi1>, vector<128x128xf32>
    %342 = vector.extract_strided_slice %297 {offsets = [4, 0], sizes = [1, 128], strides = [1, 1]} : vector<7x128xf32> to vector<1x128xf32>
    %343 = vector.broadcast %342 : vector<1x128xf32> to vector<128x128xf32>
    %344 = arith.mulf %341, %343 : vector<128x128xf32>
    %345 = arith.addf %334, %344 : vector<128x128xf32>
    %c126_i32 = arith.constant 126 : i32
    %346 = tpu.dynamic_rotate %296 by %c126_i32 dim 0 : vector<128x128xf32>, i32 -> vector<128x128xf32>
    %c126_i32_119 = arith.constant 126 : i32
    %347 = vector.broadcast %c126_i32_119 : i32 to vector<128x1xi32>
    %348 = arith.cmpi slt, %298, %347 : vector<128x1xi32>
    %cst_120 = arith.constant 0.000000e+00 : f32
    %349 = vector.shape_cast %348 : vector<128x1xi1> to vector<128x1xi1>
    %350 = vector.broadcast %349 : vector<128x1xi1> to vector<128x128xi1>
    %351 = vector.broadcast %cst_120 : f32 to vector<128x128xf32>
    %352 = arith.select %350, %346, %351 : vector<128x128xi1>, vector<128x128xf32>
    %353 = vector.extract_strided_slice %297 {offsets = [5, 0], sizes = [1, 128], strides = [1, 1]} : vector<7x128xf32> to vector<1x128xf32>
    %354 = vector.broadcast %353 : vector<1x128xf32> to vector<128x128xf32>
    %355 = arith.mulf %352, %354 : vector<128x128xf32>
    %356 = arith.addf %345, %355 : vector<128x128xf32>
    %c125_i32 = arith.constant 125 : i32
    %357 = tpu.dynamic_rotate %296 by %c125_i32 dim 0 : vector<128x128xf32>, i32 -> vector<128x128xf32>
    %c125_i32_121 = arith.constant 125 : i32
    %358 = vector.broadcast %c125_i32_121 : i32 to vector<128x1xi32>
    %359 = arith.cmpi slt, %298, %358 : vector<128x1xi32>
    %cst_122 = arith.constant 0.000000e+00 : f32
    %360 = vector.shape_cast %359 : vector<128x1xi1> to vector<128x1xi1>
    %361 = vector.broadcast %360 : vector<128x1xi1> to vector<128x128xi1>
    %362 = vector.broadcast %cst_122 : f32 to vector<128x128xf32>
    %363 = arith.select %361, %357, %362 : vector<128x128xi1>, vector<128x128xf32>
    %364 = vector.extract_strided_slice %297 {offsets = [6, 0], sizes = [1, 128], strides = [1, 1]} : vector<7x128xf32> to vector<1x128xf32>
    %365 = vector.broadcast %364 : vector<1x128xf32> to vector<128x128xf32>
    %366 = arith.mulf %363, %365 : vector<128x128xf32>
    %367 = arith.addf %356, %366 : vector<128x128xf32>
    %c0_123 = arith.constant 0 : index
    %c0_124 = arith.constant 0 : index
    %368 = vector.load %arg23[%c0_123, %c0_124] : memref<1x128xf32, #tpu.memory_space<vmem>>, vector<1x128xf32>
    %369 = vector.broadcast %368 : vector<1x128xf32> to vector<128x128xf32>
    %370 = arith.addf %367, %369 : vector<128x128xf32>
    %c0_125 = arith.constant 0 : index
    %c0_126 = arith.constant 0 : index
    %371 = vector.load %arg24[%c0_125, %c0_126] : memref<1x128xf32, #tpu.memory_space<vmem>>, vector<1x128xf32>
    %372 = vector.broadcast %371 : vector<1x128xf32> to vector<128x128xf32>
    %373 = arith.mulf %370, %372 : vector<128x128xf32>
    %c0_127 = arith.constant 0 : index
    %c0_128 = arith.constant 0 : index
    %374 = vector.load %arg25[%c0_127, %c0_128] : memref<1x128xf32, #tpu.memory_space<vmem>>, vector<1x128xf32>
    %375 = vector.broadcast %374 : vector<1x128xf32> to vector<128x128xf32>
    %376 = arith.addf %373, %375 : vector<128x128xf32>
    %377 = arith.negf %376 : vector<128x128xf32>
    %378 = math.exp %377 : vector<128x128xf32>
    %cst_129 = arith.constant 1.000000e+00 : f32
    %379 = vector.broadcast %cst_129 : f32 to vector<128x128xf32>
    %380 = arith.addf %379, %378 : vector<128x128xf32>
    %381 = arith.divf %379, %380 : vector<128x128xf32>
    %382 = arith.mulf %376, %381 : vector<128x128xf32>
    %c0_130 = arith.constant 0 : index
    %c0_131 = arith.constant 0 : index
    %383 = vector.load %arg26[%c0_130, %c0_131] : memref<128x128xbf16, #tpu.memory_space<vmem>>, vector<128x128xbf16>
    %384 = arith.truncf %382 : vector<128x128xf32> to vector<128x128xbf16>
    %cst_132 = arith.constant dense<0.000000e+00> : vector<128x128xf32>
    %385 = tpu.matmul %384, %383, %cst_132 {dimension_numbers = #tpu.dot_dimension_numbers<[1], [0], [0], [1], [0, 0, 1, 1], [], []>} : vector<128x128xbf16>, vector<128x128xbf16>, vector<128x128xf32> -> vector<128x128xf32>
    %386 = arith.addf %258, %385 : vector<128x128xf32>
    %c0_133 = arith.constant 0 : index
    %c0_134 = arith.constant 0 : index
    %387 = vector.load %arg27[%c0_133, %c0_134] : memref<1x128xf32, #tpu.memory_space<vmem>>, vector<1x128xf32>
    %388 = vector.broadcast %387 : vector<1x128xf32> to vector<128x128xf32>
    %389 = arith.addf %386, %388 : vector<128x128xf32>
    %c0_135 = arith.constant 0 : index
    %c0_136 = arith.constant 0 : index
    %390 = vector.load %arg28[%c0_135, %c0_136] : memref<1x128xf32, #tpu.memory_space<vmem>>, vector<1x128xf32>
    %c0_137 = arith.constant 0 : index
    %c0_138 = arith.constant 0 : index
    %391 = vector.load %arg29[%c0_137, %c0_138] : memref<1x128xf32, #tpu.memory_space<vmem>>, vector<1x128xf32>
    %cst_139 = arith.constant dense<0.000000e+00> : vector<128xf32>
    %392 = vector.multi_reduction <add>, %389, %cst_139 [1] : vector<128x128xf32> to vector<128xf32>
    %393 = vector.shape_cast %392 : vector<128xf32> to vector<128x1xf32>
    %cst_140 = arith.constant 1.280000e+02 : f32
    %394 = vector.broadcast %cst_140 : f32 to vector<128x1xf32>
    %395 = arith.divf %393, %394 : vector<128x1xf32>
    %396 = vector.broadcast %395 : vector<128x1xf32> to vector<128x128xf32>
    %397 = arith.subf %389, %396 : vector<128x128xf32>
    %398 = arith.mulf %397, %397 : vector<128x128xf32>
    %cst_141 = arith.constant dense<0.000000e+00> : vector<128xf32>
    %399 = vector.multi_reduction <add>, %398, %cst_141 [1] : vector<128x128xf32> to vector<128xf32>
    %400 = vector.shape_cast %399 : vector<128xf32> to vector<128x1xf32>
    %cst_142 = arith.constant 1.280000e+02 : f32
    %401 = vector.broadcast %cst_142 : f32 to vector<128x1xf32>
    %402 = arith.divf %400, %401 : vector<128x1xf32>
    %403 = vector.broadcast %395 : vector<128x1xf32> to vector<128x128xf32>
    %404 = arith.subf %389, %403 : vector<128x128xf32>
    %cst_143 = arith.constant 9.99999974E-6 : f32
    %405 = vector.broadcast %cst_143 : f32 to vector<128x1xf32>
    %406 = arith.addf %402, %405 : vector<128x1xf32>
    %407 = math.rsqrt %406 : vector<128x1xf32>
    %408 = vector.broadcast %407 : vector<128x1xf32> to vector<128x128xf32>
    %409 = arith.mulf %404, %408 : vector<128x128xf32>
    %410 = vector.broadcast %390 : vector<1x128xf32> to vector<128x128xf32>
    %411 = arith.mulf %409, %410 : vector<128x128xf32>
    %412 = vector.broadcast %391 : vector<1x128xf32> to vector<128x128xf32>
    %413 = arith.addf %411, %412 : vector<128x128xf32>
    %c0_144 = arith.constant 0 : index
    %c0_145 = arith.constant 0 : index
    %414 = vector.load %arg30[%c0_144, %c0_145] : memref<128x512xbf16, #tpu.memory_space<vmem>>, vector<128x512xbf16>
    %415 = arith.truncf %413 : vector<128x128xf32> to vector<128x128xbf16>
    %cst_146 = arith.constant dense<0.000000e+00> : vector<128x512xf32>
    %416 = tpu.matmul %415, %414, %cst_146 {dimension_numbers = #tpu.dot_dimension_numbers<[1], [0], [0], [1], [0, 0, 1, 1], [], []>} : vector<128x128xbf16>, vector<128x512xbf16>, vector<128x512xf32> -> vector<128x512xf32>
    %c0_147 = arith.constant 0 : index
    %c0_148 = arith.constant 0 : index
    %417 = vector.load %arg31[%c0_147, %c0_148] : memref<1x512xf32, #tpu.memory_space<vmem>>, vector<1x512xf32>
    %418 = vector.broadcast %417 : vector<1x512xf32> to vector<128x512xf32>
    %419 = arith.addf %416, %418 : vector<128x512xf32>
    %420 = vector.extract_strided_slice %419 {offsets = [0, 0], sizes = [128, 256], strides = [1, 1]} : vector<128x512xf32> to vector<128x256xf32>
    %421 = vector.extract_strided_slice %419 {offsets = [0, 256], sizes = [128, 256], strides = [1, 1]} : vector<128x512xf32> to vector<128x256xf32>
    %422 = arith.negf %421 : vector<128x256xf32>
    %423 = math.exp %422 : vector<128x256xf32>
    %cst_149 = arith.constant 1.000000e+00 : f32
    %424 = vector.broadcast %cst_149 : f32 to vector<128x256xf32>
    %425 = arith.addf %424, %423 : vector<128x256xf32>
    %426 = arith.divf %424, %425 : vector<128x256xf32>
    %427 = arith.mulf %420, %426 : vector<128x256xf32>
    %c0_150 = arith.constant 0 : index
    %c0_151 = arith.constant 0 : index
    %428 = vector.load %arg32[%c0_150, %c0_151] : memref<256x128xbf16, #tpu.memory_space<vmem>>, vector<256x128xbf16>
    %429 = arith.truncf %427 : vector<128x256xf32> to vector<128x256xbf16>
    %cst_152 = arith.constant dense<0.000000e+00> : vector<128x128xf32>
    %430 = tpu.matmul %429, %428, %cst_152 {dimension_numbers = #tpu.dot_dimension_numbers<[1], [0], [0], [1], [0, 0, 1, 1], [], []>} : vector<128x256xbf16>, vector<256x128xbf16>, vector<128x128xf32> -> vector<128x128xf32>
    %431 = arith.addf %389, %430 : vector<128x128xf32>
    %c0_153 = arith.constant 0 : index
    %c0_154 = arith.constant 0 : index
    %432 = vector.load %arg33[%c0_153, %c0_154] : memref<1x128xf32, #tpu.memory_space<vmem>>, vector<1x128xf32>
    %433 = vector.broadcast %432 : vector<1x128xf32> to vector<128x128xf32>
    %434 = arith.addf %431, %433 : vector<128x128xf32>
    %c0_155 = arith.constant 0 : index
    %c0_156 = arith.constant 0 : index
    %435 = vector.load %arg34[%c0_155, %c0_156] : memref<1x128xf32, #tpu.memory_space<vmem>>, vector<1x128xf32>
    %c0_157 = arith.constant 0 : index
    %c0_158 = arith.constant 0 : index
    %436 = vector.load %arg35[%c0_157, %c0_158] : memref<1x128xf32, #tpu.memory_space<vmem>>, vector<1x128xf32>
    %cst_159 = arith.constant dense<0.000000e+00> : vector<128xf32>
    %437 = vector.multi_reduction <add>, %434, %cst_159 [1] : vector<128x128xf32> to vector<128xf32>
    %438 = vector.shape_cast %437 : vector<128xf32> to vector<128x1xf32>
    %cst_160 = arith.constant 1.280000e+02 : f32
    %439 = vector.broadcast %cst_160 : f32 to vector<128x1xf32>
    %440 = arith.divf %438, %439 : vector<128x1xf32>
    %441 = vector.broadcast %440 : vector<128x1xf32> to vector<128x128xf32>
    %442 = arith.subf %434, %441 : vector<128x128xf32>
    %443 = arith.mulf %442, %442 : vector<128x128xf32>
    %cst_161 = arith.constant dense<0.000000e+00> : vector<128xf32>
    %444 = vector.multi_reduction <add>, %443, %cst_161 [1] : vector<128x128xf32> to vector<128xf32>
    %445 = vector.shape_cast %444 : vector<128xf32> to vector<128x1xf32>
    %cst_162 = arith.constant 1.280000e+02 : f32
    %446 = vector.broadcast %cst_162 : f32 to vector<128x1xf32>
    %447 = arith.divf %445, %446 : vector<128x1xf32>
    %448 = vector.broadcast %440 : vector<128x1xf32> to vector<128x128xf32>
    %449 = arith.subf %434, %448 : vector<128x128xf32>
    %cst_163 = arith.constant 9.99999974E-6 : f32
    %450 = vector.broadcast %cst_163 : f32 to vector<128x1xf32>
    %451 = arith.addf %447, %450 : vector<128x1xf32>
    %452 = math.rsqrt %451 : vector<128x1xf32>
    %453 = vector.broadcast %452 : vector<128x1xf32> to vector<128x128xf32>
    %454 = arith.mulf %449, %453 : vector<128x128xf32>
    %455 = vector.broadcast %435 : vector<1x128xf32> to vector<128x128xf32>
    %456 = arith.mulf %454, %455 : vector<128x128xf32>
    %457 = vector.broadcast %436 : vector<1x128xf32> to vector<128x128xf32>
    %458 = arith.addf %456, %457 : vector<128x128xf32>
    %c0_164 = arith.constant 0 : index
    %c0_165 = arith.constant 0 : index
    %c0_166 = arith.constant 0 : index
    %459 = vector.load %arg36[%c0_164, %c0_165, %c0_166] : memref<1x128x128xf32, #tpu.memory_space<vmem>>, vector<1x128x128xf32>
    %460 = vector.shape_cast %459 : vector<1x128x128xf32> to vector<128x128xf32>
    %461 = vector.shape_cast %458 : vector<128x128xf32> to vector<1x128x128xf32>
    tpu.vector_store %arg36[%c0_164, %c0_165, %c0_166], %461 {strides = array<i32>} : memref<1x128x128xf32, #tpu.memory_space<vmem>>, vector<1x128x128xf32>,
    return
  }
  func.func @transform_0(%arg0: i32) -> (i32, i32, i32) {
    %c0_i32 = arith.constant 0 : i32
    %c0_i32_0 = arith.constant 0 : i32
    %c0_i32_1 = arith.constant 0 : i32
    return %arg0, %c0_i32, %c0_i32_0 : i32, i32, i32
  }
  func.func @transform_1(%arg0: i32) -> (i32, i32, i32) {
    %c0_i32 = arith.constant 0 : i32
    %c0_i32_0 = arith.constant 0 : i32
    %c0_i32_1 = arith.constant 0 : i32
    return %arg0, %c0_i32, %c0_i32_0 : i32, i32, i32
  }
  func.func @transform_2(%arg0: i32) -> (i32, i32) {
    %c0_i32 = arith.constant 0 : i32
    %c0_i32_0 = arith.constant 0 : i32
    %c0_i32_1 = arith.constant 0 : i32
    return %c0_i32, %c0_i32_0 : i32, i32
  }
  func.func @transform_3(%arg0: i32) -> (i32, i32) {
    %c0_i32 = arith.constant 0 : i32
    %c0_i32_0 = arith.constant 0 : i32
    %c0_i32_1 = arith.constant 0 : i32
    return %c0_i32, %c0_i32_0 : i32, i32
  }
  func.func @transform_4(%arg0: i32) -> (i32, i32) {
    %c0_i32 = arith.constant 0 : i32
    %c0_i32_0 = arith.constant 0 : i32
    %c0_i32_1 = arith.constant 0 : i32
    return %c0_i32, %c0_i32_0 : i32, i32
  }
  func.func @transform_5(%arg0: i32) -> (i32, i32) {
    %c0_i32 = arith.constant 0 : i32
    %c0_i32_0 = arith.constant 0 : i32
    %c0_i32_1 = arith.constant 0 : i32
    return %c0_i32, %c0_i32_0 : i32, i32
  }
  func.func @transform_6(%arg0: i32) -> (i32, i32) {
    %c0_i32 = arith.constant 0 : i32
    %c0_i32_0 = arith.constant 0 : i32
    %c0_i32_1 = arith.constant 0 : i32
    return %c0_i32, %c0_i32_0 : i32, i32
  }
  func.func @transform_7(%arg0: i32) -> (i32, i32) {
    %c0_i32 = arith.constant 0 : i32
    %c0_i32_0 = arith.constant 0 : i32
    %c0_i32_1 = arith.constant 0 : i32
    return %c0_i32, %c0_i32_0 : i32, i32
  }
  func.func @transform_8(%arg0: i32) -> (i32, i32) {
    %c0_i32 = arith.constant 0 : i32
    %c0_i32_0 = arith.constant 0 : i32
    %c0_i32_1 = arith.constant 0 : i32
    return %c0_i32, %c0_i32_0 : i32, i32
  }
  func.func @transform_9(%arg0: i32) -> (i32, i32) {
    %c0_i32 = arith.constant 0 : i32
    %c0_i32_0 = arith.constant 0 : i32
    %c0_i32_1 = arith.constant 0 : i32
    return %c0_i32, %c0_i32_0 : i32, i32
  }
  func.func @transform_10(%arg0: i32) -> (i32, i32) {
    %c0_i32 = arith.constant 0 : i32
    %c0_i32_0 = arith.constant 0 : i32
    %c0_i32_1 = arith.constant 0 : i32
    return %c0_i32, %c0_i32_0 : i32, i32
  }
  func.func @transform_11(%arg0: i32) -> (i32, i32) {
    %c0_i32 = arith.constant 0 : i32
    %c0_i32_0 = arith.constant 0 : i32
    %c0_i32_1 = arith.constant 0 : i32
    return %c0_i32, %c0_i32_0 : i32, i32
  }
  func.func @transform_12(%arg0: i32) -> (i32, i32) {
    %c0_i32 = arith.constant 0 : i32
    %c0_i32_0 = arith.constant 0 : i32
    %c0_i32_1 = arith.constant 0 : i32
    return %c0_i32, %c0_i32_0 : i32, i32
  }
  func.func @transform_13(%arg0: i32) -> (i32, i32) {
    %c0_i32 = arith.constant 0 : i32
    %c0_i32_0 = arith.constant 0 : i32
    %c0_i32_1 = arith.constant 0 : i32
    return %c0_i32, %c0_i32_0 : i32, i32
  }
  func.func @transform_14(%arg0: i32) -> (i32, i32) {
    %c0_i32 = arith.constant 0 : i32
    %c0_i32_0 = arith.constant 0 : i32
    %c0_i32_1 = arith.constant 0 : i32
    return %c0_i32, %c0_i32_0 : i32, i32
  }
  func.func @transform_15(%arg0: i32) -> (i32, i32) {
    %c0_i32 = arith.constant 0 : i32
    %c0_i32_0 = arith.constant 0 : i32
    %c0_i32_1 = arith.constant 0 : i32
    return %c0_i32, %c0_i32_0 : i32, i32
  }
  func.func @transform_16(%arg0: i32) -> (i32, i32) {
    %c0_i32 = arith.constant 0 : i32
    %c0_i32_0 = arith.constant 0 : i32
    %c0_i32_1 = arith.constant 0 : i32
    return %c0_i32, %c0_i32_0 : i32, i32
  }
  func.func @transform_17(%arg0: i32) -> (i32, i32) {
    %c0_i32 = arith.constant 0 : i32
    %c0_i32_0 = arith.constant 0 : i32
    %c0_i32_1 = arith.constant 0 : i32
    return %c0_i32, %c0_i32_0 : i32, i32
  }
  func.func @transform_18(%arg0: i32) -> (i32, i32) {
    %c0_i32 = arith.constant 0 : i32
    %c0_i32_0 = arith.constant 0 : i32
    %c0_i32_1 = arith.constant 0 : i32
    return %c0_i32, %c0_i32_0 : i32, i32
  }
  func.func @transform_19(%arg0: i32) -> (i32, i32) {
    %c0_i32 = arith.constant 0 : i32
    %c0_i32_0 = arith.constant 0 : i32
    %c0_i32_1 = arith.constant 0 : i32
    return %c0_i32, %c0_i32_0 : i32, i32
  }
  func.func @transform_20(%arg0: i32) -> (i32, i32) {
    %c0_i32 = arith.constant 0 : i32
    %c0_i32_0 = arith.constant 0 : i32
    %c0_i32_1 = arith.constant 0 : i32
    return %c0_i32, %c0_i32_0 : i32, i32
  }
  func.func @transform_21(%arg0: i32) -> (i32, i32) {
    %c0_i32 = arith.constant 0 : i32
    %c0_i32_0 = arith.constant 0 : i32
    %c0_i32_1 = arith.constant 0 : i32
    return %c0_i32, %c0_i32_0 : i32, i32
  }
  func.func @transform_22(%arg0: i32) -> (i32, i32) {
    %c0_i32 = arith.constant 0 : i32
    %c0_i32_0 = arith.constant 0 : i32
    %c0_i32_1 = arith.constant 0 : i32
    return %c0_i32, %c0_i32_0 : i32, i32
  }
  func.func @transform_23(%arg0: i32) -> (i32, i32) {
    %c0_i32 = arith.constant 0 : i32
    %c0_i32_0 = arith.constant 0 : i32
    %c0_i32_1 = arith.constant 0 : i32
    return %c0_i32, %c0_i32_0 : i32, i32
  }
  func.func @transform_24(%arg0: i32) -> (i32, i32) {
    %c0_i32 = arith.constant 0 : i32
    %c0_i32_0 = arith.constant 0 : i32
    %c0_i32_1 = arith.constant 0 : i32
    return %c0_i32, %c0_i32_0 : i32, i32
  }
  func.func @transform_25(%arg0: i32) -> (i32, i32) {
    %c0_i32 = arith.constant 0 : i32
    %c0_i32_0 = arith.constant 0 : i32
    %c0_i32_1 = arith.constant 0 : i32
    return %c0_i32, %c0_i32_0 : i32, i32
  }
  func.func @transform_26(%arg0: i32) -> (i32, i32) {
    %c0_i32 = arith.constant 0 : i32
    %c0_i32_0 = arith.constant 0 : i32
    %c0_i32_1 = arith.constant 0 : i32
    return %c0_i32, %c0_i32_0 : i32, i32
  }
  func.func @transform_27(%arg0: i32) -> (i32, i32) {
    %c0_i32 = arith.constant 0 : i32
    %c0_i32_0 = arith.constant 0 : i32
    %c0_i32_1 = arith.constant 0 : i32
    return %c0_i32, %c0_i32_0 : i32, i32
  }
  func.func @transform_28(%arg0: i32) -> (i32, i32) {
    %c0_i32 = arith.constant 0 : i32
    %c0_i32_0 = arith.constant 0 : i32
    %c0_i32_1 = arith.constant 0 : i32
    return %c0_i32, %c0_i32_0 : i32, i32
  }
  func.func @transform_29(%arg0: i32) -> (i32, i32) {
    %c0_i32 = arith.constant 0 : i32
    %c0_i32_0 = arith.constant 0 : i32
    %c0_i32_1 = arith.constant 0 : i32
    return %c0_i32, %c0_i32_0 : i32, i32
  }
  func.func @transform_30(%arg0: i32) -> (i32, i32) {
    %c0_i32 = arith.constant 0 : i32
    %c0_i32_0 = arith.constant 0 : i32
    %c0_i32_1 = arith.constant 0 : i32
    return %c0_i32, %c0_i32_0 : i32, i32
  }
  func.func @transform_31(%arg0: i32) -> (i32, i32) {
    %c0_i32 = arith.constant 0 : i32
    %c0_i32_0 = arith.constant 0 : i32
    %c0_i32_1 = arith.constant 0 : i32
    return %c0_i32, %c0_i32_0 : i32, i32
  }
  func.func @transform_32(%arg0: i32) -> (i32, i32) {
    %c0_i32 = arith.constant 0 : i32
    %c0_i32_0 = arith.constant 0 : i32
    %c0_i32_1 = arith.constant 0 : i32
    return %c0_i32, %c0_i32_0 : i32, i32
  }
  func.func @transform_33(%arg0: i32) -> (i32, i32) {
    %c0_i32 = arith.constant 0 : i32
    %c0_i32_0 = arith.constant 0 : i32
    %c0_i32_1 = arith.constant 0 : i32
    return %c0_i32, %c0_i32_0 : i32, i32
  }
  func.func @transform_34(%arg0: i32) -> (i32, i32) {
    %c0_i32 = arith.constant 0 : i32
    %c0_i32_0 = arith.constant 0 : i32
    %c0_i32_1 = arith.constant 0 : i32
    return %c0_i32, %c0_i32_0 : i32, i32
  }
  func.func @transform_35(%arg0: i32) -> (i32, i32, i32) {
    %c0_i32 = arith.constant 0 : i32
    %c0_i32_0 = arith.constant 0 : i32
    %c0_i32_1 = arith.constant 0 : i32
    return %arg0, %c0_i32, %c0_i32_0 : i32, i32, i32
  }
  func.func @transform_36(%arg0: i32) -> (i32, i32, i32, i32) {
    %c0_i32 = arith.constant 0 : i32
    %c0_i32_0 = arith.constant 0 : i32
    %c0_i32_1 = arith.constant 0 : i32
    %c0_i32_2 = arith.constant 0 : i32
    return %arg0, %c0_i32, %c0_i32_0, %c0_i32_1 : i32, i32, i32, i32
  }
}

</mosaic_0001>

<llo_original>
// kernel: _lambda_.1
$region0: #{_lambda_.1}
  #allocation0 [shape = 'u32[]', space=smem, size = 0x4, offset = 0x4, fixed_abs, tag = 'smem constant byte address 0x4 - core index']
  #allocation1 [shape = 'u32[144,128]{1,0:T(1,128)}', space=vmem, size = 0x12000, scoped, tag = 'internal scratch']
  %s0 = inlined_call_operand.smem [shape: u32[37], index: -1, kind: input, shape index: {}]
  %s1 = sld [smem:[%s0]]
  %s2 = scalar_lea.smem %s0, 1
  %s3 = sld [smem:[%s2]]
  %s4 = scalar_lea.smem %s0, 2
  %s5 = sld [smem:[%s4]]
  %s6 = scalar_lea.smem %s0, 3
  %s7 = sld [smem:[%s6]]
  %s8 = scalar_lea.smem %s0, 4
  %s9 = sld [smem:[%s8]]
  %s10 = scalar_lea.smem %s0, 5
  %s11 = sld [smem:[%s10]]
  %s12 = scalar_lea.smem %s0, 6
  %s13 = sld [smem:[%s12]]
  %s14 = scalar_lea.smem %s0, 7
  %s15 = sld [smem:[%s14]]
  %s16 = scalar_lea.smem %s0, 8
  %s17 = sld [smem:[%s16]]
  %s18 = scalar_lea.smem %s0, 9
  %s19 = sld [smem:[%s18]]
  %s20 = scalar_lea.smem %s0, 10
  %s21 = sld [smem:[%s20]]
  %s22 = scalar_lea.smem %s0, 11
  %s23 = sld [smem:[%s22]]
  %s24 = scalar_lea.smem %s0, 12
  %s25 = sld [smem:[%s24]]
  %s26 = scalar_lea.smem %s0, 13
  %s27 = sld [smem:[%s26]]
  %s28 = scalar_lea.smem %s0, 14
  %s29 = sld [smem:[%s28]]
  %s30 = scalar_lea.smem %s0, 15
  %s31 = sld [smem:[%s30]]
  %s32 = scalar_lea.smem %s0, 16
  %s33 = sld [smem:[%s32]]
  %s34 = scalar_lea.smem %s0, 17
  %s35 = sld [smem:[%s34]]
  %s36 = scalar_lea.smem %s0, 18
  %s37 = sld [smem:[%s36]]
  %s38 = scalar_lea.smem %s0, 19
  %s39 = sld [smem:[%s38]]
  %s40 = scalar_lea.smem %s0, 20
  %s41 = sld [smem:[%s40]]
  %s42 = scalar_lea.smem %s0, 21
  %s43 = sld [smem:[%s42]]
  %s44 = scalar_lea.smem %s0, 22
  %s45 = sld [smem:[%s44]]
  %s46 = scalar_lea.smem %s0, 23
  %s47 = sld [smem:[%s46]]
  %s48 = scalar_lea.smem %s0, 24
  %s49 = sld [smem:[%s48]]
  %s50 = scalar_lea.smem %s0, 25
  %s51 = sld [smem:[%s50]]
  %s52 = scalar_lea.smem %s0, 26
  %s53 = sld [smem:[%s52]]
  %s54 = scalar_lea.smem %s0, 27
  %s55 = sld [smem:[%s54]]
  %s56 = scalar_lea.smem %s0, 28
  %s57 = sld [smem:[%s56]]
  %s58 = scalar_lea.smem %s0, 29
  %s59 = sld [smem:[%s58]]
  %s60 = scalar_lea.smem %s0, 30
  %s61 = sld [smem:[%s60]]
  %s62 = scalar_lea.smem %s0, 31
  %s63 = sld [smem:[%s62]]
  %s64 = scalar_lea.smem %s0, 32
  %s65 = sld [smem:[%s64]]
  %s66 = scalar_lea.smem %s0, 33
  %s67 = sld [smem:[%s66]]
  %s68 = scalar_lea.smem %s0, 34
  %s69 = sld [smem:[%s68]]
  %s70 = scalar_lea.smem %s0, 35
  %s71 = sld [smem:[%s70]]
  %s72 = scalar_lea.smem %s0, 36
  %s73 = sld [smem:[%s72]]
  %74 = xla_tuple %s71, %s73
  %s75 = sld [smem:[#allocation0]]
  $region181: #{_lambda_.1} parent=0
    _
  %s77 = ssub.s32 1, %s75
  %s78 = scalar_select 0, %s77, %s75
  $region1: #{_lambda_.1} parent=0
    #allocation2 [shape = 'u8[131072]{0}', space=vmem, size = 0x20000, scoped, tag = 'output window, operand 0']
    #allocation3 [shape = 's32[2]{0}', space=sflag, size = 0x8, scoped, tag = 'scoped memory for _lambda_.1']
    #allocation4 [shape = 'u8[262144]{0}', space=vmem, size = 0x40000, scoped, tag = 'output window, operand 1']
    #allocation5 [shape = 's32[2]{0}', space=sflag, size = 0x8, scoped, tag = 'scoped memory for _lambda_.1']
    %79 = vsyncpa [#allocation3], 0
    %s80 = scalar_lea.sflag [#allocation3], 1
    %81 = vsyncpa %s80, 0
    %82 = vsyncpa [#allocation5], 0
    %s83 = scalar_lea.sflag [#allocation5], 1
    %84 = vsyncpa %s83, 0
    loop: start=0, step=1, limit=4
    $region2: #{_lambda_.1} parent=1 // loop_pre_header
      _
    $region3: #{_lambda_.1} parent=1 // loop_header
      %s86 = sphi 0, %s90
      %p87 = scmp.ge.s32.totalorder %s86, 4
      %s96 = sphi 0, %s98
      %s99 = sphi 0, %s96
      %s100 = sphi 0, %s99
      %s116 = sphi 0, %s100
      %s122 = sphi 0, %s124
      %s125 = sphi 0, %s122
      %s126 = sphi 0, %s125
      %s142 = sphi 0, %s126
      %s146 = sphi 0, %s146
      %s148 = sphi 0, %s146
      %s149 = sphi 0, %s148
      %s163 = sphi 0, %s149
      %s167 = sphi 0, %s167
      %s169 = sphi 0, %s167
      %s170 = sphi 0, %s169
      %s184 = sphi 0, %s170
      %s188 = sphi 0, %s188
      %s190 = sphi 0, %s188
      %s191 = sphi 0, %s190
      %s205 = sphi 0, %s191
      %s209 = sphi 0, %s209
      %s211 = sphi 0, %s209
      %s212 = sphi 0, %s211
      %s226 = sphi 0, %s212
      %s230 = sphi 0, %s230
      %s232 = sphi 0, %s230
      %s233 = sphi 0, %s232
      %s247 = sphi 0, %s233
      %s251 = sphi 0, %s251
      %s253 = sphi 0, %s251
      %s254 = sphi 0, %s253
      %s268 = sphi 0, %s254
      %s272 = sphi 0, %s272
      %s274 = sphi 0, %s272
      %s275 = sphi 0, %s274
      %s289 = sphi 0, %s275
      %s293 = sphi 0, %s293
      %s295 = sphi 0, %s293
      %s296 = sphi 0, %s295
      %s310 = sphi 0, %s296
      %s314 = sphi 0, %s314
      %s316 = sphi 0, %s314
      %s317 = sphi 0, %s316
      %s331 = sphi 0, %s317
      %s335 = sphi 0, %s335
      %s337 = sphi 0, %s335
      %s338 = sphi 0, %s337
      %s352 = sphi 0, %s338
      %s356 = sphi 0, %s356
      %s358 = sphi 0, %s356
      %s359 = sphi 0, %s358
      %s373 = sphi 0, %s359
      %s377 = sphi 0, %s377
      %s379 = sphi 0, %s377
      %s380 = sphi 0, %s379
      %s394 = sphi 0, %s380
      %s398 = sphi 0, %s398
      %s400 = sphi 0, %s398
      %s401 = sphi 0, %s400
      %s415 = sphi 0, %s401
      %s419 = sphi 0, %s419
      %s421 = sphi 0, %s419
      %s422 = sphi 0, %s421
      %s436 = sphi 0, %s422
      %s440 = sphi 0, %s440
      %s442 = sphi 0, %s440
      %s443 = sphi 0, %s442
      %s457 = sphi 0, %s443
      %s461 = sphi 0, %s461
      %s463 = sphi 0, %s461
      %s464 = sphi 0, %s463
      %s478 = sphi 0, %s464
      %s482 = sphi 0, %s482
      %s484 = sphi 0, %s482
      %s485 = sphi 0, %s484
      %s499 = sphi 0, %s485
      %s503 = sphi 0, %s503
      %s505 = sphi 0, %s503
      %s506 = sphi 0, %s505
      %s520 = sphi 0, %s506
      %s524 = sphi 0, %s524
      %s526 = sphi 0, %s524
      %s527 = sphi 0, %s526
      %s541 = sphi 0, %s527
      %s545 = sphi 0, %s545
      %s547 = sphi 0, %s545
      %s548 = sphi 0, %s547
      %s562 = sphi 0, %s548
      %s566 = sphi 0, %s566
      %s568 = sphi 0, %s566
      %s569 = sphi 0, %s568
      %s583 = sphi 0, %s569
      %s587 = sphi 0, %s587
      %s589 = sphi 0, %s587
      %s590 = sphi 0, %s589
      %s604 = sphi 0, %s590
      %s608 = sphi 0, %s608
      %s610 = sphi 0, %s608
      %s611 = sphi 0, %s610
      %s625 = sphi 0, %s611
      %s629 = sphi 0, %s629
      %s631 = sphi 0, %s629
      %s632 = sphi 0, %s631
      %s646 = sphi 0, %s632
      %s650 = sphi 0, %s650
      %s652 = sphi 0, %s650
      %s653 = sphi 0, %s652
      %s667 = sphi 0, %s653
      %s671 = sphi 0, %s671
      %s673 = sphi 0, %s671
      %s674 = sphi 0, %s673
      %s688 = sphi 0, %s674
      %s692 = sphi 0, %s692
      %s694 = sphi 0, %s692
      %s695 = sphi 0, %s694
      %s709 = sphi 0, %s695
      %s713 = sphi 0, %s713
      %s715 = sphi 0, %s713
      %s716 = sphi 0, %s715
      %s730 = sphi 0, %s716
      %s734 = sphi 0, %s734
      %s736 = sphi 0, %s734
      %s737 = sphi 0, %s736
      %s751 = sphi 0, %s737
      %s755 = sphi 0, %s755
      %s757 = sphi 0, %s755
      %s758 = sphi 0, %s757
      %s772 = sphi 0, %s758
      %s776 = sphi 0, %s776
      %s778 = sphi 0, %s776
      %s779 = sphi 0, %s778
      %s793 = sphi 0, %s779
      %s797 = sphi 0, %s797
      %s799 = sphi 0, %s797
      %s800 = sphi 0, %s799
      %s814 = sphi 0, %s800
      %s818 = sphi 0, %s818
      %s820 = sphi 0, %s818
      %s821 = sphi 0, %s820
      %s835 = sphi 0, %s821
      %s841 = sphi 0, %s843
      %s844 = sphi 0, %s841
      %s845 = sphi 0, %s844
      %s861 = sphi 0, %s845
      %s867 = sphi 0, %s869
      %s870 = sphi 0, %s867
      %s871 = sphi 0, %s870
      %s887 = sphi 0, %s871
    $region4: #{_lambda_.1} parent=1 // loop_header_branch
      %89 = sbr.rel (%p87) target = $region8
    $region5: #{_lambda_.1} parent=1 // loop_body
      %s91 = ssub.s32 %s86, 1
      %s92 = ssub.s32 %s86, 2
      %s93 = sadd.s32 %s86, 1
      %s94 = ssub.s32 %s86, %s93
      %p95 = scmp.eq.s32.totalorder %s94, 0
      %s97 = sadd.s32 %s96, 1
      %s98 = scalar_select %p95, %s96, %s97
      %p101 = pneg %p95
      %p102 = scmp.eq.s32.totalorder %s86, 1
      %p103 = por %p101, %p102
      %p104 = scmp.ne.s32.totalorder %s96, %s99
      %p105 = scmp.eq.s32.totalorder %s86, 0
      %p106 = por %p104, %p105
      %p107 = scmp.ne.s32.totalorder %s96, %s99
      %p108 = scmp.eq.s32.totalorder %s91, 1
      %p109 = por %p107, %p108
      %p110 = scmp.ne.s32.totalorder %s99, %s100
      %p111 = scmp.eq.s32.totalorder %s91, 0
      %p112 = por %p110, %p111
      %p113 = scmp.ne.s32.totalorder %s99, %s100
      %p114 = scmp.eq.s32.totalorder %s92, 1
      %p115 = por %p113, %p114
      %p117 = scmp.ne.s32.totalorder %s100, %s116
      %p118 = scmp.eq.s32.totalorder %s92, 0
      %p119 = por %p117, %p118
      %s120 = ssub.s32 %s86, %s93
      %p121 = scmp.eq.s32.totalorder %s120, 0
      %s123 = sadd.s32 %s122, 1
      %s124 = scalar_select %p121, %s122, %s123
      %p127 = pneg %p121
      %p128 = scmp.eq.s32.totalorder %s86, 1
      %p129 = por %p127, %p128
      %p130 = scmp.ne.s32.totalorder %s122, %s125
      %p131 = scmp.eq.s32.totalorder %s86, 0
      %p132 = por %p130, %p131
      %p133 = scmp.ne.s32.totalorder %s122, %s125
      %p134 = scmp.eq.s32.totalorder %s91, 1
      %p135 = por %p133, %p134
      %p136 = scmp.ne.s32.totalorder %s125, %s126
      %p137 = scmp.eq.s32.totalorder %s91, 0
      %p138 = por %p136, %p137
      %p139 = scmp.ne.s32.totalorder %s125, %s126
      %p140 = scmp.eq.s32.totalorder %s92, 1
      %p141 = por %p139, %p140
      %p143 = scmp.ne.s32.totalorder %s126, %s142
      %p144 = scmp.eq.s32.totalorder %s92, 0
      %p145 = por %p143, %p144
      %s147 = sadd.s32 %s146, 1
      %p150 = scmp.eq.s32.totalorder %s86, 1
      %p151 = scmp.ne.s32.totalorder %s146, %s148
      %p152 = scmp.eq.s32.totalorder %s86, 0
      %p153 = por %p151, %p152
      %p154 = scmp.ne.s32.totalorder %s146, %s148
      %p155 = scmp.eq.s32.totalorder %s91, 1
      %p156 = por %p154, %p155
      %p157 = scmp.ne.s32.totalorder %s148, %s149
      %p158 = scmp.eq.s32.totalorder %s91, 0
      %p159 = por %p157, %p158
      %p160 = scmp.ne.s32.totalorder %s148, %s149
      %p161 = scmp.eq.s32.totalorder %s92, 1
      %p162 = por %p160, %p161
      %p164 = scmp.ne.s32.totalorder %s149, %s163
      %p165 = scmp.eq.s32.totalorder %s92, 0
      %p166 = por %p164, %p165
      %s168 = sadd.s32 %s167, 1
      %p171 = scmp.eq.s32.totalorder %s86, 1
      %p172 = scmp.ne.s32.totalorder %s167, %s169
      %p173 = scmp.eq.s32.totalorder %s86, 0
      %p174 = por %p172, %p173
      %p175 = scmp.ne.s32.totalorder %s167, %s169
      %p176 = scmp.eq.s32.totalorder %s91, 1
      %p177 = por %p175, %p176
      %p178 = scmp.ne.s32.totalorder %s169, %s170
      %p179 = scmp.eq.s32.totalorder %s91, 0
      %p180 = por %p178, %p179
      %p181 = scmp.ne.s32.totalorder %s169, %s170
      %p182 = scmp.eq.s32.totalorder %s92, 1
      %p183 = por %p181, %p182
      %p185 = scmp.ne.s32.totalorder %s170, %s184
      %p186 = scmp.eq.s32.totalorder %s92, 0
      %p187 = por %p185, %p186
      %s189 = sadd.s32 %s188, 1
      %p192 = scmp.eq.s32.totalorder %s86, 1
      %p193 = scmp.ne.s32.totalorder %s188, %s190
      %p194 = scmp.eq.s32.totalorder %s86, 0
      %p195 = por %p193, %p194
      %p196 = scmp.ne.s32.totalorder %s188, %s190
      %p197 = scmp.eq.s32.totalorder %s91, 1
      %p198 = por %p196, %p197
      %p199 = scmp.ne.s32.totalorder %s190, %s191
      %p200 = scmp.eq.s32.totalorder %s91, 0
      %p201 = por %p199, %p200
      %p202 = scmp.ne.s32.totalorder %s190, %s191
      %p203 = scmp.eq.s32.totalorder %s92, 1
      %p204 = por %p202, %p203
      %p206 = scmp.ne.s32.totalorder %s191, %s205
      %p207 = scmp.eq.s32.totalorder %s92, 0
      %p208 = por %p206, %p207
      %s210 = sadd.s32 %s209, 1
      %p213 = scmp.eq.s32.totalorder %s86, 1
      %p214 = scmp.ne.s32.totalorder %s209, %s211
      %p215 = scmp.eq.s32.totalorder %s86, 0
      %p216 = por %p214, %p215
      %p217 = scmp.ne.s32.totalorder %s209, %s211
      %p218 = scmp.eq.s32.totalorder %s91, 1
      %p219 = por %p217, %p218
      %p220 = scmp.ne.s32.totalorder %s211, %s212
      %p221 = scmp.eq.s32.totalorder %s91, 0
      %p222 = por %p220, %p221
      %p223 = scmp.ne.s32.totalorder %s211, %s212
      %p224 = scmp.eq.s32.totalorder %s92, 1
      %p225 = por %p223, %p224
      %p227 = scmp.ne.s32.totalorder %s212, %s226
      %p228 = scmp.eq.s32.totalorder %s92, 0
      %p229 = por %p227, %p228
      %s231 = sadd.s32 %s230, 1
      %p234 = scmp.eq.s32.totalorder %s86, 1
      %p235 = scmp.ne.s32.totalorder %s230, %s232
      %p236 = scmp.eq.s32.totalorder %s86, 0
      %p237 = por %p235, %p236
      %p238 = scmp.ne.s32.totalorder %s230, %s232
      %p239 = scmp.eq.s32.totalorder %s91, 1
      %p240 = por %p238, %p239
      %p241 = scmp.ne.s32.totalorder %s232, %s233
      %p242 = scmp.eq.s32.totalorder %s91, 0
      %p243 = por %p241, %p242
      %p244 = scmp.ne.s32.totalorder %s232, %s233
      %p245 = scmp.eq.s32.totalorder %s92, 1
      %p246 = por %p244, %p245
      %p248 = scmp.ne.s32.totalorder %s233, %s247
      %p249 = scmp.eq.s32.totalorder %s92, 0
      %p250 = por %p248, %p249
      %s252 = sadd.s32 %s251, 1
      %p255 = scmp.eq.s32.totalorder %s86, 1
      %p256 = scmp.ne.s32.totalorder %s251, %s253
      %p257 = scmp.eq.s32.totalorder %s86, 0
      %p258 = por %p256, %p257
      %p259 = scmp.ne.s32.totalorder %s251, %s253
      %p260 = scmp.eq.s32.totalorder %s91, 1
      %p261 = por %p259, %p260
      %p262 = scmp.ne.s32.totalorder %s253, %s254
      %p263 = scmp.eq.s32.totalorder %s91, 0
      %p264 = por %p262, %p263
      %p265 = scmp.ne.s32.totalorder %s253, %s254
      %p266 = scmp.eq.s32.totalorder %s92, 1
      %p267 = por %p265, %p266
      %p269 = scmp.ne.s32.totalorder %s254, %s268
      %p270 = scmp.eq.s32.totalorder %s92, 0
      %p271 = por %p269, %p270
      %s273 = sadd.s32 %s272, 1
      %p276 = scmp.eq.s32.totalorder %s86, 1
      %p277 = scmp.ne.s32.totalorder %s272, %s274
      %p278 = scmp.eq.s32.totalorder %s86, 0
      %p279 = por %p277, %p278
      %p280 = scmp.ne.s32.totalorder %s272, %s274
      %p281 = scmp.eq.s32.totalorder %s91, 1
      %p282 = por %p280, %p281
      %p283 = scmp.ne.s32.totalorder %s274, %s275
      %p284 = scmp.eq.s32.totalorder %s91, 0
      %p285 = por %p283, %p284
      %p286 = scmp.ne.s32.totalorder %s274, %s275
      %p287 = scmp.eq.s32.totalorder %s92, 1
      %p288 = por %p286, %p287
      %p290 = scmp.ne.s32.totalorder %s275, %s289
      %p291 = scmp.eq.s32.totalorder %s92, 0
      %p292 = por %p290, %p291
      %s294 = sadd.s32 %s293, 1
      %p297 = scmp.eq.s32.totalorder %s86, 1
      %p298 = scmp.ne.s32.totalorder %s293, %s295
      %p299 = scmp.eq.s32.totalorder %s86, 0
      %p300 = por %p298, %p299
      %p301 = scmp.ne.s32.totalorder %s293, %s295
      %p302 = scmp.eq.s32.totalorder %s91, 1
      %p303 = por %p301, %p302
      %p304 = scmp.ne.s32.totalorder %s295, %s296
      %p305 = scmp.eq.s32.totalorder %s91, 0
      %p306 = por %p304, %p305
      %p307 = scmp.ne.s32.totalorder %s295, %s296
      %p308 = scmp.eq.s32.totalorder %s92, 1
      %p309 = por %p307, %p308
      %p311 = scmp.ne.s32.totalorder %s296, %s310
      %p312 = scmp.eq.s32.totalorder %s92, 0
      %p313 = por %p311, %p312
      %s315 = sadd.s32 %s314, 1
      %p318 = scmp.eq.s32.totalorder %s86, 1
      %p319 = scmp.ne.s32.totalorder %s314, %s316
      %p320 = scmp.eq.s32.totalorder %s86, 0
      %p321 = por %p319, %p320
      %p322 = scmp.ne.s32.totalorder %s314, %s316
      %p323 = scmp.eq.s32.totalorder %s91, 1
      %p324 = por %p322, %p323
      %p325 = scmp.ne.s32.totalorder %s316, %s317
      %p326 = scmp.eq.s32.totalorder %s91, 0
      %p327 = por %p325, %p326
      %p328 = scmp.ne.s32.totalorder %s316, %s317
      %p329 = scmp.eq.s32.totalorder %s92, 1
      %p330 = por %p328, %p329
      %p332 = scmp.ne.s32.totalorder %s317, %s331
      %p333 = scmp.eq.s32.totalorder %s92, 0
      %p334 = por %p332, %p333
      %s336 = sadd.s32 %s335, 1
      %p339 = scmp.eq.s32.totalorder %s86, 1
      %p340 = scmp.ne.s32.totalorder %s335, %s337
      %p341 = scmp.eq.s32.totalorder %s86, 0
      %p342 = por %p340, %p341
      %p343 = scmp.ne.s32.totalorder %s335, %s337
      %p344 = scmp.eq.s32.totalorder %s91, 1
      %p345 = por %p343, %p344
      %p346 = scmp.ne.s32.totalorder %s337, %s338
      %p347 = scmp.eq.s32.totalorder %s91, 0
      %p348 = por %p346, %p347
      %p349 = scmp.ne.s32.totalorder %s337, %s338
      %p350 = scmp.eq.s32.totalorder %s92, 1
      %p351 = por %p349, %p350
      %p353 = scmp.ne.s32.totalorder %s338, %s352
      %p354 = scmp.eq.s32.totalorder %s92, 0
      %p355 = por %p353, %p354
      %s357 = sadd.s32 %s356, 1
      %p360 = scmp.eq.s32.totalorder %s86, 1
      %p361 = scmp.ne.s32.totalorder %s356, %s358
      %p362 = scmp.eq.s32.totalorder %s86, 0
      %p363 = por %p361, %p362
      %p364 = scmp.ne.s32.totalorder %s356, %s358
      %p365 = scmp.eq.s32.totalorder %s91, 1
      %p366 = por %p364, %p365
      %p367 = scmp.ne.s32.totalorder %s358, %s359
      %p368 = scmp.eq.s32.totalorder %s91, 0
      %p369 = por %p367, %p368
      %p370 = scmp.ne.s32.totalorder %s358, %s359
      %p371 = scmp.eq.s32.totalorder %s92, 1
      %p372 = por %p370, %p371
      %p374 = scmp.ne.s32.totalorder %s359, %s373
      %p375 = scmp.eq.s32.totalorder %s92, 0
      %p376 = por %p374, %p375
      %s378 = sadd.s32 %s377, 1
      %p381 = scmp.eq.s32.totalorder %s86, 1
      %p382 = scmp.ne.s32.totalorder %s377, %s379
      %p383 = scmp.eq.s32.totalorder %s86, 0
      %p384 = por %p382, %p383
      %p385 = scmp.ne.s32.totalorder %s377, %s379
      %p386 = scmp.eq.s32.totalorder %s91, 1
      %p387 = por %p385, %p386
      %p388 = scmp.ne.s32.totalorder %s379, %s380
      %p389 = scmp.eq.s32.totalorder %s91, 0
      %p390 = por %p388, %p389
      %p391 = scmp.ne.s32.totalorder %s379, %s380
      %p392 = scmp.eq.s32.totalorder %s92, 1
      %p393 = por %p391, %p392
      %p395 = scmp.ne.s32.totalorder %s380, %s394
      %p396 = scmp.eq.s32.totalorder %s92, 0
      %p397 = por %p395, %p396
      %s399 = sadd.s32 %s398, 1
      %p402 = scmp.eq.s32.totalorder %s86, 1
      %p403 = scmp.ne.s32.totalorder %s398, %s400
      %p404 = scmp.eq.s32.totalorder %s86, 0
      %p405 = por %p403, %p404
      %p406 = scmp.ne.s32.totalorder %s398, %s400
      %p407 = scmp.eq.s32.totalorder %s91, 1
      %p408 = por %p406, %p407
      %p409 = scmp.ne.s32.totalorder %s400, %s401
      %p410 = scmp.eq.s32.totalorder %s91, 0
      %p411 = por %p409, %p410
      %p412 = scmp.ne.s32.totalorder %s400, %s401
      %p413 = scmp.eq.s32.totalorder %s92, 1
      %p414 = por %p412, %p413
      %p416 = scmp.ne.s32.totalorder %s401, %s415
      %p417 = scmp.eq.s32.totalorder %s92, 0
      %p418 = por %p416, %p417
      %s420 = sadd.s32 %s419, 1
      %p423 = scmp.eq.s32.totalorder %s86, 1
      %p424 = scmp.ne.s32.totalorder %s419, %s421
      %p425 = scmp.eq.s32.totalorder %s86, 0
      %p426 = por %p424, %p425
      %p427 = scmp.ne.s32.totalorder %s419, %s421
      %p428 = scmp.eq.s32.totalorder %s91, 1
      %p429 = por %p427, %p428
      %p430 = scmp.ne.s32.totalorder %s421, %s422
      %p431 = scmp.eq.s32.totalorder %s91, 0
      %p432 = por %p430, %p431
      %p433 = scmp.ne.s32.totalorder %s421, %s422
      %p434 = scmp.eq.s32.totalorder %s92, 1
      %p435 = por %p433, %p434
      %p437 = scmp.ne.s32.totalorder %s422, %s436
      %p438 = scmp.eq.s32.totalorder %s92, 0
      %p439 = por %p437, %p438
      %s441 = sadd.s32 %s440, 1
      %p444 = scmp.eq.s32.totalorder %s86, 1
      %p445 = scmp.ne.s32.totalorder %s440, %s442
      %p446 = scmp.eq.s32.totalorder %s86, 0
      %p447 = por %p445, %p446
      %p448 = scmp.ne.s32.totalorder %s440, %s442
      %p449 = scmp.eq.s32.totalorder %s91, 1
      %p450 = por %p448, %p449
      %p451 = scmp.ne.s32.totalorder %s442, %s443
      %p452 = scmp.eq.s32.totalorder %s91, 0
      %p453 = por %p451, %p452
      %p454 = scmp.ne.s32.totalorder %s442, %s443
      %p455 = scmp.eq.s32.totalorder %s92, 1
      %p456 = por %p454, %p455
      %p458 = scmp.ne.s32.totalorder %s443, %s457
      %p459 = scmp.eq.s32.totalorder %s92, 0
      %p460 = por %p458, %p459
      %s462 = sadd.s32 %s461, 1
      %p465 = scmp.eq.s32.totalorder %s86, 1
      %p466 = scmp.ne.s32.totalorder %s461, %s463
      %p467 = scmp.eq.s32.totalorder %s86, 0
      %p468 = por %p466, %p467
      %p469 = scmp.ne.s32.totalorder %s461, %s463
      %p470 = scmp.eq.s32.totalorder %s91, 1
      %p471 = por %p469, %p470
      %p472 = scmp.ne.s32.totalorder %s463, %s464
      %p473 = scmp.eq.s32.totalorder %s91, 0
      %p474 = por %p472, %p473
      %p475 = scmp.ne.s32.totalorder %s463, %s464
      %p476 = scmp.eq.s32.totalorder %s92, 1
      %p477 = por %p475, %p476
      %p479 = scmp.ne.s32.totalorder %s464, %s478
      %p480 = scmp.eq.s32.totalorder %s92, 0
      %p481 = por %p479, %p480
      %s483 = sadd.s32 %s482, 1
      %p486 = scmp.eq.s32.totalorder %s86, 1
      %p487 = scmp.ne.s32.totalorder %s482, %s484
      %p488 = scmp.eq.s32.totalorder %s86, 0
      %p489 = por %p487, %p488
      %p490 = scmp.ne.s32.totalorder %s482, %s484
      %p491 = scmp.eq.s32.totalorder %s91, 1
      %p492 = por %p490, %p491
      %p493 = scmp.ne.s32.totalorder %s484, %s485
      %p494 = scmp.eq.s32.totalorder %s91, 0
      %p495 = por %p493, %p494
      %p496 = scmp.ne.s32.totalorder %s484, %s485
      %p497 = scmp.eq.s32.totalorder %s92, 1
      %p498 = por %p496, %p497
      %p500 = scmp.ne.s32.totalorder %s485, %s499
      %p501 = scmp.eq.s32.totalorder %s92, 0
      %p502 = por %p500, %p501
      %s504 = sadd.s32 %s503, 1
      %p507 = scmp.eq.s32.totalorder %s86, 1
      %p508 = scmp.ne.s32.totalorder %s503, %s505
      %p509 = scmp.eq.s32.totalorder %s86, 0
      %p510 = por %p508, %p509
      %p511 = scmp.ne.s32.totalorder %s503, %s505
      %p512 = scmp.eq.s32.totalorder %s91, 1
      %p513 = por %p511, %p512
      %p514 = scmp.ne.s32.totalorder %s505, %s506
      %p515 = scmp.eq.s32.totalorder %s91, 0
      %p516 = por %p514, %p515
      %p517 = scmp.ne.s32.totalorder %s505, %s506
      %p518 = scmp.eq.s32.totalorder %s92, 1
      %p519 = por %p517, %p518
      %p521 = scmp.ne.s32.totalorder %s506, %s520
      %p522 = scmp.eq.s32.totalorder %s92, 0
      %p523 = por %p521, %p522
      %s525 = sadd.s32 %s524, 1
      %p528 = scmp.eq.s32.totalorder %s86, 1
      %p529 = scmp.ne.s32.totalorder %s524, %s526
      %p530 = scmp.eq.s32.totalorder %s86, 0
      %p531 = por %p529, %p530
      %p532 = scmp.ne.s32.totalorder %s524, %s526
      %p533 = scmp.eq.s32.totalorder %s91, 1
      %p534 = por %p532, %p533
      %p535 = scmp.ne.s32.totalorder %s526, %s527
      %p536 = scmp.eq.s32.totalorder %s91, 0
      %p537 = por %p535, %p536
      %p538 = scmp.ne.s32.totalorder %s526, %s527
      %p539 = scmp.eq.s32.totalorder %s92, 1
      %p540 = por %p538, %p539
      %p542 = scmp.ne.s32.totalorder %s527, %s541
      %p543 = scmp.eq.s32.totalorder %s92, 0
      %p544 = por %p542, %p543
      %s546 = sadd.s32 %s545, 1
      %p549 = scmp.eq.s32.totalorder %s86, 1
      %p550 = scmp.ne.s32.totalorder %s545, %s547
      %p551 = scmp.eq.s32.totalorder %s86, 0
      %p552 = por %p550, %p551
      %p553 = scmp.ne.s32.totalorder %s545, %s547
      %p554 = scmp.eq.s32.totalorder %s91, 1
      %p555 = por %p553, %p554
      %p556 = scmp.ne.s32.totalorder %s547, %s548
      %p557 = scmp.eq.s32.totalorder %s91, 0
      %p558 = por %p556, %p557
      %p559 = scmp.ne.s32.totalorder %s547, %s548
      %p560 = scmp.eq.s32.totalorder %s92, 1
      %p561 = por %p559, %p560
      %p563 = scmp.ne.s32.totalorder %s548, %s562
      %p564 = scmp.eq.s32.totalorder %s92, 0
      %p565 = por %p563, %p564
      %s567 = sadd.s32 %s566, 1
      %p570 = scmp.eq.s32.totalorder %s86, 1
      %p571 = scmp.ne.s32.totalorder %s566, %s568
      %p572 = scmp.eq.s32.totalorder %s86, 0
      %p573 = por %p571, %p572
      %p574 = scmp.ne.s32.totalorder %s566, %s568
      %p575 = scmp.eq.s32.totalorder %s91, 1
      %p576 = por %p574, %p575
      %p577 = scmp.ne.s32.totalorder %s568, %s569
      %p578 = scmp.eq.s32.totalorder %s91, 0
      %p579 = por %p577, %p578
      %p580 = scmp.ne.s32.totalorder %s568, %s569
      %p581 = scmp.eq.s32.totalorder %s92, 1
      %p582 = por %p580, %p581
      %p584 = scmp.ne.s32.totalorder %s569, %s583
      %p585 = scmp.eq.s32.totalorder %s92, 0
      %p586 = por %p584, %p585
      %s588 = sadd.s32 %s587, 1
      %p591 = scmp.eq.s32.totalorder %s86, 1
      %p592 = scmp.ne.s32.totalorder %s587, %s589
      %p593 = scmp.eq.s32.totalorder %s86, 0
      %p594 = por %p592, %p593
      %p595 = scmp.ne.s32.totalorder %s587, %s589
      %p596 = scmp.eq.s32.totalorder %s91, 1
      %p597 = por %p595, %p596
      %p598 = scmp.ne.s32.totalorder %s589, %s590
      %p599 = scmp.eq.s32.totalorder %s91, 0
      %p600 = por %p598, %p599
      %p601 = scmp.ne.s32.totalorder %s589, %s590
      %p602 = scmp.eq.s32.totalorder %s92, 1
      %p603 = por %p601, %p602
      %p605 = scmp.ne.s32.totalorder %s590, %s604
      %p606 = scmp.eq.s32.totalorder %s92, 0
      %p607 = por %p605, %p606
      %s609 = sadd.s32 %s608, 1
      %p612 = scmp.eq.s32.totalorder %s86, 1
      %p613 = scmp.ne.s32.totalorder %s608, %s610
      %p614 = scmp.eq.s32.totalorder %s86, 0
      %p615 = por %p613, %p614
      %p616 = scmp.ne.s32.totalorder %s608, %s610
      %p617 = scmp.eq.s32.totalorder %s91, 1
      %p618 = por %p616, %p617
      %p619 = scmp.ne.s32.totalorder %s610, %s611
      %p620 = scmp.eq.s32.totalorder %s91, 0
      %p621 = por %p619, %p620
      %p622 = scmp.ne.s32.totalorder %s610, %s611
      %p623 = scmp.eq.s32.totalorder %s92, 1
      %p624 = por %p622, %p623
      %p626 = scmp.ne.s32.totalorder %s611, %s625
      %p627 = scmp.eq.s32.totalorder %s92, 0
      %p628 = por %p626, %p627
      %s630 = sadd.s32 %s629, 1
      %p633 = scmp.eq.s32.totalorder %s86, 1
      %p634 = scmp.ne.s32.totalorder %s629, %s631
      %p635 = scmp.eq.s32.totalorder %s86, 0
      %p636 = por %p634, %p635
      %p637 = scmp.ne.s32.totalorder %s629, %s631
      %p638 = scmp.eq.s32.totalorder %s91, 1
      %p639 = por %p637, %p638
      %p640 = scmp.ne.s32.totalorder %s631, %s632
      %p641 = scmp.eq.s32.totalorder %s91, 0
      %p642 = por %p640, %p641
      %p643 = scmp.ne.s32.totalorder %s631, %s632
      %p644 = scmp.eq.s32.totalorder %s92, 1
      %p645 = por %p643, %p644
      %p647 = scmp.ne.s32.totalorder %s632, %s646
      %p648 = scmp.eq.s32.totalorder %s92, 0
      %p649 = por %p647, %p648
      %s651 = sadd.s32 %s650, 1
      %p654 = scmp.eq.s32.totalorder %s86, 1
      %p655 = scmp.ne.s32.totalorder %s650, %s652
      %p656 = scmp.eq.s32.totalorder %s86, 0
      %p657 = por %p655, %p656
      %p658 = scmp.ne.s32.totalorder %s650, %s652
      %p659 = scmp.eq.s32.totalorder %s91, 1
      %p660 = por %p658, %p659
      %p661 = scmp.ne.s32.totalorder %s652, %s653
      %p662 = scmp.eq.s32.totalorder %s91, 0
      %p663 = por %p661, %p662
      %p664 = scmp.ne.s32.totalorder %s652, %s653
      %p665 = scmp.eq.s32.totalorder %s92, 1
      %p666 = por %p664, %p665
      %p668 = scmp.ne.s32.totalorder %s653, %s667
      %p669 = scmp.eq.s32.totalorder %s92, 0
      %p670 = por %p668, %p669
      %s672 = sadd.s32 %s671, 1
      %p675 = scmp.eq.s32.totalorder %s86, 1
      %p676 = scmp.ne.s32.totalorder %s671, %s673
      %p677 = scmp.eq.s32.totalorder %s86, 0
      %p678 = por %p676, %p677
      %p679 = scmp.ne.s32.totalorder %s671, %s673
      %p680 = scmp.eq.s32.totalorder %s91, 1
      %p681 = por %p679, %p680
      %p682 = scmp.ne.s32.totalorder %s673, %s674
      %p683 = scmp.eq.s32.totalorder %s91, 0
      %p684 = por %p682, %p683
      %p685 = scmp.ne.s32.totalorder %s673, %s674
      %p686 = scmp.eq.s32.totalorder %s92, 1
      %p687 = por %p685, %p686
      %p689 = scmp.ne.s32.totalorder %s674, %s688
      %p690 = scmp.eq.s32.totalorder %s92, 0
      %p691 = por %p689, %p690
      %s693 = sadd.s32 %s692, 1
      %p696 = scmp.eq.s32.totalorder %s86, 1
      %p697 = scmp.ne.s32.totalorder %s692, %s694
      %p698 = scmp.eq.s32.totalorder %s86, 0
      %p699 = por %p697, %p698
      %p700 = scmp.ne.s32.totalorder %s692, %s694
      %p701 = scmp.eq.s32.totalorder %s91, 1
      %p702 = por %p700, %p701
      %p703 = scmp.ne.s32.totalorder %s694, %s695
      %p704 = scmp.eq.s32.totalorder %s91, 0
      %p705 = por %p703, %p704
      %p706 = scmp.ne.s32.totalorder %s694, %s695
      %p707 = scmp.eq.s32.totalorder %s92, 1
      %p708 = por %p706, %p707
      %p710 = scmp.ne.s32.totalorder %s695, %s709
      %p711 = scmp.eq.s32.totalorder %s92, 0
      %p712 = por %p710, %p711
      %s714 = sadd.s32 %s713, 1
      %p717 = scmp.eq.s32.totalorder %s86, 1
      %p718 = scmp.ne.s32.totalorder %s713, %s715
      %p719 = scmp.eq.s32.totalorder %s86, 0
      %p720 = por %p718, %p719
      %p721 = scmp.ne.s32.totalorder %s713, %s715
      %p722 = scmp.eq.s32.totalorder %s91, 1
      %p723 = por %p721, %p722
      %p724 = scmp.ne.s32.totalorder %s715, %s716
      %p725 = scmp.eq.s32.totalorder %s91, 0
      %p726 = por %p724, %p725
      %p727 = scmp.ne.s32.totalorder %s715, %s716
      %p728 = scmp.eq.s32.totalorder %s92, 1
      %p729 = por %p727, %p728
      %p731 = scmp.ne.s32.totalorder %s716, %s730
      %p732 = scmp.eq.s32.totalorder %s92, 0
      %p733 = por %p731, %p732
      %s735 = sadd.s32 %s734, 1
      %p738 = scmp.eq.s32.totalorder %s86, 1
      %p739 = scmp.ne.s32.totalorder %s734, %s736
      %p740 = scmp.eq.s32.totalorder %s86, 0
      %p741 = por %p739, %p740
      %p742 = scmp.ne.s32.totalorder %s734, %s736
      %p743 = scmp.eq.s32.totalorder %s91, 1
      %p744 = por %p742, %p743
      %p745 = scmp.ne.s32.totalorder %s736, %s737
      %p746 = scmp.eq.s32.totalorder %s91, 0
      %p747 = por %p745, %p746
      %p748 = scmp.ne.s32.totalorder %s736, %s737
      %p749 = scmp.eq.s32.totalorder %s92, 1
      %p750 = por %p748, %p749
      %p752 = scmp.ne.s32.totalorder %s737, %s751
      %p753 = scmp.eq.s32.totalorder %s92, 0
      %p754 = por %p752, %p753
      %s756 = sadd.s32 %s755, 1
      %p759 = scmp.eq.s32.totalorder %s86, 1
      %p760 = scmp.ne.s32.totalorder %s755, %s757
      %p761 = scmp.eq.s32.totalorder %s86, 0
      %p762 = por %p760, %p761
      %p763 = scmp.ne.s32.totalorder %s755, %s757
      %p764 = scmp.eq.s32.totalorder %s91, 1
      %p765 = por %p763, %p764
      %p766 = scmp.ne.s32.totalorder %s757, %s758
      %p767 = scmp.eq.s32.totalorder %s91, 0
      %p768 = por %p766, %p767
      %p769 = scmp.ne.s32.totalorder %s757, %s758
      %p770 = scmp.eq.s32.totalorder %s92, 1
      %p771 = por %p769, %p770
      %p773 = scmp.ne.s32.totalorder %s758, %s772
      %p774 = scmp.eq.s32.totalorder %s92, 0
      %p775 = por %p773, %p774
      %s777 = sadd.s32 %s776, 1
      %p780 = scmp.eq.s32.totalorder %s86, 1
      %p781 = scmp.ne.s32.totalorder %s776, %s778
      %p782 = scmp.eq.s32.totalorder %s86, 0
      %p783 = por %p781, %p782
      %p784 = scmp.ne.s32.totalorder %s776, %s778
      %p785 = scmp.eq.s32.totalorder %s91, 1
      %p786 = por %p784, %p785
      %p787 = scmp.ne.s32.totalorder %s778, %s779
      %p788 = scmp.eq.s32.totalorder %s91, 0
      %p789 = por %p787, %p788
      %p790 = scmp.ne.s32.totalorder %s778, %s779
      %p791 = scmp.eq.s32.totalorder %s92, 1
      %p792 = por %p790, %p791
      %p794 = scmp.ne.s32.totalorder %s779, %s793
      %p795 = scmp.eq.s32.totalorder %s92, 0
      %p796 = por %p794, %p795
      %s798 = sadd.s32 %s797, 1
      %p801 = scmp.eq.s32.totalorder %s86, 1
      %p802 = scmp.ne.s32.totalorder %s797, %s799
      %p803 = scmp.eq.s32.totalorder %s86, 0
      %p804 = por %p802, %p803
      %p805 = scmp.ne.s32.totalorder %s797, %s799
      %p806 = scmp.eq.s32.totalorder %s91, 1
      %p807 = por %p805, %p806
      %p808 = scmp.ne.s32.totalorder %s799, %s800
      %p809 = scmp.eq.s32.totalorder %s91, 0
      %p810 = por %p808, %p809
      %p811 = scmp.ne.s32.totalorder %s799, %s800
      %p812 = scmp.eq.s32.totalorder %s92, 1
      %p813 = por %p811, %p812
      %p815 = scmp.ne.s32.totalorder %s800, %s814
      %p816 = scmp.eq.s32.totalorder %s92, 0
      %p817 = por %p815, %p816
      %s819 = sadd.s32 %s818, 1
      %p822 = scmp.eq.s32.totalorder %s86, 1
      %p823 = scmp.ne.s32.totalorder %s818, %s820
      %p824 = scmp.eq.s32.totalorder %s86, 0
      %p825 = por %p823, %p824
      %p826 = scmp.ne.s32.totalorder %s818, %s820
      %p827 = scmp.eq.s32.totalorder %s91, 1
      %p828 = por %p826, %p827
      %p829 = scmp.ne.s32.totalorder %s820, %s821
      %p830 = scmp.eq.s32.totalorder %s91, 0
      %p831 = por %p829, %p830
      %p832 = scmp.ne.s32.totalorder %s820, %s821
      %p833 = scmp.eq.s32.totalorder %s92, 1
      %p834 = por %p832, %p833
      %p836 = scmp.ne.s32.totalorder %s821, %s835
      %p837 = scmp.eq.s32.totalorder %s92, 0
      %p838 = por %p836, %p837
      %s839 = ssub.s32 %s86, %s93
      %p840 = scmp.eq.s32.totalorder %s839, 0
      %s842 = sadd.s32 %s841, 1
      %s843 = scalar_select %p840, %s841, %s842
      %p846 = pneg %p840
      %p847 = scmp.eq.s32.totalorder %s86, 1
      %p848 = por %p846, %p847
      %p849 = scmp.ne.s32.totalorder %s841, %s844
      %p850 = scmp.eq.s32.totalorder %s86, 0
      %p851 = por %p849, %p850
      %p852 = scmp.ne.s32.totalorder %s841, %s844
      %p853 = scmp.eq.s32.totalorder %s91, 1
      %p854 = por %p852, %p853
      %p855 = scmp.ne.s32.totalorder %s844, %s845
      %p856 = scmp.eq.s32.totalorder %s91, 0
      %p857 = por %p855, %p856
      %p858 = scmp.ne.s32.totalorder %s844, %s845
      %p859 = scmp.eq.s32.totalorder %s92, 1
      %p860 = por %p858, %p859
      %p862 = scmp.ne.s32.totalorder %s845, %s861
      %p863 = scmp.eq.s32.totalorder %s92, 0
      %p864 = por %p862, %p863
      %s865 = ssub.s32 %s86, %s93
      %p866 = scmp.eq.s32.totalorder %s865, 0
      %s868 = sadd.s32 %s867, 1
      %s869 = scalar_select %p866, %s867, %s868
      %p872 = pneg %p866
      %p873 = scmp.eq.s32.totalorder %s86, 1
      %p874 = por %p872, %p873
      %p875 = scmp.ne.s32.totalorder %s867, %s870
      %p876 = scmp.eq.s32.totalorder %s86, 0
      %p877 = por %p875, %p876
      %p878 = scmp.ne.s32.totalorder %s867, %s870
      %p879 = scmp.eq.s32.totalorder %s91, 1
      %p880 = por %p878, %p879
      %p881 = scmp.ne.s32.totalorder %s870, %s871
      %p882 = scmp.eq.s32.totalorder %s91, 0
      %p883 = por %p881, %p882
      %p884 = scmp.ne.s32.totalorder %s870, %s871
      %p885 = scmp.eq.s32.totalorder %s92, 1
      %p886 = por %p884, %p885
      %p888 = scmp.ne.s32.totalorder %s871, %s887
      %p889 = scmp.eq.s32.totalorder %s92, 0
      %p890 = por %p888, %p889
      %p891 = scmp.le.s32.totalorder 1, %s86
      %p892 = scmp.lt.s32.totalorder %s86, 3
      %p893 = pnand %p891, %p892
      %p894 = pneg %p893
      // Predicated region
      $region9: #{_lambda_.1} parent=5 // pred_check
        _
      $region10: #{_lambda_.1} parent=5 // pred_check_branch
        %896 = sbr.rel (%p893) target = $region12
      $region11: #{_lambda_.1} parent=5 // pred_region
        %s897 = ssub.s32 %s86, 1
        // Predicated region
        $region13: #{_lambda_.1} parent=11 // pred_check
          %p898 = pneg %p159
        $region14: #{_lambda_.1} parent=11 // pred_check_branch
          %900 = sbr.rel (%p898) target = $region16
        $region15: #{_lambda_.1} parent=11 // pred_region
          _
        $region16: #{_lambda_.1} parent=11 // pred_fallthru
          _
        // Predicated region
        $region17: #{_lambda_.1} parent=11 // pred_check
          %p901 = pneg %p180
        $region18: #{_lambda_.1} parent=11 // pred_check_branch
          %903 = sbr.rel (%p901) target = $region20
        $region19: #{_lambda_.1} parent=11 // pred_region
          _
        $region20: #{_lambda_.1} parent=11 // pred_fallthru
          _
        // Predicated region
        $region21: #{_lambda_.1} parent=11 // pred_check
          %p904 = pneg %p201
        $region22: #{_lambda_.1} parent=11 // pred_check_branch
          %906 = sbr.rel (%p904) target = $region24
        $region23: #{_lambda_.1} parent=11 // pred_region
          _
        $region24: #{_lambda_.1} parent=11 // pred_fallthru
          _
        // Predicated region
        $region25: #{_lambda_.1} parent=11 // pred_check
          %p907 = pneg %p222
        $region26: #{_lambda_.1} parent=11 // pred_check_branch
          %909 = sbr.rel (%p907) target = $region28
        $region27: #{_lambda_.1} parent=11 // pred_region
          _
        $region28: #{_lambda_.1} parent=11 // pred_fallthru
          _
        // Predicated region
        $region29: #{_lambda_.1} parent=11 // pred_check
          %p910 = pneg %p243
        $region30: #{_lambda_.1} parent=11 // pred_check_branch
          %912 = sbr.rel (%p910) target = $region32
        $region31: #{_lambda_.1} parent=11 // pred_region
          _
        $region32: #{_lambda_.1} parent=11 // pred_fallthru
          _
        // Predicated region
        $region33: #{_lambda_.1} parent=11 // pred_check
          %p913 = pneg %p264
        $region34: #{_lambda_.1} parent=11 // pred_check_branch
          %915 = sbr.rel (%p913) target = $region36
        $region35: #{_lambda_.1} parent=11 // pred_region
          _
        $region36: #{_lambda_.1} parent=11 // pred_fallthru
          _
        // Predicated region
        $region37: #{_lambda_.1} parent=11 // pred_check
          %p916 = pneg %p285
        $region38: #{_lambda_.1} parent=11 // pred_check_branch
          %918 = sbr.rel (%p916) target = $region40
        $region39: #{_lambda_.1} parent=11 // pred_region
          _
        $region40: #{_lambda_.1} parent=11 // pred_fallthru
          _
        // Predicated region
        $region41: #{_lambda_.1} parent=11 // pred_check
          %p919 = pneg %p306
        $region42: #{_lambda_.1} parent=11 // pred_check_branch
          %921 = sbr.rel (%p919) target = $region44
        $region43: #{_lambda_.1} parent=11 // pred_region
          _
        $region44: #{_lambda_.1} parent=11 // pred_fallthru
          _
        // Predicated region
        $region45: #{_lambda_.1} parent=11 // pred_check
          %p922 = pneg %p327
        $region46: #{_lambda_.1} parent=11 // pred_check_branch
          %924 = sbr.rel (%p922) target = $region48
        $region47: #{_lambda_.1} parent=11 // pred_region
          _
        $region48: #{_lambda_.1} parent=11 // pred_fallthru
          _
        // Predicated region
        $region49: #{_lambda_.1} parent=11 // pred_check
          %p925 = pneg %p348
        $region50: #{_lambda_.1} parent=11 // pred_check_branch
          %927 = sbr.rel (%p925) target = $region52
        $region51: #{_lambda_.1} parent=11 // pred_region
          _
        $region52: #{_lambda_.1} parent=11 // pred_fallthru
          _
        // Predicated region
        $region53: #{_lambda_.1} parent=11 // pred_check
          %p928 = pneg %p369
        $region54: #{_lambda_.1} parent=11 // pred_check_branch
          %930 = sbr.rel (%p928) target = $region56
        $region55: #{_lambda_.1} parent=11 // pred_region
          _
        $region56: #{_lambda_.1} parent=11 // pred_fallthru
          _
        // Predicated region
        $region57: #{_lambda_.1} parent=11 // pred_check
          %p931 = pneg %p390
        $region58: #{_lambda_.1} parent=11 // pred_check_branch
          %933 = sbr.rel (%p931) target = $region60
        $region59: #{_lambda_.1} parent=11 // pred_region
          _
        $region60: #{_lambda_.1} parent=11 // pred_fallthru
          _
        // Predicated region
        $region61: #{_lambda_.1} parent=11 // pred_check
          %p934 = pneg %p411
        $region62: #{_lambda_.1} parent=11 // pred_check_branch
          %936 = sbr.rel (%p934) target = $region64
        $region63: #{_lambda_.1} parent=11 // pred_region
          _
        $region64: #{_lambda_.1} parent=11 // pred_fallthru
          _
        // Predicated region
        $region65: #{_lambda_.1} parent=11 // pred_check
          %p937 = pneg %p432
        $region66: #{_lambda_.1} parent=11 // pred_check_branch
          %939 = sbr.rel (%p937) target = $region68
        $region67: #{_lambda_.1} parent=11 // pred_region
          _
        $region68: #{_lambda_.1} parent=11 // pred_fallthru
          _
        // Predicated region
        $region69: #{_lambda_.1} parent=11 // pred_check
          %p940 = pneg %p453
        $region70: #{_lambda_.1} parent=11 // pred_check_branch
          %942 = sbr.rel (%p940) target = $region72
        $region71: #{_lambda_.1} parent=11 // pred_region
          _
        $region72: #{_lambda_.1} parent=11 // pred_fallthru
          _
        // Predicated region
        $region73: #{_lambda_.1} parent=11 // pred_check
          %p943 = pneg %p474
        $region74: #{_lambda_.1} parent=11 // pred_check_branch
          %945 = sbr.rel (%p943) target = $region76
        $region75: #{_lambda_.1} parent=11 // pred_region
          _
        $region76: #{_lambda_.1} parent=11 // pred_fallthru
          _
        // Predicated region
        $region77: #{_lambda_.1} parent=11 // pred_check
          %p946 = pneg %p495
        $region78: #{_lambda_.1} parent=11 // pred_check_branch
          %948 = sbr.rel (%p946) target = $region80
        $region79: #{_lambda_.1} parent=11 // pred_region
          _
        $region80: #{_lambda_.1} parent=11 // pred_fallthru
          _
        // Predicated region
        $region81: #{_lambda_.1} parent=11 // pred_check
          %p949 = pneg %p516
        $region82: #{_lambda_.1} parent=11 // pred_check_branch
          %951 = sbr.rel (%p949) target = $region84
        $region83: #{_lambda_.1} parent=11 // pred_region
          _
        $region84: #{_lambda_.1} parent=11 // pred_fallthru
          _
        // Predicated region
        $region85: #{_lambda_.1} parent=11 // pred_check
          %p952 = pneg %p537
        $region86: #{_lambda_.1} parent=11 // pred_check_branch
          %954 = sbr.rel (%p952) target = $region88
        $region87: #{_lambda_.1} parent=11 // pred_region
          _
        $region88: #{_lambda_.1} parent=11 // pred_fallthru
          _
        // Predicated region
        $region89: #{_lambda_.1} parent=11 // pred_check
          %p955 = pneg %p558
        $region90: #{_lambda_.1} parent=11 // pred_check_branch
          %957 = sbr.rel (%p955) target = $region92
        $region91: #{_lambda_.1} parent=11 // pred_region
          _
        $region92: #{_lambda_.1} parent=11 // pred_fallthru
          _
        // Predicated region
        $region93: #{_lambda_.1} parent=11 // pred_check
          %p958 = pneg %p579
        $region94: #{_lambda_.1} parent=11 // pred_check_branch
          %960 = sbr.rel (%p958) target = $region96
        $region95: #{_lambda_.1} parent=11 // pred_region
          _
        $region96: #{_lambda_.1} parent=11 // pred_fallthru
          _
        // Predicated region
        $region97: #{_lambda_.1} parent=11 // pred_check
          %p961 = pneg %p600
        $region98: #{_lambda_.1} parent=11 // pred_check_branch
          %963 = sbr.rel (%p961) target = $region100
        $region99: #{_lambda_.1} parent=11 // pred_region
          _
        $region100: #{_lambda_.1} parent=11 // pred_fallthru
          _
        // Predicated region
        $region101: #{_lambda_.1} parent=11 // pred_check
          %p964 = pneg %p621
        $region102: #{_lambda_.1} parent=11 // pred_check_branch
          %966 = sbr.rel (%p964) target = $region104
        $region103: #{_lambda_.1} parent=11 // pred_region
          _
        $region104: #{_lambda_.1} parent=11 // pred_fallthru
          _
        // Predicated region
        $region105: #{_lambda_.1} parent=11 // pred_check
          %p967 = pneg %p642
        $region106: #{_lambda_.1} parent=11 // pred_check_branch
          %969 = sbr.rel (%p967) target = $region108
        $region107: #{_lambda_.1} parent=11 // pred_region
          _
        $region108: #{_lambda_.1} parent=11 // pred_fallthru
          _
        // Predicated region
        $region109: #{_lambda_.1} parent=11 // pred_check
          %p970 = pneg %p663
        $region110: #{_lambda_.1} parent=11 // pred_check_branch
          %972 = sbr.rel (%p970) target = $region112
        $region111: #{_lambda_.1} parent=11 // pred_region
          _
        $region112: #{_lambda_.1} parent=11 // pred_fallthru
          _
        // Predicated region
        $region113: #{_lambda_.1} parent=11 // pred_check
          %p973 = pneg %p684
        $region114: #{_lambda_.1} parent=11 // pred_check_branch
          %975 = sbr.rel (%p973) target = $region116
        $region115: #{_lambda_.1} parent=11 // pred_region
          _
        $region116: #{_lambda_.1} parent=11 // pred_fallthru
          _
        // Predicated region
        $region117: #{_lambda_.1} parent=11 // pred_check
          %p976 = pneg %p705
        $region118: #{_lambda_.1} parent=11 // pred_check_branch
          %978 = sbr.rel (%p976) target = $region120
        $region119: #{_lambda_.1} parent=11 // pred_region
          _
        $region120: #{_lambda_.1} parent=11 // pred_fallthru
          _
        // Predicated region
        $region121: #{_lambda_.1} parent=11 // pred_check
          %p979 = pneg %p726
        $region122: #{_lambda_.1} parent=11 // pred_check_branch
          %981 = sbr.rel (%p979) target = $region124
        $region123: #{_lambda_.1} parent=11 // pred_region
          _
        $region124: #{_lambda_.1} parent=11 // pred_fallthru
          _
        // Predicated region
        $region125: #{_lambda_.1} parent=11 // pred_check
          %p982 = pneg %p747
        $region126: #{_lambda_.1} parent=11 // pred_check_branch
          %984 = sbr.rel (%p982) target = $region128
        $region127: #{_lambda_.1} parent=11 // pred_region
          _
        $region128: #{_lambda_.1} parent=11 // pred_fallthru
          _
        // Predicated region
        $region129: #{_lambda_.1} parent=11 // pred_check
          %p985 = pneg %p768
        $region130: #{_lambda_.1} parent=11 // pred_check_branch
          %987 = sbr.rel (%p985) target = $region132
        $region131: #{_lambda_.1} parent=11 // pred_region
          _
        $region132: #{_lambda_.1} parent=11 // pred_fallthru
          _
        // Predicated region
        $region133: #{_lambda_.1} parent=11 // pred_check
          %p988 = pneg %p789
        $region134: #{_lambda_.1} parent=11 // pred_check_branch
          %990 = sbr.rel (%p988) target = $region136
        $region135: #{_lambda_.1} parent=11 // pred_region
          _
        $region136: #{_lambda_.1} parent=11 // pred_fallthru
          _
        // Predicated region
        $region137: #{_lambda_.1} parent=11 // pred_check
          %p991 = pneg %p810
        $region138: #{_lambda_.1} parent=11 // pred_check_branch
          %993 = sbr.rel (%p991) target = $region140
        $region139: #{_lambda_.1} parent=11 // pred_region
          _
        $region140: #{_lambda_.1} parent=11 // pred_fallthru
          _
        // Predicated region
        $region141: #{_lambda_.1} parent=11 // pred_check
          %p994 = pneg %p831
        $region142: #{_lambda_.1} parent=11 // pred_check_branch
          %996 = sbr.rel (%p994) target = $region144
        $region143: #{_lambda_.1} parent=11 // pred_region
          _
        $region144: #{_lambda_.1} parent=11 // pred_fallthru
          _
      $region12: #{_lambda_.1} parent=5 // pred_fallthru
        _
      %p997 = scmp.lt.s32.totalorder %s86, 2
      // Predicated region
      $region145: #{_lambda_.1} parent=5 // pred_check
        %p998 = pneg %p997
      $region146: #{_lambda_.1} parent=5 // pred_check_branch
        %1000 = sbr.rel (%p998) target = $region148
      $region147: #{_lambda_.1} parent=5 // pred_region
        // Predicated region
        $region149: #{_lambda_.1} parent=147 // pred_check
          %p1001 = pneg %p106
        $region150: #{_lambda_.1} parent=147 // pred_check_branch
          %1003 = sbr.rel (%p1001) target = $region152
        $region151: #{_lambda_.1} parent=147 // pred_region
          %p1004 = scmp.lt.s32.totalorder %s86, 1
          %s1005 = scalar_select %p1004, %s86, 1
          %s1006 = smul.addr %s1005, 16
          %s1007 = smul.addr %s1006, 8
          %s1008 = scalar_lea.vmem %s1, %s1007
        $region152: #{_lambda_.1} parent=147 // pred_fallthru
          _
        // Predicated region
        $region153: #{_lambda_.1} parent=147 // pred_check
          %p1009 = pneg %p132
        $region154: #{_lambda_.1} parent=147 // pred_check_branch
          %1011 = sbr.rel (%p1009) target = $region156
        $region155: #{_lambda_.1} parent=147 // pred_region
          %p1012 = scmp.lt.s32.totalorder %s86, 1
          %s1013 = scalar_select %p1012, %s86, 1
          %s1014 = scalar_lea.vmem %s3, %s1013
        $region156: #{_lambda_.1} parent=147 // pred_fallthru
          _
      $region148: #{_lambda_.1} parent=5 // pred_fallthru
        _
      %p1015 = scmp.le.s32.totalorder 1, %s86
      %p1016 = scmp.lt.s32.totalorder %s86, 3
      %p1017 = pnand %p1015, %p1016
      %p1018 = pneg %p1017
      // Predicated region
      $region157: #{_lambda_.1} parent=5 // pred_check
        _
      $region158: #{_lambda_.1} parent=5 // pred_check_branch
        %1020 = sbr.rel (%p1017) target = $region160
      $region159: #{_lambda_.1} parent=5 // pred_region
        %s1021 = ssub.s32 %s86, 1
        %p1022 = scmp.lt.s32.totalorder %s91, 1
        %s1023 = scalar_select %p1022, %s91, 1
        %s1024 = smul.addr %s1023, 16
        %s1025 = smul.addr %s1024, 8
        %s1026 = scalar_lea.vmem %s1, %s1025
        %p1027 = pneg %p112
        %p1028 = pneg %p109
        %p1029 = scmp.lt.s32.totalorder %s91, 1
        %s1030 = scalar_select %p1029, %s91, 1
        %s1031 = scalar_lea.vmem %s3, %s1030
        %p1032 = pneg %p138
        %p1033 = pneg %p135
        %p1034 = pneg %p159
        %p1035 = pneg %p156
        %p1036 = pneg %p180
        %p1037 = pneg %p177
        %p1038 = pneg %p201
        %p1039 = pneg %p198
        %p1040 = pneg %p222
        %p1041 = pneg %p219
        %p1042 = pneg %p243
        %p1043 = pneg %p240
        %p1044 = pneg %p264
        %p1045 = pneg %p261
        %p1046 = pneg %p285
        %p1047 = pneg %p282
        %p1048 = pneg %p306
        %p1049 = pneg %p303
        %p1050 = pneg %p327
        %p1051 = pneg %p324
        %p1052 = pneg %p348
        %p1053 = pneg %p345
        %p1054 = pneg %p369
        %p1055 = pneg %p366
        %p1056 = pneg %p390
        %p1057 = pneg %p387
        %p1058 = pneg %p411
        %p1059 = pneg %p408
        %p1060 = pneg %p432
        %p1061 = pneg %p429
        %p1062 = pneg %p453
        %p1063 = pneg %p450
        %p1064 = pneg %p474
        %p1065 = pneg %p471
        %p1066 = pneg %p495
        %p1067 = pneg %p492
        %p1068 = pneg %p516
        %p1069 = pneg %p513
        %p1070 = pneg %p537
        %p1071 = pneg %p534
        %p1072 = pneg %p558
        %p1073 = pneg %p555
        %p1074 = pneg %p579
        %p1075 = pneg %p576
        %p1076 = pneg %p600
        %p1077 = pneg %p597
        %p1078 = pneg %p621
        %p1079 = pneg %p618
        %p1080 = pneg %p642
        %p1081 = pneg %p639
        %p1082 = pneg %p663
        %p1083 = pneg %p660
        %p1084 = pneg %p684
        %p1085 = pneg %p681
        %p1086 = pneg %p705
        %p1087 = pneg %p702
        %p1088 = pneg %p726
        %p1089 = pneg %p723
        %p1090 = pneg %p747
        %p1091 = pneg %p744
        %p1092 = pneg %p768
        %p1093 = pneg %p765
        %p1094 = pneg %p789
        %p1095 = pneg %p786
        %p1096 = pneg %p810
        %p1097 = pneg %p807
        %p1098 = pneg %p831
        %p1099 = pneg %p828
        %p1100 = pneg %p857
        %p1101 = pneg %p854
        %s1102 = sand.u32 %s844, 1
        %s1103 = scalar_lea.sflag [#allocation3], %s1102
        %s1104 = sand.u32 %s844, 1
        %s1105 = smul.addr %s1104, 128
        %s1106 = scalar_lea.vmem [#allocation2], %s1105
        %p1107 = pneg %p883
        %p1108 = pneg %p880
        %s1109 = sand.u32 %s870, 1
        %s1110 = scalar_lea.sflag [#allocation5], %s1109
        %s1111 = sand.u32 %s870, 1
        %s1112 = smul.addr %s1111, 256
        %s1113 = scalar_lea.vmem [#allocation4], %s1112
        %p1114 = scmp.lt.s32.totalorder %s91, 1
        %s1115 = scalar_select %p1114, %s91, 1
        %s1116 = smul.addr %s1115, 16
        %s1117 = smul.addr %s1116, 8
        %s1118 = scalar_lea.vmem %s1, %s1117
        %p1119 = scmp.lt.s32.totalorder %s91, 1
        %s1120 = scalar_select %p1119, %s91, 1
        %s1121 = scalar_lea.vmem %s3, %s1120
        %v1123 = vld [vmem:[%s1118] sm:$0xff]
        %v1124 = vld [vmem:[%s1118 + $0x8] sm:$0xff]
        %v1125 = vld [vmem:[%s1118 + $0x10] sm:$0xff]
        %v1126 = vld [vmem:[%s1118 + $0x18] sm:$0xff]
        %v1127 = vld [vmem:[%s1118 + $0x20] sm:$0xff]
        %v1128 = vld [vmem:[%s1118 + $0x28] sm:$0xff]
        %v1129 = vld [vmem:[%s1118 + $0x30] sm:$0xff]
        %v1130 = vld [vmem:[%s1118 + $0x38] sm:$0xff]
        %v1131 = vld [vmem:[%s1118 + $0x40] sm:$0xff]
        %v1132 = vld [vmem:[%s1118 + $0x48] sm:$0xff]
        %v1133 = vld [vmem:[%s1118 + $0x50] sm:$0xff]
        %v1134 = vld [vmem:[%s1118 + $0x58] sm:$0xff]
        %v1135 = vld [vmem:[%s1118 + $0x60] sm:$0xff]
        %v1136 = vld [vmem:[%s1118 + $0x68] sm:$0xff]
        %v1137 = vld [vmem:[%s1118 + $0x70] sm:$0xff]
        %v1138 = vld [vmem:[%s1118 + $0x78] sm:$0xff]
        %v1139 = vld [vmem:[%s7] sm:$0x1]
        %v1140 = vld [vmem:[%s9] sm:$0x1]
        %1141 = vadd.xlane.f32.xlu0 %v1123
        %v1142 = vpop.xlane.xlu0 %1141
        %1143 = vadd.xlane.f32.xlu0 %v1124
        %v1144 = vpop.xlane.xlu0 %1143
        %1145 = vadd.xlane.f32.xlu0 %v1125
        %v1146 = vpop.xlane.xlu0 %1145
        %1147 = vadd.xlane.f32.xlu0 %v1126
        %v1148 = vpop.xlane.xlu0 %1147
        %1149 = vadd.xlane.f32.xlu0 %v1127
        %v1150 = vpop.xlane.xlu0 %1149
        %1151 = vadd.xlane.f32.xlu0 %v1128
        %v1152 = vpop.xlane.xlu0 %1151
        %1153 = vadd.xlane.f32.xlu0 %v1129
        %v1154 = vpop.xlane.xlu0 %1153
        %1155 = vadd.xlane.f32.xlu0 %v1130
        %v1156 = vpop.xlane.xlu0 %1155
        %1157 = vadd.xlane.f32.xlu0 %v1131
        %v1158 = vpop.xlane.xlu0 %1157
        %1159 = vadd.xlane.f32.xlu0 %v1132
        %v1160 = vpop.xlane.xlu0 %1159
        %1161 = vadd.xlane.f32.xlu0 %v1133
        %v1162 = vpop.xlane.xlu0 %1161
        %1163 = vadd.xlane.f32.xlu0 %v1134
        %v1164 = vpop.xlane.xlu0 %1163
        %1165 = vadd.xlane.f32.xlu0 %v1135
        %v1166 = vpop.xlane.xlu0 %1165
        %1167 = vadd.xlane.f32.xlu0 %v1136
        %v1168 = vpop.xlane.xlu0 %1167
        %1169 = vadd.xlane.f32.xlu0 %v1137
        %v1170 = vpop.xlane.xlu0 %1169
        %1171 = vadd.xlane.f32.xlu0 %v1138
        %v1172 = vpop.xlane.xlu0 %1171
        %v1173 = vrcp.pop 128.0
        %v1174 = vmul.f32 %v1142, %v1173
        %v1175 = vmul.f32 %v1144, %v1173
        %v1176 = vmul.f32 %v1146, %v1173
        %v1177 = vmul.f32 %v1148, %v1173
        %v1178 = vmul.f32 %v1150, %v1173
        %v1179 = vmul.f32 %v1152, %v1173
        %v1180 = vmul.f32 %v1154, %v1173
        %v1181 = vmul.f32 %v1156, %v1173
        %v1182 = vmul.f32 %v1158, %v1173
        %v1183 = vmul.f32 %v1160, %v1173
        %v1184 = vmul.f32 %v1162, %v1173
        %v1185 = vmul.f32 %v1164, %v1173
        %v1186 = vmul.f32 %v1166, %v1173
        %v1187 = vmul.f32 %v1168, %v1173
        %v1188 = vmul.f32 %v1170, %v1173
        %v1189 = vmul.f32 %v1172, %v1173
        %v1190 = vsub.f32 %v1123, %v1174
        %v1191 = vsub.f32 %v1124, %v1175
        %v1192 = vsub.f32 %v1125, %v1176
        %v1193 = vsub.f32 %v1126, %v1177
        %v1194 = vsub.f32 %v1127, %v1178
        %v1195 = vsub.f32 %v1128, %v1179
        %v1196 = vsub.f32 %v1129, %v1180
        %v1197 = vsub.f32 %v1130, %v1181
        %v1198 = vsub.f32 %v1131, %v1182
        %v1199 = vsub.f32 %v1132, %v1183
        %v1200 = vsub.f32 %v1133, %v1184
        %v1201 = vsub.f32 %v1134, %v1185
        %v1202 = vsub.f32 %v1135, %v1186
        %v1203 = vsub.f32 %v1136, %v1187
        %v1204 = vsub.f32 %v1137, %v1188
        %v1205 = vsub.f32 %v1138, %v1189
        %v1206 = vmul.f32 %v1190, %v1190
        %v1207 = vmul.f32 %v1191, %v1191
        %v1208 = vmul.f32 %v1192, %v1192
        %v1209 = vmul.f32 %v1193, %v1193
        %v1210 = vmul.f32 %v1194, %v1194
        %v1211 = vmul.f32 %v1195, %v1195
        %v1212 = vmul.f32 %v1196, %v1196
        %v1213 = vmul.f32 %v1197, %v1197
        %v1214 = vmul.f32 %v1198, %v1198
        %v1215 = vmul.f32 %v1199, %v1199
        %v1216 = vmul.f32 %v1200, %v1200
        %v1217 = vmul.f32 %v1201, %v1201
        %v1218 = vmul.f32 %v1202, %v1202
        %v1219 = vmul.f32 %v1203, %v1203
        %v1220 = vmul.f32 %v1204, %v1204
        %v1221 = vmul.f32 %v1205, %v1205
        %1222 = vadd.xlane.f32.xlu0 %v1206
        %v1223 = vpop.xlane.xlu0 %1222
        %1224 = vadd.xlane.f32.xlu0 %v1207
        %v1225 = vpop.xlane.xlu0 %1224
        %1226 = vadd.xlane.f32.xlu0 %v1208
        %v1227 = vpop.xlane.xlu0 %1226
        %1228 = vadd.xlane.f32.xlu0 %v1209
        %v1229 = vpop.xlane.xlu0 %1228
        %1230 = vadd.xlane.f32.xlu0 %v1210
        %v1231 = vpop.xlane.xlu0 %1230
        %1232 = vadd.xlane.f32.xlu0 %v1211
        %v1233 = vpop.xlane.xlu0 %1232
        %1234 = vadd.xlane.f32.xlu0 %v1212
        %v1235 = vpop.xlane.xlu0 %1234
        %1236 = vadd.xlane.f32.xlu0 %v1213
        %v1237 = vpop.xlane.xlu0 %1236
        %1238 = vadd.xlane.f32.xlu0 %v1214
        %v1239 = vpop.xlane.xlu0 %1238
        %1240 = vadd.xlane.f32.xlu0 %v1215
        %v1241 = vpop.xlane.xlu0 %1240
        %1242 = vadd.xlane.f32.xlu0 %v1216
        %v1243 = vpop.xlane.xlu0 %1242
        %1244 = vadd.xlane.f32.xlu0 %v1217
        %v1245 = vpop.xlane.xlu0 %1244
        %1246 = vadd.xlane.f32.xlu0 %v1218
        %v1247 = vpop.xlane.xlu0 %1246
        %1248 = vadd.xlane.f32.xlu0 %v1219
        %v1249 = vpop.xlane.xlu0 %1248
        %1250 = vadd.xlane.f32.xlu0 %v1220
        %v1251 = vpop.xlane.xlu0 %1250
        %1252 = vadd.xlane.f32.xlu0 %v1221
        %v1253 = vpop.xlane.xlu0 %1252
        %v1254 = vmul.f32 %v1223, %v1173
        %v1255 = vmul.f32 %v1225, %v1173
        %v1256 = vmul.f32 %v1227, %v1173
        %v1257 = vmul.f32 %v1229, %v1173
        %v1258 = vmul.f32 %v1231, %v1173
        %v1259 = vmul.f32 %v1233, %v1173
        %v1260 = vmul.f32 %v1235, %v1173
        %v1261 = vmul.f32 %v1237, %v1173
        %v1262 = vmul.f32 %v1239, %v1173
        %v1263 = vmul.f32 %v1241, %v1173
        %v1264 = vmul.f32 %v1243, %v1173
        %v1265 = vmul.f32 %v1245, %v1173
        %v1266 = vmul.f32 %v1247, %v1173
        %v1267 = vmul.f32 %v1249, %v1173
        %v1268 = vmul.f32 %v1251, %v1173
        %v1269 = vmul.f32 %v1253, %v1173
        %v1270 = vadd.f32 %v1254, 1e-05
        %v1271 = vadd.f32 %v1255, 1e-05
        %v1272 = vadd.f32 %v1256, 1e-05
        %v1273 = vadd.f32 %v1257, 1e-05
        %v1274 = vadd.f32 %v1258, 1e-05
        %v1275 = vadd.f32 %v1259, 1e-05
        %v1276 = vadd.f32 %v1260, 1e-05
        %v1277 = vadd.f32 %v1261, 1e-05
        %v1278 = vadd.f32 %v1262, 1e-05
        %v1279 = vadd.f32 %v1263, 1e-05
        %v1280 = vadd.f32 %v1264, 1e-05
        %v1281 = vadd.f32 %v1265, 1e-05
        %v1282 = vadd.f32 %v1266, 1e-05
        %v1283 = vadd.f32 %v1267, 1e-05
        %v1284 = vadd.f32 %v1268, 1e-05
        %v1285 = vadd.f32 %v1269, 1e-05
        %v1286 = vrsqrt.pop %v1270
        %v1287 = vrsqrt.pop %v1271
        %v1288 = vrsqrt.pop %v1272
        %v1289 = vrsqrt.pop %v1273
        %v1290 = vrsqrt.pop %v1274
        %v1291 = vrsqrt.pop %v1275
        %v1292 = vrsqrt.pop %v1276
        %v1293 = vrsqrt.pop %v1277
        %v1294 = vrsqrt.pop %v1278
        %v1295 = vrsqrt.pop %v1279
        %v1296 = vrsqrt.pop %v1280
        %v1297 = vrsqrt.pop %v1281
        %v1298 = vrsqrt.pop %v1282
        %v1299 = vrsqrt.pop %v1283
        %v1300 = vrsqrt.pop %v1284
        %v1301 = vrsqrt.pop %v1285
        %v1302 = vmul.f32 %v1190, %v1286
        %v1303 = vmul.f32 %v1191, %v1287
        %v1304 = vmul.f32 %v1192, %v1288
        %v1305 = vmul.f32 %v1193, %v1289
        %v1306 = vmul.f32 %v1194, %v1290
        %v1307 = vmul.f32 %v1195, %v1291
        %v1308 = vmul.f32 %v1196, %v1292
        %v1309 = vmul.f32 %v1197, %v1293
        %v1310 = vmul.f32 %v1198, %v1294
        %v1311 = vmul.f32 %v1199, %v1295
        %v1312 = vmul.f32 %v1200, %v1296
        %v1313 = vmul.f32 %v1201, %v1297
        %v1314 = vmul.f32 %v1202, %v1298
        %v1315 = vmul.f32 %v1203, %v1299
        %v1316 = vmul.f32 %v1204, %v1300
        %v1317 = vmul.f32 %v1205, %v1301
        %v1319 = vlaneseq
        %v1320 = vshrl.u32 %v1319, 7
        %v1321 = vsub.s32 0, %v1320
        %v1322 = vrot.slane %v1139, %v1321
        %v1324 = vmul.f32 %v1302, %v1322
        %v1325 = vmul.f32 %v1303, %v1322
        %v1326 = vmul.f32 %v1304, %v1322
        %v1327 = vmul.f32 %v1305, %v1322
        %v1328 = vmul.f32 %v1306, %v1322
        %v1329 = vmul.f32 %v1307, %v1322
        %v1330 = vmul.f32 %v1308, %v1322
        %v1331 = vmul.f32 %v1309, %v1322
        %v1332 = vmul.f32 %v1310, %v1322
        %v1333 = vmul.f32 %v1311, %v1322
        %v1334 = vmul.f32 %v1312, %v1322
        %v1335 = vmul.f32 %v1313, %v1322
        %v1336 = vmul.f32 %v1314, %v1322
        %v1337 = vmul.f32 %v1315, %v1322
        %v1338 = vmul.f32 %v1316, %v1322
        %v1339 = vmul.f32 %v1317, %v1322
        %v1341 = vlaneseq
        %v1342 = vshrl.u32 %v1341, 7
        %v1343 = vsub.s32 0, %v1342
        %v1344 = vrot.slane %v1140, %v1343
        %v1346 = vadd.f32 %v1324, %v1344
        %v1347 = vadd.f32 %v1325, %v1344
        %v1348 = vadd.f32 %v1326, %v1344
        %v1349 = vadd.f32 %v1327, %v1344
        %v1350 = vadd.f32 %v1328, %v1344
        %v1351 = vadd.f32 %v1329, %v1344
        %v1352 = vadd.f32 %v1330, %v1344
        %v1353 = vadd.f32 %v1331, %v1344
        %v1354 = vadd.f32 %v1332, %v1344
        %v1355 = vadd.f32 %v1333, %v1344
        %v1356 = vadd.f32 %v1334, %v1344
        %v1357 = vadd.f32 %v1335, %v1344
        %v1358 = vadd.f32 %v1336, %v1344
        %v1359 = vadd.f32 %v1337, %v1344
        %v1360 = vadd.f32 %v1338, %v1344
        %v1361 = vadd.f32 %v1339, %v1344
        %v1362 = vld [vmem:[%s11] sm:$0xff]
        %v1363 = vld [vmem:[%s11 + $0x8] sm:$0xff]
        %v1364 = vld [vmem:[%s11 + $0x10] sm:$0xff]
        %v1365 = vld [vmem:[%s11 + $0x18] sm:$0xff]
        %v1366 = vld [vmem:[%s11 + $0x20] sm:$0xff]
        %v1367 = vld [vmem:[%s11 + $0x28] sm:$0xff]
        %v1368 = vld [vmem:[%s11 + $0x30] sm:$0xff]
        %v1369 = vld [vmem:[%s11 + $0x38] sm:$0xff]
        %v1370 = vld [vmem:[%s11 + $0x40] sm:$0xff]
        %v1371 = vld [vmem:[%s11 + $0x48] sm:$0xff]
        %v1372 = vld [vmem:[%s11 + $0x50] sm:$0xff]
        %v1373 = vld [vmem:[%s11 + $0x58] sm:$0xff]
        %v1374 = vld [vmem:[%s11 + $0x60] sm:$0xff]
        %v1375 = vld [vmem:[%s11 + $0x68] sm:$0xff]
        %v1376 = vld [vmem:[%s11 + $0x70] sm:$0xff]
        %v1377 = vld [vmem:[%s11 + $0x78] sm:$0xff]
        %v1378 = vld [vmem:[%s11 + $0x80] sm:$0xff]
        %v1379 = vld [vmem:[%s11 + $0x88] sm:$0xff]
        %v1380 = vld [vmem:[%s11 + $0x90] sm:$0xff]
        %v1381 = vld [vmem:[%s11 + $0x98] sm:$0xff]
        %v1382 = vld [vmem:[%s11 + $0xa0] sm:$0xff]
        %v1383 = vld [vmem:[%s11 + $0xa8] sm:$0xff]
        %v1384 = vld [vmem:[%s11 + $0xb0] sm:$0xff]
        %v1385 = vld [vmem:[%s11 + $0xb8] sm:$0xff]
        %v1386 = vld [vmem:[%s11 + $0xc0] sm:$0xff]
        %v1387 = vld [vmem:[%s11 + $0xc8] sm:$0xff]
        %v1388 = vld [vmem:[%s11 + $0xd0] sm:$0xff]
        %v1389 = vld [vmem:[%s11 + $0xd8] sm:$0xff]
        %v1390 = vld [vmem:[%s11 + $0xe0] sm:$0xff]
        %v1391 = vld [vmem:[%s11 + $0xe8] sm:$0xff]
        %v1392 = vld [vmem:[%s11 + $0xf0] sm:$0xff]
        %v1393 = vld [vmem:[%s11 + $0xf8] sm:$0xff]
        %v1394 = vpack.c.bf16 %v1347, %v1346
        %v1395 = vpack.c.bf16 %v1349, %v1348
        %v1396 = vpack.c.bf16 %v1351, %v1350
        %v1397 = vpack.c.bf16 %v1353, %v1352
        %v1398 = vpack.c.bf16 %v1355, %v1354
        %v1399 = vpack.c.bf16 %v1357, %v1356
        %v1400 = vpack.c.bf16 %v1359, %v1358
        %v1401 = vpack.c.bf16 %v1361, %v1360
        %v1402 = vld [vmem:[%s13] sm:$0xf]
        %v1404 = vlaneseq
        %v1405 = vshrl.u32 %v1404, 7
        %v1406 = vsub.s32 0, %v1405
        %v1407 = vrot.slane %v1402, %v1406
        %v1408 = vlaneseq
        %v1409 = vshrl.u32 %v1408, 7
        %v1410 = vsub.s32 1, %v1409
        %v1411 = vrot.slane %v1402, %v1410
        %v1412 = vlaneseq
        %v1413 = vshrl.u32 %v1412, 7
        %v1414 = vsub.s32 2, %v1413
        %v1415 = vrot.slane %v1402, %v1414
        %v1416 = vlaneseq
        %v1417 = vshrl.u32 %v1416, 7
        %v1418 = vsub.s32 3, %v1417
        %v1419 = vrot.slane %v1402, %v1418
        %v1456 = vunpack.c.l.b16 %v1362
        %v1457 = vunpack.c.h.b16 %v1362
        %v1458 = vunpack.c.l.b16 %v1363
        %v1459 = vunpack.c.h.b16 %v1363
        %v1460 = vunpack.c.l.b16 %v1364
        %v1461 = vunpack.c.h.b16 %v1364
        %v1462 = vunpack.c.l.b16 %v1365
        %v1463 = vunpack.c.h.b16 %v1365
        %v1464 = vunpack.c.l.b16 %v1366
        %v1465 = vunpack.c.h.b16 %v1366
        %v1466 = vunpack.c.l.b16 %v1367
        %v1467 = vunpack.c.h.b16 %v1367
        %v1468 = vunpack.c.l.b16 %v1368
        %v1469 = vunpack.c.h.b16 %v1368
        %v1470 = vunpack.c.l.b16 %v1369
        %v1471 = vunpack.c.h.b16 %v1369
        %v1472 = vunpack.c.l.b16 %v1370
        %v1473 = vunpack.c.h.b16 %v1370
        %v1474 = vunpack.c.l.b16 %v1371
        %v1475 = vunpack.c.h.b16 %v1371
        %v1476 = vunpack.c.l.b16 %v1372
        %v1477 = vunpack.c.h.b16 %v1372
        %v1478 = vunpack.c.l.b16 %v1373
        %v1479 = vunpack.c.h.b16 %v1373
        %v1480 = vunpack.c.l.b16 %v1374
        %v1481 = vunpack.c.h.b16 %v1374
        %v1482 = vunpack.c.l.b16 %v1375
        %v1483 = vunpack.c.h.b16 %v1375
        %v1484 = vunpack.c.l.b16 %v1376
        %v1485 = vunpack.c.h.b16 %v1376
        %v1486 = vunpack.c.l.b16 %v1377
        %v1487 = vunpack.c.h.b16 %v1377
        %v1488 = vunpack.c.l.b16 %v1378
        %v1489 = vunpack.c.h.b16 %v1378
        %v1490 = vunpack.c.l.b16 %v1379
        %v1491 = vunpack.c.h.b16 %v1379
        %v1492 = vunpack.c.l.b16 %v1380
        %v1493 = vunpack.c.h.b16 %v1380
        %v1494 = vunpack.c.l.b16 %v1381
        %v1495 = vunpack.c.h.b16 %v1381
        %v1496 = vunpack.c.l.b16 %v1382
        %v1497 = vunpack.c.h.b16 %v1382
        %v1498 = vunpack.c.l.b16 %v1383
        %v1499 = vunpack.c.h.b16 %v1383
        %v1500 = vunpack.c.l.b16 %v1384
        %v1501 = vunpack.c.h.b16 %v1384
        %v1502 = vunpack.c.l.b16 %v1385
        %v1503 = vunpack.c.h.b16 %v1385
        %v1504 = vunpack.c.l.b16 %v1386
        %v1505 = vunpack.c.h.b16 %v1386
        %v1506 = vunpack.c.l.b16 %v1387
        %v1507 = vunpack.c.h.b16 %v1387
        %v1508 = vunpack.c.l.b16 %v1388
        %v1509 = vunpack.c.h.b16 %v1388
        %v1510 = vunpack.c.l.b16 %v1389
        %v1511 = vunpack.c.h.b16 %v1389
        %v1512 = vunpack.c.l.b16 %v1390
        %v1513 = vunpack.c.h.b16 %v1390
        %v1514 = vunpack.c.l.b16 %v1391
        %v1515 = vunpack.c.h.b16 %v1391
        %v1516 = vunpack.c.l.b16 %v1392
        %v1517 = vunpack.c.h.b16 %v1392
        %v1518 = vunpack.c.l.b16 %v1393
        %v1519 = vunpack.c.h.b16 %v1393
        %v1520 = vpack.c.b16 %v1460, %v1456
        %v1521 = vpack.c.b16 %v1461, %v1457
        %v1522 = vpack.c.b16 %v1462, %v1458
        %v1523 = vpack.c.b16 %v1463, %v1459
        %v1524 = vpack.c.b16 %v1468, %v1464
        %v1525 = vpack.c.b16 %v1469, %v1465
        %v1526 = vpack.c.b16 %v1470, %v1466
        %v1527 = vpack.c.b16 %v1471, %v1467
        %v1528 = vpack.c.b16 %v1476, %v1472
        %v1529 = vpack.c.b16 %v1477, %v1473
        %v1530 = vpack.c.b16 %v1478, %v1474
        %v1531 = vpack.c.b16 %v1479, %v1475
        %v1532 = vpack.c.b16 %v1484, %v1480
        %v1533 = vpack.c.b16 %v1485, %v1481
        %v1534 = vpack.c.b16 %v1486, %v1482
        %v1535 = vpack.c.b16 %v1487, %v1483
        %v1536 = vpack.c.b16 %v1492, %v1488
        %v1537 = vpack.c.b16 %v1493, %v1489
        %v1538 = vpack.c.b16 %v1494, %v1490
        %v1539 = vpack.c.b16 %v1495, %v1491
        %v1540 = vpack.c.b16 %v1500, %v1496
        %v1541 = vpack.c.b16 %v1501, %v1497
        %v1542 = vpack.c.b16 %v1502, %v1498
        %v1543 = vpack.c.b16 %v1503, %v1499
        %v1544 = vpack.c.b16 %v1508, %v1504
        %v1545 = vpack.c.b16 %v1509, %v1505
        %v1546 = vpack.c.b16 %v1510, %v1506
        %v1547 = vpack.c.b16 %v1511, %v1507
        %v1548 = vpack.c.b16 %v1516, %v1512
        %v1549 = vpack.c.b16 %v1517, %v1513
        %v1550 = vpack.c.b16 %v1518, %v1514
        %v1551 = vpack.c.b16 %v1519, %v1515
        %1584 = vmatprep.subr.bf16.mxu0 %v1549
        %1585 = vmatpush1.bf16.msra.mxu0 %v1548
        %1586 = vmatprep.subr.bf16.mxu0 %v1545
        %1587 = vmatpush1.bf16.msra.mxu0 %v1544
        %1588 = vmatprep.subr.bf16.mxu0 %v1541
        %1589 = vmatpush1.bf16.msra.mxu0 %v1540
        %1590 = vmatprep.subr.bf16.mxu0 %v1537
        %1591 = vmatpush1.bf16.msra.mxu0 %v1536
        %1592 = vmatprep.subr.bf16.mxu0 %v1533
        %1593 = vmatpush1.bf16.msra.mxu0 %v1532
        %1594 = vmatprep.subr.bf16.mxu0 %v1529
        %1595 = vmatpush1.bf16.msra.mxu0 %v1528
        %1596 = vmatprep.subr.bf16.mxu0 %v1525
        %1597 = vmatpush1.bf16.msra.mxu0 %v1524
        %1598 = vmatprep.subr.bf16.mxu0 %v1521
        %1599 = vmatpush1.bf16.msra.mxu0 %v1520
        %1600 = vmatprep.subr.bf16.mxu0 0
        %1601 = vmatpush2.bf16.msra.mxu0 0
        %1602 = vmatprep.subr.bf16.mxu0 0
        %1603 = vmatpush2.bf16.msra.mxu0 0
        %1604 = vmatprep.subr.bf16.mxu0 0
        %1605 = vmatpush2.bf16.msra.mxu0 0
        %1606 = vmatprep.subr.bf16.mxu0 0
        %1607 = vmatpush2.bf16.msra.mxu0 0
        %1608 = vmatprep.subr.bf16.mxu0 0
        %1609 = vmatpush2.bf16.msra.mxu0 0
        %1610 = vmatprep.subr.bf16.mxu0 0
        %1611 = vmatpush2.bf16.msra.mxu0 0
        %1612 = vmatprep.subr.bf16.mxu0 0
        %1613 = vmatpush2.bf16.msra.mxu0 0
        %1614 = vmatprep.subr.bf16.mxu0 0
        %1615 = vmatpush2.bf16.msra.mxu0 0
        %1616 = vmatprep.mubr.bf16.mxu0 0
        %1617 = vmatmul.mubr.bf16.gmra.mxu0 %v1394
        %v1618 = vpop.f32.mrf.mxu0
        %v1619 = vadd.f32 %v1407, %v1618
        %v1620 = vpop.f32.mrf.mxu0
        %v1621 = vadd.f32 %v1411, %v1620
        %v1622 = vpop.f32.mrf.mxu0
        %v1623 = vadd.f32 %v1407, %v1622
        %v1624 = vpop.f32.mrf.mxu0
        %v1625 = vadd.f32 %v1411, %v1624
        %1626 = vmatprep.mubr.bf16.mxu0 0
        %1627 = vmatmul.mubr.bf16.gmra.mxu0 %v1395
        %v1628 = vpop.f32.mrf.mxu0
        %v1629 = vadd.f32 %v1407, %v1628
        %v1630 = vpop.f32.mrf.mxu0
        %v1631 = vadd.f32 %v1411, %v1630
        %v1632 = vpop.f32.mrf.mxu0
        %v1633 = vadd.f32 %v1407, %v1632
        %v1634 = vpop.f32.mrf.mxu0
        %v1635 = vadd.f32 %v1411, %v1634
        %1636 = vmatprep.mubr.bf16.mxu0 0
        %1637 = vmatmul.mubr.bf16.gmra.mxu0 %v1396
        %v1638 = vpop.f32.mrf.mxu0
        %v1639 = vadd.f32 %v1407, %v1638
        %v1640 = vpop.f32.mrf.mxu0
        %v1641 = vadd.f32 %v1411, %v1640
        %v1642 = vpop.f32.mrf.mxu0
        %v1643 = vadd.f32 %v1407, %v1642
        %v1644 = vpop.f32.mrf.mxu0
        %v1645 = vadd.f32 %v1411, %v1644
        %1646 = vmatprep.mubr.bf16.mxu0 0
        %1647 = vmatmul.mubr.bf16.gmra.mxu0 %v1397
        %v1648 = vpop.f32.mrf.mxu0
        %v1649 = vadd.f32 %v1407, %v1648
        %v1650 = vpop.f32.mrf.mxu0
        %v1651 = vadd.f32 %v1411, %v1650
        %v1652 = vpop.f32.mrf.mxu0
        %v1653 = vadd.f32 %v1407, %v1652
        %v1654 = vpop.f32.mrf.mxu0
        %v1655 = vadd.f32 %v1411, %v1654
        %1656 = vmatprep.mubr.bf16.mxu0 0
        %1657 = vmatmul.mubr.bf16.gmra.mxu0 %v1398
        %v1658 = vpop.f32.mrf.mxu0
        %v1659 = vadd.f32 %v1407, %v1658
        %v1660 = vpop.f32.mrf.mxu0
        %v1661 = vadd.f32 %v1411, %v1660
        %v1662 = vpop.f32.mrf.mxu0
        %v1663 = vadd.f32 %v1407, %v1662
        %v1664 = vpop.f32.mrf.mxu0
        %v1665 = vadd.f32 %v1411, %v1664
        %1666 = vmatprep.mubr.bf16.mxu0 0
        %1667 = vmatmul.mubr.bf16.gmra.mxu0 %v1399
        %v1668 = vpop.f32.mrf.mxu0
        %v1669 = vadd.f32 %v1407, %v1668
        %v1670 = vpop.f32.mrf.mxu0
        %v1671 = vadd.f32 %v1411, %v1670
        %v1672 = vpop.f32.mrf.mxu0
        %v1673 = vadd.f32 %v1407, %v1672
        %v1674 = vpop.f32.mrf.mxu0
        %v1675 = vadd.f32 %v1411, %v1674
        %1676 = vmatprep.mubr.bf16.mxu0 0
        %1677 = vmatmul.mubr.bf16.gmra.mxu0 %v1400
        %v1678 = vpop.f32.mrf.mxu0
        %v1679 = vadd.f32 %v1407, %v1678
        %v1680 = vpop.f32.mrf.mxu0
        %v1681 = vadd.f32 %v1411, %v1680
        %v1682 = vpop.f32.mrf.mxu0
        %v1683 = vadd.f32 %v1407, %v1682
        %v1684 = vpop.f32.mrf.mxu0
        %v1685 = vadd.f32 %v1411, %v1684
        %1686 = vmatprep.mubr.bf16.mxu0 0
        %1687 = vmatmul.mubr.bf16.gmra.mxu0 %v1401
        %v1688 = vpop.f32.mrf.mxu0
        %v1689 = vadd.f32 %v1407, %v1688
        %v1690 = vpop.f32.mrf.mxu0
        %v1691 = vadd.f32 %v1411, %v1690
        %v1692 = vpop.f32.mrf.mxu0
        %v1693 = vadd.f32 %v1407, %v1692
        %v1694 = vpop.f32.mrf.mxu0
        %v1695 = vadd.f32 %v1411, %v1694
        %1696 = vdwg.mxu0
        %1697 = vmatprep.subr.bf16.mxu0 %v1551
        %1698 = vmatpush1.bf16.msra.mxu0 %v1550
        %1699 = vmatprep.subr.bf16.mxu0 %v1547
        %1700 = vmatpush1.bf16.msra.mxu0 %v1546
        %1701 = vmatprep.subr.bf16.mxu0 %v1543
        %1702 = vmatpush1.bf16.msra.mxu0 %v1542
        %1703 = vmatprep.subr.bf16.mxu0 %v1539
        %1704 = vmatpush1.bf16.msra.mxu0 %v1538
        %1705 = vmatprep.subr.bf16.mxu0 %v1535
        %1706 = vmatpush1.bf16.msra.mxu0 %v1534
        %1707 = vmatprep.subr.bf16.mxu0 %v1531
        %1708 = vmatpush1.bf16.msra.mxu0 %v1530
        %1709 = vmatprep.subr.bf16.mxu0 %v1527
        %1710 = vmatpush1.bf16.msra.mxu0 %v1526
        %1711 = vmatprep.subr.bf16.mxu0 %v1523
        %1712 = vmatpush1.bf16.msra.mxu0 %v1522
        %1713 = vmatprep.subr.bf16.mxu0 0
        %1714 = vmatpush2.bf16.msra.mxu0 0
        %1715 = vmatprep.subr.bf16.mxu0 0
        %1716 = vmatpush2.bf16.msra.mxu0 0
        %1717 = vmatprep.subr.bf16.mxu0 0
        %1718 = vmatpush2.bf16.msra.mxu0 0
        %1719 = vmatprep.subr.bf16.mxu0 0
        %1720 = vmatpush2.bf16.msra.mxu0 0
        %1721 = vmatprep.subr.bf16.mxu0 0
        %1722 = vmatpush2.bf16.msra.mxu0 0
        %1723 = vmatprep.subr.bf16.mxu0 0
        %1724 = vmatpush2.bf16.msra.mxu0 0
        %1725 = vmatprep.subr.bf16.mxu0 0
        %1726 = vmatpush2.bf16.msra.mxu0 0
        %1727 = vmatprep.subr.bf16.mxu0 0
        %1728 = vmatpush2.bf16.msra.mxu0 0
        %1729 = vmatprep.mubr.bf16.mxu0 0
        %1730 = vmatmul.mubr.bf16.gmra.mxu0 %v1394
        %v1731 = vpop.f32.mrf.mxu0
        %v1732 = vadd.f32 %v1415, %v1731
        %v1733 = vpop.f32.mrf.mxu0
        %v1734 = vadd.f32 %v1419, %v1733
        %v1735 = vpop.f32.mrf.mxu0
        %v1736 = vadd.f32 %v1415, %v1735
        %v1737 = vpop.f32.mrf.mxu0
        %v1738 = vadd.f32 %v1419, %v1737
        %1739 = vmatprep.mubr.bf16.mxu0 0
        %1740 = vmatmul.mubr.bf16.gmra.mxu0 %v1395
        %v1741 = vpop.f32.mrf.mxu0
        %v1742 = vadd.f32 %v1415, %v1741
        %v1743 = vpop.f32.mrf.mxu0
        %v1744 = vadd.f32 %v1419, %v1743
        %v1745 = vpop.f32.mrf.mxu0
        %v1746 = vadd.f32 %v1415, %v1745
        %v1747 = vpop.f32.mrf.mxu0
        %v1748 = vadd.f32 %v1419, %v1747
        %1749 = vmatprep.mubr.bf16.mxu0 0
        %1750 = vmatmul.mubr.bf16.gmra.mxu0 %v1396
        %v1751 = vpop.f32.mrf.mxu0
        %v1752 = vadd.f32 %v1415, %v1751
        %v1753 = vpop.f32.mrf.mxu0
        %v1754 = vadd.f32 %v1419, %v1753
        %v1755 = vpop.f32.mrf.mxu0
        %v1756 = vadd.f32 %v1415, %v1755
        %v1757 = vpop.f32.mrf.mxu0
        %v1758 = vadd.f32 %v1419, %v1757
        %1759 = vmatprep.mubr.bf16.mxu0 0
        %1760 = vmatmul.mubr.bf16.gmra.mxu0 %v1397
        %v1761 = vpop.f32.mrf.mxu0
        %v1762 = vadd.f32 %v1415, %v1761
        %v1763 = vpop.f32.mrf.mxu0
        %v1764 = vadd.f32 %v1419, %v1763
        %v1765 = vpop.f32.mrf.mxu0
        %v1766 = vadd.f32 %v1415, %v1765
        %v1767 = vpop.f32.mrf.mxu0
        %v1768 = vadd.f32 %v1419, %v1767
        %1769 = vmatprep.mubr.bf16.mxu0 0
        %1770 = vmatmul.mubr.bf16.gmra.mxu0 %v1398
        %v1771 = vpop.f32.mrf.mxu0
        %v1772 = vadd.f32 %v1415, %v1771
        %v1773 = vpop.f32.mrf.mxu0
        %v1774 = vadd.f32 %v1419, %v1773
        %v1775 = vpop.f32.mrf.mxu0
        %v1776 = vadd.f32 %v1415, %v1775
        %v1777 = vpop.f32.mrf.mxu0
        %v1778 = vadd.f32 %v1419, %v1777
        %1779 = vmatprep.mubr.bf16.mxu0 0
        %1780 = vmatmul.mubr.bf16.gmra.mxu0 %v1399
        %v1781 = vpop.f32.mrf.mxu0
        %v1782 = vadd.f32 %v1415, %v1781
        %v1783 = vpop.f32.mrf.mxu0
        %v1784 = vadd.f32 %v1419, %v1783
        %v1785 = vpop.f32.mrf.mxu0
        %v1786 = vadd.f32 %v1415, %v1785
        %v1787 = vpop.f32.mrf.mxu0
        %v1788 = vadd.f32 %v1419, %v1787
        %1789 = vmatprep.mubr.bf16.mxu0 0
        %1790 = vmatmul.mubr.bf16.gmra.mxu0 %v1400
        %v1791 = vpop.f32.mrf.mxu0
        %v1792 = vadd.f32 %v1415, %v1791
        %v1793 = vpop.f32.mrf.mxu0
        %v1794 = vadd.f32 %v1419, %v1793
        %v1795 = vpop.f32.mrf.mxu0
        %v1796 = vadd.f32 %v1415, %v1795
        %v1797 = vpop.f32.mrf.mxu0
        %v1798 = vadd.f32 %v1419, %v1797
        %1799 = vmatprep.mubr.bf16.mxu0 0
        %1800 = vmatmul.mubr.bf16.gmra.mxu0 %v1401
        %v1801 = vpop.f32.mrf.mxu0
        %v1802 = vadd.f32 %v1415, %v1801
        %v1803 = vpop.f32.mrf.mxu0
        %v1804 = vadd.f32 %v1419, %v1803
        %v1805 = vpop.f32.mrf.mxu0
        %v1806 = vadd.f32 %v1415, %v1805
        %v1807 = vpop.f32.mrf.mxu0
        %v1808 = vadd.f32 %v1419, %v1807
        %1809 = vdwg.mxu0
        %v1810 = vxor.u32 %v1732, 2147483648
        %v1811 = vxor.u32 %v1734, 2147483648
        %v1812 = vxor.u32 %v1736, 2147483648
        %v1813 = vxor.u32 %v1738, 2147483648
        %v1814 = vxor.u32 %v1742, 2147483648
        %v1815 = vxor.u32 %v1744, 2147483648
        %v1816 = vxor.u32 %v1746, 2147483648
        %v1817 = vxor.u32 %v1748, 2147483648
        %v1818 = vxor.u32 %v1752, 2147483648
        %v1819 = vxor.u32 %v1754, 2147483648
        %v1820 = vxor.u32 %v1756, 2147483648
        %v1821 = vxor.u32 %v1758, 2147483648
        %v1822 = vxor.u32 %v1762, 2147483648
        %v1823 = vxor.u32 %v1764, 2147483648
        %v1824 = vxor.u32 %v1766, 2147483648
        %v1825 = vxor.u32 %v1768, 2147483648
        %v1826 = vxor.u32 %v1772, 2147483648
        %v1827 = vxor.u32 %v1774, 2147483648
        %v1828 = vxor.u32 %v1776, 2147483648
        %v1829 = vxor.u32 %v1778, 2147483648
        %v1830 = vxor.u32 %v1782, 2147483648
        %v1831 = vxor.u32 %v1784, 2147483648
        %v1832 = vxor.u32 %v1786, 2147483648
        %v1833 = vxor.u32 %v1788, 2147483648
        %v1834 = vxor.u32 %v1792, 2147483648
        %v1835 = vxor.u32 %v1794, 2147483648
        %v1836 = vxor.u32 %v1796, 2147483648
        %v1837 = vxor.u32 %v1798, 2147483648
        %v1838 = vxor.u32 %v1802, 2147483648
        %v1839 = vxor.u32 %v1804, 2147483648
        %v1840 = vxor.u32 %v1806, 2147483648
        %v1841 = vxor.u32 %v1808, 2147483648
        %v1842 = vmul.f32 %v1810, 1.442695
        %v1843 = vpow.pop %v1842
        %v1844 = vmul.f32 %v1811, 1.442695
        %v1845 = vpow.pop %v1844
        %v1846 = vmul.f32 %v1812, 1.442695
        %v1847 = vpow.pop %v1846
        %v1848 = vmul.f32 %v1813, 1.442695
        %v1849 = vpow.pop %v1848
        %v1850 = vmul.f32 %v1814, 1.442695
        %v1851 = vpow.pop %v1850
        %v1852 = vmul.f32 %v1815, 1.442695
        %v1853 = vpow.pop %v1852
        %v1854 = vmul.f32 %v1816, 1.442695
        %v1855 = vpow.pop %v1854
        %v1856 = vmul.f32 %v1817, 1.442695
        %v1857 = vpow.pop %v1856
        %v1858 = vmul.f32 %v1818, 1.442695
        %v1859 = vpow.pop %v1858
        %v1860 = vmul.f32 %v1819, 1.442695
        %v1861 = vpow.pop %v1860
        %v1862 = vmul.f32 %v1820, 1.442695
        %v1863 = vpow.pop %v1862
        %v1864 = vmul.f32 %v1821, 1.442695
        %v1865 = vpow.pop %v1864
        %v1866 = vmul.f32 %v1822, 1.442695
        %v1867 = vpow.pop %v1866
        %v1868 = vmul.f32 %v1823, 1.442695
        %v1869 = vpow.pop %v1868
        %v1870 = vmul.f32 %v1824, 1.442695
        %v1871 = vpow.pop %v1870
        %v1872 = vmul.f32 %v1825, 1.442695
        %v1873 = vpow.pop %v1872
        %v1874 = vmul.f32 %v1826, 1.442695
        %v1875 = vpow.pop %v1874
        %v1876 = vmul.f32 %v1827, 1.442695
        %v1877 = vpow.pop %v1876
        %v1878 = vmul.f32 %v1828, 1.442695
        %v1879 = vpow.pop %v1878
        %v1880 = vmul.f32 %v1829, 1.442695
        %v1881 = vpow.pop %v1880
        %v1882 = vmul.f32 %v1830, 1.442695
        %v1883 = vpow.pop %v1882
        %v1884 = vmul.f32 %v1831, 1.442695
        %v1885 = vpow.pop %v1884
        %v1886 = vmul.f32 %v1832, 1.442695
        %v1887 = vpow.pop %v1886
        %v1888 = vmul.f32 %v1833, 1.442695
        %v1889 = vpow.pop %v1888
        %v1890 = vmul.f32 %v1834, 1.442695
        %v1891 = vpow.pop %v1890
        %v1892 = vmul.f32 %v1835, 1.442695
        %v1893 = vpow.pop %v1892
        %v1894 = vmul.f32 %v1836, 1.442695
        %v1895 = vpow.pop %v1894
        %v1896 = vmul.f32 %v1837, 1.442695
        %v1897 = vpow.pop %v1896
        %v1898 = vmul.f32 %v1838, 1.442695
        %v1899 = vpow.pop %v1898
        %v1900 = vmul.f32 %v1839, 1.442695
        %v1901 = vpow.pop %v1900
        %v1902 = vmul.f32 %v1840, 1.442695
        %v1903 = vpow.pop %v1902
        %v1904 = vmul.f32 %v1841, 1.442695
        %v1905 = vpow.pop %v1904
        %v1906 = vadd.f32 %v1843, 1.0
        %v1907 = vadd.f32 %v1845, 1.0
        %v1908 = vadd.f32 %v1847, 1.0
        %v1909 = vadd.f32 %v1849, 1.0
        %v1910 = vadd.f32 %v1851, 1.0
        %v1911 = vadd.f32 %v1853, 1.0
        %v1912 = vadd.f32 %v1855, 1.0
        %v1913 = vadd.f32 %v1857, 1.0
        %v1914 = vadd.f32 %v1859, 1.0
        %v1915 = vadd.f32 %v1861, 1.0
        %v1916 = vadd.f32 %v1863, 1.0
        %v1917 = vadd.f32 %v1865, 1.0
        %v1918 = vadd.f32 %v1867, 1.0
        %v1919 = vadd.f32 %v1869, 1.0
        %v1920 = vadd.f32 %v1871, 1.0
        %v1921 = vadd.f32 %v1873, 1.0
        %v1922 = vadd.f32 %v1875, 1.0
        %v1923 = vadd.f32 %v1877, 1.0
        %v1924 = vadd.f32 %v1879, 1.0
        %v1925 = vadd.f32 %v1881, 1.0
        %v1926 = vadd.f32 %v1883, 1.0
        %v1927 = vadd.f32 %v1885, 1.0
        %v1928 = vadd.f32 %v1887, 1.0
        %v1929 = vadd.f32 %v1889, 1.0
        %v1930 = vadd.f32 %v1891, 1.0
        %v1931 = vadd.f32 %v1893, 1.0
        %v1932 = vadd.f32 %v1895, 1.0
        %v1933 = vadd.f32 %v1897, 1.0
        %v1934 = vadd.f32 %v1899, 1.0
        %v1935 = vadd.f32 %v1901, 1.0
        %v1936 = vadd.f32 %v1903, 1.0
        %v1937 = vadd.f32 %v1905, 1.0
        %v1938 = vrcp.pop %v1906
        %v1939 = vmul.f32 1.0, %v1938
        %v1940 = vrcp.pop %v1907
        %v1941 = vmul.f32 1.0, %v1940
        %v1942 = vrcp.pop %v1908
        %v1943 = vmul.f32 1.0, %v1942
        %v1944 = vrcp.pop %v1909
        %v1945 = vmul.f32 1.0, %v1944
        %v1946 = vrcp.pop %v1910
        %v1947 = vmul.f32 1.0, %v1946
        %v1948 = vrcp.pop %v1911
        %v1949 = vmul.f32 1.0, %v1948
        %v1950 = vrcp.pop %v1912
        %v1951 = vmul.f32 1.0, %v1950
        %v1952 = vrcp.pop %v1913
        %v1953 = vmul.f32 1.0, %v1952
        %v1954 = vrcp.pop %v1914
        %v1955 = vmul.f32 1.0, %v1954
        %v1956 = vrcp.pop %v1915
        %v1957 = vmul.f32 1.0, %v1956
        %v1958 = vrcp.pop %v1916
        %v1959 = vmul.f32 1.0, %v1958
        %v1960 = vrcp.pop %v1917
        %v1961 = vmul.f32 1.0, %v1960
        %v1962 = vrcp.pop %v1918
        %v1963 = vmul.f32 1.0, %v1962
        %v1964 = vrcp.pop %v1919
        %v1965 = vmul.f32 1.0, %v1964
        %v1966 = vrcp.pop %v1920
        %v1967 = vmul.f32 1.0, %v1966
        %v1968 = vrcp.pop %v1921
        %v1969 = vmul.f32 1.0, %v1968
        %v1970 = vrcp.pop %v1922
        %v1971 = vmul.f32 1.0, %v1970
        %v1972 = vrcp.pop %v1923
        %v1973 = vmul.f32 1.0, %v1972
        %v1974 = vrcp.pop %v1924
        %v1975 = vmul.f32 1.0, %v1974
        %v1976 = vrcp.pop %v1925
        %v1977 = vmul.f32 1.0, %v1976
        %v1978 = vrcp.pop %v1926
        %v1979 = vmul.f32 1.0, %v1978
        %v1980 = vrcp.pop %v1927
        %v1981 = vmul.f32 1.0, %v1980
        %v1982 = vrcp.pop %v1928
        %v1983 = vmul.f32 1.0, %v1982
        %v1984 = vrcp.pop %v1929
        %v1985 = vmul.f32 1.0, %v1984
        %v1986 = vrcp.pop %v1930
        %v1987 = vmul.f32 1.0, %v1986
        %v1988 = vrcp.pop %v1931
        %v1989 = vmul.f32 1.0, %v1988
        %v1990 = vrcp.pop %v1932
        %v1991 = vmul.f32 1.0, %v1990
        %v1992 = vrcp.pop %v1933
        %v1993 = vmul.f32 1.0, %v1992
        %v1994 = vrcp.pop %v1934
        %v1995 = vmul.f32 1.0, %v1994
        %v1996 = vrcp.pop %v1935
        %v1997 = vmul.f32 1.0, %v1996
        %v1998 = vrcp.pop %v1936
        %v1999 = vmul.f32 1.0, %v1998
        %v2000 = vrcp.pop %v1937
        %v2001 = vmul.f32 1.0, %v2000
        %v2002 = vmul.f32 %v1619, %v1939
        %v2003 = vmul.f32 %v1621, %v1941
        %v2004 = vmul.f32 %v1623, %v1943
        %v2005 = vmul.f32 %v1625, %v1945
        %v2006 = vmul.f32 %v1629, %v1947
        %v2007 = vmul.f32 %v1631, %v1949
        %v2008 = vmul.f32 %v1633, %v1951
        %v2009 = vmul.f32 %v1635, %v1953
        %v2010 = vmul.f32 %v1639, %v1955
        %v2011 = vmul.f32 %v1641, %v1957
        %v2012 = vmul.f32 %v1643, %v1959
        %v2013 = vmul.f32 %v1645, %v1961
        %v2014 = vmul.f32 %v1649, %v1963
        %v2015 = vmul.f32 %v1651, %v1965
        %v2016 = vmul.f32 %v1653, %v1967
        %v2017 = vmul.f32 %v1655, %v1969
        %v2018 = vmul.f32 %v1659, %v1971
        %v2019 = vmul.f32 %v1661, %v1973
        %v2020 = vmul.f32 %v1663, %v1975
        %v2021 = vmul.f32 %v1665, %v1977
        %v2022 = vmul.f32 %v1669, %v1979
        %v2023 = vmul.f32 %v1671, %v1981
        %v2024 = vmul.f32 %v1673, %v1983
        %v2025 = vmul.f32 %v1675, %v1985
        %v2026 = vmul.f32 %v1679, %v1987
        %v2027 = vmul.f32 %v1681, %v1989
        %v2028 = vmul.f32 %v1683, %v1991
        %v2029 = vmul.f32 %v1685, %v1993
        %v2030 = vmul.f32 %v1689, %v1995
        %v2031 = vmul.f32 %v1691, %v1997
        %v2032 = vmul.f32 %v1693, %v1999
        %v2033 = vmul.f32 %v1695, %v2001
        %v2034 = vld [vmem:[%s15] sm:$0xf]
        %v2035 = vld [vmem:[%s15 + $0x4] sm:$0xf]
        %v2036 = vld [vmem:[%s15 + $0x8] sm:$0xf]
        %v2037 = vld [vmem:[%s15 + $0xc] sm:$0xf]
        %v2038 = vld [vmem:[%s15 + $0x10] sm:$0xf]
        %v2039 = vld [vmem:[%s15 + $0x14] sm:$0xf]
        %v2040 = vld [vmem:[%s15 + $0x18] sm:$0xf]
        %v2041 = vld [vmem:[%s15 + $0x1c] sm:$0xf]
        %v2042 = vld [vmem:[%s15 + $0x20] sm:$0xf]
        %v2043 = vld [vmem:[%s15 + $0x24] sm:$0xf]
        %v2044 = vld [vmem:[%s15 + $0x28] sm:$0xf]
        %v2045 = vld [vmem:[%s15 + $0x2c] sm:$0xf]
        %v2046 = vld [vmem:[%s15 + $0x30] sm:$0xf]
        %v2047 = vld [vmem:[%s15 + $0x34] sm:$0xf]
        %v2048 = vld [vmem:[%s15 + $0x38] sm:$0xf]
        %v2049 = vld [vmem:[%s15 + $0x3c] sm:$0xf]
        %v2050 = vld [vmem:[%s15 + $0x40] sm:$0xf]
        %v2051 = vld [vmem:[%s15 + $0x44] sm:$0xf]
        %v2052 = vld [vmem:[%s15 + $0x48] sm:$0xf]
        %v2053 = vld [vmem:[%s15 + $0x4c] sm:$0xf]
        %v2054 = vld [vmem:[%s15 + $0x50] sm:$0xf]
        %v2055 = vld [vmem:[%s15 + $0x54] sm:$0xf]
        %v2056 = vld [vmem:[%s15 + $0x58] sm:$0xf]
        %v2057 = vld [vmem:[%s15 + $0x5c] sm:$0xf]
        %v2058 = vld [vmem:[%s15 + $0x60] sm:$0xf]
        %v2059 = vld [vmem:[%s15 + $0x64] sm:$0xf]
        %v2060 = vld [vmem:[%s15 + $0x68] sm:$0xf]
        %v2061 = vld [vmem:[%s15 + $0x6c] sm:$0xf]
        %v2062 = vld [vmem:[%s15 + $0x70] sm:$0xf]
        %v2063 = vld [vmem:[%s15 + $0x74] sm:$0xf]
        %v2064 = vld [vmem:[%s15 + $0x78] sm:$0xf]
        %v2065 = vld [vmem:[%s15 + $0x7c] sm:$0xf]
        %v2066 = vpack.c.bf16 %v2004, %v2002
        %v2067 = vpack.c.bf16 %v2005, %v2003
        %v2068 = vpack.c.bf16 %v2008, %v2006
        %v2069 = vpack.c.bf16 %v2009, %v2007
        %v2070 = vpack.c.bf16 %v2012, %v2010
        %v2071 = vpack.c.bf16 %v2013, %v2011
        %v2072 = vpack.c.bf16 %v2016, %v2014
        %v2073 = vpack.c.bf16 %v2017, %v2015
        %v2074 = vpack.c.bf16 %v2020, %v2018
        %v2075 = vpack.c.bf16 %v2021, %v2019
        %v2076 = vpack.c.bf16 %v2024, %v2022
        %v2077 = vpack.c.bf16 %v2025, %v2023
        %v2078 = vpack.c.bf16 %v2028, %v2026
        %v2079 = vpack.c.bf16 %v2029, %v2027
        %v2080 = vpack.c.bf16 %v2032, %v2030
        %v2081 = vpack.c.bf16 %v2033, %v2031
        %v2114 = vunpack.c.l.b16 %v2034
        %v2115 = vunpack.c.l.b16 %v2035
        %v2116 = vunpack.c.l.b16 %v2036
        %v2117 = vunpack.c.l.b16 %v2037
        %v2118 = vunpack.c.l.b16 %v2038
        %v2119 = vunpack.c.l.b16 %v2039
        %v2120 = vunpack.c.l.b16 %v2040
        %v2121 = vunpack.c.l.b16 %v2041
        %v2122 = vunpack.c.l.b16 %v2042
        %v2123 = vunpack.c.l.b16 %v2043
        %v2124 = vunpack.c.l.b16 %v2044
        %v2125 = vunpack.c.l.b16 %v2045
        %v2126 = vunpack.c.l.b16 %v2046
        %v2127 = vunpack.c.l.b16 %v2047
        %v2128 = vunpack.c.l.b16 %v2048
        %v2129 = vunpack.c.l.b16 %v2049
        %v2130 = vunpack.c.l.b16 %v2050
        %v2131 = vunpack.c.l.b16 %v2051
        %v2132 = vunpack.c.l.b16 %v2052
        %v2133 = vunpack.c.l.b16 %v2053
        %v2134 = vunpack.c.l.b16 %v2054
        %v2135 = vunpack.c.l.b16 %v2055
        %v2136 = vunpack.c.l.b16 %v2056
        %v2137 = vunpack.c.l.b16 %v2057
        %v2138 = vunpack.c.l.b16 %v2058
        %v2139 = vunpack.c.l.b16 %v2059
        %v2140 = vunpack.c.l.b16 %v2060
        %v2141 = vunpack.c.l.b16 %v2061
        %v2142 = vunpack.c.l.b16 %v2062
        %v2143 = vunpack.c.l.b16 %v2063
        %v2144 = vunpack.c.l.b16 %v2064
        %v2145 = vunpack.c.l.b16 %v2065
        %v2146 = vpack.c.b16 %v2115, %v2114
        %v2147 = vpack.c.b16 %v2117, %v2116
        %v2148 = vpack.c.b16 %v2119, %v2118
        %v2149 = vpack.c.b16 %v2121, %v2120
        %v2150 = vpack.c.b16 %v2123, %v2122
        %v2151 = vpack.c.b16 %v2125, %v2124
        %v2152 = vpack.c.b16 %v2127, %v2126
        %v2153 = vpack.c.b16 %v2129, %v2128
        %v2154 = vpack.c.b16 %v2131, %v2130
        %v2155 = vpack.c.b16 %v2133, %v2132
        %v2156 = vpack.c.b16 %v2135, %v2134
        %v2157 = vpack.c.b16 %v2137, %v2136
        %v2158 = vpack.c.b16 %v2139, %v2138
        %v2159 = vpack.c.b16 %v2141, %v2140
        %v2160 = vpack.c.b16 %v2143, %v2142
        %v2161 = vpack.c.b16 %v2145, %v2144
        %2178 = vmatprep.subr.bf16.mxu0 0
        %2179 = vmatpush1.bf16.msra.mxu0 %v2153
        %2180 = vmatprep.subr.bf16.mxu0 0
        %2181 = vmatpush1.bf16.msra.mxu0 %v2152
        %2182 = vmatprep.subr.bf16.mxu0 0
        %2183 = vmatpush1.bf16.msra.mxu0 %v2151
        %2184 = vmatprep.subr.bf16.mxu0 0
        %2185 = vmatpush1.bf16.msra.mxu0 %v2150
        %2186 = vmatprep.subr.bf16.mxu0 0
        %2187 = vmatpush1.bf16.msra.mxu0 %v2149
        %2188 = vmatprep.subr.bf16.mxu0 0
        %2189 = vmatpush1.bf16.msra.mxu0 %v2148
        %2190 = vmatprep.subr.bf16.mxu0 0
        %2191 = vmatpush1.bf16.msra.mxu0 %v2147
        %2192 = vmatprep.subr.bf16.mxu0 0
        %2193 = vmatpush1.bf16.msra.mxu0 %v2146
        %2194 = vmatprep.subr.bf16.mxu0 0
        %2195 = vmatpush2.bf16.msra.mxu0 %v2161
        %2196 = vmatprep.subr.bf16.mxu0 0
        %2197 = vmatpush2.bf16.msra.mxu0 %v2160
        %2198 = vmatprep.subr.bf16.mxu0 0
        %2199 = vmatpush2.bf16.msra.mxu0 %v2159
        %2200 = vmatprep.subr.bf16.mxu0 0
        %2201 = vmatpush2.bf16.msra.mxu0 %v2158
        %2202 = vmatprep.subr.bf16.mxu0 0
        %2203 = vmatpush2.bf16.msra.mxu0 %v2157
        %2204 = vmatprep.subr.bf16.mxu0 0
        %2205 = vmatpush2.bf16.msra.mxu0 %v2156
        %2206 = vmatprep.subr.bf16.mxu0 0
        %2207 = vmatpush2.bf16.msra.mxu0 %v2155
        %2208 = vmatprep.subr.bf16.mxu0 0
        %2209 = vmatpush2.bf16.msra.mxu0 %v2154
        %2210 = vmatprep.mubr.bf16.mxu0 %v2067
        %2211 = vmatmul.mubr.bf16.gmra.mxu0 %v2066
        %v2212 = vpop.f32.mrf.mxu0
        %v2213 = vadd.f32 0.0, %v2212
        %v2214 = vpop.f32.mrf.mxu0
        %v2215 = vpop.f32.mrf.mxu0
        %v2216 = vadd.f32 0.0, %v2215
        %v2217 = vpop.f32.mrf.mxu0
        %2218 = vmatprep.mubr.bf16.mxu0 %v2069
        %2219 = vmatmul.mubr.bf16.gmra.mxu0 %v2068
        %v2220 = vpop.f32.mrf.mxu0
        %v2221 = vadd.f32 0.0, %v2220
        %v2222 = vpop.f32.mrf.mxu0
        %v2223 = vpop.f32.mrf.mxu0
        %v2224 = vadd.f32 0.0, %v2223
        %v2225 = vpop.f32.mrf.mxu0
        %2226 = vmatprep.mubr.bf16.mxu0 %v2071
        %2227 = vmatmul.mubr.bf16.gmra.mxu0 %v2070
        %v2228 = vpop.f32.mrf.mxu0
        %v2229 = vadd.f32 0.0, %v2228
        %v2230 = vpop.f32.mrf.mxu0
        %v2231 = vpop.f32.mrf.mxu0
        %v2232 = vadd.f32 0.0, %v2231
        %v2233 = vpop.f32.mrf.mxu0
        %2234 = vmatprep.mubr.bf16.mxu0 %v2073
        %2235 = vmatmul.mubr.bf16.gmra.mxu0 %v2072
        %v2236 = vpop.f32.mrf.mxu0
        %v2237 = vadd.f32 0.0, %v2236
        %v2238 = vpop.f32.mrf.mxu0
        %v2239 = vpop.f32.mrf.mxu0
        %v2240 = vadd.f32 0.0, %v2239
        %v2241 = vpop.f32.mrf.mxu0
        %2242 = vmatprep.mubr.bf16.mxu0 %v2075
        %2243 = vmatmul.mubr.bf16.gmra.mxu0 %v2074
        %v2244 = vpop.f32.mrf.mxu0
        %v2245 = vadd.f32 0.0, %v2244
        %v2246 = vpop.f32.mrf.mxu0
        %v2247 = vpop.f32.mrf.mxu0
        %v2248 = vadd.f32 0.0, %v2247
        %v2249 = vpop.f32.mrf.mxu0
        %2250 = vmatprep.mubr.bf16.mxu0 %v2077
        %2251 = vmatmul.mubr.bf16.gmra.mxu0 %v2076
        %v2252 = vpop.f32.mrf.mxu0
        %v2253 = vadd.f32 0.0, %v2252
        %v2254 = vpop.f32.mrf.mxu0
        %v2255 = vpop.f32.mrf.mxu0
        %v2256 = vadd.f32 0.0, %v2255
        %v2257 = vpop.f32.mrf.mxu0
        %2258 = vmatprep.mubr.bf16.mxu0 %v2079
        %2259 = vmatmul.mubr.bf16.gmra.mxu0 %v2078
        %v2260 = vpop.f32.mrf.mxu0
        %v2261 = vadd.f32 0.0, %v2260
        %v2262 = vpop.f32.mrf.mxu0
        %v2263 = vpop.f32.mrf.mxu0
        %v2264 = vadd.f32 0.0, %v2263
        %v2265 = vpop.f32.mrf.mxu0
        %2266 = vmatprep.mubr.bf16.mxu0 %v2081
        %2267 = vmatmul.mubr.bf16.gmra.mxu0 %v2080
        %v2268 = vpop.f32.mrf.mxu0
        %v2269 = vadd.f32 0.0, %v2268
        %v2270 = vpop.f32.mrf.mxu0
        %v2271 = vpop.f32.mrf.mxu0
        %v2272 = vadd.f32 0.0, %v2271
        %v2273 = vpop.f32.mrf.mxu0
        %2274 = vdwg.mxu0
        %v2275 = vadd.f32 %v1123, %v2213
        %v2276 = vadd.f32 %v1124, %v2216
        %v2277 = vadd.f32 %v1125, %v2221
        %v2278 = vadd.f32 %v1126, %v2224
        %v2279 = vadd.f32 %v1127, %v2229
        %v2280 = vadd.f32 %v1128, %v2232
        %v2281 = vadd.f32 %v1129, %v2237
        %v2282 = vadd.f32 %v1130, %v2240
        %v2283 = vadd.f32 %v1131, %v2245
        %v2284 = vadd.f32 %v1132, %v2248
        %v2285 = vadd.f32 %v1133, %v2253
        %v2286 = vadd.f32 %v1134, %v2256
        %v2287 = vadd.f32 %v1135, %v2261
        %v2288 = vadd.f32 %v1136, %v2264
        %v2289 = vadd.f32 %v1137, %v2269
        %v2290 = vadd.f32 %v1138, %v2272
        %v2291 = vld [vmem:[%s17] sm:$0x1]
        %v2293 = vlaneseq
        %v2294 = vshrl.u32 %v2293, 7
        %v2295 = vsub.s32 0, %v2294
        %v2296 = vrot.slane %v2291, %v2295
        %v2298 = vadd.f32 %v2275, %v2296
        %v2299 = vadd.f32 %v2276, %v2296
        %v2300 = vadd.f32 %v2277, %v2296
        %v2301 = vadd.f32 %v2278, %v2296
        %v2302 = vadd.f32 %v2279, %v2296
        %v2303 = vadd.f32 %v2280, %v2296
        %v2304 = vadd.f32 %v2281, %v2296
        %v2305 = vadd.f32 %v2282, %v2296
        %v2306 = vadd.f32 %v2283, %v2296
        %v2307 = vadd.f32 %v2284, %v2296
        %v2308 = vadd.f32 %v2285, %v2296
        %v2309 = vadd.f32 %v2286, %v2296
        %v2310 = vadd.f32 %v2287, %v2296
        %v2311 = vadd.f32 %v2288, %v2296
        %v2312 = vadd.f32 %v2289, %v2296
        %v2313 = vadd.f32 %v2290, %v2296
        %v2314 = vld [vmem:[%s19] sm:$0x1]
        %v2315 = vld [vmem:[%s21] sm:$0x1]
        %2316 = vadd.xlane.f32.xlu0 %v2298
        %v2317 = vpop.xlane.xlu0 %2316
        %2318 = vadd.xlane.f32.xlu0 %v2299
        %v2319 = vpop.xlane.xlu0 %2318
        %2320 = vadd.xlane.f32.xlu0 %v2300
        %v2321 = vpop.xlane.xlu0 %2320
        %2322 = vadd.xlane.f32.xlu0 %v2301
        %v2323 = vpop.xlane.xlu0 %2322
        %2324 = vadd.xlane.f32.xlu0 %v2302
        %v2325 = vpop.xlane.xlu0 %2324
        %2326 = vadd.xlane.f32.xlu0 %v2303
        %v2327 = vpop.xlane.xlu0 %2326
        %2328 = vadd.xlane.f32.xlu0 %v2304
        %v2329 = vpop.xlane.xlu0 %2328
        %2330 = vadd.xlane.f32.xlu0 %v2305
        %v2331 = vpop.xlane.xlu0 %2330
        %2332 = vadd.xlane.f32.xlu0 %v2306
        %v2333 = vpop.xlane.xlu0 %2332
        %2334 = vadd.xlane.f32.xlu0 %v2307
        %v2335 = vpop.xlane.xlu0 %2334
        %2336 = vadd.xlane.f32.xlu0 %v2308
        %v2337 = vpop.xlane.xlu0 %2336
        %2338 = vadd.xlane.f32.xlu0 %v2309
        %v2339 = vpop.xlane.xlu0 %2338
        %2340 = vadd.xlane.f32.xlu0 %v2310
        %v2341 = vpop.xlane.xlu0 %2340
        %2342 = vadd.xlane.f32.xlu0 %v2311
        %v2343 = vpop.xlane.xlu0 %2342
        %2344 = vadd.xlane.f32.xlu0 %v2312
        %v2345 = vpop.xlane.xlu0 %2344
        %2346 = vadd.xlane.f32.xlu0 %v2313
        %v2347 = vpop.xlane.xlu0 %2346
        %v2348 = vmul.f32 %v2317, %v1173
        %v2349 = vmul.f32 %v2319, %v1173
        %v2350 = vmul.f32 %v2321, %v1173
        %v2351 = vmul.f32 %v2323, %v1173
        %v2352 = vmul.f32 %v2325, %v1173
        %v2353 = vmul.f32 %v2327, %v1173
        %v2354 = vmul.f32 %v2329, %v1173
        %v2355 = vmul.f32 %v2331, %v1173
        %v2356 = vmul.f32 %v2333, %v1173
        %v2357 = vmul.f32 %v2335, %v1173
        %v2358 = vmul.f32 %v2337, %v1173
        %v2359 = vmul.f32 %v2339, %v1173
        %v2360 = vmul.f32 %v2341, %v1173
        %v2361 = vmul.f32 %v2343, %v1173
        %v2362 = vmul.f32 %v2345, %v1173
        %v2363 = vmul.f32 %v2347, %v1173
        %v2364 = vsub.f32 %v2298, %v2348
        %v2365 = vsub.f32 %v2299, %v2349
        %v2366 = vsub.f32 %v2300, %v2350
        %v2367 = vsub.f32 %v2301, %v2351
        %v2368 = vsub.f32 %v2302, %v2352
        %v2369 = vsub.f32 %v2303, %v2353
        %v2370 = vsub.f32 %v2304, %v2354
        %v2371 = vsub.f32 %v2305, %v2355
        %v2372 = vsub.f32 %v2306, %v2356
        %v2373 = vsub.f32 %v2307, %v2357
        %v2374 = vsub.f32 %v2308, %v2358
        %v2375 = vsub.f32 %v2309, %v2359
        %v2376 = vsub.f32 %v2310, %v2360
        %v2377 = vsub.f32 %v2311, %v2361
        %v2378 = vsub.f32 %v2312, %v2362
        %v2379 = vsub.f32 %v2313, %v2363
        %v2380 = vmul.f32 %v2364, %v2364
        %v2381 = vmul.f32 %v2365, %v2365
        %v2382 = vmul.f32 %v2366, %v2366
        %v2383 = vmul.f32 %v2367, %v2367
        %v2384 = vmul.f32 %v2368, %v2368
        %v2385 = vmul.f32 %v2369, %v2369
        %v2386 = vmul.f32 %v2370, %v2370
        %v2387 = vmul.f32 %v2371, %v2371
        %v2388 = vmul.f32 %v2372, %v2372
        %v2389 = vmul.f32 %v2373, %v2373
        %v2390 = vmul.f32 %v2374, %v2374
        %v2391 = vmul.f32 %v2375, %v2375
        %v2392 = vmul.f32 %v2376, %v2376
        %v2393 = vmul.f32 %v2377, %v2377
        %v2394 = vmul.f32 %v2378, %v2378
        %v2395 = vmul.f32 %v2379, %v2379
        %2396 = vadd.xlane.f32.xlu0 %v2380
        %v2397 = vpop.xlane.xlu0 %2396
        %2398 = vadd.xlane.f32.xlu0 %v2381
        %v2399 = vpop.xlane.xlu0 %2398
        %2400 = vadd.xlane.f32.xlu0 %v2382
        %v2401 = vpop.xlane.xlu0 %2400
        %2402 = vadd.xlane.f32.xlu0 %v2383
        %v2403 = vpop.xlane.xlu0 %2402
        %2404 = vadd.xlane.f32.xlu0 %v2384
        %v2405 = vpop.xlane.xlu0 %2404
        %2406 = vadd.xlane.f32.xlu0 %v2385
        %v2407 = vpop.xlane.xlu0 %2406
        %2408 = vadd.xlane.f32.xlu0 %v2386
        %v2409 = vpop.xlane.xlu0 %2408
        %2410 = vadd.xlane.f32.xlu0 %v2387
        %v2411 = vpop.xlane.xlu0 %2410
        %2412 = vadd.xlane.f32.xlu0 %v2388
        %v2413 = vpop.xlane.xlu0 %2412
        %2414 = vadd.xlane.f32.xlu0 %v2389
        %v2415 = vpop.xlane.xlu0 %2414
        %2416 = vadd.xlane.f32.xlu0 %v2390
        %v2417 = vpop.xlane.xlu0 %2416
        %2418 = vadd.xlane.f32.xlu0 %v2391
        %v2419 = vpop.xlane.xlu0 %2418
        %2420 = vadd.xlane.f32.xlu0 %v2392
        %v2421 = vpop.xlane.xlu0 %2420
        %2422 = vadd.xlane.f32.xlu0 %v2393
        %v2423 = vpop.xlane.xlu0 %2422
        %2424 = vadd.xlane.f32.xlu0 %v2394
        %v2425 = vpop.xlane.xlu0 %2424
        %2426 = vadd.xlane.f32.xlu0 %v2395
        %v2427 = vpop.xlane.xlu0 %2426
        %v2428 = vmul.f32 %v2397, %v1173
        %v2429 = vmul.f32 %v2399, %v1173
        %v2430 = vmul.f32 %v2401, %v1173
        %v2431 = vmul.f32 %v2403, %v1173
        %v2432 = vmul.f32 %v2405, %v1173
        %v2433 = vmul.f32 %v2407, %v1173
        %v2434 = vmul.f32 %v2409, %v1173
        %v2435 = vmul.f32 %v2411, %v1173
        %v2436 = vmul.f32 %v2413, %v1173
        %v2437 = vmul.f32 %v2415, %v1173
        %v2438 = vmul.f32 %v2417, %v1173
        %v2439 = vmul.f32 %v2419, %v1173
        %v2440 = vmul.f32 %v2421, %v1173
        %v2441 = vmul.f32 %v2423, %v1173
        %v2442 = vmul.f32 %v2425, %v1173
        %v2443 = vmul.f32 %v2427, %v1173
        %v2444 = vadd.f32 %v2428, 1e-05
        %v2445 = vadd.f32 %v2429, 1e-05
        %v2446 = vadd.f32 %v2430, 1e-05
        %v2447 = vadd.f32 %v2431, 1e-05
        %v2448 = vadd.f32 %v2432, 1e-05
        %v2449 = vadd.f32 %v2433, 1e-05
        %v2450 = vadd.f32 %v2434, 1e-05
        %v2451 = vadd.f32 %v2435, 1e-05
        %v2452 = vadd.f32 %v2436, 1e-05
        %v2453 = vadd.f32 %v2437, 1e-05
        %v2454 = vadd.f32 %v2438, 1e-05
        %v2455 = vadd.f32 %v2439, 1e-05
        %v2456 = vadd.f32 %v2440, 1e-05
        %v2457 = vadd.f32 %v2441, 1e-05
        %v2458 = vadd.f32 %v2442, 1e-05
        %v2459 = vadd.f32 %v2443, 1e-05
        %v2460 = vrsqrt.pop %v2444
        %v2461 = vrsqrt.pop %v2445
        %v2462 = vrsqrt.pop %v2446
        %v2463 = vrsqrt.pop %v2447
        %v2464 = vrsqrt.pop %v2448
        %v2465 = vrsqrt.pop %v2449
        %v2466 = vrsqrt.pop %v2450
        %v2467 = vrsqrt.pop %v2451
        %v2468 = vrsqrt.pop %v2452
        %v2469 = vrsqrt.pop %v2453
        %v2470 = vrsqrt.pop %v2454
        %v2471 = vrsqrt.pop %v2455
        %v2472 = vrsqrt.pop %v2456
        %v2473 = vrsqrt.pop %v2457
        %v2474 = vrsqrt.pop %v2458
        %v2475 = vrsqrt.pop %v2459
        %v2476 = vmul.f32 %v2364, %v2460
        %v2477 = vmul.f32 %v2365, %v2461
        %v2478 = vmul.f32 %v2366, %v2462
        %v2479 = vmul.f32 %v2367, %v2463
        %v2480 = vmul.f32 %v2368, %v2464
        %v2481 = vmul.f32 %v2369, %v2465
        %v2482 = vmul.f32 %v2370, %v2466
        %v2483 = vmul.f32 %v2371, %v2467
        %v2484 = vmul.f32 %v2372, %v2468
        %v2485 = vmul.f32 %v2373, %v2469
        %v2486 = vmul.f32 %v2374, %v2470
        %v2487 = vmul.f32 %v2375, %v2471
        %v2488 = vmul.f32 %v2376, %v2472
        %v2489 = vmul.f32 %v2377, %v2473
        %v2490 = vmul.f32 %v2378, %v2474
        %v2491 = vmul.f32 %v2379, %v2475
        %v2493 = vlaneseq
        %v2494 = vshrl.u32 %v2493, 7
        %v2495 = vsub.s32 0, %v2494
        %v2496 = vrot.slane %v2314, %v2495
        %v2498 = vmul.f32 %v2476, %v2496
        %v2499 = vmul.f32 %v2477, %v2496
        %v2500 = vmul.f32 %v2478, %v2496
        %v2501 = vmul.f32 %v2479, %v2496
        %v2502 = vmul.f32 %v2480, %v2496
        %v2503 = vmul.f32 %v2481, %v2496
        %v2504 = vmul.f32 %v2482, %v2496
        %v2505 = vmul.f32 %v2483, %v2496
        %v2506 = vmul.f32 %v2484, %v2496
        %v2507 = vmul.f32 %v2485, %v2496
        %v2508 = vmul.f32 %v2486, %v2496
        %v2509 = vmul.f32 %v2487, %v2496
        %v2510 = vmul.f32 %v2488, %v2496
        %v2511 = vmul.f32 %v2489, %v2496
        %v2512 = vmul.f32 %v2490, %v2496
        %v2513 = vmul.f32 %v2491, %v2496
        %v2515 = vlaneseq
        %v2516 = vshrl.u32 %v2515, 7
        %v2517 = vsub.s32 0, %v2516
        %v2518 = vrot.slane %v2315, %v2517
        %v2520 = vadd.f32 %v2498, %v2518
        %v2521 = vadd.f32 %v2499, %v2518
        %v2522 = vadd.f32 %v2500, %v2518
        %v2523 = vadd.f32 %v2501, %v2518
        %v2524 = vadd.f32 %v2502, %v2518
        %v2525 = vadd.f32 %v2503, %v2518
        %v2526 = vadd.f32 %v2504, %v2518
        %v2527 = vadd.f32 %v2505, %v2518
        %v2528 = vadd.f32 %v2506, %v2518
        %v2529 = vadd.f32 %v2507, %v2518
        %v2530 = vadd.f32 %v2508, %v2518
        %v2531 = vadd.f32 %v2509, %v2518
        %v2532 = vadd.f32 %v2510, %v2518
        %v2533 = vadd.f32 %v2511, %v2518
        %v2534 = vadd.f32 %v2512, %v2518
        %v2535 = vadd.f32 %v2513, %v2518
        %v2536 = vld [vmem:[%s23] sm:$0xff]
        %v2537 = vld [vmem:[%s23 + $0x8] sm:$0xf]
        %v2538 = vld [vmem:[%s23 + $0xc] sm:$0xff]
        %v2539 = vld [vmem:[%s23 + $0x14] sm:$0xf]
        %v2540 = vld [vmem:[%s23 + $0x18] sm:$0xff]
        %v2541 = vld [vmem:[%s23 + $0x20] sm:$0xf]
        %v2542 = vld [vmem:[%s23 + $0x24] sm:$0xff]
        %v2543 = vld [vmem:[%s23 + $0x2c] sm:$0xf]
        %v2544 = vld [vmem:[%s23 + $0x30] sm:$0xff]
        %v2545 = vld [vmem:[%s23 + $0x38] sm:$0xf]
        %v2546 = vld [vmem:[%s23 + $0x3c] sm:$0xff]
        %v2547 = vld [vmem:[%s23 + $0x44] sm:$0xf]
        %v2548 = vld [vmem:[%s23 + $0x48] sm:$0xff]
        %v2549 = vld [vmem:[%s23 + $0x50] sm:$0xf]
        %v2550 = vld [vmem:[%s23 + $0x54] sm:$0xff]
        %v2551 = vld [vmem:[%s23 + $0x5c] sm:$0xf]
        %v2552 = vld [vmem:[%s23 + $0x60] sm:$0xff]
        %v2553 = vld [vmem:[%s23 + $0x68] sm:$0xf]
        %v2554 = vld [vmem:[%s23 + $0x6c] sm:$0xff]
        %v2555 = vld [vmem:[%s23 + $0x74] sm:$0xf]
        %v2556 = vld [vmem:[%s23 + $0x78] sm:$0xff]
        %v2557 = vld [vmem:[%s23 + $0x80] sm:$0xf]
        %v2558 = vld [vmem:[%s23 + $0x84] sm:$0xff]
        %v2559 = vld [vmem:[%s23 + $0x8c] sm:$0xf]
        %v2560 = vld [vmem:[%s23 + $0x90] sm:$0xff]
        %v2561 = vld [vmem:[%s23 + $0x98] sm:$0xf]
        %v2562 = vld [vmem:[%s23 + $0x9c] sm:$0xff]
        %v2563 = vld [vmem:[%s23 + $0xa4] sm:$0xf]
        %v2564 = vld [vmem:[%s23 + $0xa8] sm:$0xff]
        %v2565 = vld [vmem:[%s23 + $0xb0] sm:$0xf]
        %v2566 = vld [vmem:[%s23 + $0xb4] sm:$0xff]
        %v2567 = vld [vmem:[%s23 + $0xbc] sm:$0xf]
        %v2568 = vpack.c.bf16 %v2521, %v2520
        %v2569 = vpack.c.bf16 %v2523, %v2522
        %v2570 = vpack.c.bf16 %v2525, %v2524
        %v2571 = vpack.c.bf16 %v2527, %v2526
        %v2572 = vpack.c.bf16 %v2529, %v2528
        %v2573 = vpack.c.bf16 %v2531, %v2530
        %v2574 = vpack.c.bf16 %v2533, %v2532
        %v2575 = vpack.c.bf16 %v2535, %v2534
        %v2576 = vld [vmem:[%s25] sm:$0x7]
        %v2578 = vlaneseq
        %v2579 = vshrl.u32 %v2578, 7
        %v2580 = vsub.s32 0, %v2579
        %v2581 = vrot.slane %v2576, %v2580
        %v2582 = vlaneseq
        %v2583 = vshrl.u32 %v2582, 7
        %v2584 = vsub.s32 1, %v2583
        %v2585 = vrot.slane %v2576, %v2584
        %v2586 = vlaneseq
        %v2587 = vshrl.u32 %v2586, 7
        %v2588 = vsub.s32 2, %v2587
        %v2589 = vrot.slane %v2576, %v2588
        %v2625 = vunpack.c.l.b16 %v2536
        %v2626 = vunpack.c.h.b16 %v2536
        %v2627 = vunpack.c.l.b16 %v2537
        %v2628 = vunpack.c.l.b16 %v2538
        %v2629 = vunpack.c.h.b16 %v2538
        %v2630 = vunpack.c.l.b16 %v2539
        %v2631 = vunpack.c.l.b16 %v2540
        %v2632 = vunpack.c.h.b16 %v2540
        %v2633 = vunpack.c.l.b16 %v2541
        %v2634 = vunpack.c.l.b16 %v2542
        %v2635 = vunpack.c.h.b16 %v2542
        %v2636 = vunpack.c.l.b16 %v2543
        %v2637 = vunpack.c.l.b16 %v2544
        %v2638 = vunpack.c.h.b16 %v2544
        %v2639 = vunpack.c.l.b16 %v2545
        %v2640 = vunpack.c.l.b16 %v2546
        %v2641 = vunpack.c.h.b16 %v2546
        %v2642 = vunpack.c.l.b16 %v2547
        %v2643 = vunpack.c.l.b16 %v2548
        %v2644 = vunpack.c.h.b16 %v2548
        %v2645 = vunpack.c.l.b16 %v2549
        %v2646 = vunpack.c.l.b16 %v2550
        %v2647 = vunpack.c.h.b16 %v2550
        %v2648 = vunpack.c.l.b16 %v2551
        %v2649 = vunpack.c.l.b16 %v2552
        %v2650 = vunpack.c.h.b16 %v2552
        %v2651 = vunpack.c.l.b16 %v2553
        %v2652 = vunpack.c.l.b16 %v2554
        %v2653 = vunpack.c.h.b16 %v2554
        %v2654 = vunpack.c.l.b16 %v2555
        %v2655 = vunpack.c.l.b16 %v2556
        %v2656 = vunpack.c.h.b16 %v2556
        %v2657 = vunpack.c.l.b16 %v2557
        %v2658 = vunpack.c.l.b16 %v2558
        %v2659 = vunpack.c.h.b16 %v2558
        %v2660 = vunpack.c.l.b16 %v2559
        %v2661 = vunpack.c.l.b16 %v2560
        %v2662 = vunpack.c.h.b16 %v2560
        %v2663 = vunpack.c.l.b16 %v2561
        %v2664 = vunpack.c.l.b16 %v2562
        %v2665 = vunpack.c.h.b16 %v2562
        %v2666 = vunpack.c.l.b16 %v2563
        %v2667 = vunpack.c.l.b16 %v2564
        %v2668 = vunpack.c.h.b16 %v2564
        %v2669 = vunpack.c.l.b16 %v2565
        %v2670 = vunpack.c.l.b16 %v2566
        %v2671 = vunpack.c.h.b16 %v2566
        %v2672 = vunpack.c.l.b16 %v2567
        %v2673 = vpack.c.b16 %v2628, %v2625
        %v2674 = vpack.c.b16 %v2629, %v2626
        %v2675 = vpack.c.b16 %v2630, %v2627
        %v2676 = vpack.c.b16 %v2634, %v2631
        %v2677 = vpack.c.b16 %v2635, %v2632
        %v2678 = vpack.c.b16 %v2636, %v2633
        %v2679 = vpack.c.b16 %v2640, %v2637
        %v2680 = vpack.c.b16 %v2641, %v2638
        %v2681 = vpack.c.b16 %v2642, %v2639
        %v2682 = vpack.c.b16 %v2646, %v2643
        %v2683 = vpack.c.b16 %v2647, %v2644
        %v2684 = vpack.c.b16 %v2648, %v2645
        %v2685 = vpack.c.b16 %v2652, %v2649
        %v2686 = vpack.c.b16 %v2653, %v2650
        %v2687 = vpack.c.b16 %v2654, %v2651
        %v2688 = vpack.c.b16 %v2658, %v2655
        %v2689 = vpack.c.b16 %v2659, %v2656
        %v2690 = vpack.c.b16 %v2660, %v2657
        %v2691 = vpack.c.b16 %v2664, %v2661
        %v2692 = vpack.c.b16 %v2665, %v2662
        %v2693 = vpack.c.b16 %v2666, %v2663
        %v2694 = vpack.c.b16 %v2670, %v2667
        %v2695 = vpack.c.b16 %v2671, %v2668
        %v2696 = vpack.c.b16 %v2672, %v2669
        %2721 = vmatprep.subr.bf16.mxu0 %v2695
        %2722 = vmatpush1.bf16.msra.mxu0 %v2694
        %2723 = vmatprep.subr.bf16.mxu0 %v2692
        %2724 = vmatpush1.bf16.msra.mxu0 %v2691
        %2725 = vmatprep.subr.bf16.mxu0 %v2689
        %2726 = vmatpush1.bf16.msra.mxu0 %v2688
        %2727 = vmatprep.subr.bf16.mxu0 %v2686
        %2728 = vmatpush1.bf16.msra.mxu0 %v2685
        %2729 = vmatprep.subr.bf16.mxu0 %v2683
        %2730 = vmatpush1.bf16.msra.mxu0 %v2682
        %2731 = vmatprep.subr.bf16.mxu0 %v2680
        %2732 = vmatpush1.bf16.msra.mxu0 %v2679
        %2733 = vmatprep.subr.bf16.mxu0 %v2677
        %2734 = vmatpush1.bf16.msra.mxu0 %v2676
        %2735 = vmatprep.subr.bf16.mxu0 %v2674
        %2736 = vmatpush1.bf16.msra.mxu0 %v2673
        %2737 = vmatprep.subr.bf16.mxu0 0
        %2738 = vmatpush2.bf16.msra.mxu0 0
        %2739 = vmatprep.subr.bf16.mxu0 0
        %2740 = vmatpush2.bf16.msra.mxu0 0
        %2741 = vmatprep.subr.bf16.mxu0 0
        %2742 = vmatpush2.bf16.msra.mxu0 0
        %2743 = vmatprep.subr.bf16.mxu0 0
        %2744 = vmatpush2.bf16.msra.mxu0 0
        %2745 = vmatprep.subr.bf16.mxu0 0
        %2746 = vmatpush2.bf16.msra.mxu0 0
        %2747 = vmatprep.subr.bf16.mxu0 0
        %2748 = vmatpush2.bf16.msra.mxu0 0
        %2749 = vmatprep.subr.bf16.mxu0 0
        %2750 = vmatpush2.bf16.msra.mxu0 0
        %2751 = vmatprep.subr.bf16.mxu0 0
        %2752 = vmatpush2.bf16.msra.mxu0 0
        %2753 = vmatprep.mubr.bf16.mxu0 0
        %2754 = vmatmul.mubr.bf16.gmra.mxu0 %v2568
        %v2755 = vpop.f32.mrf.mxu0
        %v2756 = vadd.f32 %v2581, %v2755
        %v2757 = vpop.f32.mrf.mxu0
        %v2758 = vadd.f32 %v2585, %v2757
        %v2759 = vpop.f32.mrf.mxu0
        %v2760 = vadd.f32 %v2581, %v2759
        %v2761 = vpop.f32.mrf.mxu0
        %v2762 = vadd.f32 %v2585, %v2761
        %2763 = vmatprep.mubr.bf16.mxu0 0
        %2764 = vmatmul.mubr.bf16.gmra.mxu0 %v2569
        %v2765 = vpop.f32.mrf.mxu0
        %v2766 = vadd.f32 %v2581, %v2765
        %v2767 = vpop.f32.mrf.mxu0
        %v2768 = vadd.f32 %v2585, %v2767
        %v2769 = vpop.f32.mrf.mxu0
        %v2770 = vadd.f32 %v2581, %v2769
        %v2771 = vpop.f32.mrf.mxu0
        %v2772 = vadd.f32 %v2585, %v2771
        %2773 = vmatprep.mubr.bf16.mxu0 0
        %2774 = vmatmul.mubr.bf16.gmra.mxu0 %v2570
        %v2775 = vpop.f32.mrf.mxu0
        %v2776 = vadd.f32 %v2581, %v2775
        %v2777 = vpop.f32.mrf.mxu0
        %v2778 = vadd.f32 %v2585, %v2777
        %v2779 = vpop.f32.mrf.mxu0
        %v2780 = vadd.f32 %v2581, %v2779
        %v2781 = vpop.f32.mrf.mxu0
        %v2782 = vadd.f32 %v2585, %v2781
        %2783 = vmatprep.mubr.bf16.mxu0 0
        %2784 = vmatmul.mubr.bf16.gmra.mxu0 %v2571
        %v2785 = vpop.f32.mrf.mxu0
        %v2786 = vadd.f32 %v2581, %v2785
        %v2787 = vpop.f32.mrf.mxu0
        %v2788 = vadd.f32 %v2585, %v2787
        %v2789 = vpop.f32.mrf.mxu0
        %v2790 = vadd.f32 %v2581, %v2789
        %v2791 = vpop.f32.mrf.mxu0
        %v2792 = vadd.f32 %v2585, %v2791
        %2793 = vmatprep.mubr.bf16.mxu0 0
        %2794 = vmatmul.mubr.bf16.gmra.mxu0 %v2572
        %v2795 = vpop.f32.mrf.mxu0
        %v2796 = vadd.f32 %v2581, %v2795
        %v2797 = vpop.f32.mrf.mxu0
        %v2798 = vadd.f32 %v2585, %v2797
        %v2799 = vpop.f32.mrf.mxu0
        %v2800 = vadd.f32 %v2581, %v2799
        %v2801 = vpop.f32.mrf.mxu0
        %v2802 = vadd.f32 %v2585, %v2801
        %2803 = vmatprep.mubr.bf16.mxu0 0
        %2804 = vmatmul.mubr.bf16.gmra.mxu0 %v2573
        %v2805 = vpop.f32.mrf.mxu0
        %v2806 = vadd.f32 %v2581, %v2805
        %v2807 = vpop.f32.mrf.mxu0
        %v2808 = vadd.f32 %v2585, %v2807
        %v2809 = vpop.f32.mrf.mxu0
        %v2810 = vadd.f32 %v2581, %v2809
        %v2811 = vpop.f32.mrf.mxu0
        %v2812 = vadd.f32 %v2585, %v2811
        %2813 = vmatprep.mubr.bf16.mxu0 0
        %2814 = vmatmul.mubr.bf16.gmra.mxu0 %v2574
        %v2815 = vpop.f32.mrf.mxu0
        %v2816 = vadd.f32 %v2581, %v2815
        %v2817 = vpop.f32.mrf.mxu0
        %v2818 = vadd.f32 %v2585, %v2817
        %v2819 = vpop.f32.mrf.mxu0
        %v2820 = vadd.f32 %v2581, %v2819
        %v2821 = vpop.f32.mrf.mxu0
        %v2822 = vadd.f32 %v2585, %v2821
        %2823 = vmatprep.mubr.bf16.mxu0 0
        %2824 = vmatmul.mubr.bf16.gmra.mxu0 %v2575
        %v2825 = vpop.f32.mrf.mxu0
        %v2826 = vadd.f32 %v2581, %v2825
        %v2827 = vpop.f32.mrf.mxu0
        %v2828 = vadd.f32 %v2585, %v2827
        %v2829 = vpop.f32.mrf.mxu0
        %v2830 = vadd.f32 %v2581, %v2829
        %v2831 = vpop.f32.mrf.mxu0
        %v2832 = vadd.f32 %v2585, %v2831
        %2833 = vdwg.mxu0
        %2834 = vmatprep.subr.bf16.mxu0 0
        %2835 = vmatpush1.bf16.msra.mxu0 %v2696
        %2836 = vmatprep.subr.bf16.mxu0 0
        %2837 = vmatpush1.bf16.msra.mxu0 %v2693
        %2838 = vmatprep.subr.bf16.mxu0 0
        %2839 = vmatpush1.bf16.msra.mxu0 %v2690
        %2840 = vmatprep.subr.bf16.mxu0 0
        %2841 = vmatpush1.bf16.msra.mxu0 %v2687
        %2842 = vmatprep.subr.bf16.mxu0 0
        %2843 = vmatpush1.bf16.msra.mxu0 %v2684
        %2844 = vmatprep.subr.bf16.mxu0 0
        %2845 = vmatpush1.bf16.msra.mxu0 %v2681
        %2846 = vmatprep.subr.bf16.mxu0 0
        %2847 = vmatpush1.bf16.msra.mxu0 %v2678
        %2848 = vmatprep.subr.bf16.mxu0 0
        %2849 = vmatpush1.bf16.msra.mxu0 %v2675
        %2850 = vmatprep.subr.bf16.mxu0 0
        %2851 = vmatpush2.bf16.msra.mxu0 0
        %2852 = vmatprep.subr.bf16.mxu0 0
        %2853 = vmatpush2.bf16.msra.mxu0 0
        %2854 = vmatprep.subr.bf16.mxu0 0
        %2855 = vmatpush2.bf16.msra.mxu0 0
        %2856 = vmatprep.subr.bf16.mxu0 0
        %2857 = vmatpush2.bf16.msra.mxu0 0
        %2858 = vmatprep.subr.bf16.mxu0 0
        %2859 = vmatpush2.bf16.msra.mxu0 0
        %2860 = vmatprep.subr.bf16.mxu0 0
        %2861 = vmatpush2.bf16.msra.mxu0 0
        %2862 = vmatprep.subr.bf16.mxu0 0
        %2863 = vmatpush2.bf16.msra.mxu0 0
        %2864 = vmatprep.subr.bf16.mxu0 0
        %2865 = vmatpush2.bf16.msra.mxu0 0
        %2866 = vmatprep.mubr.bf16.mxu0 0
        %2867 = vmatmul.mubr.bf16.gmra.mxu0 %v2568
        %v2868 = vpop.f32.mrf.mxu0
        %v2869 = vadd.f32 %v2589, %v2868
        %v2870 = vpop.f32.mrf.mxu0
        %v2871 = vpop.f32.mrf.mxu0
        %v2872 = vadd.f32 %v2589, %v2871
        %v2873 = vpop.f32.mrf.mxu0
        %2874 = vmatprep.mubr.bf16.mxu0 0
        %2875 = vmatmul.mubr.bf16.gmra.mxu0 %v2569
        %v2876 = vpop.f32.mrf.mxu0
        %v2877 = vadd.f32 %v2589, %v2876
        %v2878 = vpop.f32.mrf.mxu0
        %v2879 = vpop.f32.mrf.mxu0
        %v2880 = vadd.f32 %v2589, %v2879
        %v2881 = vpop.f32.mrf.mxu0
        %2882 = vmatprep.mubr.bf16.mxu0 0
        %2883 = vmatmul.mubr.bf16.gmra.mxu0 %v2570
        %v2884 = vpop.f32.mrf.mxu0
        %v2885 = vadd.f32 %v2589, %v2884
        %v2886 = vpop.f32.mrf.mxu0
        %v2887 = vpop.f32.mrf.mxu0
        %v2888 = vadd.f32 %v2589, %v2887
        %v2889 = vpop.f32.mrf.mxu0
        %2890 = vmatprep.mubr.bf16.mxu0 0
        %2891 = vmatmul.mubr.bf16.gmra.mxu0 %v2571
        %v2892 = vpop.f32.mrf.mxu0
        %v2893 = vadd.f32 %v2589, %v2892
        %v2894 = vpop.f32.mrf.mxu0
        %v2895 = vpop.f32.mrf.mxu0
        %v2896 = vadd.f32 %v2589, %v2895
        %v2897 = vpop.f32.mrf.mxu0
        %2898 = vmatprep.mubr.bf16.mxu0 0
        %2899 = vmatmul.mubr.bf16.gmra.mxu0 %v2572
        %v2900 = vpop.f32.mrf.mxu0
        %v2901 = vadd.f32 %v2589, %v2900
        %v2902 = vpop.f32.mrf.mxu0
        %v2903 = vpop.f32.mrf.mxu0
        %v2904 = vadd.f32 %v2589, %v2903
        %v2905 = vpop.f32.mrf.mxu0
        %2906 = vmatprep.mubr.bf16.mxu0 0
        %2907 = vmatmul.mubr.bf16.gmra.mxu0 %v2573
        %v2908 = vpop.f32.mrf.mxu0
        %v2909 = vadd.f32 %v2589, %v2908
        %v2910 = vpop.f32.mrf.mxu0
        %v2911 = vpop.f32.mrf.mxu0
        %v2912 = vadd.f32 %v2589, %v2911
        %v2913 = vpop.f32.mrf.mxu0
        %2914 = vmatprep.mubr.bf16.mxu0 0
        %2915 = vmatmul.mubr.bf16.gmra.mxu0 %v2574
        %v2916 = vpop.f32.mrf.mxu0
        %v2917 = vadd.f32 %v2589, %v2916
        %v2918 = vpop.f32.mrf.mxu0
        %v2919 = vpop.f32.mrf.mxu0
        %v2920 = vadd.f32 %v2589, %v2919
        %v2921 = vpop.f32.mrf.mxu0
        %2922 = vmatprep.mubr.bf16.mxu0 0
        %2923 = vmatmul.mubr.bf16.gmra.mxu0 %v2575
        %v2924 = vpop.f32.mrf.mxu0
        %v2925 = vadd.f32 %v2589, %v2924
        %v2926 = vpop.f32.mrf.mxu0
        %v2927 = vpop.f32.mrf.mxu0
        %v2928 = vadd.f32 %v2589, %v2927
        %v2929 = vpop.f32.mrf.mxu0
        %2930 = vdwg.mxu0
        %v2931 = vld [vmem:[%s5] sm:$0xf]
        %v2932 = vld [vmem:[%s5 + $0x4] sm:$0xf]
        %v2933 = vld [vmem:[%s5 + $0x8] sm:$0xf]
        %v2934 = vld [vmem:[%s5 + $0xc] sm:$0xf]
        %v2935 = vld [vmem:[%s5 + $0x10] sm:$0xf]
        %v2936 = vld [vmem:[%s5 + $0x14] sm:$0xf]
        %v2937 = vld [vmem:[%s5 + $0x18] sm:$0xf]
        %v2938 = vld [vmem:[%s5 + $0x1c] sm:$0xf]
        %v2939 = vld [vmem:[%s5 + $0x20] sm:$0xf]
        %v2940 = vld [vmem:[%s5 + $0x24] sm:$0xf]
        %v2941 = vld [vmem:[%s5 + $0x28] sm:$0xf]
        %v2942 = vld [vmem:[%s5 + $0x2c] sm:$0xf]
        %v2943 = vld [vmem:[%s5 + $0x30] sm:$0xf]
        %v2944 = vld [vmem:[%s5 + $0x34] sm:$0xf]
        %v2945 = vld [vmem:[%s5 + $0x38] sm:$0xf]
        %v2946 = vld [vmem:[%s5 + $0x3c] sm:$0xf]
        %v2947 = vld [vmem:[%s27] sm:$0x1]
        %v2948 = vld [vmem:[%s29] sm:$0x1]
        %v2949 = vld [vmem:[%s1121] sm:$0x1]
        %vm2950 = vcmp.gt.f32.partialorder %v2949, 0.0
        %v2951 = vsel %vm2950, 0.0, -1e+09
        %v2952 = vlaneseq
        %v2953 = vshrl.u32 %v2952, 7
        %v2954 = vadd.s32 %v2953, 8
        %v2955 = vadd.s32 %v2953, 16
        %v2956 = vadd.s32 %v2953, 24
        %v2957 = vadd.s32 %v2953, 32
        %v2958 = vadd.s32 %v2953, 40
        %v2959 = vadd.s32 %v2953, 48
        %v2960 = vadd.s32 %v2953, 56
        %v2961 = vadd.s32 %v2953, 64
        %v2962 = vadd.s32 %v2953, 72
        %v2963 = vadd.s32 %v2953, 80
        %v2964 = vadd.s32 %v2953, 88
        %v2965 = vadd.s32 %v2953, 96
        %v2966 = vadd.s32 %v2953, 104
        %v2967 = vadd.s32 %v2953, 112
        %v2968 = vadd.s32 %v2953, 120
        %v2969 = vlaneseq
        %v2970 = vand.u32 %v2969, 127
        %vm2971 = vcmp.le.s32.totalorder %v2970, %v2953
        %vm2972 = vcmp.le.s32.totalorder %v2970, %v2954
        %vm2973 = vcmp.le.s32.totalorder %v2970, %v2955
        %vm2974 = vcmp.le.s32.totalorder %v2970, %v2956
        %vm2975 = vcmp.le.s32.totalorder %v2970, %v2957
        %vm2976 = vcmp.le.s32.totalorder %v2970, %v2958
        %vm2977 = vcmp.le.s32.totalorder %v2970, %v2959
        %vm2978 = vcmp.le.s32.totalorder %v2970, %v2960
        %vm2979 = vcmp.le.s32.totalorder %v2970, %v2961
        %vm2980 = vcmp.le.s32.totalorder %v2970, %v2962
        %vm2981 = vcmp.le.s32.totalorder %v2970, %v2963
        %vm2982 = vcmp.le.s32.totalorder %v2970, %v2964
        %vm2983 = vcmp.le.s32.totalorder %v2970, %v2965
        %vm2984 = vcmp.le.s32.totalorder %v2970, %v2966
        %vm2985 = vcmp.le.s32.totalorder %v2970, %v2967
        %vm2986 = vcmp.le.s32.totalorder %v2970, %v2968
        %v2987 = vadd.s32 %v2953, 2
        %v2988 = vadd.s32 %v2954, 2
        %v2989 = vadd.s32 %v2955, 2
        %v2990 = vadd.s32 %v2956, 2
        %v2991 = vadd.s32 %v2957, 2
        %v2992 = vadd.s32 %v2958, 2
        %v2993 = vadd.s32 %v2959, 2
        %v2994 = vadd.s32 %v2960, 2
        %v2995 = vadd.s32 %v2961, 2
        %v2996 = vadd.s32 %v2962, 2
        %v2997 = vadd.s32 %v2963, 2
        %v2998 = vadd.s32 %v2964, 2
        %v2999 = vadd.s32 %v2965, 2
        %v3000 = vadd.s32 %v2966, 2
        %v3001 = vadd.s32 %v2967, 2
        %v3002 = vadd.s32 %v2968, 2
        %vm3003 = vcmp.ge.s32.totalorder %v2970, %v2987
        %vm3004 = vcmp.ge.s32.totalorder %v2970, %v2988
        %vm3005 = vcmp.ge.s32.totalorder %v2970, %v2989
        %vm3006 = vcmp.ge.s32.totalorder %v2970, %v2990
        %vm3007 = vcmp.ge.s32.totalorder %v2970, %v2991
        %vm3008 = vcmp.ge.s32.totalorder %v2970, %v2992
        %vm3009 = vcmp.ge.s32.totalorder %v2970, %v2993
        %vm3010 = vcmp.ge.s32.totalorder %v2970, %v2994
        %vm3011 = vcmp.ge.s32.totalorder %v2970, %v2995
        %vm3012 = vcmp.ge.s32.totalorder %v2970, %v2996
        %vm3013 = vcmp.ge.s32.totalorder %v2970, %v2997
        %vm3014 = vcmp.ge.s32.totalorder %v2970, %v2998
        %vm3015 = vcmp.ge.s32.totalorder %v2970, %v2999
        %vm3016 = vcmp.ge.s32.totalorder %v2970, %v3000
        %vm3017 = vcmp.ge.s32.totalorder %v2970, %v3001
        %vm3018 = vcmp.ge.s32.totalorder %v2970, %v3002
        %v3019 = vsel %vm3003, 1, 0
        %v3020 = vsel %vm3004, 1, 0
        %v3021 = vsel %vm3005, 1, 0
        %v3022 = vsel %vm3006, 1, 0
        %v3023 = vsel %vm3007, 1, 0
        %v3024 = vsel %vm3008, 1, 0
        %v3025 = vsel %vm3009, 1, 0
        %v3026 = vsel %vm3010, 1, 0
        %v3027 = vsel %vm3011, 1, 0
        %v3028 = vsel %vm3012, 1, 0
        %v3029 = vsel %vm3013, 1, 0
        %v3030 = vsel %vm3014, 1, 0
        %v3031 = vsel %vm3015, 1, 0
        %v3032 = vsel %vm3016, 1, 0
        %v3033 = vsel %vm3017, 1, 0
        %v3034 = vsel %vm3018, 1, 0
        %v3035 = vcvt.s32.f32 %v3019
        %v3036 = vcvt.s32.f32 %v3020
        %v3037 = vcvt.s32.f32 %v3021
        %v3038 = vcvt.s32.f32 %v3022
        %v3039 = vcvt.s32.f32 %v3023
        %v3040 = vcvt.s32.f32 %v3024
        %v3041 = vcvt.s32.f32 %v3025
        %v3042 = vcvt.s32.f32 %v3026
        %v3043 = vcvt.s32.f32 %v3027
        %v3044 = vcvt.s32.f32 %v3028
        %v3045 = vcvt.s32.f32 %v3029
        %v3046 = vcvt.s32.f32 %v3030
        %v3047 = vcvt.s32.f32 %v3031
        %v3048 = vcvt.s32.f32 %v3032
        %v3049 = vcvt.s32.f32 %v3033
        %v3050 = vcvt.s32.f32 %v3034
        %v3052 = vlaneseq
        %v3053 = vshrl.u32 %v3052, 7
        %v3054 = vsub.s32 0, %v3053
        %v3055 = vrot.slane %v2947, %v3054
        %v3057 = vadd.f32 %v2756, %v3055
        %v3058 = vadd.f32 %v2760, %v3055
        %v3059 = vadd.f32 %v2766, %v3055
        %v3060 = vadd.f32 %v2770, %v3055
        %v3061 = vadd.f32 %v2776, %v3055
        %v3062 = vadd.f32 %v2780, %v3055
        %v3063 = vadd.f32 %v2786, %v3055
        %v3064 = vadd.f32 %v2790, %v3055
        %v3065 = vadd.f32 %v2796, %v3055
        %v3066 = vadd.f32 %v2800, %v3055
        %v3067 = vadd.f32 %v2806, %v3055
        %v3068 = vadd.f32 %v2810, %v3055
        %v3069 = vadd.f32 %v2816, %v3055
        %v3070 = vadd.f32 %v2820, %v3055
        %v3071 = vadd.f32 %v2826, %v3055
        %v3072 = vadd.f32 %v2830, %v3055
        %v3073 = vpack.c.bf16 %v3058, %v3057
        %v3074 = vpack.c.bf16 %v3060, %v3059
        %v3075 = vpack.c.bf16 %v3062, %v3061
        %v3076 = vpack.c.bf16 %v3064, %v3063
        %v3077 = vpack.c.bf16 %v3066, %v3065
        %v3078 = vpack.c.bf16 %v3068, %v3067
        %v3079 = vpack.c.bf16 %v3070, %v3069
        %v3080 = vpack.c.bf16 %v3072, %v3071
        %v3081 = vpack.c.bf16 %v2762, %v2758
        %v3082 = vpack.c.bf16 %v2772, %v2768
        %v3083 = vpack.c.bf16 %v2782, %v2778
        %v3084 = vpack.c.bf16 %v2792, %v2788
        %v3085 = vpack.c.bf16 %v2802, %v2798
        %v3086 = vpack.c.bf16 %v2812, %v2808
        %v3087 = vpack.c.bf16 %v2822, %v2818
        %v3088 = vpack.c.bf16 %v2832, %v2828
        %v3090 = vlaneseq
        %v3091 = vshrl.u32 %v3090, 7
        %v3092 = vsub.s32 0, %v3091
        %v3093 = vrot.slane %v2948, %v3092
        %v3095 = vadd.f32 %v2756, %v3093
        %v3096 = vadd.f32 %v2760, %v3093
        %v3097 = vadd.f32 %v2766, %v3093
        %v3098 = vadd.f32 %v2770, %v3093
        %v3099 = vadd.f32 %v2776, %v3093
        %v3100 = vadd.f32 %v2780, %v3093
        %v3101 = vadd.f32 %v2786, %v3093
        %v3102 = vadd.f32 %v2790, %v3093
        %v3103 = vadd.f32 %v2796, %v3093
        %v3104 = vadd.f32 %v2800, %v3093
        %v3105 = vadd.f32 %v2806, %v3093
        %v3106 = vadd.f32 %v2810, %v3093
        %v3107 = vadd.f32 %v2816, %v3093
        %v3108 = vadd.f32 %v2820, %v3093
        %v3109 = vadd.f32 %v2826, %v3093
        %v3110 = vadd.f32 %v2830, %v3093
        %v3111 = vpack.c.bf16 %v3096, %v3095
        %v3112 = vpack.c.bf16 %v3098, %v3097
        %v3113 = vpack.c.bf16 %v3100, %v3099
        %v3114 = vpack.c.bf16 %v3102, %v3101
        %v3115 = vpack.c.bf16 %v3104, %v3103
        %v3116 = vpack.c.bf16 %v3106, %v3105
        %v3117 = vpack.c.bf16 %v3108, %v3107
        %v3118 = vpack.c.bf16 %v3110, %v3109
        %v3135 = vunpack.c.l.b16 %v2931
        %v3136 = vunpack.c.l.b16 %v2932
        %v3137 = vunpack.c.l.b16 %v2933
        %v3138 = vunpack.c.l.b16 %v2934
        %v3139 = vunpack.c.l.b16 %v2935
        %v3140 = vunpack.c.l.b16 %v2936
        %v3141 = vunpack.c.l.b16 %v2937
        %v3142 = vunpack.c.l.b16 %v2938
        %v3143 = vunpack.c.l.b16 %v2939
        %v3144 = vunpack.c.l.b16 %v2940
        %v3145 = vunpack.c.l.b16 %v2941
        %v3146 = vunpack.c.l.b16 %v2942
        %v3147 = vunpack.c.l.b16 %v2943
        %v3148 = vunpack.c.l.b16 %v2944
        %v3149 = vunpack.c.l.b16 %v2945
        %v3150 = vunpack.c.l.b16 %v2946
        %v3151 = vpack.c.b16 %v3136, %v3135
        %v3152 = vpack.c.b16 %v3138, %v3137
        %v3153 = vpack.c.b16 %v3140, %v3139
        %v3154 = vpack.c.b16 %v3142, %v3141
        %v3155 = vpack.c.b16 %v3144, %v3143
        %v3156 = vpack.c.b16 %v3146, %v3145
        %v3157 = vpack.c.b16 %v3148, %v3147
        %v3158 = vpack.c.b16 %v3150, %v3149
        %vm3159 = vcmask 261120
        %v3161 = vsel %vm3159, %v3111, 0
        %v3164 = vsel %vm3159, %v3112, 0
        %v3167 = vsel %vm3159, %v3113, 0
        %v3170 = vsel %vm3159, %v3114, 0
        %v3173 = vsel %vm3159, %v3115, 0
        %v3176 = vsel %vm3159, %v3116, 0
        %v3179 = vsel %vm3159, %v3117, 0
        %v3182 = vsel %vm3159, %v3118, 0
        %v3185 = vsel %vm3159, %v3151, 0
        %v3188 = vsel %vm3159, %v3152, 0
        %v3191 = vsel %vm3159, %v3153, 0
        %v3194 = vsel %vm3159, %v3154, 0
        %v3197 = vsel %vm3159, %v3155, 0
        %v3200 = vsel %vm3159, %v3156, 0
        %v3203 = vsel %vm3159, %v3157, 0
        %v3206 = vsel %vm3159, %v3158, 0
        %3208 = vmatprep.subr.bf16.mxu0 0
        %3209 = vmatpush1.bf16.xpose.msra.mxu0 %v3206
        %3210 = vmatprep.subr.bf16.mxu0 0
        %3211 = vmatpush1.bf16.xpose.msra.mxu0 %v3203
        %3212 = vmatprep.subr.bf16.mxu0 0
        %3213 = vmatpush1.bf16.xpose.msra.mxu0 %v3200
        %3214 = vmatprep.subr.bf16.mxu0 0
        %3215 = vmatpush1.bf16.xpose.msra.mxu0 %v3197
        %3216 = vmatprep.subr.bf16.mxu0 0
        %3217 = vmatpush1.bf16.xpose.msra.mxu0 %v3194
        %3218 = vmatprep.subr.bf16.mxu0 0
        %3219 = vmatpush1.bf16.xpose.msra.mxu0 %v3191
        %3220 = vmatprep.subr.bf16.mxu0 0
        %3221 = vmatpush1.bf16.xpose.msra.mxu0 %v3188
        %3222 = vmatprep.subr.bf16.mxu0 0
        %3223 = vmatpush1.bf16.xpose.msra.mxu0 %v3185
        %3224 = vmatprep.subr.bf16.mxu0 0
        %3225 = vmatpush2.bf16.xpose.msra.mxu0 0
        %3226 = vmatprep.subr.bf16.mxu0 0
        %3227 = vmatpush2.bf16.xpose.msra.mxu0 0
        %3228 = vmatprep.subr.bf16.mxu0 0
        %3229 = vmatpush2.bf16.xpose.msra.mxu0 0
        %3230 = vmatprep.subr.bf16.mxu0 0
        %3231 = vmatpush2.bf16.xpose.msra.mxu0 0
        %3232 = vmatprep.subr.bf16.mxu0 0
        %3233 = vmatpush2.bf16.xpose.msra.mxu0 0
        %3234 = vmatprep.subr.bf16.mxu0 0
        %3235 = vmatpush2.bf16.xpose.msra.mxu0 0
        %3236 = vmatprep.subr.bf16.mxu0 0
        %3237 = vmatpush2.bf16.xpose.msra.mxu0 0
        %3238 = vmatprep.subr.bf16.mxu0 0
        %3239 = vmatpush2.bf16.xpose.msra.mxu0 0
        %3240 = vmatprep.mubr.bf16.mxu0 0
        %3241 = vmatmul.mubr.bf16.gmra.mxu0 %v3161
        %v3242 = vpop.f32.mrf.mxu0
        %v3243 = vadd.f32 0.0, %v3242
        %v3244 = vpop.f32.mrf.mxu0
        %v3245 = vpop.f32.mrf.mxu0
        %v3246 = vadd.f32 0.0, %v3245
        %v3247 = vpop.f32.mrf.mxu0
        %3248 = vmatprep.mubr.bf16.mxu0 0
        %3249 = vmatmul.mubr.bf16.gmra.mxu0 %v3164
        %v3250 = vpop.f32.mrf.mxu0
        %v3251 = vadd.f32 0.0, %v3250
        %v3252 = vpop.f32.mrf.mxu0
        %v3253 = vpop.f32.mrf.mxu0
        %v3254 = vadd.f32 0.0, %v3253
        %v3255 = vpop.f32.mrf.mxu0
        %3256 = vmatprep.mubr.bf16.mxu0 0
        %3257 = vmatmul.mubr.bf16.gmra.mxu0 %v3167
        %v3258 = vpop.f32.mrf.mxu0
        %v3259 = vadd.f32 0.0, %v3258
        %v3260 = vpop.f32.mrf.mxu0
        %v3261 = vpop.f32.mrf.mxu0
        %v3262 = vadd.f32 0.0, %v3261
        %v3263 = vpop.f32.mrf.mxu0
        %3264 = vmatprep.mubr.bf16.mxu0 0
        %3265 = vmatmul.mubr.bf16.gmra.mxu0 %v3170
        %v3266 = vpop.f32.mrf.mxu0
        %v3267 = vadd.f32 0.0, %v3266
        %v3268 = vpop.f32.mrf.mxu0
        %v3269 = vpop.f32.mrf.mxu0
        %v3270 = vadd.f32 0.0, %v3269
        %v3271 = vpop.f32.mrf.mxu0
        %3272 = vmatprep.mubr.bf16.mxu0 0
        %3273 = vmatmul.mubr.bf16.gmra.mxu0 %v3173
        %v3274 = vpop.f32.mrf.mxu0
        %v3275 = vadd.f32 0.0, %v3274
        %v3276 = vpop.f32.mrf.mxu0
        %v3277 = vpop.f32.mrf.mxu0
        %v3278 = vadd.f32 0.0, %v3277
        %v3279 = vpop.f32.mrf.mxu0
        %3280 = vmatprep.mubr.bf16.mxu0 0
        %3281 = vmatmul.mubr.bf16.gmra.mxu0 %v3176
        %v3282 = vpop.f32.mrf.mxu0
        %v3283 = vadd.f32 0.0, %v3282
        %v3284 = vpop.f32.mrf.mxu0
        %v3285 = vpop.f32.mrf.mxu0
        %v3286 = vadd.f32 0.0, %v3285
        %v3287 = vpop.f32.mrf.mxu0
        %3288 = vmatprep.mubr.bf16.mxu0 0
        %3289 = vmatmul.mubr.bf16.gmra.mxu0 %v3179
        %v3290 = vpop.f32.mrf.mxu0
        %v3291 = vadd.f32 0.0, %v3290
        %v3292 = vpop.f32.mrf.mxu0
        %v3293 = vpop.f32.mrf.mxu0
        %v3294 = vadd.f32 0.0, %v3293
        %v3295 = vpop.f32.mrf.mxu0
        %3296 = vmatprep.mubr.bf16.mxu0 0
        %3297 = vmatmul.mubr.bf16.gmra.mxu0 %v3182
        %v3298 = vpop.f32.mrf.mxu0
        %v3299 = vadd.f32 0.0, %v3298
        %v3300 = vpop.f32.mrf.mxu0
        %v3301 = vpop.f32.mrf.mxu0
        %v3302 = vadd.f32 0.0, %v3301
        %v3303 = vpop.f32.mrf.mxu0
        %3304 = vdwg.mxu0
        %s3306 = sor.u32 256, 1
        %3307 = vrot.lane.b32.xlu0 %v3243, %s3306
        %v3308 = vpop.permute.xlu0 %3307
        %s3310 = sor.u32 256, 9
        %3311 = vrot.lane.b32.xlu0 %v3246, %s3310
        %v3312 = vpop.permute.xlu0 %3311
        %s3314 = sor.u32 256, 17
        %3315 = vrot.lane.b32.xlu0 %v3251, %s3314
        %v3316 = vpop.permute.xlu0 %3315
        %s3318 = sor.u32 256, 25
        %3319 = vrot.lane.b32.xlu0 %v3254, %s3318
        %v3320 = vpop.permute.xlu0 %3319
        %s3322 = sor.u32 256, 33
        %3323 = vrot.lane.b32.xlu0 %v3259, %s3322
        %v3324 = vpop.permute.xlu0 %3323
        %s3326 = sor.u32 256, 41
        %3327 = vrot.lane.b32.xlu0 %v3262, %s3326
        %v3328 = vpop.permute.xlu0 %3327
        %s3330 = sor.u32 256, 49
        %3331 = vrot.lane.b32.xlu0 %v3267, %s3330
        %v3332 = vpop.permute.xlu0 %3331
        %s3334 = sor.u32 256, 57
        %3335 = vrot.lane.b32.xlu0 %v3270, %s3334
        %v3336 = vpop.permute.xlu0 %3335
        %s3338 = sor.u32 256, 65
        %3339 = vrot.lane.b32.xlu0 %v3275, %s3338
        %v3340 = vpop.permute.xlu0 %3339
        %s3342 = sor.u32 256, 73
        %3343 = vrot.lane.b32.xlu0 %v3278, %s3342
        %v3344 = vpop.permute.xlu0 %3343
        %s3346 = sor.u32 256, 81
        %3347 = vrot.lane.b32.xlu0 %v3283, %s3346
        %v3348 = vpop.permute.xlu0 %3347
        %s3350 = sor.u32 256, 89
        %3351 = vrot.lane.b32.xlu0 %v3286, %s3350
        %v3352 = vpop.permute.xlu0 %3351
        %s3354 = sor.u32 256, 97
        %3355 = vrot.lane.b32.xlu0 %v3291, %s3354
        %v3356 = vpop.permute.xlu0 %3355
        %s3358 = sor.u32 256, 105
        %3359 = vrot.lane.b32.xlu0 %v3294, %s3358
        %v3360 = vpop.permute.xlu0 %3359
        %s3362 = sor.u32 256, 113
        %3363 = vrot.lane.b32.xlu0 %v3299, %s3362
        %v3364 = vpop.permute.xlu0 %3363
        %s3366 = sor.u32 256, 121
        %3367 = vrot.lane.b32.xlu0 %v3302, %s3366
        %v3368 = vpop.permute.xlu0 %3367
        %v3369 = vrot.slane %v3308, 1
        %v3370 = vrot.slane %v3312, 1
        %v3371 = vrot.slane %v3316, 1
        %v3372 = vrot.slane %v3320, 1
        %v3373 = vrot.slane %v3324, 1
        %v3374 = vrot.slane %v3328, 1
        %v3375 = vrot.slane %v3332, 1
        %v3376 = vrot.slane %v3336, 1
        %v3377 = vrot.slane %v3340, 1
        %v3378 = vrot.slane %v3344, 1
        %v3379 = vrot.slane %v3348, 1
        %v3380 = vrot.slane %v3352, 1
        %v3381 = vrot.slane %v3356, 1
        %v3382 = vrot.slane %v3360, 1
        %v3383 = vrot.slane %v3364, 1
        %v3384 = vrot.slane %v3368, 1
        %vm3385 = vcmp.lt.s32.totalorder %v2953, 7
        %v3386 = vsel %vm3385, %v3383, %v3384
        %v3387 = vsel %vm3385, %v3382, %v3383
        %v3388 = vsel %vm3385, %v3381, %v3382
        %v3389 = vsel %vm3385, %v3380, %v3381
        %v3390 = vsel %vm3385, %v3379, %v3380
        %v3391 = vsel %vm3385, %v3378, %v3379
        %v3392 = vsel %vm3385, %v3377, %v3378
        %v3393 = vsel %vm3385, %v3376, %v3377
        %v3394 = vsel %vm3385, %v3375, %v3376
        %v3395 = vsel %vm3385, %v3374, %v3375
        %v3396 = vsel %vm3385, %v3373, %v3374
        %v3397 = vsel %vm3385, %v3372, %v3373
        %v3398 = vsel %vm3385, %v3371, %v3372
        %v3399 = vsel %vm3385, %v3370, %v3371
        %v3400 = vsel %vm3385, %v3369, %v3370
        %v3401 = vsel %vm3385, %v3384, %v3369
        %v3402 = vmul.f32 %v3400, %v3035
        %v3403 = vmul.f32 %v3399, %v3036
        %v3404 = vmul.f32 %v3398, %v3037
        %v3405 = vmul.f32 %v3397, %v3038
        %v3406 = vmul.f32 %v3396, %v3039
        %v3407 = vmul.f32 %v3395, %v3040
        %v3408 = vmul.f32 %v3394, %v3041
        %v3409 = vmul.f32 %v3393, %v3042
        %v3410 = vmul.f32 %v3392, %v3043
        %v3411 = vmul.f32 %v3391, %v3044
        %v3412 = vmul.f32 %v3390, %v3045
        %v3413 = vmul.f32 %v3389, %v3046
        %v3414 = vmul.f32 %v3388, %v3047
        %v3415 = vmul.f32 %v3387, %v3048
        %v3416 = vmul.f32 %v3386, %v3049
        %v3417 = vmul.f32 %v3401, %v3050
        %v3418 = vsel %vm2971, %v3308, %v3402
        %v3419 = vsel %vm2972, %v3312, %v3403
        %v3420 = vsel %vm2973, %v3316, %v3404
        %v3421 = vsel %vm2974, %v3320, %v3405
        %v3422 = vsel %vm2975, %v3324, %v3406
        %v3423 = vsel %vm2976, %v3328, %v3407
        %v3424 = vsel %vm2977, %v3332, %v3408
        %v3425 = vsel %vm2978, %v3336, %v3409
        %v3426 = vsel %vm2979, %v3340, %v3410
        %v3427 = vsel %vm2980, %v3344, %v3411
        %v3428 = vsel %vm2981, %v3348, %v3412
        %v3429 = vsel %vm2982, %v3352, %v3413
        %v3430 = vsel %vm2983, %v3356, %v3414
        %v3431 = vsel %vm2984, %v3360, %v3415
        %v3432 = vsel %vm2985, %v3364, %v3416
        %v3433 = vsel %vm2986, %v3368, %v3417
        %v3435 = vsel %vm3159, %v3073, 0
        %v3438 = vsel %vm3159, %v3074, 0
        %v3441 = vsel %vm3159, %v3075, 0
        %v3444 = vsel %vm3159, %v3076, 0
        %v3447 = vsel %vm3159, %v3077, 0
        %v3450 = vsel %vm3159, %v3078, 0
        %v3453 = vsel %vm3159, %v3079, 0
        %v3456 = vsel %vm3159, %v3080, 0
        %v3459 = vsel %vm3159, %v3081, 0
        %v3462 = vsel %vm3159, %v3082, 0
        %v3465 = vsel %vm3159, %v3083, 0
        %v3468 = vsel %vm3159, %v3084, 0
        %v3471 = vsel %vm3159, %v3085, 0
        %v3474 = vsel %vm3159, %v3086, 0
        %v3477 = vsel %vm3159, %v3087, 0
        %v3480 = vsel %vm3159, %v3088, 0
        %3482 = vmatprep.subr.bf16.mxu0 0
        %3483 = vmatpush1.bf16.xpose.msra.mxu0 %v3480
        %3484 = vmatprep.subr.bf16.mxu0 0
        %3485 = vmatpush1.bf16.xpose.msra.mxu0 %v3477
        %3486 = vmatprep.subr.bf16.mxu0 0
        %3487 = vmatpush1.bf16.xpose.msra.mxu0 %v3474
        %3488 = vmatprep.subr.bf16.mxu0 0
        %3489 = vmatpush1.bf16.xpose.msra.mxu0 %v3471
        %3490 = vmatprep.subr.bf16.mxu0 0
        %3491 = vmatpush1.bf16.xpose.msra.mxu0 %v3468
        %3492 = vmatprep.subr.bf16.mxu0 0
        %3493 = vmatpush1.bf16.xpose.msra.mxu0 %v3465
        %3494 = vmatprep.subr.bf16.mxu0 0
        %3495 = vmatpush1.bf16.xpose.msra.mxu0 %v3462
        %3496 = vmatprep.subr.bf16.mxu0 0
        %3497 = vmatpush1.bf16.xpose.msra.mxu0 %v3459
        %3498 = vmatprep.subr.bf16.mxu0 0
        %3499 = vmatpush2.bf16.xpose.msra.mxu0 0
        %3500 = vmatprep.subr.bf16.mxu0 0
        %3501 = vmatpush2.bf16.xpose.msra.mxu0 0
        %3502 = vmatprep.subr.bf16.mxu0 0
        %3503 = vmatpush2.bf16.xpose.msra.mxu0 0
        %3504 = vmatprep.subr.bf16.mxu0 0
        %3505 = vmatpush2.bf16.xpose.msra.mxu0 0
        %3506 = vmatprep.subr.bf16.mxu0 0
        %3507 = vmatpush2.bf16.xpose.msra.mxu0 0
        %3508 = vmatprep.subr.bf16.mxu0 0
        %3509 = vmatpush2.bf16.xpose.msra.mxu0 0
        %3510 = vmatprep.subr.bf16.mxu0 0
        %3511 = vmatpush2.bf16.xpose.msra.mxu0 0
        %3512 = vmatprep.subr.bf16.mxu0 0
        %3513 = vmatpush2.bf16.xpose.msra.mxu0 0
        %3514 = vmatprep.mubr.bf16.mxu0 0
        %3515 = vmatmul.mubr.bf16.gmra.mxu0 %v3435
        %v3516 = vpop.f32.mrf.mxu0
        %v3517 = vadd.f32 %v3418, %v3516
        %v3518 = vpop.f32.mrf.mxu0
        %v3519 = vpop.f32.mrf.mxu0
        %v3520 = vadd.f32 %v3419, %v3519
        %v3521 = vpop.f32.mrf.mxu0
        %3522 = vmatprep.mubr.bf16.mxu0 0
        %3523 = vmatmul.mubr.bf16.gmra.mxu0 %v3438
        %v3524 = vpop.f32.mrf.mxu0
        %v3525 = vadd.f32 %v3420, %v3524
        %v3526 = vpop.f32.mrf.mxu0
        %v3527 = vpop.f32.mrf.mxu0
        %v3528 = vadd.f32 %v3421, %v3527
        %v3529 = vpop.f32.mrf.mxu0
        %3530 = vmatprep.mubr.bf16.mxu0 0
        %3531 = vmatmul.mubr.bf16.gmra.mxu0 %v3441
        %v3532 = vpop.f32.mrf.mxu0
        %v3533 = vadd.f32 %v3422, %v3532
        %v3534 = vpop.f32.mrf.mxu0
        %v3535 = vpop.f32.mrf.mxu0
        %v3536 = vadd.f32 %v3423, %v3535
        %v3537 = vpop.f32.mrf.mxu0
        %3538 = vmatprep.mubr.bf16.mxu0 0
        %3539 = vmatmul.mubr.bf16.gmra.mxu0 %v3444
        %v3540 = vpop.f32.mrf.mxu0
        %v3541 = vadd.f32 %v3424, %v3540
        %v3542 = vpop.f32.mrf.mxu0
        %v3543 = vpop.f32.mrf.mxu0
        %v3544 = vadd.f32 %v3425, %v3543
        %v3545 = vpop.f32.mrf.mxu0
        %3546 = vmatprep.mubr.bf16.mxu0 0
        %3547 = vmatmul.mubr.bf16.gmra.mxu0 %v3447
        %v3548 = vpop.f32.mrf.mxu0
        %v3549 = vadd.f32 %v3426, %v3548
        %v3550 = vpop.f32.mrf.mxu0
        %v3551 = vpop.f32.mrf.mxu0
        %v3552 = vadd.f32 %v3427, %v3551
        %v3553 = vpop.f32.mrf.mxu0
        %3554 = vmatprep.mubr.bf16.mxu0 0
        %3555 = vmatmul.mubr.bf16.gmra.mxu0 %v3450
        %v3556 = vpop.f32.mrf.mxu0
        %v3557 = vadd.f32 %v3428, %v3556
        %v3558 = vpop.f32.mrf.mxu0
        %v3559 = vpop.f32.mrf.mxu0
        %v3560 = vadd.f32 %v3429, %v3559
        %v3561 = vpop.f32.mrf.mxu0
        %3562 = vmatprep.mubr.bf16.mxu0 0
        %3563 = vmatmul.mubr.bf16.gmra.mxu0 %v3453
        %v3564 = vpop.f32.mrf.mxu0
        %v3565 = vadd.f32 %v3430, %v3564
        %v3566 = vpop.f32.mrf.mxu0
        %v3567 = vpop.f32.mrf.mxu0
        %v3568 = vadd.f32 %v3431, %v3567
        %v3569 = vpop.f32.mrf.mxu0
        %3570 = vmatprep.mubr.bf16.mxu0 0
        %3571 = vmatmul.mubr.bf16.gmra.mxu0 %v3456
        %v3572 = vpop.f32.mrf.mxu0
        %v3573 = vadd.f32 %v3432, %v3572
        %v3574 = vpop.f32.mrf.mxu0
        %v3575 = vpop.f32.mrf.mxu0
        %v3576 = vadd.f32 %v3433, %v3575
        %v3577 = vpop.f32.mrf.mxu0
        %3578 = vdwg.mxu0
        %v3580 = vlaneseq
        %v3581 = vshrl.u32 %v3580, 7
        %v3582 = vsub.s32 0, %v3581
        %v3583 = vrot.slane %v2951, %v3582
        %v3585 = vadd.f32 %v3517, %v3583
        %v3586 = vadd.f32 %v3520, %v3583
        %v3587 = vadd.f32 %v3525, %v3583
        %v3588 = vadd.f32 %v3528, %v3583
        %v3589 = vadd.f32 %v3533, %v3583
        %v3590 = vadd.f32 %v3536, %v3583
        %v3591 = vadd.f32 %v3541, %v3583
        %v3592 = vadd.f32 %v3544, %v3583
        %v3593 = vadd.f32 %v3549, %v3583
        %v3594 = vadd.f32 %v3552, %v3583
        %v3595 = vadd.f32 %v3557, %v3583
        %v3596 = vadd.f32 %v3560, %v3583
        %v3597 = vadd.f32 %v3565, %v3583
        %v3598 = vadd.f32 %v3568, %v3583
        %v3599 = vadd.f32 %v3573, %v3583
        %v3600 = vadd.f32 %v3576, %v3583
        %3601 = vmax.xlane.f32.xlu0 %v3585
        %v3602 = vpop.xlane.xlu0 %3601
        %3603 = vmax.xlane.f32.xlu0 %v3586
        %v3604 = vpop.xlane.xlu0 %3603
        %3605 = vmax.xlane.f32.xlu0 %v3587
        %v3606 = vpop.xlane.xlu0 %3605
        %3607 = vmax.xlane.f32.xlu0 %v3588
        %v3608 = vpop.xlane.xlu0 %3607
        %3609 = vmax.xlane.f32.xlu0 %v3589
        %v3610 = vpop.xlane.xlu0 %3609
        %3611 = vmax.xlane.f32.xlu0 %v3590
        %v3612 = vpop.xlane.xlu0 %3611
        %3613 = vmax.xlane.f32.xlu0 %v3591
        %v3614 = vpop.xlane.xlu0 %3613
        %3615 = vmax.xlane.f32.xlu0 %v3592
        %v3616 = vpop.xlane.xlu0 %3615
        %3617 = vmax.xlane.f32.xlu0 %v3593
        %v3618 = vpop.xlane.xlu0 %3617
        %3619 = vmax.xlane.f32.xlu0 %v3594
        %v3620 = vpop.xlane.xlu0 %3619
        %3621 = vmax.xlane.f32.xlu0 %v3595
        %v3622 = vpop.xlane.xlu0 %3621
        %3623 = vmax.xlane.f32.xlu0 %v3596
        %v3624 = vpop.xlane.xlu0 %3623
        %3625 = vmax.xlane.f32.xlu0 %v3597
        %v3626 = vpop.xlane.xlu0 %3625
        %3627 = vmax.xlane.f32.xlu0 %v3598
        %v3628 = vpop.xlane.xlu0 %3627
        %3629 = vmax.xlane.f32.xlu0 %v3599
        %v3630 = vpop.xlane.xlu0 %3629
        %3631 = vmax.xlane.f32.xlu0 %v3600
        %v3632 = vpop.xlane.xlu0 %3631
        %v3633 = vsub.f32 %v3585, %v3602
        %v3634 = vsub.f32 %v3586, %v3604
        %v3635 = vsub.f32 %v3587, %v3606
        %v3636 = vsub.f32 %v3588, %v3608
        %v3637 = vsub.f32 %v3589, %v3610
        %v3638 = vsub.f32 %v3590, %v3612
        %v3639 = vsub.f32 %v3591, %v3614
        %v3640 = vsub.f32 %v3592, %v3616
        %v3641 = vsub.f32 %v3593, %v3618
        %v3642 = vsub.f32 %v3594, %v3620
        %v3643 = vsub.f32 %v3595, %v3622
        %v3644 = vsub.f32 %v3596, %v3624
        %v3645 = vsub.f32 %v3597, %v3626
        %v3646 = vsub.f32 %v3598, %v3628
        %v3647 = vsub.f32 %v3599, %v3630
        %v3648 = vsub.f32 %v3600, %v3632
        %v3649 = vmul.f32 %v3633, 1.442695
        %v3650 = vpow.pop %v3649
        %v3651 = vmul.f32 %v3634, 1.442695
        %v3652 = vpow.pop %v3651
        %v3653 = vmul.f32 %v3635, 1.442695
        %v3654 = vpow.pop %v3653
        %v3655 = vmul.f32 %v3636, 1.442695
        %v3656 = vpow.pop %v3655
        %v3657 = vmul.f32 %v3637, 1.442695
        %v3658 = vpow.pop %v3657
        %v3659 = vmul.f32 %v3638, 1.442695
        %v3660 = vpow.pop %v3659
        %v3661 = vmul.f32 %v3639, 1.442695
        %v3662 = vpow.pop %v3661
        %v3663 = vmul.f32 %v3640, 1.442695
        %v3664 = vpow.pop %v3663
        %v3665 = vmul.f32 %v3641, 1.442695
        %v3666 = vpow.pop %v3665
        %v3667 = vmul.f32 %v3642, 1.442695
        %v3668 = vpow.pop %v3667
        %v3669 = vmul.f32 %v3643, 1.442695
        %v3670 = vpow.pop %v3669
        %v3671 = vmul.f32 %v3644, 1.442695
        %v3672 = vpow.pop %v3671
        %v3673 = vmul.f32 %v3645, 1.442695
        %v3674 = vpow.pop %v3673
        %v3675 = vmul.f32 %v3646, 1.442695
        %v3676 = vpow.pop %v3675
        %v3677 = vmul.f32 %v3647, 1.442695
        %v3678 = vpow.pop %v3677
        %v3679 = vmul.f32 %v3648, 1.442695
        %v3680 = vpow.pop %v3679
        %3681 = vadd.xlane.f32.xlu0 %v3650
        %v3682 = vpop.xlane.xlu0 %3681
        %3683 = vadd.xlane.f32.xlu0 %v3652
        %v3684 = vpop.xlane.xlu0 %3683
        %3685 = vadd.xlane.f32.xlu0 %v3654
        %v3686 = vpop.xlane.xlu0 %3685
        %3687 = vadd.xlane.f32.xlu0 %v3656
        %v3688 = vpop.xlane.xlu0 %3687
        %3689 = vadd.xlane.f32.xlu0 %v3658
        %v3690 = vpop.xlane.xlu0 %3689
        %3691 = vadd.xlane.f32.xlu0 %v3660
        %v3692 = vpop.xlane.xlu0 %3691
        %3693 = vadd.xlane.f32.xlu0 %v3662
        %v3694 = vpop.xlane.xlu0 %3693
        %3695 = vadd.xlane.f32.xlu0 %v3664
        %v3696 = vpop.xlane.xlu0 %3695
        %3697 = vadd.xlane.f32.xlu0 %v3666
        %v3698 = vpop.xlane.xlu0 %3697
        %3699 = vadd.xlane.f32.xlu0 %v3668
        %v3700 = vpop.xlane.xlu0 %3699
        %3701 = vadd.xlane.f32.xlu0 %v3670
        %v3702 = vpop.xlane.xlu0 %3701
        %3703 = vadd.xlane.f32.xlu0 %v3672
        %v3704 = vpop.xlane.xlu0 %3703
        %3705 = vadd.xlane.f32.xlu0 %v3674
        %v3706 = vpop.xlane.xlu0 %3705
        %3707 = vadd.xlane.f32.xlu0 %v3676
        %v3708 = vpop.xlane.xlu0 %3707
        %3709 = vadd.xlane.f32.xlu0 %v3678
        %v3710 = vpop.xlane.xlu0 %3709
        %3711 = vadd.xlane.f32.xlu0 %v3680
        %v3712 = vpop.xlane.xlu0 %3711
        %v3713 = vrcp.pop %v3682
        %v3714 = vrcp.pop %v3684
        %v3715 = vrcp.pop %v3686
        %v3716 = vrcp.pop %v3688
        %v3717 = vrcp.pop %v3690
        %v3718 = vrcp.pop %v3692
        %v3719 = vrcp.pop %v3694
        %v3720 = vrcp.pop %v3696
        %v3721 = vrcp.pop %v3698
        %v3722 = vrcp.pop %v3700
        %v3723 = vrcp.pop %v3702
        %v3724 = vrcp.pop %v3704
        %v3725 = vrcp.pop %v3706
        %v3726 = vrcp.pop %v3708
        %v3727 = vrcp.pop %v3710
        %v3728 = vrcp.pop %v3712
        %v3729 = vmul.f32 %v3650, %v3713
        %v3730 = vmul.f32 %v3652, %v3714
        %v3731 = vmul.f32 %v3654, %v3715
        %v3732 = vmul.f32 %v3656, %v3716
        %v3733 = vmul.f32 %v3658, %v3717
        %v3734 = vmul.f32 %v3660, %v3718
        %v3735 = vmul.f32 %v3662, %v3719
        %v3736 = vmul.f32 %v3664, %v3720
        %v3737 = vmul.f32 %v3666, %v3721
        %v3738 = vmul.f32 %v3668, %v3722
        %v3739 = vmul.f32 %v3670, %v3723
        %v3740 = vmul.f32 %v3672, %v3724
        %v3741 = vmul.f32 %v3674, %v3725
        %v3742 = vmul.f32 %v3676, %v3726
        %v3743 = vmul.f32 %v3678, %v3727
        %v3744 = vmul.f32 %v3680, %v3728
        %v3745 = vpack.c.bf16 %v3730, %v3729
        %v3746 = vpack.c.bf16 %v3732, %v3731
        %v3747 = vpack.c.bf16 %v3734, %v3733
        %v3748 = vpack.c.bf16 %v3736, %v3735
        %v3749 = vpack.c.bf16 %v3738, %v3737
        %v3750 = vpack.c.bf16 %v3740, %v3739
        %v3751 = vpack.c.bf16 %v3742, %v3741
        %v3752 = vpack.c.bf16 %v3744, %v3743
        %v3761 = vunpack.c.l.b16 %v3745
        %v3762 = vunpack.c.h.b16 %v3745
        %v3763 = vunpack.c.l.b16 %v3746
        %v3764 = vunpack.c.h.b16 %v3746
        %v3765 = vunpack.c.l.b16 %v3747
        %v3766 = vunpack.c.h.b16 %v3747
        %v3767 = vunpack.c.l.b16 %v3748
        %v3768 = vunpack.c.h.b16 %v3748
        %v3769 = vunpack.c.l.b16 %v3749
        %v3770 = vunpack.c.h.b16 %v3749
        %v3771 = vunpack.c.l.b16 %v3750
        %v3772 = vunpack.c.h.b16 %v3750
        %v3773 = vunpack.c.l.b16 %v3751
        %v3774 = vunpack.c.h.b16 %v3751
        %v3775 = vunpack.c.l.b16 %v3752
        %v3776 = vunpack.c.h.b16 %v3752
        %v3777 = vpack.c.b16 %v3761, %v3761
        %v3778 = vpack.c.b16 %v3762, %v3762
        %v3779 = vpack.c.b16 %v3763, %v3763
        %v3780 = vpack.c.b16 %v3764, %v3764
        %v3781 = vpack.c.b16 %v3765, %v3765
        %v3782 = vpack.c.b16 %v3766, %v3766
        %v3783 = vpack.c.b16 %v3767, %v3767
        %v3784 = vpack.c.b16 %v3768, %v3768
        %v3785 = vpack.c.b16 %v3769, %v3769
        %v3786 = vpack.c.b16 %v3770, %v3770
        %v3787 = vpack.c.b16 %v3771, %v3771
        %v3788 = vpack.c.b16 %v3772, %v3772
        %v3789 = vpack.c.b16 %v3773, %v3773
        %v3790 = vpack.c.b16 %v3774, %v3774
        %v3791 = vpack.c.b16 %v3775, %v3775
        %v3792 = vpack.c.b16 %v3776, %v3776
        %3809 = vst [vmem:[%s1113] sm:$0xf] %v3777
        %3810 = vst [vmem:[%s1113 + $0x4] sm:$0xf] %v3778
        %3811 = vst [vmem:[%s1113 + $0x8] sm:$0xf] %v3779
        %3812 = vst [vmem:[%s1113 + $0xc] sm:$0xf] %v3780
        %3813 = vst [vmem:[%s1113 + $0x10] sm:$0xf] %v3781
        %3814 = vst [vmem:[%s1113 + $0x14] sm:$0xf] %v3782
        %3815 = vst [vmem:[%s1113 + $0x18] sm:$0xf] %v3783
        %3816 = vst [vmem:[%s1113 + $0x1c] sm:$0xf] %v3784
        %3817 = vst [vmem:[%s1113 + $0x20] sm:$0xf] %v3785
        %3818 = vst [vmem:[%s1113 + $0x24] sm:$0xf] %v3786
        %3819 = vst [vmem:[%s1113 + $0x28] sm:$0xf] %v3787
        %3820 = vst [vmem:[%s1113 + $0x2c] sm:$0xf] %v3788
        %3821 = vst [vmem:[%s1113 + $0x30] sm:$0xf] %v3789
        %3822 = vst [vmem:[%s1113 + $0x34] sm:$0xf] %v3790
        %3823 = vst [vmem:[%s1113 + $0x38] sm:$0xf] %v3791
        %3824 = vst [vmem:[%s1113 + $0x3c] sm:$0xf] %v3792
        %v3825 = vpack.c.bf16 %v2872, %v2869
        %v3826 = vpack.c.bf16 %v2880, %v2877
        %v3827 = vpack.c.bf16 %v2888, %v2885
        %v3828 = vpack.c.bf16 %v2896, %v2893
        %v3829 = vpack.c.bf16 %v2904, %v2901
        %v3830 = vpack.c.bf16 %v2912, %v2909
        %v3831 = vpack.c.bf16 %v2920, %v2917
        %v3832 = vpack.c.bf16 %v2928, %v2925
        %3833 = vmatprep.subr.bf16.mxu0 0
        %3834 = vmatpush1.bf16.msra.mxu0 %v3832
        %3835 = vmatprep.subr.bf16.mxu0 0
        %3836 = vmatpush1.bf16.msra.mxu0 %v3831
        %3837 = vmatprep.subr.bf16.mxu0 0
        %3838 = vmatpush1.bf16.msra.mxu0 %v3830
        %3839 = vmatprep.subr.bf16.mxu0 0
        %3840 = vmatpush1.bf16.msra.mxu0 %v3829
        %3841 = vmatprep.subr.bf16.mxu0 0
        %3842 = vmatpush1.bf16.msra.mxu0 %v3828
        %3843 = vmatprep.subr.bf16.mxu0 0
        %3844 = vmatpush1.bf16.msra.mxu0 %v3827
        %3845 = vmatprep.subr.bf16.mxu0 0
        %3846 = vmatpush1.bf16.msra.mxu0 %v3826
        %3847 = vmatprep.subr.bf16.mxu0 0
        %3848 = vmatpush1.bf16.msra.mxu0 %v3825
        %3849 = vmatprep.subr.bf16.mxu0 0
        %3850 = vmatpush2.bf16.msra.mxu0 0
        %3851 = vmatprep.subr.bf16.mxu0 0
        %3852 = vmatpush2.bf16.msra.mxu0 0
        %3853 = vmatprep.subr.bf16.mxu0 0
        %3854 = vmatpush2.bf16.msra.mxu0 0
        %3855 = vmatprep.subr.bf16.mxu0 0
        %3856 = vmatpush2.bf16.msra.mxu0 0
        %3857 = vmatprep.subr.bf16.mxu0 0
        %3858 = vmatpush2.bf16.msra.mxu0 0
        %3859 = vmatprep.subr.bf16.mxu0 0
        %3860 = vmatpush2.bf16.msra.mxu0 0
        %3861 = vmatprep.subr.bf16.mxu0 0
        %3862 = vmatpush2.bf16.msra.mxu0 0
        %3863 = vmatprep.subr.bf16.mxu0 0
        %3864 = vmatpush2.bf16.msra.mxu0 0
        %3865 = vmatprep.mubr.bf16.mxu0 0
        %3866 = vmatmul.mubr.bf16.gmra.mxu0 %v3745
        %v3867 = vpop.f32.mrf.mxu0
        %v3868 = vadd.f32 0.0, %v3867
        %v3869 = vpop.f32.mrf.mxu0
        %v3870 = vpop.f32.mrf.mxu0
        %v3871 = vadd.f32 0.0, %v3870
        %v3872 = vpop.f32.mrf.mxu0
        %3873 = vmatprep.mubr.bf16.mxu0 0
        %3874 = vmatmul.mubr.bf16.gmra.mxu0 %v3746
        %v3875 = vpop.f32.mrf.mxu0
        %v3876 = vadd.f32 0.0, %v3875
        %v3877 = vpop.f32.mrf.mxu0
        %v3878 = vpop.f32.mrf.mxu0
        %v3879 = vadd.f32 0.0, %v3878
        %v3880 = vpop.f32.mrf.mxu0
        %3881 = vmatprep.mubr.bf16.mxu0 0
        %3882 = vmatmul.mubr.bf16.gmra.mxu0 %v3747
        %v3883 = vpop.f32.mrf.mxu0
        %v3884 = vadd.f32 0.0, %v3883
        %v3885 = vpop.f32.mrf.mxu0
        %v3886 = vpop.f32.mrf.mxu0
        %v3887 = vadd.f32 0.0, %v3886
        %v3888 = vpop.f32.mrf.mxu0
        %3889 = vmatprep.mubr.bf16.mxu0 0
        %3890 = vmatmul.mubr.bf16.gmra.mxu0 %v3748
        %v3891 = vpop.f32.mrf.mxu0
        %v3892 = vadd.f32 0.0, %v3891
        %v3893 = vpop.f32.mrf.mxu0
        %v3894 = vpop.f32.mrf.mxu0
        %v3895 = vadd.f32 0.0, %v3894
        %v3896 = vpop.f32.mrf.mxu0
        %3897 = vmatprep.mubr.bf16.mxu0 0
        %3898 = vmatmul.mubr.bf16.gmra.mxu0 %v3749
        %v3899 = vpop.f32.mrf.mxu0
        %v3900 = vadd.f32 0.0, %v3899
        %v3901 = vpop.f32.mrf.mxu0
        %v3902 = vpop.f32.mrf.mxu0
        %v3903 = vadd.f32 0.0, %v3902
        %v3904 = vpop.f32.mrf.mxu0
        %3905 = vmatprep.mubr.bf16.mxu0 0
        %3906 = vmatmul.mubr.bf16.gmra.mxu0 %v3750
        %v3907 = vpop.f32.mrf.mxu0
        %v3908 = vadd.f32 0.0, %v3907
        %v3909 = vpop.f32.mrf.mxu0
        %v3910 = vpop.f32.mrf.mxu0
        %v3911 = vadd.f32 0.0, %v3910
        %v3912 = vpop.f32.mrf.mxu0
        %3913 = vmatprep.mubr.bf16.mxu0 0
        %3914 = vmatmul.mubr.bf16.gmra.mxu0 %v3751
        %v3915 = vpop.f32.mrf.mxu0
        %v3916 = vadd.f32 0.0, %v3915
        %v3917 = vpop.f32.mrf.mxu0
        %v3918 = vpop.f32.mrf.mxu0
        %v3919 = vadd.f32 0.0, %v3918
        %v3920 = vpop.f32.mrf.mxu0
        %3921 = vmatprep.mubr.bf16.mxu0 0
        %3922 = vmatmul.mubr.bf16.gmra.mxu0 %v3752
        %v3923 = vpop.f32.mrf.mxu0
        %v3924 = vadd.f32 0.0, %v3923
        %v3925 = vpop.f32.mrf.mxu0
        %v3926 = vpop.f32.mrf.mxu0
        %v3927 = vadd.f32 0.0, %v3926
        %v3928 = vpop.f32.mrf.mxu0
        %3929 = vdwg.mxu0
        %3938 = vrot.lane.b32.xlu0 %v3111, 96
        %v3939 = vpop.permute.xlu0 %3938
        %3940 = vrot.lane.b32.xlu0 %v3112, 96
        %v3941 = vpop.permute.xlu0 %3940
        %3942 = vrot.lane.b32.xlu0 %v3113, 96
        %v3943 = vpop.permute.xlu0 %3942
        %3944 = vrot.lane.b32.xlu0 %v3114, 96
        %v3945 = vpop.permute.xlu0 %3944
        %3946 = vrot.lane.b32.xlu0 %v3115, 96
        %v3947 = vpop.permute.xlu0 %3946
        %3948 = vrot.lane.b32.xlu0 %v3116, 96
        %v3949 = vpop.permute.xlu0 %3948
        %3950 = vrot.lane.b32.xlu0 %v3117, 96
        %v3951 = vpop.permute.xlu0 %3950
        %3952 = vrot.lane.b32.xlu0 %v3118, 96
        %v3953 = vpop.permute.xlu0 %3952
        %3954 = vrot.lane.b32.xlu0 %v3151, 96
        %v3955 = vpop.permute.xlu0 %3954
        %3956 = vrot.lane.b32.xlu0 %v3152, 96
        %v3957 = vpop.permute.xlu0 %3956
        %3958 = vrot.lane.b32.xlu0 %v3153, 96
        %v3959 = vpop.permute.xlu0 %3958
        %3960 = vrot.lane.b32.xlu0 %v3154, 96
        %v3961 = vpop.permute.xlu0 %3960
        %3962 = vrot.lane.b32.xlu0 %v3155, 96
        %v3963 = vpop.permute.xlu0 %3962
        %3964 = vrot.lane.b32.xlu0 %v3156, 96
        %v3965 = vpop.permute.xlu0 %3964
        %3966 = vrot.lane.b32.xlu0 %v3157, 96
        %v3967 = vpop.permute.xlu0 %3966
        %3968 = vrot.lane.b32.xlu0 %v3158, 96
        %v3969 = vpop.permute.xlu0 %3968
        %v3971 = vsel %vm3159, %v3939, 0
        %v3974 = vsel %vm3159, %v3941, 0
        %v3977 = vsel %vm3159, %v3943, 0
        %v3980 = vsel %vm3159, %v3945, 0
        %v3983 = vsel %vm3159, %v3947, 0
        %v3986 = vsel %vm3159, %v3949, 0
        %v3989 = vsel %vm3159, %v3951, 0
        %v3992 = vsel %vm3159, %v3953, 0
        %v3995 = vsel %vm3159, %v3955, 0
        %v3998 = vsel %vm3159, %v3957, 0
        %v4001 = vsel %vm3159, %v3959, 0
        %v4004 = vsel %vm3159, %v3961, 0
        %v4007 = vsel %vm3159, %v3963, 0
        %v4010 = vsel %vm3159, %v3965, 0
        %v4013 = vsel %vm3159, %v3967, 0
        %v4016 = vsel %vm3159, %v3969, 0
        %4018 = vmatprep.subr.bf16.mxu0 0
        %4019 = vmatpush1.bf16.xpose.msra.mxu0 %v4016
        %4020 = vmatprep.subr.bf16.mxu0 0
        %4021 = vmatpush1.bf16.xpose.msra.mxu0 %v4013
        %4022 = vmatprep.subr.bf16.mxu0 0
        %4023 = vmatpush1.bf16.xpose.msra.mxu0 %v4010
        %4024 = vmatprep.subr.bf16.mxu0 0
        %4025 = vmatpush1.bf16.xpose.msra.mxu0 %v4007
        %4026 = vmatprep.subr.bf16.mxu0 0
        %4027 = vmatpush1.bf16.xpose.msra.mxu0 %v4004
        %4028 = vmatprep.subr.bf16.mxu0 0
        %4029 = vmatpush1.bf16.xpose.msra.mxu0 %v4001
        %4030 = vmatprep.subr.bf16.mxu0 0
        %4031 = vmatpush1.bf16.xpose.msra.mxu0 %v3998
        %4032 = vmatprep.subr.bf16.mxu0 0
        %4033 = vmatpush1.bf16.xpose.msra.mxu0 %v3995
        %4034 = vmatprep.subr.bf16.mxu0 0
        %4035 = vmatpush2.bf16.xpose.msra.mxu0 0
        %4036 = vmatprep.subr.bf16.mxu0 0
        %4037 = vmatpush2.bf16.xpose.msra.mxu0 0
        %4038 = vmatprep.subr.bf16.mxu0 0
        %4039 = vmatpush2.bf16.xpose.msra.mxu0 0
        %4040 = vmatprep.subr.bf16.mxu0 0
        %4041 = vmatpush2.bf16.xpose.msra.mxu0 0
        %4042 = vmatprep.subr.bf16.mxu0 0
        %4043 = vmatpush2.bf16.xpose.msra.mxu0 0
        %4044 = vmatprep.subr.bf16.mxu0 0
        %4045 = vmatpush2.bf16.xpose.msra.mxu0 0
        %4046 = vmatprep.subr.bf16.mxu0 0
        %4047 = vmatpush2.bf16.xpose.msra.mxu0 0
        %4048 = vmatprep.subr.bf16.mxu0 0
        %4049 = vmatpush2.bf16.xpose.msra.mxu0 0
        %4050 = vmatprep.mubr.bf16.mxu0 0
        %4051 = vmatmul.mubr.bf16.gmra.mxu0 %v3971
        %v4052 = vpop.f32.mrf.mxu0
        %v4053 = vadd.f32 0.0, %v4052
        %v4054 = vpop.f32.mrf.mxu0
        %v4055 = vpop.f32.mrf.mxu0
        %v4056 = vadd.f32 0.0, %v4055
        %v4057 = vpop.f32.mrf.mxu0
        %4058 = vmatprep.mubr.bf16.mxu0 0
        %4059 = vmatmul.mubr.bf16.gmra.mxu0 %v3974
        %v4060 = vpop.f32.mrf.mxu0
        %v4061 = vadd.f32 0.0, %v4060
        %v4062 = vpop.f32.mrf.mxu0
        %v4063 = vpop.f32.mrf.mxu0
        %v4064 = vadd.f32 0.0, %v4063
        %v4065 = vpop.f32.mrf.mxu0
        %4066 = vmatprep.mubr.bf16.mxu0 0
        %4067 = vmatmul.mubr.bf16.gmra.mxu0 %v3977
        %v4068 = vpop.f32.mrf.mxu0
        %v4069 = vadd.f32 0.0, %v4068
        %v4070 = vpop.f32.mrf.mxu0
        %v4071 = vpop.f32.mrf.mxu0
        %v4072 = vadd.f32 0.0, %v4071
        %v4073 = vpop.f32.mrf.mxu0
        %4074 = vmatprep.mubr.bf16.mxu0 0
        %4075 = vmatmul.mubr.bf16.gmra.mxu0 %v3980
        %v4076 = vpop.f32.mrf.mxu0
        %v4077 = vadd.f32 0.0, %v4076
        %v4078 = vpop.f32.mrf.mxu0
        %v4079 = vpop.f32.mrf.mxu0
        %v4080 = vadd.f32 0.0, %v4079
        %v4081 = vpop.f32.mrf.mxu0
        %4082 = vmatprep.mubr.bf16.mxu0 0
        %4083 = vmatmul.mubr.bf16.gmra.mxu0 %v3983
        %v4084 = vpop.f32.mrf.mxu0
        %v4085 = vadd.f32 0.0, %v4084
        %v4086 = vpop.f32.mrf.mxu0
        %v4087 = vpop.f32.mrf.mxu0
        %v4088 = vadd.f32 0.0, %v4087
        %v4089 = vpop.f32.mrf.mxu0
        %4090 = vmatprep.mubr.bf16.mxu0 0
        %4091 = vmatmul.mubr.bf16.gmra.mxu0 %v3986
        %v4092 = vpop.f32.mrf.mxu0
        %v4093 = vadd.f32 0.0, %v4092
        %v4094 = vpop.f32.mrf.mxu0
        %v4095 = vpop.f32.mrf.mxu0
        %v4096 = vadd.f32 0.0, %v4095
        %v4097 = vpop.f32.mrf.mxu0
        %4098 = vmatprep.mubr.bf16.mxu0 0
        %4099 = vmatmul.mubr.bf16.gmra.mxu0 %v3989
        %v4100 = vpop.f32.mrf.mxu0
        %v4101 = vadd.f32 0.0, %v4100
        %v4102 = vpop.f32.mrf.mxu0
        %v4103 = vpop.f32.mrf.mxu0
        %v4104 = vadd.f32 0.0, %v4103
        %v4105 = vpop.f32.mrf.mxu0
        %4106 = vmatprep.mubr.bf16.mxu0 0
        %4107 = vmatmul.mubr.bf16.gmra.mxu0 %v3992
        %v4108 = vpop.f32.mrf.mxu0
        %v4109 = vadd.f32 0.0, %v4108
        %v4110 = vpop.f32.mrf.mxu0
        %v4111 = vpop.f32.mrf.mxu0
        %v4112 = vadd.f32 0.0, %v4111
        %v4113 = vpop.f32.mrf.mxu0
        %4114 = vdwg.mxu0
        %s4116 = sor.u32 256, 1
        %4117 = vrot.lane.b32.xlu0 %v4053, %s4116
        %v4118 = vpop.permute.xlu0 %4117
        %s4120 = sor.u32 256, 9
        %4121 = vrot.lane.b32.xlu0 %v4056, %s4120
        %v4122 = vpop.permute.xlu0 %4121
        %s4124 = sor.u32 256, 17
        %4125 = vrot.lane.b32.xlu0 %v4061, %s4124
        %v4126 = vpop.permute.xlu0 %4125
        %s4128 = sor.u32 256, 25
        %4129 = vrot.lane.b32.xlu0 %v4064, %s4128
        %v4130 = vpop.permute.xlu0 %4129
        %s4132 = sor.u32 256, 33
        %4133 = vrot.lane.b32.xlu0 %v4069, %s4132
        %v4134 = vpop.permute.xlu0 %4133
        %s4136 = sor.u32 256, 41
        %4137 = vrot.lane.b32.xlu0 %v4072, %s4136
        %v4138 = vpop.permute.xlu0 %4137
        %s4140 = sor.u32 256, 49
        %4141 = vrot.lane.b32.xlu0 %v4077, %s4140
        %v4142 = vpop.permute.xlu0 %4141
        %s4144 = sor.u32 256, 57
        %4145 = vrot.lane.b32.xlu0 %v4080, %s4144
        %v4146 = vpop.permute.xlu0 %4145
        %s4148 = sor.u32 256, 65
        %4149 = vrot.lane.b32.xlu0 %v4085, %s4148
        %v4150 = vpop.permute.xlu0 %4149
        %s4152 = sor.u32 256, 73
        %4153 = vrot.lane.b32.xlu0 %v4088, %s4152
        %v4154 = vpop.permute.xlu0 %4153
        %s4156 = sor.u32 256, 81
        %4157 = vrot.lane.b32.xlu0 %v4093, %s4156
        %v4158 = vpop.permute.xlu0 %4157
        %s4160 = sor.u32 256, 89
        %4161 = vrot.lane.b32.xlu0 %v4096, %s4160
        %v4162 = vpop.permute.xlu0 %4161
        %s4164 = sor.u32 256, 97
        %4165 = vrot.lane.b32.xlu0 %v4101, %s4164
        %v4166 = vpop.permute.xlu0 %4165
        %s4168 = sor.u32 256, 105
        %4169 = vrot.lane.b32.xlu0 %v4104, %s4168
        %v4170 = vpop.permute.xlu0 %4169
        %s4172 = sor.u32 256, 113
        %4173 = vrot.lane.b32.xlu0 %v4109, %s4172
        %v4174 = vpop.permute.xlu0 %4173
        %s4176 = sor.u32 256, 121
        %4177 = vrot.lane.b32.xlu0 %v4112, %s4176
        %v4178 = vpop.permute.xlu0 %4177
        %v4179 = vrot.slane %v4118, 1
        %v4180 = vrot.slane %v4122, 1
        %v4181 = vrot.slane %v4126, 1
        %v4182 = vrot.slane %v4130, 1
        %v4183 = vrot.slane %v4134, 1
        %v4184 = vrot.slane %v4138, 1
        %v4185 = vrot.slane %v4142, 1
        %v4186 = vrot.slane %v4146, 1
        %v4187 = vrot.slane %v4150, 1
        %v4188 = vrot.slane %v4154, 1
        %v4189 = vrot.slane %v4158, 1
        %v4190 = vrot.slane %v4162, 1
        %v4191 = vrot.slane %v4166, 1
        %v4192 = vrot.slane %v4170, 1
        %v4193 = vrot.slane %v4174, 1
        %v4194 = vrot.slane %v4178, 1
        %v4195 = vsel %vm3385, %v4193, %v4194
        %v4196 = vsel %vm3385, %v4192, %v4193
        %v4197 = vsel %vm3385, %v4191, %v4192
        %v4198 = vsel %vm3385, %v4190, %v4191
        %v4199 = vsel %vm3385, %v4189, %v4190
        %v4200 = vsel %vm3385, %v4188, %v4189
        %v4201 = vsel %vm3385, %v4187, %v4188
        %v4202 = vsel %vm3385, %v4186, %v4187
        %v4203 = vsel %vm3385, %v4185, %v4186
        %v4204 = vsel %vm3385, %v4184, %v4185
        %v4205 = vsel %vm3385, %v4183, %v4184
        %v4206 = vsel %vm3385, %v4182, %v4183
        %v4207 = vsel %vm3385, %v4181, %v4182
        %v4208 = vsel %vm3385, %v4180, %v4181
        %v4209 = vsel %vm3385, %v4179, %v4180
        %v4210 = vsel %vm3385, %v4194, %v4179
        %v4211 = vmul.f32 %v4209, %v3035
        %v4212 = vmul.f32 %v4208, %v3036
        %v4213 = vmul.f32 %v4207, %v3037
        %v4214 = vmul.f32 %v4206, %v3038
        %v4215 = vmul.f32 %v4205, %v3039
        %v4216 = vmul.f32 %v4204, %v3040
        %v4217 = vmul.f32 %v4203, %v3041
        %v4218 = vmul.f32 %v4202, %v3042
        %v4219 = vmul.f32 %v4201, %v3043
        %v4220 = vmul.f32 %v4200, %v3044
        %v4221 = vmul.f32 %v4199, %v3045
        %v4222 = vmul.f32 %v4198, %v3046
        %v4223 = vmul.f32 %v4197, %v3047
        %v4224 = vmul.f32 %v4196, %v3048
        %v4225 = vmul.f32 %v4195, %v3049
        %v4226 = vmul.f32 %v4210, %v3050
        %v4227 = vsel %vm2971, %v4118, %v4211
        %v4228 = vsel %vm2972, %v4122, %v4212
        %v4229 = vsel %vm2973, %v4126, %v4213
        %v4230 = vsel %vm2974, %v4130, %v4214
        %v4231 = vsel %vm2975, %v4134, %v4215
        %v4232 = vsel %vm2976, %v4138, %v4216
        %v4233 = vsel %vm2977, %v4142, %v4217
        %v4234 = vsel %vm2978, %v4146, %v4218
        %v4235 = vsel %vm2979, %v4150, %v4219
        %v4236 = vsel %vm2980, %v4154, %v4220
        %v4237 = vsel %vm2981, %v4158, %v4221
        %v4238 = vsel %vm2982, %v4162, %v4222
        %v4239 = vsel %vm2983, %v4166, %v4223
        %v4240 = vsel %vm2984, %v4170, %v4224
        %v4241 = vsel %vm2985, %v4174, %v4225
        %v4242 = vsel %vm2986, %v4178, %v4226
        %4251 = vrot.lane.b32.xlu0 %v3073, 96
        %v4252 = vpop.permute.xlu0 %4251
        %4253 = vrot.lane.b32.xlu0 %v3074, 96
        %v4254 = vpop.permute.xlu0 %4253
        %4255 = vrot.lane.b32.xlu0 %v3075, 96
        %v4256 = vpop.permute.xlu0 %4255
        %4257 = vrot.lane.b32.xlu0 %v3076, 96
        %v4258 = vpop.permute.xlu0 %4257
        %4259 = vrot.lane.b32.xlu0 %v3077, 96
        %v4260 = vpop.permute.xlu0 %4259
        %4261 = vrot.lane.b32.xlu0 %v3078, 96
        %v4262 = vpop.permute.xlu0 %4261
        %4263 = vrot.lane.b32.xlu0 %v3079, 96
        %v4264 = vpop.permute.xlu0 %4263
        %4265 = vrot.lane.b32.xlu0 %v3080, 96
        %v4266 = vpop.permute.xlu0 %4265
        %4275 = vrot.lane.b32.xlu0 %v3081, 96
        %v4276 = vpop.permute.xlu0 %4275
        %4277 = vrot.lane.b32.xlu0 %v3082, 96
        %v4278 = vpop.permute.xlu0 %4277
        %4279 = vrot.lane.b32.xlu0 %v3083, 96
        %v4280 = vpop.permute.xlu0 %4279
        %4281 = vrot.lane.b32.xlu0 %v3084, 96
        %v4282 = vpop.permute.xlu0 %4281
        %4283 = vrot.lane.b32.xlu0 %v3085, 96
        %v4284 = vpop.permute.xlu0 %4283
        %4285 = vrot.lane.b32.xlu0 %v3086, 96
        %v4286 = vpop.permute.xlu0 %4285
        %4287 = vrot.lane.b32.xlu0 %v3087, 96
        %v4288 = vpop.permute.xlu0 %4287
        %4289 = vrot.lane.b32.xlu0 %v3088, 96
        %v4290 = vpop.permute.xlu0 %4289
        %v4292 = vsel %vm3159, %v4252, 0
        %v4295 = vsel %vm3159, %v4254, 0
        %v4298 = vsel %vm3159, %v4256, 0
        %v4301 = vsel %vm3159, %v4258, 0
        %v4304 = vsel %vm3159, %v4260, 0
        %v4307 = vsel %vm3159, %v4262, 0
        %v4310 = vsel %vm3159, %v4264, 0
        %v4313 = vsel %vm3159, %v4266, 0
        %v4316 = vsel %vm3159, %v4276, 0
        %v4319 = vsel %vm3159, %v4278, 0
        %v4322 = vsel %vm3159, %v4280, 0
        %v4325 = vsel %vm3159, %v4282, 0
        %v4328 = vsel %vm3159, %v4284, 0
        %v4331 = vsel %vm3159, %v4286, 0
        %v4334 = vsel %vm3159, %v4288, 0
        %v4337 = vsel %vm3159, %v4290, 0
        %4339 = vmatprep.subr.bf16.mxu0 0
        %4340 = vmatpush1.bf16.xpose.msra.mxu0 %v4337
        %4341 = vmatprep.subr.bf16.mxu0 0
        %4342 = vmatpush1.bf16.xpose.msra.mxu0 %v4334
        %4343 = vmatprep.subr.bf16.mxu0 0
        %4344 = vmatpush1.bf16.xpose.msra.mxu0 %v4331
        %4345 = vmatprep.subr.bf16.mxu0 0
        %4346 = vmatpush1.bf16.xpose.msra.mxu0 %v4328
        %4347 = vmatprep.subr.bf16.mxu0 0
        %4348 = vmatpush1.bf16.xpose.msra.mxu0 %v4325
        %4349 = vmatprep.subr.bf16.mxu0 0
        %4350 = vmatpush1.bf16.xpose.msra.mxu0 %v4322
        %4351 = vmatprep.subr.bf16.mxu0 0
        %4352 = vmatpush1.bf16.xpose.msra.mxu0 %v4319
        %4353 = vmatprep.subr.bf16.mxu0 0
        %4354 = vmatpush1.bf16.xpose.msra.mxu0 %v4316
        %4355 = vmatprep.subr.bf16.mxu0 0
        %4356 = vmatpush2.bf16.xpose.msra.mxu0 0
        %4357 = vmatprep.subr.bf16.mxu0 0
        %4358 = vmatpush2.bf16.xpose.msra.mxu0 0
        %4359 = vmatprep.subr.bf16.mxu0 0
        %4360 = vmatpush2.bf16.xpose.msra.mxu0 0
        %4361 = vmatprep.subr.bf16.mxu0 0
        %4362 = vmatpush2.bf16.xpose.msra.mxu0 0
        %4363 = vmatprep.subr.bf16.mxu0 0
        %4364 = vmatpush2.bf16.xpose.msra.mxu0 0
        %4365 = vmatprep.subr.bf16.mxu0 0
        %4366 = vmatpush2.bf16.xpose.msra.mxu0 0
        %4367 = vmatprep.subr.bf16.mxu0 0
        %4368 = vmatpush2.bf16.xpose.msra.mxu0 0
        %4369 = vmatprep.subr.bf16.mxu0 0
        %4370 = vmatpush2.bf16.xpose.msra.mxu0 0
        %4371 = vmatprep.mubr.bf16.mxu0 0
        %4372 = vmatmul.mubr.bf16.gmra.mxu0 %v4292
        %v4373 = vpop.f32.mrf.mxu0
        %v4374 = vadd.f32 %v4227, %v4373
        %v4375 = vpop.f32.mrf.mxu0
        %v4376 = vpop.f32.mrf.mxu0
        %v4377 = vadd.f32 %v4228, %v4376
        %v4378 = vpop.f32.mrf.mxu0
        %4379 = vmatprep.mubr.bf16.mxu0 0
        %4380 = vmatmul.mubr.bf16.gmra.mxu0 %v4295
        %v4381 = vpop.f32.mrf.mxu0
        %v4382 = vadd.f32 %v4229, %v4381
        %v4383 = vpop.f32.mrf.mxu0
        %v4384 = vpop.f32.mrf.mxu0
        %v4385 = vadd.f32 %v4230, %v4384
        %v4386 = vpop.f32.mrf.mxu0
        %4387 = vmatprep.mubr.bf16.mxu0 0
        %4388 = vmatmul.mubr.bf16.gmra.mxu0 %v4298
        %v4389 = vpop.f32.mrf.mxu0
        %v4390 = vadd.f32 %v4231, %v4389
        %v4391 = vpop.f32.mrf.mxu0
        %v4392 = vpop.f32.mrf.mxu0
        %v4393 = vadd.f32 %v4232, %v4392
        %v4394 = vpop.f32.mrf.mxu0
        %4395 = vmatprep.mubr.bf16.mxu0 0
        %4396 = vmatmul.mubr.bf16.gmra.mxu0 %v4301
        %v4397 = vpop.f32.mrf.mxu0
        %v4398 = vadd.f32 %v4233, %v4397
        %v4399 = vpop.f32.mrf.mxu0
        %v4400 = vpop.f32.mrf.mxu0
        %v4401 = vadd.f32 %v4234, %v4400
        %v4402 = vpop.f32.mrf.mxu0
        %4403 = vmatprep.mubr.bf16.mxu0 0
        %4404 = vmatmul.mubr.bf16.gmra.mxu0 %v4304
        %v4405 = vpop.f32.mrf.mxu0
        %v4406 = vadd.f32 %v4235, %v4405
        %v4407 = vpop.f32.mrf.mxu0
        %v4408 = vpop.f32.mrf.mxu0
        %v4409 = vadd.f32 %v4236, %v4408
        %v4410 = vpop.f32.mrf.mxu0
        %4411 = vmatprep.mubr.bf16.mxu0 0
        %4412 = vmatmul.mubr.bf16.gmra.mxu0 %v4307
        %v4413 = vpop.f32.mrf.mxu0
        %v4414 = vadd.f32 %v4237, %v4413
        %v4415 = vpop.f32.mrf.mxu0
        %v4416 = vpop.f32.mrf.mxu0
        %v4417 = vadd.f32 %v4238, %v4416
        %v4418 = vpop.f32.mrf.mxu0
        %4419 = vmatprep.mubr.bf16.mxu0 0
        %4420 = vmatmul.mubr.bf16.gmra.mxu0 %v4310
        %v4421 = vpop.f32.mrf.mxu0
        %v4422 = vadd.f32 %v4239, %v4421
        %v4423 = vpop.f32.mrf.mxu0
        %v4424 = vpop.f32.mrf.mxu0
        %v4425 = vadd.f32 %v4240, %v4424
        %v4426 = vpop.f32.mrf.mxu0
        %4427 = vmatprep.mubr.bf16.mxu0 0
        %4428 = vmatmul.mubr.bf16.gmra.mxu0 %v4313
        %v4429 = vpop.f32.mrf.mxu0
        %v4430 = vadd.f32 %v4241, %v4429
        %v4431 = vpop.f32.mrf.mxu0
        %v4432 = vpop.f32.mrf.mxu0
        %v4433 = vadd.f32 %v4242, %v4432
        %v4434 = vpop.f32.mrf.mxu0
        %4435 = vdwg.mxu0
        %v4436 = vadd.f32 %v4374, %v3583
        %v4437 = vadd.f32 %v4377, %v3583
        %v4438 = vadd.f32 %v4382, %v3583
        %v4439 = vadd.f32 %v4385, %v3583
        %v4440 = vadd.f32 %v4390, %v3583
        %v4441 = vadd.f32 %v4393, %v3583
        %v4442 = vadd.f32 %v4398, %v3583
        %v4443 = vadd.f32 %v4401, %v3583
        %v4444 = vadd.f32 %v4406, %v3583
        %v4445 = vadd.f32 %v4409, %v3583
        %v4446 = vadd.f32 %v4414, %v3583
        %v4447 = vadd.f32 %v4417, %v3583
        %v4448 = vadd.f32 %v4422, %v3583
        %v4449 = vadd.f32 %v4425, %v3583
        %v4450 = vadd.f32 %v4430, %v3583
        %v4451 = vadd.f32 %v4433, %v3583
        %4452 = vmax.xlane.f32.xlu0 %v4436
        %v4453 = vpop.xlane.xlu0 %4452
        %4454 = vmax.xlane.f32.xlu0 %v4437
        %v4455 = vpop.xlane.xlu0 %4454
        %4456 = vmax.xlane.f32.xlu0 %v4438
        %v4457 = vpop.xlane.xlu0 %4456
        %4458 = vmax.xlane.f32.xlu0 %v4439
        %v4459 = vpop.xlane.xlu0 %4458
        %4460 = vmax.xlane.f32.xlu0 %v4440
        %v4461 = vpop.xlane.xlu0 %4460
        %4462 = vmax.xlane.f32.xlu0 %v4441
        %v4463 = vpop.xlane.xlu0 %4462
        %4464 = vmax.xlane.f32.xlu0 %v4442
        %v4465 = vpop.xlane.xlu0 %4464
        %4466 = vmax.xlane.f32.xlu0 %v4443
        %v4467 = vpop.xlane.xlu0 %4466
        %4468 = vmax.xlane.f32.xlu0 %v4444
        %v4469 = vpop.xlane.xlu0 %4468
        %4470 = vmax.xlane.f32.xlu0 %v4445
        %v4471 = vpop.xlane.xlu0 %4470
        %4472 = vmax.xlane.f32.xlu0 %v4446
        %v4473 = vpop.xlane.xlu0 %4472
        %4474 = vmax.xlane.f32.xlu0 %v4447
        %v4475 = vpop.xlane.xlu0 %4474
        %4476 = vmax.xlane.f32.xlu0 %v4448
        %v4477 = vpop.xlane.xlu0 %4476
        %4478 = vmax.xlane.f32.xlu0 %v4449
        %v4479 = vpop.xlane.xlu0 %4478
        %4480 = vmax.xlane.f32.xlu0 %v4450
        %v4481 = vpop.xlane.xlu0 %4480
        %4482 = vmax.xlane.f32.xlu0 %v4451
        %v4483 = vpop.xlane.xlu0 %4482
        %v4484 = vsub.f32 %v4436, %v4453
        %v4485 = vsub.f32 %v4437, %v4455
        %v4486 = vsub.f32 %v4438, %v4457
        %v4487 = vsub.f32 %v4439, %v4459
        %v4488 = vsub.f32 %v4440, %v4461
        %v4489 = vsub.f32 %v4441, %v4463
        %v4490 = vsub.f32 %v4442, %v4465
        %v4491 = vsub.f32 %v4443, %v4467
        %v4492 = vsub.f32 %v4444, %v4469
        %v4493 = vsub.f32 %v4445, %v4471
        %v4494 = vsub.f32 %v4446, %v4473
        %v4495 = vsub.f32 %v4447, %v4475
        %v4496 = vsub.f32 %v4448, %v4477
        %v4497 = vsub.f32 %v4449, %v4479
        %v4498 = vsub.f32 %v4450, %v4481
        %v4499 = vsub.f32 %v4451, %v4483
        %v4500 = vmul.f32 %v4484, 1.442695
        %v4501 = vpow.pop %v4500
        %v4502 = vmul.f32 %v4485, 1.442695
        %v4503 = vpow.pop %v4502
        %v4504 = vmul.f32 %v4486, 1.442695
        %v4505 = vpow.pop %v4504
        %v4506 = vmul.f32 %v4487, 1.442695
        %v4507 = vpow.pop %v4506
        %v4508 = vmul.f32 %v4488, 1.442695
        %v4509 = vpow.pop %v4508
        %v4510 = vmul.f32 %v4489, 1.442695
        %v4511 = vpow.pop %v4510
        %v4512 = vmul.f32 %v4490, 1.442695
        %v4513 = vpow.pop %v4512
        %v4514 = vmul.f32 %v4491, 1.442695
        %v4515 = vpow.pop %v4514
        %v4516 = vmul.f32 %v4492, 1.442695
        %v4517 = vpow.pop %v4516
        %v4518 = vmul.f32 %v4493, 1.442695
        %v4519 = vpow.pop %v4518
        %v4520 = vmul.f32 %v4494, 1.442695
        %v4521 = vpow.pop %v4520
        %v4522 = vmul.f32 %v4495, 1.442695
        %v4523 = vpow.pop %v4522
        %v4524 = vmul.f32 %v4496, 1.442695
        %v4525 = vpow.pop %v4524
        %v4526 = vmul.f32 %v4497, 1.442695
        %v4527 = vpow.pop %v4526
        %v4528 = vmul.f32 %v4498, 1.442695
        %v4529 = vpow.pop %v4528
        %v4530 = vmul.f32 %v4499, 1.442695
        %v4531 = vpow.pop %v4530
        %4532 = vadd.xlane.f32.xlu0 %v4501
        %v4533 = vpop.xlane.xlu0 %4532
        %4534 = vadd.xlane.f32.xlu0 %v4503
        %v4535 = vpop.xlane.xlu0 %4534
        %4536 = vadd.xlane.f32.xlu0 %v4505
        %v4537 = vpop.xlane.xlu0 %4536
        %4538 = vadd.xlane.f32.xlu0 %v4507
        %v4539 = vpop.xlane.xlu0 %4538
        %4540 = vadd.xlane.f32.xlu0 %v4509
        %v4541 = vpop.xlane.xlu0 %4540
        %4542 = vadd.xlane.f32.xlu0 %v4511
        %v4543 = vpop.xlane.xlu0 %4542
        %4544 = vadd.xlane.f32.xlu0 %v4513
        %v4545 = vpop.xlane.xlu0 %4544
        %4546 = vadd.xlane.f32.xlu0 %v4515
        %v4547 = vpop.xlane.xlu0 %4546
        %4548 = vadd.xlane.f32.xlu0 %v4517
        %v4549 = vpop.xlane.xlu0 %4548
        %4550 = vadd.xlane.f32.xlu0 %v4519
        %v4551 = vpop.xlane.xlu0 %4550
        %4552 = vadd.xlane.f32.xlu0 %v4521
        %v4553 = vpop.xlane.xlu0 %4552
        %4554 = vadd.xlane.f32.xlu0 %v4523
        %v4555 = vpop.xlane.xlu0 %4554
        %4556 = vadd.xlane.f32.xlu0 %v4525
        %v4557 = vpop.xlane.xlu0 %4556
        %4558 = vadd.xlane.f32.xlu0 %v4527
        %v4559 = vpop.xlane.xlu0 %4558
        %4560 = vadd.xlane.f32.xlu0 %v4529
        %v4561 = vpop.xlane.xlu0 %4560
        %4562 = vadd.xlane.f32.xlu0 %v4531
        %v4563 = vpop.xlane.xlu0 %4562
        %v4564 = vrcp.pop %v4533
        %v4565 = vrcp.pop %v4535
        %v4566 = vrcp.pop %v4537
        %v4567 = vrcp.pop %v4539
        %v4568 = vrcp.pop %v4541
        %v4569 = vrcp.pop %v4543
        %v4570 = vrcp.pop %v4545
        %v4571 = vrcp.pop %v4547
        %v4572 = vrcp.pop %v4549
        %v4573 = vrcp.pop %v4551
        %v4574 = vrcp.pop %v4553
        %v4575 = vrcp.pop %v4555
        %v4576 = vrcp.pop %v4557
        %v4577 = vrcp.pop %v4559
        %v4578 = vrcp.pop %v4561
        %v4579 = vrcp.pop %v4563
        %v4580 = vmul.f32 %v4501, %v4564
        %v4581 = vmul.f32 %v4503, %v4565
        %v4582 = vmul.f32 %v4505, %v4566
        %v4583 = vmul.f32 %v4507, %v4567
        %v4584 = vmul.f32 %v4509, %v4568
        %v4585 = vmul.f32 %v4511, %v4569
        %v4586 = vmul.f32 %v4513, %v4570
        %v4587 = vmul.f32 %v4515, %v4571
        %v4588 = vmul.f32 %v4517, %v4572
        %v4589 = vmul.f32 %v4519, %v4573
        %v4590 = vmul.f32 %v4521, %v4574
        %v4591 = vmul.f32 %v4523, %v4575
        %v4592 = vmul.f32 %v4525, %v4576
        %v4593 = vmul.f32 %v4527, %v4577
        %v4594 = vmul.f32 %v4529, %v4578
        %v4595 = vmul.f32 %v4531, %v4579
        %v4596 = vpack.c.bf16 %v4581, %v4580
        %v4597 = vpack.c.bf16 %v4583, %v4582
        %v4598 = vpack.c.bf16 %v4585, %v4584
        %v4599 = vpack.c.bf16 %v4587, %v4586
        %v4600 = vpack.c.bf16 %v4589, %v4588
        %v4601 = vpack.c.bf16 %v4591, %v4590
        %v4602 = vpack.c.bf16 %v4593, %v4592
        %v4603 = vpack.c.bf16 %v4595, %v4594
        %v4612 = vunpack.c.l.b16 %v4596
        %v4613 = vunpack.c.h.b16 %v4596
        %v4614 = vunpack.c.l.b16 %v4597
        %v4615 = vunpack.c.h.b16 %v4597
        %v4616 = vunpack.c.l.b16 %v4598
        %v4617 = vunpack.c.h.b16 %v4598
        %v4618 = vunpack.c.l.b16 %v4599
        %v4619 = vunpack.c.h.b16 %v4599
        %v4620 = vunpack.c.l.b16 %v4600
        %v4621 = vunpack.c.h.b16 %v4600
        %v4622 = vunpack.c.l.b16 %v4601
        %v4623 = vunpack.c.h.b16 %v4601
        %v4624 = vunpack.c.l.b16 %v4602
        %v4625 = vunpack.c.h.b16 %v4602
        %v4626 = vunpack.c.l.b16 %v4603
        %v4627 = vunpack.c.h.b16 %v4603
        %v4628 = vpack.c.b16 %v4612, %v4612
        %v4629 = vpack.c.b16 %v4613, %v4613
        %v4630 = vpack.c.b16 %v4614, %v4614
        %v4631 = vpack.c.b16 %v4615, %v4615
        %v4632 = vpack.c.b16 %v4616, %v4616
        %v4633 = vpack.c.b16 %v4617, %v4617
        %v4634 = vpack.c.b16 %v4618, %v4618
        %v4635 = vpack.c.b16 %v4619, %v4619
        %v4636 = vpack.c.b16 %v4620, %v4620
        %v4637 = vpack.c.b16 %v4621, %v4621
        %v4638 = vpack.c.b16 %v4622, %v4622
        %v4639 = vpack.c.b16 %v4623, %v4623
        %v4640 = vpack.c.b16 %v4624, %v4624
        %v4641 = vpack.c.b16 %v4625, %v4625
        %v4642 = vpack.c.b16 %v4626, %v4626
        %v4643 = vpack.c.b16 %v4627, %v4627
        %s4660 = scalar_lea.vmem %s1113, 64 [#allocation4]
        %4661 = vst [vmem:[%s4660] sm:$0xf] %v4628
        %4662 = vst [vmem:[%s4660 + $0x4] sm:$0xf] %v4629
        %4663 = vst [vmem:[%s4660 + $0x8] sm:$0xf] %v4630
        %4664 = vst [vmem:[%s4660 + $0xc] sm:$0xf] %v4631
        %4665 = vst [vmem:[%s4660 + $0x10] sm:$0xf] %v4632
        %4666 = vst [vmem:[%s4660 + $0x14] sm:$0xf] %v4633
        %4667 = vst [vmem:[%s4660 + $0x18] sm:$0xf] %v4634
        %4668 = vst [vmem:[%s4660 + $0x1c] sm:$0xf] %v4635
        %4669 = vst [vmem:[%s4660 + $0x20] sm:$0xf] %v4636
        %4670 = vst [vmem:[%s4660 + $0x24] sm:$0xf] %v4637
        %4671 = vst [vmem:[%s4660 + $0x28] sm:$0xf] %v4638
        %4672 = vst [vmem:[%s4660 + $0x2c] sm:$0xf] %v4639
        %4673 = vst [vmem:[%s4660 + $0x30] sm:$0xf] %v4640
        %4674 = vst [vmem:[%s4660 + $0x34] sm:$0xf] %v4641
        %4675 = vst [vmem:[%s4660 + $0x38] sm:$0xf] %v4642
        %4676 = vst [vmem:[%s4660 + $0x3c] sm:$0xf] %v4643
        %4685 = vrot.lane.b32.xlu0 %v3825, 96
        %v4686 = vpop.permute.xlu0 %4685
        %4687 = vrot.lane.b32.xlu0 %v3826, 96
        %v4688 = vpop.permute.xlu0 %4687
        %4689 = vrot.lane.b32.xlu0 %v3827, 96
        %v4690 = vpop.permute.xlu0 %4689
        %4691 = vrot.lane.b32.xlu0 %v3828, 96
        %v4692 = vpop.permute.xlu0 %4691
        %4693 = vrot.lane.b32.xlu0 %v3829, 96
        %v4694 = vpop.permute.xlu0 %4693
        %4695 = vrot.lane.b32.xlu0 %v3830, 96
        %v4696 = vpop.permute.xlu0 %4695
        %4697 = vrot.lane.b32.xlu0 %v3831, 96
        %v4698 = vpop.permute.xlu0 %4697
        %4699 = vrot.lane.b32.xlu0 %v3832, 96
        %v4700 = vpop.permute.xlu0 %4699
        %4709 = vmatprep.subr.bf16.mxu0 0
        %4710 = vmatpush1.bf16.msra.mxu0 %v4700
        %4711 = vmatprep.subr.bf16.mxu0 0
        %4712 = vmatpush1.bf16.msra.mxu0 %v4698
        %4713 = vmatprep.subr.bf16.mxu0 0
        %4714 = vmatpush1.bf16.msra.mxu0 %v4696
        %4715 = vmatprep.subr.bf16.mxu0 0
        %4716 = vmatpush1.bf16.msra.mxu0 %v4694
        %4717 = vmatprep.subr.bf16.mxu0 0
        %4718 = vmatpush1.bf16.msra.mxu0 %v4692
        %4719 = vmatprep.subr.bf16.mxu0 0
        %4720 = vmatpush1.bf16.msra.mxu0 %v4690
        %4721 = vmatprep.subr.bf16.mxu0 0
        %4722 = vmatpush1.bf16.msra.mxu0 %v4688
        %4723 = vmatprep.subr.bf16.mxu0 0
        %4724 = vmatpush1.bf16.msra.mxu0 %v4686
        %4725 = vmatprep.subr.bf16.mxu0 0
        %4726 = vmatpush2.bf16.msra.mxu0 0
        %4727 = vmatprep.subr.bf16.mxu0 0
        %4728 = vmatpush2.bf16.msra.mxu0 0
        %4729 = vmatprep.subr.bf16.mxu0 0
        %4730 = vmatpush2.bf16.msra.mxu0 0
        %4731 = vmatprep.subr.bf16.mxu0 0
        %4732 = vmatpush2.bf16.msra.mxu0 0
        %4733 = vmatprep.subr.bf16.mxu0 0
        %4734 = vmatpush2.bf16.msra.mxu0 0
        %4735 = vmatprep.subr.bf16.mxu0 0
        %4736 = vmatpush2.bf16.msra.mxu0 0
        %4737 = vmatprep.subr.bf16.mxu0 0
        %4738 = vmatpush2.bf16.msra.mxu0 0
        %4739 = vmatprep.subr.bf16.mxu0 0
        %4740 = vmatpush2.bf16.msra.mxu0 0
        %4741 = vmatprep.mubr.bf16.mxu0 0
        %4742 = vmatmul.mubr.bf16.gmra.mxu0 %v4596
        %v4743 = vpop.f32.mrf.mxu0
        %v4744 = vadd.f32 0.0, %v4743
        %v4745 = vpop.f32.mrf.mxu0
        %v4746 = vpop.f32.mrf.mxu0
        %v4747 = vadd.f32 0.0, %v4746
        %v4748 = vpop.f32.mrf.mxu0
        %4749 = vmatprep.mubr.bf16.mxu0 0
        %4750 = vmatmul.mubr.bf16.gmra.mxu0 %v4597
        %v4751 = vpop.f32.mrf.mxu0
        %v4752 = vadd.f32 0.0, %v4751
        %v4753 = vpop.f32.mrf.mxu0
        %v4754 = vpop.f32.mrf.mxu0
        %v4755 = vadd.f32 0.0, %v4754
        %v4756 = vpop.f32.mrf.mxu0
        %4757 = vmatprep.mubr.bf16.mxu0 0
        %4758 = vmatmul.mubr.bf16.gmra.mxu0 %v4598
        %v4759 = vpop.f32.mrf.mxu0
        %v4760 = vadd.f32 0.0, %v4759
        %v4761 = vpop.f32.mrf.mxu0
        %v4762 = vpop.f32.mrf.mxu0
        %v4763 = vadd.f32 0.0, %v4762
        %v4764 = vpop.f32.mrf.mxu0
        %4765 = vmatprep.mubr.bf16.mxu0 0
        %4766 = vmatmul.mubr.bf16.gmra.mxu0 %v4599
        %v4767 = vpop.f32.mrf.mxu0
        %v4768 = vadd.f32 0.0, %v4767
        %v4769 = vpop.f32.mrf.mxu0
        %v4770 = vpop.f32.mrf.mxu0
        %v4771 = vadd.f32 0.0, %v4770
        %v4772 = vpop.f32.mrf.mxu0
        %4773 = vmatprep.mubr.bf16.mxu0 0
        %4774 = vmatmul.mubr.bf16.gmra.mxu0 %v4600
        %v4775 = vpop.f32.mrf.mxu0
        %v4776 = vadd.f32 0.0, %v4775
        %v4777 = vpop.f32.mrf.mxu0
        %v4778 = vpop.f32.mrf.mxu0
        %v4779 = vadd.f32 0.0, %v4778
        %v4780 = vpop.f32.mrf.mxu0
        %4781 = vmatprep.mubr.bf16.mxu0 0
        %4782 = vmatmul.mubr.bf16.gmra.mxu0 %v4601
        %v4783 = vpop.f32.mrf.mxu0
        %v4784 = vadd.f32 0.0, %v4783
        %v4785 = vpop.f32.mrf.mxu0
        %v4786 = vpop.f32.mrf.mxu0
        %v4787 = vadd.f32 0.0, %v4786
        %v4788 = vpop.f32.mrf.mxu0
        %4789 = vmatprep.mubr.bf16.mxu0 0
        %4790 = vmatmul.mubr.bf16.gmra.mxu0 %v4602
        %v4791 = vpop.f32.mrf.mxu0
        %v4792 = vadd.f32 0.0, %v4791
        %v4793 = vpop.f32.mrf.mxu0
        %v4794 = vpop.f32.mrf.mxu0
        %v4795 = vadd.f32 0.0, %v4794
        %v4796 = vpop.f32.mrf.mxu0
        %4797 = vmatprep.mubr.bf16.mxu0 0
        %4798 = vmatmul.mubr.bf16.gmra.mxu0 %v4603
        %v4799 = vpop.f32.mrf.mxu0
        %v4800 = vadd.f32 0.0, %v4799
        %v4801 = vpop.f32.mrf.mxu0
        %v4802 = vpop.f32.mrf.mxu0
        %v4803 = vadd.f32 0.0, %v4802
        %v4804 = vpop.f32.mrf.mxu0
        %4805 = vdwg.mxu0
        %4806 = vrot.lane.b32.xlu0 %v3111, 64
        %v4807 = vpop.permute.xlu0 %4806
        %4808 = vrot.lane.b32.xlu0 %v3112, 64
        %v4809 = vpop.permute.xlu0 %4808
        %4810 = vrot.lane.b32.xlu0 %v3113, 64
        %v4811 = vpop.permute.xlu0 %4810
        %4812 = vrot.lane.b32.xlu0 %v3114, 64
        %v4813 = vpop.permute.xlu0 %4812
        %4814 = vrot.lane.b32.xlu0 %v3115, 64
        %v4815 = vpop.permute.xlu0 %4814
        %4816 = vrot.lane.b32.xlu0 %v3116, 64
        %v4817 = vpop.permute.xlu0 %4816
        %4818 = vrot.lane.b32.xlu0 %v3117, 64
        %v4819 = vpop.permute.xlu0 %4818
        %4820 = vrot.lane.b32.xlu0 %v3118, 64
        %v4821 = vpop.permute.xlu0 %4820
        %4822 = vrot.lane.b32.xlu0 %v3151, 64
        %v4823 = vpop.permute.xlu0 %4822
        %4824 = vrot.lane.b32.xlu0 %v3152, 64
        %v4825 = vpop.permute.xlu0 %4824
        %4826 = vrot.lane.b32.xlu0 %v3153, 64
        %v4827 = vpop.permute.xlu0 %4826
        %4828 = vrot.lane.b32.xlu0 %v3154, 64
        %v4829 = vpop.permute.xlu0 %4828
        %4830 = vrot.lane.b32.xlu0 %v3155, 64
        %v4831 = vpop.permute.xlu0 %4830
        %4832 = vrot.lane.b32.xlu0 %v3156, 64
        %v4833 = vpop.permute.xlu0 %4832
        %4834 = vrot.lane.b32.xlu0 %v3157, 64
        %v4835 = vpop.permute.xlu0 %4834
        %4836 = vrot.lane.b32.xlu0 %v3158, 64
        %v4837 = vpop.permute.xlu0 %4836
        %v4839 = vsel %vm3159, %v4807, 0
        %v4842 = vsel %vm3159, %v4809, 0
        %v4845 = vsel %vm3159, %v4811, 0
        %v4848 = vsel %vm3159, %v4813, 0
        %v4851 = vsel %vm3159, %v4815, 0
        %v4854 = vsel %vm3159, %v4817, 0
        %v4857 = vsel %vm3159, %v4819, 0
        %v4860 = vsel %vm3159, %v4821, 0
        %v4863 = vsel %vm3159, %v4823, 0
        %v4866 = vsel %vm3159, %v4825, 0
        %v4869 = vsel %vm3159, %v4827, 0
        %v4872 = vsel %vm3159, %v4829, 0
        %v4875 = vsel %vm3159, %v4831, 0
        %v4878 = vsel %vm3159, %v4833, 0
        %v4881 = vsel %vm3159, %v4835, 0
        %v4884 = vsel %vm3159, %v4837, 0
        %4886 = vmatprep.subr.bf16.mxu0 0
        %4887 = vmatpush1.bf16.xpose.msra.mxu0 %v4884
        %4888 = vmatprep.subr.bf16.mxu0 0
        %4889 = vmatpush1.bf16.xpose.msra.mxu0 %v4881
        %4890 = vmatprep.subr.bf16.mxu0 0
        %4891 = vmatpush1.bf16.xpose.msra.mxu0 %v4878
        %4892 = vmatprep.subr.bf16.mxu0 0
        %4893 = vmatpush1.bf16.xpose.msra.mxu0 %v4875
        %4894 = vmatprep.subr.bf16.mxu0 0
        %4895 = vmatpush1.bf16.xpose.msra.mxu0 %v4872
        %4896 = vmatprep.subr.bf16.mxu0 0
        %4897 = vmatpush1.bf16.xpose.msra.mxu0 %v4869
        %4898 = vmatprep.subr.bf16.mxu0 0
        %4899 = vmatpush1.bf16.xpose.msra.mxu0 %v4866
        %4900 = vmatprep.subr.bf16.mxu0 0
        %4901 = vmatpush1.bf16.xpose.msra.mxu0 %v4863
        %4902 = vmatprep.subr.bf16.mxu0 0
        %4903 = vmatpush2.bf16.xpose.msra.mxu0 0
        %4904 = vmatprep.subr.bf16.mxu0 0
        %4905 = vmatpush2.bf16.xpose.msra.mxu0 0
        %4906 = vmatprep.subr.bf16.mxu0 0
        %4907 = vmatpush2.bf16.xpose.msra.mxu0 0
        %4908 = vmatprep.subr.bf16.mxu0 0
        %4909 = vmatpush2.bf16.xpose.msra.mxu0 0
        %4910 = vmatprep.subr.bf16.mxu0 0
        %4911 = vmatpush2.bf16.xpose.msra.mxu0 0
        %4912 = vmatprep.subr.bf16.mxu0 0
        %4913 = vmatpush2.bf16.xpose.msra.mxu0 0
        %4914 = vmatprep.subr.bf16.mxu0 0
        %4915 = vmatpush2.bf16.xpose.msra.mxu0 0
        %4916 = vmatprep.subr.bf16.mxu0 0
        %4917 = vmatpush2.bf16.xpose.msra.mxu0 0
        %4918 = vmatprep.mubr.bf16.mxu0 0
        %4919 = vmatmul.mubr.bf16.gmra.mxu0 %v4839
        %v4920 = vpop.f32.mrf.mxu0
        %v4921 = vadd.f32 0.0, %v4920
        %v4922 = vpop.f32.mrf.mxu0
        %v4923 = vpop.f32.mrf.mxu0
        %v4924 = vadd.f32 0.0, %v4923
        %v4925 = vpop.f32.mrf.mxu0
        %4926 = vmatprep.mubr.bf16.mxu0 0
        %4927 = vmatmul.mubr.bf16.gmra.mxu0 %v4842
        %v4928 = vpop.f32.mrf.mxu0
        %v4929 = vadd.f32 0.0, %v4928
        %v4930 = vpop.f32.mrf.mxu0
        %v4931 = vpop.f32.mrf.mxu0
        %v4932 = vadd.f32 0.0, %v4931
        %v4933 = vpop.f32.mrf.mxu0
        %4934 = vmatprep.mubr.bf16.mxu0 0
        %4935 = vmatmul.mubr.bf16.gmra.mxu0 %v4845
        %v4936 = vpop.f32.mrf.mxu0
        %v4937 = vadd.f32 0.0, %v4936
        %v4938 = vpop.f32.mrf.mxu0
        %v4939 = vpop.f32.mrf.mxu0
        %v4940 = vadd.f32 0.0, %v4939
        %v4941 = vpop.f32.mrf.mxu0
        %4942 = vmatprep.mubr.bf16.mxu0 0
        %4943 = vmatmul.mubr.bf16.gmra.mxu0 %v4848
        %v4944 = vpop.f32.mrf.mxu0
        %v4945 = vadd.f32 0.0, %v4944
        %v4946 = vpop.f32.mrf.mxu0
        %v4947 = vpop.f32.mrf.mxu0
        %v4948 = vadd.f32 0.0, %v4947
        %v4949 = vpop.f32.mrf.mxu0
        %4950 = vmatprep.mubr.bf16.mxu0 0
        %4951 = vmatmul.mubr.bf16.gmra.mxu0 %v4851
        %v4952 = vpop.f32.mrf.mxu0
        %v4953 = vadd.f32 0.0, %v4952
        %v4954 = vpop.f32.mrf.mxu0
        %v4955 = vpop.f32.mrf.mxu0
        %v4956 = vadd.f32 0.0, %v4955
        %v4957 = vpop.f32.mrf.mxu0
        %4958 = vmatprep.mubr.bf16.mxu0 0
        %4959 = vmatmul.mubr.bf16.gmra.mxu0 %v4854
        %v4960 = vpop.f32.mrf.mxu0
        %v4961 = vadd.f32 0.0, %v4960
        %v4962 = vpop.f32.mrf.mxu0
        %v4963 = vpop.f32.mrf.mxu0
        %v4964 = vadd.f32 0.0, %v4963
        %v4965 = vpop.f32.mrf.mxu0
        %4966 = vmatprep.mubr.bf16.mxu0 0
        %4967 = vmatmul.mubr.bf16.gmra.mxu0 %v4857
        %v4968 = vpop.f32.mrf.mxu0
        %v4969 = vadd.f32 0.0, %v4968
        %v4970 = vpop.f32.mrf.mxu0
        %v4971 = vpop.f32.mrf.mxu0
        %v4972 = vadd.f32 0.0, %v4971
        %v4973 = vpop.f32.mrf.mxu0
        %4974 = vmatprep.mubr.bf16.mxu0 0
        %4975 = vmatmul.mubr.bf16.gmra.mxu0 %v4860
        %v4976 = vpop.f32.mrf.mxu0
        %v4977 = vadd.f32 0.0, %v4976
        %v4978 = vpop.f32.mrf.mxu0
        %v4979 = vpop.f32.mrf.mxu0
        %v4980 = vadd.f32 0.0, %v4979
        %v4981 = vpop.f32.mrf.mxu0
        %4982 = vdwg.mxu0
        %s4984 = sor.u32 256, 1
        %4985 = vrot.lane.b32.xlu0 %v4921, %s4984
        %v4986 = vpop.permute.xlu0 %4985
        %s4988 = sor.u32 256, 9
        %4989 = vrot.lane.b32.xlu0 %v4924, %s4988
        %v4990 = vpop.permute.xlu0 %4989
        %s4992 = sor.u32 256, 17
        %4993 = vrot.lane.b32.xlu0 %v4929, %s4992
        %v4994 = vpop.permute.xlu0 %4993
        %s4996 = sor.u32 256, 25
        %4997 = vrot.lane.b32.xlu0 %v4932, %s4996
        %v4998 = vpop.permute.xlu0 %4997
        %s5000 = sor.u32 256, 33
        %5001 = vrot.lane.b32.xlu0 %v4937, %s5000
        %v5002 = vpop.permute.xlu0 %5001
        %s5004 = sor.u32 256, 41
        %5005 = vrot.lane.b32.xlu0 %v4940, %s5004
        %v5006 = vpop.permute.xlu0 %5005
        %s5008 = sor.u32 256, 49
        %5009 = vrot.lane.b32.xlu0 %v4945, %s5008
        %v5010 = vpop.permute.xlu0 %5009
        %s5012 = sor.u32 256, 57
        %5013 = vrot.lane.b32.xlu0 %v4948, %s5012
        %v5014 = vpop.permute.xlu0 %5013
        %s5016 = sor.u32 256, 65
        %5017 = vrot.lane.b32.xlu0 %v4953, %s5016
        %v5018 = vpop.permute.xlu0 %5017
        %s5020 = sor.u32 256, 73
        %5021 = vrot.lane.b32.xlu0 %v4956, %s5020
        %v5022 = vpop.permute.xlu0 %5021
        %s5024 = sor.u32 256, 81
        %5025 = vrot.lane.b32.xlu0 %v4961, %s5024
        %v5026 = vpop.permute.xlu0 %5025
        %s5028 = sor.u32 256, 89
        %5029 = vrot.lane.b32.xlu0 %v4964, %s5028
        %v5030 = vpop.permute.xlu0 %5029
        %s5032 = sor.u32 256, 97
        %5033 = vrot.lane.b32.xlu0 %v4969, %s5032
        %v5034 = vpop.permute.xlu0 %5033
        %s5036 = sor.u32 256, 105
        %5037 = vrot.lane.b32.xlu0 %v4972, %s5036
        %v5038 = vpop.permute.xlu0 %5037
        %s5040 = sor.u32 256, 113
        %5041 = vrot.lane.b32.xlu0 %v4977, %s5040
        %v5042 = vpop.permute.xlu0 %5041
        %s5044 = sor.u32 256, 121
        %5045 = vrot.lane.b32.xlu0 %v4980, %s5044
        %v5046 = vpop.permute.xlu0 %5045
        %v5047 = vrot.slane %v4986, 1
        %v5048 = vrot.slane %v4990, 1
        %v5049 = vrot.slane %v4994, 1
        %v5050 = vrot.slane %v4998, 1
        %v5051 = vrot.slane %v5002, 1
        %v5052 = vrot.slane %v5006, 1
        %v5053 = vrot.slane %v5010, 1
        %v5054 = vrot.slane %v5014, 1
        %v5055 = vrot.slane %v5018, 1
        %v5056 = vrot.slane %v5022, 1
        %v5057 = vrot.slane %v5026, 1
        %v5058 = vrot.slane %v5030, 1
        %v5059 = vrot.slane %v5034, 1
        %v5060 = vrot.slane %v5038, 1
        %v5061 = vrot.slane %v5042, 1
        %v5062 = vrot.slane %v5046, 1
        %v5063 = vsel %vm3385, %v5061, %v5062
        %v5064 = vsel %vm3385, %v5060, %v5061
        %v5065 = vsel %vm3385, %v5059, %v5060
        %v5066 = vsel %vm3385, %v5058, %v5059
        %v5067 = vsel %vm3385, %v5057, %v5058
        %v5068 = vsel %vm3385, %v5056, %v5057
        %v5069 = vsel %vm3385, %v5055, %v5056
        %v5070 = vsel %vm3385, %v5054, %v5055
        %v5071 = vsel %vm3385, %v5053, %v5054
        %v5072 = vsel %vm3385, %v5052, %v5053
        %v5073 = vsel %vm3385, %v5051, %v5052
        %v5074 = vsel %vm3385, %v5050, %v5051
        %v5075 = vsel %vm3385, %v5049, %v5050
        %v5076 = vsel %vm3385, %v5048, %v5049
        %v5077 = vsel %vm3385, %v5047, %v5048
        %v5078 = vsel %vm3385, %v5062, %v5047
        %v5079 = vmul.f32 %v5077, %v3035
        %v5080 = vmul.f32 %v5076, %v3036
        %v5081 = vmul.f32 %v5075, %v3037
        %v5082 = vmul.f32 %v5074, %v3038
        %v5083 = vmul.f32 %v5073, %v3039
        %v5084 = vmul.f32 %v5072, %v3040
        %v5085 = vmul.f32 %v5071, %v3041
        %v5086 = vmul.f32 %v5070, %v3042
        %v5087 = vmul.f32 %v5069, %v3043
        %v5088 = vmul.f32 %v5068, %v3044
        %v5089 = vmul.f32 %v5067, %v3045
        %v5090 = vmul.f32 %v5066, %v3046
        %v5091 = vmul.f32 %v5065, %v3047
        %v5092 = vmul.f32 %v5064, %v3048
        %v5093 = vmul.f32 %v5063, %v3049
        %v5094 = vmul.f32 %v5078, %v3050
        %v5095 = vsel %vm2971, %v4986, %v5079
        %v5096 = vsel %vm2972, %v4990, %v5080
        %v5097 = vsel %vm2973, %v4994, %v5081
        %v5098 = vsel %vm2974, %v4998, %v5082
        %v5099 = vsel %vm2975, %v5002, %v5083
        %v5100 = vsel %vm2976, %v5006, %v5084
        %v5101 = vsel %vm2977, %v5010, %v5085
        %v5102 = vsel %vm2978, %v5014, %v5086
        %v5103 = vsel %vm2979, %v5018, %v5087
        %v5104 = vsel %vm2980, %v5022, %v5088
        %v5105 = vsel %vm2981, %v5026, %v5089
        %v5106 = vsel %vm2982, %v5030, %v5090
        %v5107 = vsel %vm2983, %v5034, %v5091
        %v5108 = vsel %vm2984, %v5038, %v5092
        %v5109 = vsel %vm2985, %v5042, %v5093
        %v5110 = vsel %vm2986, %v5046, %v5094
        %5111 = vrot.lane.b32.xlu0 %v3073, 64
        %v5112 = vpop.permute.xlu0 %5111
        %5113 = vrot.lane.b32.xlu0 %v3074, 64
        %v5114 = vpop.permute.xlu0 %5113
        %5115 = vrot.lane.b32.xlu0 %v3075, 64
        %v5116 = vpop.permute.xlu0 %5115
        %5117 = vrot.lane.b32.xlu0 %v3076, 64
        %v5118 = vpop.permute.xlu0 %5117
        %5119 = vrot.lane.b32.xlu0 %v3077, 64
        %v5120 = vpop.permute.xlu0 %5119
        %5121 = vrot.lane.b32.xlu0 %v3078, 64
        %v5122 = vpop.permute.xlu0 %5121
        %5123 = vrot.lane.b32.xlu0 %v3079, 64
        %v5124 = vpop.permute.xlu0 %5123
        %5125 = vrot.lane.b32.xlu0 %v3080, 64
        %v5126 = vpop.permute.xlu0 %5125
        %5127 = vrot.lane.b32.xlu0 %v3081, 64
        %v5128 = vpop.permute.xlu0 %5127
        %5129 = vrot.lane.b32.xlu0 %v3082, 64
        %v5130 = vpop.permute.xlu0 %5129
        %5131 = vrot.lane.b32.xlu0 %v3083, 64
        %v5132 = vpop.permute.xlu0 %5131
        %5133 = vrot.lane.b32.xlu0 %v3084, 64
        %v5134 = vpop.permute.xlu0 %5133
        %5135 = vrot.lane.b32.xlu0 %v3085, 64
        %v5136 = vpop.permute.xlu0 %5135
        %5137 = vrot.lane.b32.xlu0 %v3086, 64
        %v5138 = vpop.permute.xlu0 %5137
        %5139 = vrot.lane.b32.xlu0 %v3087, 64
        %v5140 = vpop.permute.xlu0 %5139
        %5141 = vrot.lane.b32.xlu0 %v3088, 64
        %v5142 = vpop.permute.xlu0 %5141
        %v5144 = vsel %vm3159, %v5112, 0
        %v5147 = vsel %vm3159, %v5114, 0
        %v5150 = vsel %vm3159, %v5116, 0
        %v5153 = vsel %vm3159, %v5118, 0
        %v5156 = vsel %vm3159, %v5120, 0
        %v5159 = vsel %vm3159, %v5122, 0
        %v5162 = vsel %vm3159, %v5124, 0
        %v5165 = vsel %vm3159, %v5126, 0
        %v5168 = vsel %vm3159, %v5128, 0
        %v5171 = vsel %vm3159, %v5130, 0
        %v5174 = vsel %vm3159, %v5132, 0
        %v5177 = vsel %vm3159, %v5134, 0
        %v5180 = vsel %vm3159, %v5136, 0
        %v5183 = vsel %vm3159, %v5138, 0
        %v5186 = vsel %vm3159, %v5140, 0
        %v5189 = vsel %vm3159, %v5142, 0
        %5191 = vmatprep.subr.bf16.mxu0 0
        %5192 = vmatpush1.bf16.xpose.msra.mxu0 %v5189
        %5193 = vmatprep.subr.bf16.mxu0 0
        %5194 = vmatpush1.bf16.xpose.msra.mxu0 %v5186
        %5195 = vmatprep.subr.bf16.mxu0 0
        %5196 = vmatpush1.bf16.xpose.msra.mxu0 %v5183
        %5197 = vmatprep.subr.bf16.mxu0 0
        %5198 = vmatpush1.bf16.xpose.msra.mxu0 %v5180
        %5199 = vmatprep.subr.bf16.mxu0 0
        %5200 = vmatpush1.bf16.xpose.msra.mxu0 %v5177
        %5201 = vmatprep.subr.bf16.mxu0 0
        %5202 = vmatpush1.bf16.xpose.msra.mxu0 %v5174
        %5203 = vmatprep.subr.bf16.mxu0 0
        %5204 = vmatpush1.bf16.xpose.msra.mxu0 %v5171
        %5205 = vmatprep.subr.bf16.mxu0 0
        %5206 = vmatpush1.bf16.xpose.msra.mxu0 %v5168
        %5207 = vmatprep.subr.bf16.mxu0 0
        %5208 = vmatpush2.bf16.xpose.msra.mxu0 0
        %5209 = vmatprep.subr.bf16.mxu0 0
        %5210 = vmatpush2.bf16.xpose.msra.mxu0 0
        %5211 = vmatprep.subr.bf16.mxu0 0
        %5212 = vmatpush2.bf16.xpose.msra.mxu0 0
        %5213 = vmatprep.subr.bf16.mxu0 0
        %5214 = vmatpush2.bf16.xpose.msra.mxu0 0
        %5215 = vmatprep.subr.bf16.mxu0 0
        %5216 = vmatpush2.bf16.xpose.msra.mxu0 0
        %5217 = vmatprep.subr.bf16.mxu0 0
        %5218 = vmatpush2.bf16.xpose.msra.mxu0 0
        %5219 = vmatprep.subr.bf16.mxu0 0
        %5220 = vmatpush2.bf16.xpose.msra.mxu0 0
        %5221 = vmatprep.subr.bf16.mxu0 0
        %5222 = vmatpush2.bf16.xpose.msra.mxu0 0
        %5223 = vmatprep.mubr.bf16.mxu0 0
        %5224 = vmatmul.mubr.bf16.gmra.mxu0 %v5144
        %v5225 = vpop.f32.mrf.mxu0
        %v5226 = vadd.f32 %v5095, %v5225
        %v5227 = vpop.f32.mrf.mxu0
        %v5228 = vpop.f32.mrf.mxu0
        %v5229 = vadd.f32 %v5096, %v5228
        %v5230 = vpop.f32.mrf.mxu0
        %5231 = vmatprep.mubr.bf16.mxu0 0
        %5232 = vmatmul.mubr.bf16.gmra.mxu0 %v5147
        %v5233 = vpop.f32.mrf.mxu0
        %v5234 = vadd.f32 %v5097, %v5233
        %v5235 = vpop.f32.mrf.mxu0
        %v5236 = vpop.f32.mrf.mxu0
        %v5237 = vadd.f32 %v5098, %v5236
        %v5238 = vpop.f32.mrf.mxu0
        %5239 = vmatprep.mubr.bf16.mxu0 0
        %5240 = vmatmul.mubr.bf16.gmra.mxu0 %v5150
        %v5241 = vpop.f32.mrf.mxu0
        %v5242 = vadd.f32 %v5099, %v5241
        %v5243 = vpop.f32.mrf.mxu0
        %v5244 = vpop.f32.mrf.mxu0
        %v5245 = vadd.f32 %v5100, %v5244
        %v5246 = vpop.f32.mrf.mxu0
        %5247 = vmatprep.mubr.bf16.mxu0 0
        %5248 = vmatmul.mubr.bf16.gmra.mxu0 %v5153
        %v5249 = vpop.f32.mrf.mxu0
        %v5250 = vadd.f32 %v5101, %v5249
        %v5251 = vpop.f32.mrf.mxu0
        %v5252 = vpop.f32.mrf.mxu0
        %v5253 = vadd.f32 %v5102, %v5252
        %v5254 = vpop.f32.mrf.mxu0
        %5255 = vmatprep.mubr.bf16.mxu0 0
        %5256 = vmatmul.mubr.bf16.gmra.mxu0 %v5156
        %v5257 = vpop.f32.mrf.mxu0
        %v5258 = vadd.f32 %v5103, %v5257
        %v5259 = vpop.f32.mrf.mxu0
        %v5260 = vpop.f32.mrf.mxu0
        %v5261 = vadd.f32 %v5104, %v5260
        %v5262 = vpop.f32.mrf.mxu0
        %5263 = vmatprep.mubr.bf16.mxu0 0
        %5264 = vmatmul.mubr.bf16.gmra.mxu0 %v5159
        %v5265 = vpop.f32.mrf.mxu0
        %v5266 = vadd.f32 %v5105, %v5265
        %v5267 = vpop.f32.mrf.mxu0
        %v5268 = vpop.f32.mrf.mxu0
        %v5269 = vadd.f32 %v5106, %v5268
        %v5270 = vpop.f32.mrf.mxu0
        %5271 = vmatprep.mubr.bf16.mxu0 0
        %5272 = vmatmul.mubr.bf16.gmra.mxu0 %v5162
        %v5273 = vpop.f32.mrf.mxu0
        %v5274 = vadd.f32 %v5107, %v5273
        %v5275 = vpop.f32.mrf.mxu0
        %v5276 = vpop.f32.mrf.mxu0
        %v5277 = vadd.f32 %v5108, %v5276
        %v5278 = vpop.f32.mrf.mxu0
        %5279 = vmatprep.mubr.bf16.mxu0 0
        %5280 = vmatmul.mubr.bf16.gmra.mxu0 %v5165
        %v5281 = vpop.f32.mrf.mxu0
        %v5282 = vadd.f32 %v5109, %v5281
        %v5283 = vpop.f32.mrf.mxu0
        %v5284 = vpop.f32.mrf.mxu0
        %v5285 = vadd.f32 %v5110, %v5284
        %v5286 = vpop.f32.mrf.mxu0
        %5287 = vdwg.mxu0
        %v5288 = vadd.f32 %v5226, %v3583
        %v5289 = vadd.f32 %v5229, %v3583
        %v5290 = vadd.f32 %v5234, %v3583
        %v5291 = vadd.f32 %v5237, %v3583
        %v5292 = vadd.f32 %v5242, %v3583
        %v5293 = vadd.f32 %v5245, %v3583
        %v5294 = vadd.f32 %v5250, %v3583
        %v5295 = vadd.f32 %v5253, %v3583
        %v5296 = vadd.f32 %v5258, %v3583
        %v5297 = vadd.f32 %v5261, %v3583
        %v5298 = vadd.f32 %v5266, %v3583
        %v5299 = vadd.f32 %v5269, %v3583
        %v5300 = vadd.f32 %v5274, %v3583
        %v5301 = vadd.f32 %v5277, %v3583
        %v5302 = vadd.f32 %v5282, %v3583
        %v5303 = vadd.f32 %v5285, %v3583
        %5304 = vmax.xlane.f32.xlu0 %v5288
        %v5305 = vpop.xlane.xlu0 %5304
        %5306 = vmax.xlane.f32.xlu0 %v5289
        %v5307 = vpop.xlane.xlu0 %5306
        %5308 = vmax.xlane.f32.xlu0 %v5290
        %v5309 = vpop.xlane.xlu0 %5308
        %5310 = vmax.xlane.f32.xlu0 %v5291
        %v5311 = vpop.xlane.xlu0 %5310
        %5312 = vmax.xlane.f32.xlu0 %v5292
        %v5313 = vpop.xlane.xlu0 %5312
        %5314 = vmax.xlane.f32.xlu0 %v5293
        %v5315 = vpop.xlane.xlu0 %5314
        %5316 = vmax.xlane.f32.xlu0 %v5294
        %v5317 = vpop.xlane.xlu0 %5316
        %5318 = vmax.xlane.f32.xlu0 %v5295
        %v5319 = vpop.xlane.xlu0 %5318
        %5320 = vmax.xlane.f32.xlu0 %v5296
        %v5321 = vpop.xlane.xlu0 %5320
        %5322 = vmax.xlane.f32.xlu0 %v5297
        %v5323 = vpop.xlane.xlu0 %5322
        %5324 = vmax.xlane.f32.xlu0 %v5298
        %v5325 = vpop.xlane.xlu0 %5324
        %5326 = vmax.xlane.f32.xlu0 %v5299
        %v5327 = vpop.xlane.xlu0 %5326
        %5328 = vmax.xlane.f32.xlu0 %v5300
        %v5329 = vpop.xlane.xlu0 %5328
        %5330 = vmax.xlane.f32.xlu0 %v5301
        %v5331 = vpop.xlane.xlu0 %5330
        %5332 = vmax.xlane.f32.xlu0 %v5302
        %v5333 = vpop.xlane.xlu0 %5332
        %5334 = vmax.xlane.f32.xlu0 %v5303
        %v5335 = vpop.xlane.xlu0 %5334
        %v5336 = vsub.f32 %v5288, %v5305
        %v5337 = vsub.f32 %v5289, %v5307
        %v5338 = vsub.f32 %v5290, %v5309
        %v5339 = vsub.f32 %v5291, %v5311
        %v5340 = vsub.f32 %v5292, %v5313
        %v5341 = vsub.f32 %v5293, %v5315
        %v5342 = vsub.f32 %v5294, %v5317
        %v5343 = vsub.f32 %v5295, %v5319
        %v5344 = vsub.f32 %v5296, %v5321
        %v5345 = vsub.f32 %v5297, %v5323
        %v5346 = vsub.f32 %v5298, %v5325
        %v5347 = vsub.f32 %v5299, %v5327
        %v5348 = vsub.f32 %v5300, %v5329
        %v5349 = vsub.f32 %v5301, %v5331
        %v5350 = vsub.f32 %v5302, %v5333
        %v5351 = vsub.f32 %v5303, %v5335
        %v5352 = vmul.f32 %v5336, 1.442695
        %v5353 = vpow.pop %v5352
        %v5354 = vmul.f32 %v5337, 1.442695
        %v5355 = vpow.pop %v5354
        %v5356 = vmul.f32 %v5338, 1.442695
        %v5357 = vpow.pop %v5356
        %v5358 = vmul.f32 %v5339, 1.442695
        %v5359 = vpow.pop %v5358
        %v5360 = vmul.f32 %v5340, 1.442695
        %v5361 = vpow.pop %v5360
        %v5362 = vmul.f32 %v5341, 1.442695
        %v5363 = vpow.pop %v5362
        %v5364 = vmul.f32 %v5342, 1.442695
        %v5365 = vpow.pop %v5364
        %v5366 = vmul.f32 %v5343, 1.442695
        %v5367 = vpow.pop %v5366
        %v5368 = vmul.f32 %v5344, 1.442695
        %v5369 = vpow.pop %v5368
        %v5370 = vmul.f32 %v5345, 1.442695
        %v5371 = vpow.pop %v5370
        %v5372 = vmul.f32 %v5346, 1.442695
        %v5373 = vpow.pop %v5372
        %v5374 = vmul.f32 %v5347, 1.442695
        %v5375 = vpow.pop %v5374
        %v5376 = vmul.f32 %v5348, 1.442695
        %v5377 = vpow.pop %v5376
        %v5378 = vmul.f32 %v5349, 1.442695
        %v5379 = vpow.pop %v5378
        %v5380 = vmul.f32 %v5350, 1.442695
        %v5381 = vpow.pop %v5380
        %v5382 = vmul.f32 %v5351, 1.442695
        %v5383 = vpow.pop %v5382
        %5384 = vadd.xlane.f32.xlu0 %v5353
        %v5385 = vpop.xlane.xlu0 %5384
        %5386 = vadd.xlane.f32.xlu0 %v5355
        %v5387 = vpop.xlane.xlu0 %5386
        %5388 = vadd.xlane.f32.xlu0 %v5357
        %v5389 = vpop.xlane.xlu0 %5388
        %5390 = vadd.xlane.f32.xlu0 %v5359
        %v5391 = vpop.xlane.xlu0 %5390
        %5392 = vadd.xlane.f32.xlu0 %v5361
        %v5393 = vpop.xlane.xlu0 %5392
        %5394 = vadd.xlane.f32.xlu0 %v5363
        %v5395 = vpop.xlane.xlu0 %5394
        %5396 = vadd.xlane.f32.xlu0 %v5365
        %v5397 = vpop.xlane.xlu0 %5396
        %5398 = vadd.xlane.f32.xlu0 %v5367
        %v5399 = vpop.xlane.xlu0 %5398
        %5400 = vadd.xlane.f32.xlu0 %v5369
        %v5401 = vpop.xlane.xlu0 %5400
        %5402 = vadd.xlane.f32.xlu0 %v5371
        %v5403 = vpop.xlane.xlu0 %5402
        %5404 = vadd.xlane.f32.xlu0 %v5373
        %v5405 = vpop.xlane.xlu0 %5404
        %5406 = vadd.xlane.f32.xlu0 %v5375
        %v5407 = vpop.xlane.xlu0 %5406
        %5408 = vadd.xlane.f32.xlu0 %v5377
        %v5409 = vpop.xlane.xlu0 %5408
        %5410 = vadd.xlane.f32.xlu0 %v5379
        %v5411 = vpop.xlane.xlu0 %5410
        %5412 = vadd.xlane.f32.xlu0 %v5381
        %v5413 = vpop.xlane.xlu0 %5412
        %5414 = vadd.xlane.f32.xlu0 %v5383
        %v5415 = vpop.xlane.xlu0 %5414
        %v5416 = vrcp.pop %v5385
        %v5417 = vrcp.pop %v5387
        %v5418 = vrcp.pop %v5389
        %v5419 = vrcp.pop %v5391
        %v5420 = vrcp.pop %v5393
        %v5421 = vrcp.pop %v5395
        %v5422 = vrcp.pop %v5397
        %v5423 = vrcp.pop %v5399
        %v5424 = vrcp.pop %v5401
        %v5425 = vrcp.pop %v5403
        %v5426 = vrcp.pop %v5405
        %v5427 = vrcp.pop %v5407
        %v5428 = vrcp.pop %v5409
        %v5429 = vrcp.pop %v5411
        %v5430 = vrcp.pop %v5413
        %v5431 = vrcp.pop %v5415
        %v5432 = vmul.f32 %v5353, %v5416
        %v5433 = vmul.f32 %v5355, %v5417
        %v5434 = vmul.f32 %v5357, %v5418
        %v5435 = vmul.f32 %v5359, %v5419
        %v5436 = vmul.f32 %v5361, %v5420
        %v5437 = vmul.f32 %v5363, %v5421
        %v5438 = vmul.f32 %v5365, %v5422
        %v5439 = vmul.f32 %v5367, %v5423
        %v5440 = vmul.f32 %v5369, %v5424
        %v5441 = vmul.f32 %v5371, %v5425
        %v5442 = vmul.f32 %v5373, %v5426
        %v5443 = vmul.f32 %v5375, %v5427
        %v5444 = vmul.f32 %v5377, %v5428
        %v5445 = vmul.f32 %v5379, %v5429
        %v5446 = vmul.f32 %v5381, %v5430
        %v5447 = vmul.f32 %v5383, %v5431
        %v5448 = vpack.c.bf16 %v5433, %v5432
        %v5449 = vpack.c.bf16 %v5435, %v5434
        %v5450 = vpack.c.bf16 %v5437, %v5436
        %v5451 = vpack.c.bf16 %v5439, %v5438
        %v5452 = vpack.c.bf16 %v5441, %v5440
        %v5453 = vpack.c.bf16 %v5443, %v5442
        %v5454 = vpack.c.bf16 %v5445, %v5444
        %v5455 = vpack.c.bf16 %v5447, %v5446
        %v5464 = vunpack.c.l.b16 %v5448
        %v5465 = vunpack.c.h.b16 %v5448
        %v5466 = vunpack.c.l.b16 %v5449
        %v5467 = vunpack.c.h.b16 %v5449
        %v5468 = vunpack.c.l.b16 %v5450
        %v5469 = vunpack.c.h.b16 %v5450
        %v5470 = vunpack.c.l.b16 %v5451
        %v5471 = vunpack.c.h.b16 %v5451
        %v5472 = vunpack.c.l.b16 %v5452
        %v5473 = vunpack.c.h.b16 %v5452
        %v5474 = vunpack.c.l.b16 %v5453
        %v5475 = vunpack.c.h.b16 %v5453
        %v5476 = vunpack.c.l.b16 %v5454
        %v5477 = vunpack.c.h.b16 %v5454
        %v5478 = vunpack.c.l.b16 %v5455
        %v5479 = vunpack.c.h.b16 %v5455
        %v5480 = vpack.c.b16 %v5464, %v5464
        %v5481 = vpack.c.b16 %v5465, %v5465
        %v5482 = vpack.c.b16 %v5466, %v5466
        %v5483 = vpack.c.b16 %v5467, %v5467
        %v5484 = vpack.c.b16 %v5468, %v5468
        %v5485 = vpack.c.b16 %v5469, %v5469
        %v5486 = vpack.c.b16 %v5470, %v5470
        %v5487 = vpack.c.b16 %v5471, %v5471
        %v5488 = vpack.c.b16 %v5472, %v5472
        %v5489 = vpack.c.b16 %v5473, %v5473
        %v5490 = vpack.c.b16 %v5474, %v5474
        %v5491 = vpack.c.b16 %v5475, %v5475
        %v5492 = vpack.c.b16 %v5476, %v5476
        %v5493 = vpack.c.b16 %v5477, %v5477
        %v5494 = vpack.c.b16 %v5478, %v5478
        %v5495 = vpack.c.b16 %v5479, %v5479
        %s5512 = scalar_lea.vmem %s1113, 128 [#allocation4]
        %5513 = vst [vmem:[%s5512] sm:$0xf] %v5480
        %5514 = vst [vmem:[%s5512 + $0x4] sm:$0xf] %v5481
        %5515 = vst [vmem:[%s5512 + $0x8] sm:$0xf] %v5482
        %5516 = vst [vmem:[%s5512 + $0xc] sm:$0xf] %v5483
        %5517 = vst [vmem:[%s5512 + $0x10] sm:$0xf] %v5484
        %5518 = vst [vmem:[%s5512 + $0x14] sm:$0xf] %v5485
        %5519 = vst [vmem:[%s5512 + $0x18] sm:$0xf] %v5486
        %5520 = vst [vmem:[%s5512 + $0x1c] sm:$0xf] %v5487
        %5521 = vst [vmem:[%s5512 + $0x20] sm:$0xf] %v5488
        %5522 = vst [vmem:[%s5512 + $0x24] sm:$0xf] %v5489
        %5523 = vst [vmem:[%s5512 + $0x28] sm:$0xf] %v5490
        %5524 = vst [vmem:[%s5512 + $0x2c] sm:$0xf] %v5491
        %5525 = vst [vmem:[%s5512 + $0x30] sm:$0xf] %v5492
        %5526 = vst [vmem:[%s5512 + $0x34] sm:$0xf] %v5493
        %5527 = vst [vmem:[%s5512 + $0x38] sm:$0xf] %v5494
        %5528 = vst [vmem:[%s5512 + $0x3c] sm:$0xf] %v5495
        %5529 = vrot.lane.b32.xlu0 %v3825, 64
        %v5530 = vpop.permute.xlu0 %5529
        %5531 = vrot.lane.b32.xlu0 %v3826, 64
        %v5532 = vpop.permute.xlu0 %5531
        %5533 = vrot.lane.b32.xlu0 %v3827, 64
        %v5534 = vpop.permute.xlu0 %5533
        %5535 = vrot.lane.b32.xlu0 %v3828, 64
        %v5536 = vpop.permute.xlu0 %5535
        %5537 = vrot.lane.b32.xlu0 %v3829, 64
        %v5538 = vpop.permute.xlu0 %5537
        %5539 = vrot.lane.b32.xlu0 %v3830, 64
        %v5540 = vpop.permute.xlu0 %5539
        %5541 = vrot.lane.b32.xlu0 %v3831, 64
        %v5542 = vpop.permute.xlu0 %5541
        %5543 = vrot.lane.b32.xlu0 %v3832, 64
        %v5544 = vpop.permute.xlu0 %5543
        %5553 = vmatprep.subr.bf16.mxu0 0
        %5554 = vmatpush1.bf16.msra.mxu0 %v5544
        %5555 = vmatprep.subr.bf16.mxu0 0
        %5556 = vmatpush1.bf16.msra.mxu0 %v5542
        %5557 = vmatprep.subr.bf16.mxu0 0
        %5558 = vmatpush1.bf16.msra.mxu0 %v5540
        %5559 = vmatprep.subr.bf16.mxu0 0
        %5560 = vmatpush1.bf16.msra.mxu0 %v5538
        %5561 = vmatprep.subr.bf16.mxu0 0
        %5562 = vmatpush1.bf16.msra.mxu0 %v5536
        %5563 = vmatprep.subr.bf16.mxu0 0
        %5564 = vmatpush1.bf16.msra.mxu0 %v5534
        %5565 = vmatprep.subr.bf16.mxu0 0
        %5566 = vmatpush1.bf16.msra.mxu0 %v5532
        %5567 = vmatprep.subr.bf16.mxu0 0
        %5568 = vmatpush1.bf16.msra.mxu0 %v5530
        %5569 = vmatprep.subr.bf16.mxu0 0
        %5570 = vmatpush2.bf16.msra.mxu0 0
        %5571 = vmatprep.subr.bf16.mxu0 0
        %5572 = vmatpush2.bf16.msra.mxu0 0
        %5573 = vmatprep.subr.bf16.mxu0 0
        %5574 = vmatpush2.bf16.msra.mxu0 0
        %5575 = vmatprep.subr.bf16.mxu0 0
        %5576 = vmatpush2.bf16.msra.mxu0 0
        %5577 = vmatprep.subr.bf16.mxu0 0
        %5578 = vmatpush2.bf16.msra.mxu0 0
        %5579 = vmatprep.subr.bf16.mxu0 0
        %5580 = vmatpush2.bf16.msra.mxu0 0
        %5581 = vmatprep.subr.bf16.mxu0 0
        %5582 = vmatpush2.bf16.msra.mxu0 0
        %5583 = vmatprep.subr.bf16.mxu0 0
        %5584 = vmatpush2.bf16.msra.mxu0 0
        %5585 = vmatprep.mubr.bf16.mxu0 0
        %5586 = vmatmul.mubr.bf16.gmra.mxu0 %v5448
        %v5587 = vpop.f32.mrf.mxu0
        %v5588 = vadd.f32 0.0, %v5587
        %v5589 = vpop.f32.mrf.mxu0
        %v5590 = vpop.f32.mrf.mxu0
        %v5591 = vadd.f32 0.0, %v5590
        %v5592 = vpop.f32.mrf.mxu0
        %5593 = vmatprep.mubr.bf16.mxu0 0
        %5594 = vmatmul.mubr.bf16.gmra.mxu0 %v5449
        %v5595 = vpop.f32.mrf.mxu0
        %v5596 = vadd.f32 0.0, %v5595
        %v5597 = vpop.f32.mrf.mxu0
        %v5598 = vpop.f32.mrf.mxu0
        %v5599 = vadd.f32 0.0, %v5598
        %v5600 = vpop.f32.mrf.mxu0
        %5601 = vmatprep.mubr.bf16.mxu0 0
        %5602 = vmatmul.mubr.bf16.gmra.mxu0 %v5450
        %v5603 = vpop.f32.mrf.mxu0
        %v5604 = vadd.f32 0.0, %v5603
        %v5605 = vpop.f32.mrf.mxu0
        %v5606 = vpop.f32.mrf.mxu0
        %v5607 = vadd.f32 0.0, %v5606
        %v5608 = vpop.f32.mrf.mxu0
        %5609 = vmatprep.mubr.bf16.mxu0 0
        %5610 = vmatmul.mubr.bf16.gmra.mxu0 %v5451
        %v5611 = vpop.f32.mrf.mxu0
        %v5612 = vadd.f32 0.0, %v5611
        %v5613 = vpop.f32.mrf.mxu0
        %v5614 = vpop.f32.mrf.mxu0
        %v5615 = vadd.f32 0.0, %v5614
        %v5616 = vpop.f32.mrf.mxu0
        %5617 = vmatprep.mubr.bf16.mxu0 0
        %5618 = vmatmul.mubr.bf16.gmra.mxu0 %v5452
        %v5619 = vpop.f32.mrf.mxu0
        %v5620 = vadd.f32 0.0, %v5619
        %v5621 = vpop.f32.mrf.mxu0
        %v5622 = vpop.f32.mrf.mxu0
        %v5623 = vadd.f32 0.0, %v5622
        %v5624 = vpop.f32.mrf.mxu0
        %5625 = vmatprep.mubr.bf16.mxu0 0
        %5626 = vmatmul.mubr.bf16.gmra.mxu0 %v5453
        %v5627 = vpop.f32.mrf.mxu0
        %v5628 = vadd.f32 0.0, %v5627
        %v5629 = vpop.f32.mrf.mxu0
        %v5630 = vpop.f32.mrf.mxu0
        %v5631 = vadd.f32 0.0, %v5630
        %v5632 = vpop.f32.mrf.mxu0
        %5633 = vmatprep.mubr.bf16.mxu0 0
        %5634 = vmatmul.mubr.bf16.gmra.mxu0 %v5454
        %v5635 = vpop.f32.mrf.mxu0
        %v5636 = vadd.f32 0.0, %v5635
        %v5637 = vpop.f32.mrf.mxu0
        %v5638 = vpop.f32.mrf.mxu0
        %v5639 = vadd.f32 0.0, %v5638
        %v5640 = vpop.f32.mrf.mxu0
        %5641 = vmatprep.mubr.bf16.mxu0 0
        %5642 = vmatmul.mubr.bf16.gmra.mxu0 %v5455
        %v5643 = vpop.f32.mrf.mxu0
        %v5644 = vadd.f32 0.0, %v5643
        %v5645 = vpop.f32.mrf.mxu0
        %v5646 = vpop.f32.mrf.mxu0
        %v5647 = vadd.f32 0.0, %v5646
        %v5648 = vpop.f32.mrf.mxu0
        %5649 = vdwg.mxu0
        %5650 = vrot.lane.b32.xlu0 %v3111, 32
        %v5651 = vpop.permute.xlu0 %5650
        %5652 = vrot.lane.b32.xlu0 %v3112, 32
        %v5653 = vpop.permute.xlu0 %5652
        %5654 = vrot.lane.b32.xlu0 %v3113, 32
        %v5655 = vpop.permute.xlu0 %5654
        %5656 = vrot.lane.b32.xlu0 %v3114, 32
        %v5657 = vpop.permute.xlu0 %5656
        %5658 = vrot.lane.b32.xlu0 %v3115, 32
        %v5659 = vpop.permute.xlu0 %5658
        %5660 = vrot.lane.b32.xlu0 %v3116, 32
        %v5661 = vpop.permute.xlu0 %5660
        %5662 = vrot.lane.b32.xlu0 %v3117, 32
        %v5663 = vpop.permute.xlu0 %5662
        %5664 = vrot.lane.b32.xlu0 %v3118, 32
        %v5665 = vpop.permute.xlu0 %5664
        %5666 = vrot.lane.b32.xlu0 %v3151, 32
        %v5667 = vpop.permute.xlu0 %5666
        %5668 = vrot.lane.b32.xlu0 %v3152, 32
        %v5669 = vpop.permute.xlu0 %5668
        %5670 = vrot.lane.b32.xlu0 %v3153, 32
        %v5671 = vpop.permute.xlu0 %5670
        %5672 = vrot.lane.b32.xlu0 %v3154, 32
        %v5673 = vpop.permute.xlu0 %5672
        %5674 = vrot.lane.b32.xlu0 %v3155, 32
        %v5675 = vpop.permute.xlu0 %5674
        %5676 = vrot.lane.b32.xlu0 %v3156, 32
        %v5677 = vpop.permute.xlu0 %5676
        %5678 = vrot.lane.b32.xlu0 %v3157, 32
        %v5679 = vpop.permute.xlu0 %5678
        %5680 = vrot.lane.b32.xlu0 %v3158, 32
        %v5681 = vpop.permute.xlu0 %5680
        %v5683 = vsel %vm3159, %v5651, 0
        %v5686 = vsel %vm3159, %v5653, 0
        %v5689 = vsel %vm3159, %v5655, 0
        %v5692 = vsel %vm3159, %v5657, 0
        %v5695 = vsel %vm3159, %v5659, 0
        %v5698 = vsel %vm3159, %v5661, 0
        %v5701 = vsel %vm3159, %v5663, 0
        %v5704 = vsel %vm3159, %v5665, 0
        %v5707 = vsel %vm3159, %v5667, 0
        %v5710 = vsel %vm3159, %v5669, 0
        %v5713 = vsel %vm3159, %v5671, 0
        %v5716 = vsel %vm3159, %v5673, 0
        %v5719 = vsel %vm3159, %v5675, 0
        %v5722 = vsel %vm3159, %v5677, 0
        %v5725 = vsel %vm3159, %v5679, 0
        %v5728 = vsel %vm3159, %v5681, 0
        %5730 = vmatprep.subr.bf16.mxu0 0
        %5731 = vmatpush1.bf16.xpose.msra.mxu0 %v5728
        %5732 = vmatprep.subr.bf16.mxu0 0
        %5733 = vmatpush1.bf16.xpose.msra.mxu0 %v5725
        %5734 = vmatprep.subr.bf16.mxu0 0
        %5735 = vmatpush1.bf16.xpose.msra.mxu0 %v5722
        %5736 = vmatprep.subr.bf16.mxu0 0
        %5737 = vmatpush1.bf16.xpose.msra.mxu0 %v5719
        %5738 = vmatprep.subr.bf16.mxu0 0
        %5739 = vmatpush1.bf16.xpose.msra.mxu0 %v5716
        %5740 = vmatprep.subr.bf16.mxu0 0
        %5741 = vmatpush1.bf16.xpose.msra.mxu0 %v5713
        %5742 = vmatprep.subr.bf16.mxu0 0
        %5743 = vmatpush1.bf16.xpose.msra.mxu0 %v5710
        %5744 = vmatprep.subr.bf16.mxu0 0
        %5745 = vmatpush1.bf16.xpose.msra.mxu0 %v5707
        %5746 = vmatprep.subr.bf16.mxu0 0
        %5747 = vmatpush2.bf16.xpose.msra.mxu0 0
        %5748 = vmatprep.subr.bf16.mxu0 0
        %5749 = vmatpush2.bf16.xpose.msra.mxu0 0
        %5750 = vmatprep.subr.bf16.mxu0 0
        %5751 = vmatpush2.bf16.xpose.msra.mxu0 0
        %5752 = vmatprep.subr.bf16.mxu0 0
        %5753 = vmatpush2.bf16.xpose.msra.mxu0 0
        %5754 = vmatprep.subr.bf16.mxu0 0
        %5755 = vmatpush2.bf16.xpose.msra.mxu0 0
        %5756 = vmatprep.subr.bf16.mxu0 0
        %5757 = vmatpush2.bf16.xpose.msra.mxu0 0
        %5758 = vmatprep.subr.bf16.mxu0 0
        %5759 = vmatpush2.bf16.xpose.msra.mxu0 0
        %5760 = vmatprep.subr.bf16.mxu0 0
        %5761 = vmatpush2.bf16.xpose.msra.mxu0 0
        %5762 = vmatprep.mubr.bf16.mxu0 0
        %5763 = vmatmul.mubr.bf16.gmra.mxu0 %v5683
        %v5764 = vpop.f32.mrf.mxu0
        %v5765 = vadd.f32 0.0, %v5764
        %v5766 = vpop.f32.mrf.mxu0
        %v5767 = vpop.f32.mrf.mxu0
        %v5768 = vadd.f32 0.0, %v5767
        %v5769 = vpop.f32.mrf.mxu0
        %5770 = vmatprep.mubr.bf16.mxu0 0
        %5771 = vmatmul.mubr.bf16.gmra.mxu0 %v5686
        %v5772 = vpop.f32.mrf.mxu0
        %v5773 = vadd.f32 0.0, %v5772
        %v5774 = vpop.f32.mrf.mxu0
        %v5775 = vpop.f32.mrf.mxu0
        %v5776 = vadd.f32 0.0, %v5775
        %v5777 = vpop.f32.mrf.mxu0
        %5778 = vmatprep.mubr.bf16.mxu0 0
        %5779 = vmatmul.mubr.bf16.gmra.mxu0 %v5689
        %v5780 = vpop.f32.mrf.mxu0
        %v5781 = vadd.f32 0.0, %v5780
        %v5782 = vpop.f32.mrf.mxu0
        %v5783 = vpop.f32.mrf.mxu0
        %v5784 = vadd.f32 0.0, %v5783
        %v5785 = vpop.f32.mrf.mxu0
        %5786 = vmatprep.mubr.bf16.mxu0 0
        %5787 = vmatmul.mubr.bf16.gmra.mxu0 %v5692
        %v5788 = vpop.f32.mrf.mxu0
        %v5789 = vadd.f32 0.0, %v5788
        %v5790 = vpop.f32.mrf.mxu0
        %v5791 = vpop.f32.mrf.mxu0
        %v5792 = vadd.f32 0.0, %v5791
        %v5793 = vpop.f32.mrf.mxu0
        %5794 = vmatprep.mubr.bf16.mxu0 0
        %5795 = vmatmul.mubr.bf16.gmra.mxu0 %v5695
        %v5796 = vpop.f32.mrf.mxu0
        %v5797 = vadd.f32 0.0, %v5796
        %v5798 = vpop.f32.mrf.mxu0
        %v5799 = vpop.f32.mrf.mxu0
        %v5800 = vadd.f32 0.0, %v5799
        %v5801 = vpop.f32.mrf.mxu0
        %5802 = vmatprep.mubr.bf16.mxu0 0
        %5803 = vmatmul.mubr.bf16.gmra.mxu0 %v5698
        %v5804 = vpop.f32.mrf.mxu0
        %v5805 = vadd.f32 0.0, %v5804
        %v5806 = vpop.f32.mrf.mxu0
        %v5807 = vpop.f32.mrf.mxu0
        %v5808 = vadd.f32 0.0, %v5807
        %v5809 = vpop.f32.mrf.mxu0
        %5810 = vmatprep.mubr.bf16.mxu0 0
        %5811 = vmatmul.mubr.bf16.gmra.mxu0 %v5701
        %v5812 = vpop.f32.mrf.mxu0
        %v5813 = vadd.f32 0.0, %v5812
        %v5814 = vpop.f32.mrf.mxu0
        %v5815 = vpop.f32.mrf.mxu0
        %v5816 = vadd.f32 0.0, %v5815
        %v5817 = vpop.f32.mrf.mxu0
        %5818 = vmatprep.mubr.bf16.mxu0 0
        %5819 = vmatmul.mubr.bf16.gmra.mxu0 %v5704
        %v5820 = vpop.f32.mrf.mxu0
        %v5821 = vadd.f32 0.0, %v5820
        %v5822 = vpop.f32.mrf.mxu0
        %v5823 = vpop.f32.mrf.mxu0
        %v5824 = vadd.f32 0.0, %v5823
        %v5825 = vpop.f32.mrf.mxu0
        %5826 = vdwg.mxu0
        %s5828 = sor.u32 256, 1
        %5829 = vrot.lane.b32.xlu0 %v5765, %s5828
        %v5830 = vpop.permute.xlu0 %5829
        %s5832 = sor.u32 256, 9
        %5833 = vrot.lane.b32.xlu0 %v5768, %s5832
        %v5834 = vpop.permute.xlu0 %5833
        %s5836 = sor.u32 256, 17
        %5837 = vrot.lane.b32.xlu0 %v5773, %s5836
        %v5838 = vpop.permute.xlu0 %5837
        %s5840 = sor.u32 256, 25
        %5841 = vrot.lane.b32.xlu0 %v5776, %s5840
        %v5842 = vpop.permute.xlu0 %5841
        %s5844 = sor.u32 256, 33
        %5845 = vrot.lane.b32.xlu0 %v5781, %s5844
        %v5846 = vpop.permute.xlu0 %5845
        %s5848 = sor.u32 256, 41
        %5849 = vrot.lane.b32.xlu0 %v5784, %s5848
        %v5850 = vpop.permute.xlu0 %5849
        %s5852 = sor.u32 256, 49
        %5853 = vrot.lane.b32.xlu0 %v5789, %s5852
        %v5854 = vpop.permute.xlu0 %5853
        %s5856 = sor.u32 256, 57
        %5857 = vrot.lane.b32.xlu0 %v5792, %s5856
        %v5858 = vpop.permute.xlu0 %5857
        %s5860 = sor.u32 256, 65
        %5861 = vrot.lane.b32.xlu0 %v5797, %s5860
        %v5862 = vpop.permute.xlu0 %5861
        %s5864 = sor.u32 256, 73
        %5865 = vrot.lane.b32.xlu0 %v5800, %s5864
        %v5866 = vpop.permute.xlu0 %5865
        %s5868 = sor.u32 256, 81
        %5869 = vrot.lane.b32.xlu0 %v5805, %s5868
        %v5870 = vpop.permute.xlu0 %5869
        %s5872 = sor.u32 256, 89
        %5873 = vrot.lane.b32.xlu0 %v5808, %s5872
        %v5874 = vpop.permute.xlu0 %5873
        %s5876 = sor.u32 256, 97
        %5877 = vrot.lane.b32.xlu0 %v5813, %s5876
        %v5878 = vpop.permute.xlu0 %5877
        %s5880 = sor.u32 256, 105
        %5881 = vrot.lane.b32.xlu0 %v5816, %s5880
        %v5882 = vpop.permute.xlu0 %5881
        %s5884 = sor.u32 256, 113
        %5885 = vrot.lane.b32.xlu0 %v5821, %s5884
        %v5886 = vpop.permute.xlu0 %5885
        %s5888 = sor.u32 256, 121
        %5889 = vrot.lane.b32.xlu0 %v5824, %s5888
        %v5890 = vpop.permute.xlu0 %5889
        %v5891 = vrot.slane %v5830, 1
        %v5892 = vrot.slane %v5834, 1
        %v5893 = vrot.slane %v5838, 1
        %v5894 = vrot.slane %v5842, 1
        %v5895 = vrot.slane %v5846, 1
        %v5896 = vrot.slane %v5850, 1
        %v5897 = vrot.slane %v5854, 1
        %v5898 = vrot.slane %v5858, 1
        %v5899 = vrot.slane %v5862, 1
        %v5900 = vrot.slane %v5866, 1
        %v5901 = vrot.slane %v5870, 1
        %v5902 = vrot.slane %v5874, 1
        %v5903 = vrot.slane %v5878, 1
        %v5904 = vrot.slane %v5882, 1
        %v5905 = vrot.slane %v5886, 1
        %v5906 = vrot.slane %v5890, 1
        %v5907 = vsel %vm3385, %v5905, %v5906
        %v5908 = vsel %vm3385, %v5904, %v5905
        %v5909 = vsel %vm3385, %v5903, %v5904
        %v5910 = vsel %vm3385, %v5902, %v5903
        %v5911 = vsel %vm3385, %v5901, %v5902
        %v5912 = vsel %vm3385, %v5900, %v5901
        %v5913 = vsel %vm3385, %v5899, %v5900
        %v5914 = vsel %vm3385, %v5898, %v5899
        %v5915 = vsel %vm3385, %v5897, %v5898
        %v5916 = vsel %vm3385, %v5896, %v5897
        %v5917 = vsel %vm3385, %v5895, %v5896
        %v5918 = vsel %vm3385, %v5894, %v5895
        %v5919 = vsel %vm3385, %v5893, %v5894
        %v5920 = vsel %vm3385, %v5892, %v5893
        %v5921 = vsel %vm3385, %v5891, %v5892
        %v5922 = vsel %vm3385, %v5906, %v5891
        %v5923 = vmul.f32 %v5921, %v3035
        %v5924 = vmul.f32 %v5920, %v3036
        %v5925 = vmul.f32 %v5919, %v3037
        %v5926 = vmul.f32 %v5918, %v3038
        %v5927 = vmul.f32 %v5917, %v3039
        %v5928 = vmul.f32 %v5916, %v3040
        %v5929 = vmul.f32 %v5915, %v3041
        %v5930 = vmul.f32 %v5914, %v3042
        %v5931 = vmul.f32 %v5913, %v3043
        %v5932 = vmul.f32 %v5912, %v3044
        %v5933 = vmul.f32 %v5911, %v3045
        %v5934 = vmul.f32 %v5910, %v3046
        %v5935 = vmul.f32 %v5909, %v3047
        %v5936 = vmul.f32 %v5908, %v3048
        %v5937 = vmul.f32 %v5907, %v3049
        %v5938 = vmul.f32 %v5922, %v3050
        %v5939 = vsel %vm2971, %v5830, %v5923
        %v5940 = vsel %vm2972, %v5834, %v5924
        %v5941 = vsel %vm2973, %v5838, %v5925
        %v5942 = vsel %vm2974, %v5842, %v5926
        %v5943 = vsel %vm2975, %v5846, %v5927
        %v5944 = vsel %vm2976, %v5850, %v5928
        %v5945 = vsel %vm2977, %v5854, %v5929
        %v5946 = vsel %vm2978, %v5858, %v5930
        %v5947 = vsel %vm2979, %v5862, %v5931
        %v5948 = vsel %vm2980, %v5866, %v5932
        %v5949 = vsel %vm2981, %v5870, %v5933
        %v5950 = vsel %vm2982, %v5874, %v5934
        %v5951 = vsel %vm2983, %v5878, %v5935
        %v5952 = vsel %vm2984, %v5882, %v5936
        %v5953 = vsel %vm2985, %v5886, %v5937
        %v5954 = vsel %vm2986, %v5890, %v5938
        %5955 = vrot.lane.b32.xlu0 %v3073, 32
        %v5956 = vpop.permute.xlu0 %5955
        %5957 = vrot.lane.b32.xlu0 %v3074, 32
        %v5958 = vpop.permute.xlu0 %5957
        %5959 = vrot.lane.b32.xlu0 %v3075, 32
        %v5960 = vpop.permute.xlu0 %5959
        %5961 = vrot.lane.b32.xlu0 %v3076, 32
        %v5962 = vpop.permute.xlu0 %5961
        %5963 = vrot.lane.b32.xlu0 %v3077, 32
        %v5964 = vpop.permute.xlu0 %5963
        %5965 = vrot.lane.b32.xlu0 %v3078, 32
        %v5966 = vpop.permute.xlu0 %5965
        %5967 = vrot.lane.b32.xlu0 %v3079, 32
        %v5968 = vpop.permute.xlu0 %5967
        %5969 = vrot.lane.b32.xlu0 %v3080, 32
        %v5970 = vpop.permute.xlu0 %5969
        %5971 = vrot.lane.b32.xlu0 %v3081, 32
        %v5972 = vpop.permute.xlu0 %5971
        %5973 = vrot.lane.b32.xlu0 %v3082, 32
        %v5974 = vpop.permute.xlu0 %5973
        %5975 = vrot.lane.b32.xlu0 %v3083, 32
        %v5976 = vpop.permute.xlu0 %5975
        %5977 = vrot.lane.b32.xlu0 %v3084, 32
        %v5978 = vpop.permute.xlu0 %5977
        %5979 = vrot.lane.b32.xlu0 %v3085, 32
        %v5980 = vpop.permute.xlu0 %5979
        %5981 = vrot.lane.b32.xlu0 %v3086, 32
        %v5982 = vpop.permute.xlu0 %5981
        %5983 = vrot.lane.b32.xlu0 %v3087, 32
        %v5984 = vpop.permute.xlu0 %5983
        %5985 = vrot.lane.b32.xlu0 %v3088, 32
        %v5986 = vpop.permute.xlu0 %5985
        %v5988 = vsel %vm3159, %v5956, 0
        %v5991 = vsel %vm3159, %v5958, 0
        %v5994 = vsel %vm3159, %v5960, 0
        %v5997 = vsel %vm3159, %v5962, 0
        %v6000 = vsel %vm3159, %v5964, 0
        %v6003 = vsel %vm3159, %v5966, 0
        %v6006 = vsel %vm3159, %v5968, 0
        %v6009 = vsel %vm3159, %v5970, 0
        %v6012 = vsel %vm3159, %v5972, 0
        %v6015 = vsel %vm3159, %v5974, 0
        %v6018 = vsel %vm3159, %v5976, 0
        %v6021 = vsel %vm3159, %v5978, 0
        %v6024 = vsel %vm3159, %v5980, 0
        %v6027 = vsel %vm3159, %v5982, 0
        %v6030 = vsel %vm3159, %v5984, 0
        %v6033 = vsel %vm3159, %v5986, 0
        %6035 = vmatprep.subr.bf16.mxu0 0
        %6036 = vmatpush1.bf16.xpose.msra.mxu0 %v6033
        %6037 = vmatprep.subr.bf16.mxu0 0
        %6038 = vmatpush1.bf16.xpose.msra.mxu0 %v6030
        %6039 = vmatprep.subr.bf16.mxu0 0
        %6040 = vmatpush1.bf16.xpose.msra.mxu0 %v6027
        %6041 = vmatprep.subr.bf16.mxu0 0
        %6042 = vmatpush1.bf16.xpose.msra.mxu0 %v6024
        %6043 = vmatprep.subr.bf16.mxu0 0
        %6044 = vmatpush1.bf16.xpose.msra.mxu0 %v6021
        %6045 = vmatprep.subr.bf16.mxu0 0
        %6046 = vmatpush1.bf16.xpose.msra.mxu0 %v6018
        %6047 = vmatprep.subr.bf16.mxu0 0
        %6048 = vmatpush1.bf16.xpose.msra.mxu0 %v6015
        %6049 = vmatprep.subr.bf16.mxu0 0
        %6050 = vmatpush1.bf16.xpose.msra.mxu0 %v6012
        %6051 = vmatprep.subr.bf16.mxu0 0
        %6052 = vmatpush2.bf16.xpose.msra.mxu0 0
        %6053 = vmatprep.subr.bf16.mxu0 0
        %6054 = vmatpush2.bf16.xpose.msra.mxu0 0
        %6055 = vmatprep.subr.bf16.mxu0 0
        %6056 = vmatpush2.bf16.xpose.msra.mxu0 0
        %6057 = vmatprep.subr.bf16.mxu0 0
        %6058 = vmatpush2.bf16.xpose.msra.mxu0 0
        %6059 = vmatprep.subr.bf16.mxu0 0
        %6060 = vmatpush2.bf16.xpose.msra.mxu0 0
        %6061 = vmatprep.subr.bf16.mxu0 0
        %6062 = vmatpush2.bf16.xpose.msra.mxu0 0
        %6063 = vmatprep.subr.bf16.mxu0 0
        %6064 = vmatpush2.bf16.xpose.msra.mxu0 0
        %6065 = vmatprep.subr.bf16.mxu0 0
        %6066 = vmatpush2.bf16.xpose.msra.mxu0 0
        %6067 = vmatprep.mubr.bf16.mxu0 0
        %6068 = vmatmul.mubr.bf16.gmra.mxu0 %v5988
        %v6069 = vpop.f32.mrf.mxu0
        %v6070 = vadd.f32 %v5939, %v6069
        %v6071 = vpop.f32.mrf.mxu0
        %v6072 = vpop.f32.mrf.mxu0
        %v6073 = vadd.f32 %v5940, %v6072
        %v6074 = vpop.f32.mrf.mxu0
        %6075 = vmatprep.mubr.bf16.mxu0 0
        %6076 = vmatmul.mubr.bf16.gmra.mxu0 %v5991
        %v6077 = vpop.f32.mrf.mxu0
        %v6078 = vadd.f32 %v5941, %v6077
        %v6079 = vpop.f32.mrf.mxu0
        %v6080 = vpop.f32.mrf.mxu0
        %v6081 = vadd.f32 %v5942, %v6080
        %v6082 = vpop.f32.mrf.mxu0
        %6083 = vmatprep.mubr.bf16.mxu0 0
        %6084 = vmatmul.mubr.bf16.gmra.mxu0 %v5994
        %v6085 = vpop.f32.mrf.mxu0
        %v6086 = vadd.f32 %v5943, %v6085
        %v6087 = vpop.f32.mrf.mxu0
        %v6088 = vpop.f32.mrf.mxu0
        %v6089 = vadd.f32 %v5944, %v6088
        %v6090 = vpop.f32.mrf.mxu0
        %6091 = vmatprep.mubr.bf16.mxu0 0
        %6092 = vmatmul.mubr.bf16.gmra.mxu0 %v5997
        %v6093 = vpop.f32.mrf.mxu0
        %v6094 = vadd.f32 %v5945, %v6093
        %v6095 = vpop.f32.mrf.mxu0
        %v6096 = vpop.f32.mrf.mxu0
        %v6097 = vadd.f32 %v5946, %v6096
        %v6098 = vpop.f32.mrf.mxu0
        %6099 = vmatprep.mubr.bf16.mxu0 0
        %6100 = vmatmul.mubr.bf16.gmra.mxu0 %v6000
        %v6101 = vpop.f32.mrf.mxu0
        %v6102 = vadd.f32 %v5947, %v6101
        %v6103 = vpop.f32.mrf.mxu0
        %v6104 = vpop.f32.mrf.mxu0
        %v6105 = vadd.f32 %v5948, %v6104
        %v6106 = vpop.f32.mrf.mxu0
        %6107 = vmatprep.mubr.bf16.mxu0 0
        %6108 = vmatmul.mubr.bf16.gmra.mxu0 %v6003
        %v6109 = vpop.f32.mrf.mxu0
        %v6110 = vadd.f32 %v5949, %v6109
        %v6111 = vpop.f32.mrf.mxu0
        %v6112 = vpop.f32.mrf.mxu0
        %v6113 = vadd.f32 %v5950, %v6112
        %v6114 = vpop.f32.mrf.mxu0
        %6115 = vmatprep.mubr.bf16.mxu0 0
        %6116 = vmatmul.mubr.bf16.gmra.mxu0 %v6006
        %v6117 = vpop.f32.mrf.mxu0
        %v6118 = vadd.f32 %v5951, %v6117
        %v6119 = vpop.f32.mrf.mxu0
        %v6120 = vpop.f32.mrf.mxu0
        %v6121 = vadd.f32 %v5952, %v6120
        %v6122 = vpop.f32.mrf.mxu0
        %6123 = vmatprep.mubr.bf16.mxu0 0
        %6124 = vmatmul.mubr.bf16.gmra.mxu0 %v6009
        %v6125 = vpop.f32.mrf.mxu0
        %v6126 = vadd.f32 %v5953, %v6125
        %v6127 = vpop.f32.mrf.mxu0
        %v6128 = vpop.f32.mrf.mxu0
        %v6129 = vadd.f32 %v5954, %v6128
        %v6130 = vpop.f32.mrf.mxu0
        %6131 = vdwg.mxu0
        %v6132 = vadd.f32 %v6070, %v3583
        %v6133 = vadd.f32 %v6073, %v3583
        %v6134 = vadd.f32 %v6078, %v3583
        %v6135 = vadd.f32 %v6081, %v3583
        %v6136 = vadd.f32 %v6086, %v3583
        %v6137 = vadd.f32 %v6089, %v3583
        %v6138 = vadd.f32 %v6094, %v3583
        %v6139 = vadd.f32 %v6097, %v3583
        %v6140 = vadd.f32 %v6102, %v3583
        %v6141 = vadd.f32 %v6105, %v3583
        %v6142 = vadd.f32 %v6110, %v3583
        %v6143 = vadd.f32 %v6113, %v3583
        %v6144 = vadd.f32 %v6118, %v3583
        %v6145 = vadd.f32 %v6121, %v3583
        %v6146 = vadd.f32 %v6126, %v3583
        %v6147 = vadd.f32 %v6129, %v3583
        %6148 = vmax.xlane.f32.xlu0 %v6132
        %v6149 = vpop.xlane.xlu0 %6148
        %6150 = vmax.xlane.f32.xlu0 %v6133
        %v6151 = vpop.xlane.xlu0 %6150
        %6152 = vmax.xlane.f32.xlu0 %v6134
        %v6153 = vpop.xlane.xlu0 %6152
        %6154 = vmax.xlane.f32.xlu0 %v6135
        %v6155 = vpop.xlane.xlu0 %6154
        %6156 = vmax.xlane.f32.xlu0 %v6136
        %v6157 = vpop.xlane.xlu0 %6156
        %6158 = vmax.xlane.f32.xlu0 %v6137
        %v6159 = vpop.xlane.xlu0 %6158
        %6160 = vmax.xlane.f32.xlu0 %v6138
        %v6161 = vpop.xlane.xlu0 %6160
        %6162 = vmax.xlane.f32.xlu0 %v6139
        %v6163 = vpop.xlane.xlu0 %6162
        %6164 = vmax.xlane.f32.xlu0 %v6140
        %v6165 = vpop.xlane.xlu0 %6164
        %6166 = vmax.xlane.f32.xlu0 %v6141
        %v6167 = vpop.xlane.xlu0 %6166
        %6168 = vmax.xlane.f32.xlu0 %v6142
        %v6169 = vpop.xlane.xlu0 %6168
        %6170 = vmax.xlane.f32.xlu0 %v6143
        %v6171 = vpop.xlane.xlu0 %6170
        %6172 = vmax.xlane.f32.xlu0 %v6144
        %v6173 = vpop.xlane.xlu0 %6172
        %6174 = vmax.xlane.f32.xlu0 %v6145
        %v6175 = vpop.xlane.xlu0 %6174
        %6176 = vmax.xlane.f32.xlu0 %v6146
        %v6177 = vpop.xlane.xlu0 %6176
        %6178 = vmax.xlane.f32.xlu0 %v6147
        %v6179 = vpop.xlane.xlu0 %6178
        %v6180 = vsub.f32 %v6132, %v6149
        %v6181 = vsub.f32 %v6133, %v6151
        %v6182 = vsub.f32 %v6134, %v6153
        %v6183 = vsub.f32 %v6135, %v6155
        %v6184 = vsub.f32 %v6136, %v6157
        %v6185 = vsub.f32 %v6137, %v6159
        %v6186 = vsub.f32 %v6138, %v6161
        %v6187 = vsub.f32 %v6139, %v6163
        %v6188 = vsub.f32 %v6140, %v6165
        %v6189 = vsub.f32 %v6141, %v6167
        %v6190 = vsub.f32 %v6142, %v6169
        %v6191 = vsub.f32 %v6143, %v6171
        %v6192 = vsub.f32 %v6144, %v6173
        %v6193 = vsub.f32 %v6145, %v6175
        %v6194 = vsub.f32 %v6146, %v6177
        %v6195 = vsub.f32 %v6147, %v6179
        %v6196 = vmul.f32 %v6180, 1.442695
        %v6197 = vpow.pop %v6196
        %v6198 = vmul.f32 %v6181, 1.442695
        %v6199 = vpow.pop %v6198
        %v6200 = vmul.f32 %v6182, 1.442695
        %v6201 = vpow.pop %v6200
        %v6202 = vmul.f32 %v6183, 1.442695
        %v6203 = vpow.pop %v6202
        %v6204 = vmul.f32 %v6184, 1.442695
        %v6205 = vpow.pop %v6204
        %v6206 = vmul.f32 %v6185, 1.442695
        %v6207 = vpow.pop %v6206
        %v6208 = vmul.f32 %v6186, 1.442695
        %v6209 = vpow.pop %v6208
        %v6210 = vmul.f32 %v6187, 1.442695
        %v6211 = vpow.pop %v6210
        %v6212 = vmul.f32 %v6188, 1.442695
        %v6213 = vpow.pop %v6212
        %v6214 = vmul.f32 %v6189, 1.442695
        %v6215 = vpow.pop %v6214
        %v6216 = vmul.f32 %v6190, 1.442695
        %v6217 = vpow.pop %v6216
        %v6218 = vmul.f32 %v6191, 1.442695
        %v6219 = vpow.pop %v6218
        %v6220 = vmul.f32 %v6192, 1.442695
        %v6221 = vpow.pop %v6220
        %v6222 = vmul.f32 %v6193, 1.442695
        %v6223 = vpow.pop %v6222
        %v6224 = vmul.f32 %v6194, 1.442695
        %v6225 = vpow.pop %v6224
        %v6226 = vmul.f32 %v6195, 1.442695
        %v6227 = vpow.pop %v6226
        %6228 = vadd.xlane.f32.xlu0 %v6197
        %v6229 = vpop.xlane.xlu0 %6228
        %6230 = vadd.xlane.f32.xlu0 %v6199
        %v6231 = vpop.xlane.xlu0 %6230
        %6232 = vadd.xlane.f32.xlu0 %v6201
        %v6233 = vpop.xlane.xlu0 %6232
        %6234 = vadd.xlane.f32.xlu0 %v6203
        %v6235 = vpop.xlane.xlu0 %6234
        %6236 = vadd.xlane.f32.xlu0 %v6205
        %v6237 = vpop.xlane.xlu0 %6236
        %6238 = vadd.xlane.f32.xlu0 %v6207
        %v6239 = vpop.xlane.xlu0 %6238
        %6240 = vadd.xlane.f32.xlu0 %v6209
        %v6241 = vpop.xlane.xlu0 %6240
        %6242 = vadd.xlane.f32.xlu0 %v6211
        %v6243 = vpop.xlane.xlu0 %6242
        %6244 = vadd.xlane.f32.xlu0 %v6213
        %v6245 = vpop.xlane.xlu0 %6244
        %6246 = vadd.xlane.f32.xlu0 %v6215
        %v6247 = vpop.xlane.xlu0 %6246
        %6248 = vadd.xlane.f32.xlu0 %v6217
        %v6249 = vpop.xlane.xlu0 %6248
        %6250 = vadd.xlane.f32.xlu0 %v6219
        %v6251 = vpop.xlane.xlu0 %6250
        %6252 = vadd.xlane.f32.xlu0 %v6221
        %v6253 = vpop.xlane.xlu0 %6252
        %6254 = vadd.xlane.f32.xlu0 %v6223
        %v6255 = vpop.xlane.xlu0 %6254
        %6256 = vadd.xlane.f32.xlu0 %v6225
        %v6257 = vpop.xlane.xlu0 %6256
        %6258 = vadd.xlane.f32.xlu0 %v6227
        %v6259 = vpop.xlane.xlu0 %6258
        %v6260 = vrcp.pop %v6229
        %v6261 = vrcp.pop %v6231
        %v6262 = vrcp.pop %v6233
        %v6263 = vrcp.pop %v6235
        %v6264 = vrcp.pop %v6237
        %v6265 = vrcp.pop %v6239
        %v6266 = vrcp.pop %v6241
        %v6267 = vrcp.pop %v6243
        %v6268 = vrcp.pop %v6245
        %v6269 = vrcp.pop %v6247
        %v6270 = vrcp.pop %v6249
        %v6271 = vrcp.pop %v6251
        %v6272 = vrcp.pop %v6253
        %v6273 = vrcp.pop %v6255
        %v6274 = vrcp.pop %v6257
        %v6275 = vrcp.pop %v6259
        %v6276 = vmul.f32 %v6197, %v6260
        %v6277 = vmul.f32 %v6199, %v6261
        %v6278 = vmul.f32 %v6201, %v6262
        %v6279 = vmul.f32 %v6203, %v6263
        %v6280 = vmul.f32 %v6205, %v6264
        %v6281 = vmul.f32 %v6207, %v6265
        %v6282 = vmul.f32 %v6209, %v6266
        %v6283 = vmul.f32 %v6211, %v6267
        %v6284 = vmul.f32 %v6213, %v6268
        %v6285 = vmul.f32 %v6215, %v6269
        %v6286 = vmul.f32 %v6217, %v6270
        %v6287 = vmul.f32 %v6219, %v6271
        %v6288 = vmul.f32 %v6221, %v6272
        %v6289 = vmul.f32 %v6223, %v6273
        %v6290 = vmul.f32 %v6225, %v6274
        %v6291 = vmul.f32 %v6227, %v6275
        %v6292 = vpack.c.bf16 %v6277, %v6276
        %v6293 = vpack.c.bf16 %v6279, %v6278
        %v6294 = vpack.c.bf16 %v6281, %v6280
        %v6295 = vpack.c.bf16 %v6283, %v6282
        %v6296 = vpack.c.bf16 %v6285, %v6284
        %v6297 = vpack.c.bf16 %v6287, %v6286
        %v6298 = vpack.c.bf16 %v6289, %v6288
        %v6299 = vpack.c.bf16 %v6291, %v6290
        %v6308 = vunpack.c.l.b16 %v6292
        %v6309 = vunpack.c.h.b16 %v6292
        %v6310 = vunpack.c.l.b16 %v6293
        %v6311 = vunpack.c.h.b16 %v6293
        %v6312 = vunpack.c.l.b16 %v6294
        %v6313 = vunpack.c.h.b16 %v6294
        %v6314 = vunpack.c.l.b16 %v6295
        %v6315 = vunpack.c.h.b16 %v6295
        %v6316 = vunpack.c.l.b16 %v6296
        %v6317 = vunpack.c.h.b16 %v6296
        %v6318 = vunpack.c.l.b16 %v6297
        %v6319 = vunpack.c.h.b16 %v6297
        %v6320 = vunpack.c.l.b16 %v6298
        %v6321 = vunpack.c.h.b16 %v6298
        %v6322 = vunpack.c.l.b16 %v6299
        %v6323 = vunpack.c.h.b16 %v6299
        %v6324 = vpack.c.b16 %v6308, %v6308
        %v6325 = vpack.c.b16 %v6309, %v6309
        %v6326 = vpack.c.b16 %v6310, %v6310
        %v6327 = vpack.c.b16 %v6311, %v6311
        %v6328 = vpack.c.b16 %v6312, %v6312
        %v6329 = vpack.c.b16 %v6313, %v6313
        %v6330 = vpack.c.b16 %v6314, %v6314
        %v6331 = vpack.c.b16 %v6315, %v6315
        %v6332 = vpack.c.b16 %v6316, %v6316
        %v6333 = vpack.c.b16 %v6317, %v6317
        %v6334 = vpack.c.b16 %v6318, %v6318
        %v6335 = vpack.c.b16 %v6319, %v6319
        %v6336 = vpack.c.b16 %v6320, %v6320
        %v6337 = vpack.c.b16 %v6321, %v6321
        %v6338 = vpack.c.b16 %v6322, %v6322
        %v6339 = vpack.c.b16 %v6323, %v6323
        %s6356 = scalar_lea.vmem %s1113, 192 [#allocation4]
        %6357 = vst [vmem:[%s6356] sm:$0xf] %v6324
        %6358 = vst [vmem:[%s6356 + $0x4] sm:$0xf] %v6325
        %6359 = vst [vmem:[%s6356 + $0x8] sm:$0xf] %v6326
        %6360 = vst [vmem:[%s6356 + $0xc] sm:$0xf] %v6327
        %6361 = vst [vmem:[%s6356 + $0x10] sm:$0xf] %v6328
        %6362 = vst [vmem:[%s6356 + $0x14] sm:$0xf] %v6329
        %6363 = vst [vmem:[%s6356 + $0x18] sm:$0xf] %v6330
        %6364 = vst [vmem:[%s6356 + $0x1c] sm:$0xf] %v6331
        %6365 = vst [vmem:[%s6356 + $0x20] sm:$0xf] %v6332
        %6366 = vst [vmem:[%s6356 + $0x24] sm:$0xf] %v6333
        %6367 = vst [vmem:[%s6356 + $0x28] sm:$0xf] %v6334
        %6368 = vst [vmem:[%s6356 + $0x2c] sm:$0xf] %v6335
        %6369 = vst [vmem:[%s6356 + $0x30] sm:$0xf] %v6336
        %6370 = vst [vmem:[%s6356 + $0x34] sm:$0xf] %v6337
        %6371 = vst [vmem:[%s6356 + $0x38] sm:$0xf] %v6338
        %6372 = vst [vmem:[%s6356 + $0x3c] sm:$0xf] %v6339
        %6373 = vrot.lane.b32.xlu0 %v3825, 32
        %v6374 = vpop.permute.xlu0 %6373
        %6375 = vrot.lane.b32.xlu0 %v3826, 32
        %v6376 = vpop.permute.xlu0 %6375
        %6377 = vrot.lane.b32.xlu0 %v3827, 32
        %v6378 = vpop.permute.xlu0 %6377
        %6379 = vrot.lane.b32.xlu0 %v3828, 32
        %v6380 = vpop.permute.xlu0 %6379
        %6381 = vrot.lane.b32.xlu0 %v3829, 32
        %v6382 = vpop.permute.xlu0 %6381
        %6383 = vrot.lane.b32.xlu0 %v3830, 32
        %v6384 = vpop.permute.xlu0 %6383
        %6385 = vrot.lane.b32.xlu0 %v3831, 32
        %v6386 = vpop.permute.xlu0 %6385
        %6387 = vrot.lane.b32.xlu0 %v3832, 32
        %v6388 = vpop.permute.xlu0 %6387
        %6397 = vmatprep.subr.bf16.mxu0 0
        %6398 = vmatpush1.bf16.msra.mxu0 %v6388
        %6399 = vmatprep.subr.bf16.mxu0 0
        %6400 = vmatpush1.bf16.msra.mxu0 %v6386
        %6401 = vmatprep.subr.bf16.mxu0 0
        %6402 = vmatpush1.bf16.msra.mxu0 %v6384
        %6403 = vmatprep.subr.bf16.mxu0 0
        %6404 = vmatpush1.bf16.msra.mxu0 %v6382
        %6405 = vmatprep.subr.bf16.mxu0 0
        %6406 = vmatpush1.bf16.msra.mxu0 %v6380
        %6407 = vmatprep.subr.bf16.mxu0 0
        %6408 = vmatpush1.bf16.msra.mxu0 %v6378
        %6409 = vmatprep.subr.bf16.mxu0 0
        %6410 = vmatpush1.bf16.msra.mxu0 %v6376
        %6411 = vmatprep.subr.bf16.mxu0 0
        %6412 = vmatpush1.bf16.msra.mxu0 %v6374
        %6413 = vmatprep.subr.bf16.mxu0 0
        %6414 = vmatpush2.bf16.msra.mxu0 0
        %6415 = vmatprep.subr.bf16.mxu0 0
        %6416 = vmatpush2.bf16.msra.mxu0 0
        %6417 = vmatprep.subr.bf16.mxu0 0
        %6418 = vmatpush2.bf16.msra.mxu0 0
        %6419 = vmatprep.subr.bf16.mxu0 0
        %6420 = vmatpush2.bf16.msra.mxu0 0
        %6421 = vmatprep.subr.bf16.mxu0 0
        %6422 = vmatpush2.bf16.msra.mxu0 0
        %6423 = vmatprep.subr.bf16.mxu0 0
        %6424 = vmatpush2.bf16.msra.mxu0 0
        %6425 = vmatprep.subr.bf16.mxu0 0
        %6426 = vmatpush2.bf16.msra.mxu0 0
        %6427 = vmatprep.subr.bf16.mxu0 0
        %6428 = vmatpush2.bf16.msra.mxu0 0
        %6429 = vmatprep.mubr.bf16.mxu0 0
        %6430 = vmatmul.mubr.bf16.gmra.mxu0 %v6292
        %v6431 = vpop.f32.mrf.mxu0
        %v6432 = vadd.f32 0.0, %v6431
        %v6433 = vpop.f32.mrf.mxu0
        %v6434 = vpop.f32.mrf.mxu0
        %v6435 = vadd.f32 0.0, %v6434
        %v6436 = vpop.f32.mrf.mxu0
        %6437 = vmatprep.mubr.bf16.mxu0 0
        %6438 = vmatmul.mubr.bf16.gmra.mxu0 %v6293
        %v6439 = vpop.f32.mrf.mxu0
        %v6440 = vadd.f32 0.0, %v6439
        %v6441 = vpop.f32.mrf.mxu0
        %v6442 = vpop.f32.mrf.mxu0
        %v6443 = vadd.f32 0.0, %v6442
        %v6444 = vpop.f32.mrf.mxu0
        %6445 = vmatprep.mubr.bf16.mxu0 0
        %6446 = vmatmul.mubr.bf16.gmra.mxu0 %v6294
        %v6447 = vpop.f32.mrf.mxu0
        %v6448 = vadd.f32 0.0, %v6447
        %v6449 = vpop.f32.mrf.mxu0
        %v6450 = vpop.f32.mrf.mxu0
        %v6451 = vadd.f32 0.0, %v6450
        %v6452 = vpop.f32.mrf.mxu0
        %6453 = vmatprep.mubr.bf16.mxu0 0
        %6454 = vmatmul.mubr.bf16.gmra.mxu0 %v6295
        %v6455 = vpop.f32.mrf.mxu0
        %v6456 = vadd.f32 0.0, %v6455
        %v6457 = vpop.f32.mrf.mxu0
        %v6458 = vpop.f32.mrf.mxu0
        %v6459 = vadd.f32 0.0, %v6458
        %v6460 = vpop.f32.mrf.mxu0
        %6461 = vmatprep.mubr.bf16.mxu0 0
        %6462 = vmatmul.mubr.bf16.gmra.mxu0 %v6296
        %v6463 = vpop.f32.mrf.mxu0
        %v6464 = vadd.f32 0.0, %v6463
        %v6465 = vpop.f32.mrf.mxu0
        %v6466 = vpop.f32.mrf.mxu0
        %v6467 = vadd.f32 0.0, %v6466
        %v6468 = vpop.f32.mrf.mxu0
        %6469 = vmatprep.mubr.bf16.mxu0 0
        %6470 = vmatmul.mubr.bf16.gmra.mxu0 %v6297
        %v6471 = vpop.f32.mrf.mxu0
        %v6472 = vadd.f32 0.0, %v6471
        %v6473 = vpop.f32.mrf.mxu0
        %v6474 = vpop.f32.mrf.mxu0
        %v6475 = vadd.f32 0.0, %v6474
        %v6476 = vpop.f32.mrf.mxu0
        %6477 = vmatprep.mubr.bf16.mxu0 0
        %6478 = vmatmul.mubr.bf16.gmra.mxu0 %v6298
        %v6479 = vpop.f32.mrf.mxu0
        %v6480 = vadd.f32 0.0, %v6479
        %v6481 = vpop.f32.mrf.mxu0
        %v6482 = vpop.f32.mrf.mxu0
        %v6483 = vadd.f32 0.0, %v6482
        %v6484 = vpop.f32.mrf.mxu0
        %6485 = vmatprep.mubr.bf16.mxu0 0
        %6486 = vmatmul.mubr.bf16.gmra.mxu0 %v6299
        %v6487 = vpop.f32.mrf.mxu0
        %v6488 = vadd.f32 0.0, %v6487
        %v6489 = vpop.f32.mrf.mxu0
        %v6490 = vpop.f32.mrf.mxu0
        %v6491 = vadd.f32 0.0, %v6490
        %v6492 = vpop.f32.mrf.mxu0
        %6493 = vdwg.mxu0
        %6510 = vrot.lane.b32.xlu0 %v4744, 32
        %v6511 = vpop.permute.xlu0 %6510
        %6512 = vrot.lane.b32.xlu0 %v4747, 32
        %v6513 = vpop.permute.xlu0 %6512
        %6514 = vrot.lane.b32.xlu0 %v4752, 32
        %v6515 = vpop.permute.xlu0 %6514
        %6516 = vrot.lane.b32.xlu0 %v4755, 32
        %v6517 = vpop.permute.xlu0 %6516
        %6518 = vrot.lane.b32.xlu0 %v4760, 32
        %v6519 = vpop.permute.xlu0 %6518
        %6520 = vrot.lane.b32.xlu0 %v4763, 32
        %v6521 = vpop.permute.xlu0 %6520
        %6522 = vrot.lane.b32.xlu0 %v4768, 32
        %v6523 = vpop.permute.xlu0 %6522
        %6524 = vrot.lane.b32.xlu0 %v4771, 32
        %v6525 = vpop.permute.xlu0 %6524
        %6526 = vrot.lane.b32.xlu0 %v4776, 32
        %v6527 = vpop.permute.xlu0 %6526
        %6528 = vrot.lane.b32.xlu0 %v4779, 32
        %v6529 = vpop.permute.xlu0 %6528
        %6530 = vrot.lane.b32.xlu0 %v4784, 32
        %v6531 = vpop.permute.xlu0 %6530
        %6532 = vrot.lane.b32.xlu0 %v4787, 32
        %v6533 = vpop.permute.xlu0 %6532
        %6534 = vrot.lane.b32.xlu0 %v4792, 32
        %v6535 = vpop.permute.xlu0 %6534
        %6536 = vrot.lane.b32.xlu0 %v4795, 32
        %v6537 = vpop.permute.xlu0 %6536
        %6538 = vrot.lane.b32.xlu0 %v4800, 32
        %v6539 = vpop.permute.xlu0 %6538
        %6540 = vrot.lane.b32.xlu0 %v4803, 32
        %v6541 = vpop.permute.xlu0 %6540
        %6574 = vrot.lane.b32.xlu0 %v5588, 64
        %v6575 = vpop.permute.xlu0 %6574
        %6576 = vrot.lane.b32.xlu0 %v5591, 64
        %v6577 = vpop.permute.xlu0 %6576
        %6578 = vrot.lane.b32.xlu0 %v5596, 64
        %v6579 = vpop.permute.xlu0 %6578
        %6580 = vrot.lane.b32.xlu0 %v5599, 64
        %v6581 = vpop.permute.xlu0 %6580
        %6582 = vrot.lane.b32.xlu0 %v5604, 64
        %v6583 = vpop.permute.xlu0 %6582
        %6584 = vrot.lane.b32.xlu0 %v5607, 64
        %v6585 = vpop.permute.xlu0 %6584
        %6586 = vrot.lane.b32.xlu0 %v5612, 64
        %v6587 = vpop.permute.xlu0 %6586
        %6588 = vrot.lane.b32.xlu0 %v5615, 64
        %v6589 = vpop.permute.xlu0 %6588
        %6590 = vrot.lane.b32.xlu0 %v5620, 64
        %v6591 = vpop.permute.xlu0 %6590
        %6592 = vrot.lane.b32.xlu0 %v5623, 64
        %v6593 = vpop.permute.xlu0 %6592
        %6594 = vrot.lane.b32.xlu0 %v5628, 64
        %v6595 = vpop.permute.xlu0 %6594
        %6596 = vrot.lane.b32.xlu0 %v5631, 64
        %v6597 = vpop.permute.xlu0 %6596
        %6598 = vrot.lane.b32.xlu0 %v5636, 64
        %v6599 = vpop.permute.xlu0 %6598
        %6600 = vrot.lane.b32.xlu0 %v5639, 64
        %v6601 = vpop.permute.xlu0 %6600
        %6602 = vrot.lane.b32.xlu0 %v5644, 64
        %v6603 = vpop.permute.xlu0 %6602
        %6604 = vrot.lane.b32.xlu0 %v5647, 64
        %v6605 = vpop.permute.xlu0 %6604
        %6638 = vrot.lane.b32.xlu0 %v6432, 96
        %v6639 = vpop.permute.xlu0 %6638
        %6640 = vrot.lane.b32.xlu0 %v6435, 96
        %v6641 = vpop.permute.xlu0 %6640
        %6642 = vrot.lane.b32.xlu0 %v6440, 96
        %v6643 = vpop.permute.xlu0 %6642
        %6644 = vrot.lane.b32.xlu0 %v6443, 96
        %v6645 = vpop.permute.xlu0 %6644
        %6646 = vrot.lane.b32.xlu0 %v6448, 96
        %v6647 = vpop.permute.xlu0 %6646
        %6648 = vrot.lane.b32.xlu0 %v6451, 96
        %v6649 = vpop.permute.xlu0 %6648
        %6650 = vrot.lane.b32.xlu0 %v6456, 96
        %v6651 = vpop.permute.xlu0 %6650
        %6652 = vrot.lane.b32.xlu0 %v6459, 96
        %v6653 = vpop.permute.xlu0 %6652
        %6654 = vrot.lane.b32.xlu0 %v6464, 96
        %v6655 = vpop.permute.xlu0 %6654
        %6656 = vrot.lane.b32.xlu0 %v6467, 96
        %v6657 = vpop.permute.xlu0 %6656
        %6658 = vrot.lane.b32.xlu0 %v6472, 96
        %v6659 = vpop.permute.xlu0 %6658
        %6660 = vrot.lane.b32.xlu0 %v6475, 96
        %v6661 = vpop.permute.xlu0 %6660
        %6662 = vrot.lane.b32.xlu0 %v6480, 96
        %v6663 = vpop.permute.xlu0 %6662
        %6664 = vrot.lane.b32.xlu0 %v6483, 96
        %v6665 = vpop.permute.xlu0 %6664
        %6666 = vrot.lane.b32.xlu0 %v6488, 96
        %v6667 = vpop.permute.xlu0 %6666
        %6668 = vrot.lane.b32.xlu0 %v6491, 96
        %v6669 = vpop.permute.xlu0 %6668
        %v6686 = vsel %vm3159, %v3868, %v6511
        %v6687 = vsel %vm3159, %v3871, %v6513
        %v6688 = vsel %vm3159, %v3876, %v6515
        %v6689 = vsel %vm3159, %v3879, %v6517
        %v6690 = vsel %vm3159, %v3884, %v6519
        %v6691 = vsel %vm3159, %v3887, %v6521
        %v6692 = vsel %vm3159, %v3892, %v6523
        %v6693 = vsel %vm3159, %v3895, %v6525
        %v6694 = vsel %vm3159, %v3900, %v6527
        %v6695 = vsel %vm3159, %v3903, %v6529
        %v6696 = vsel %vm3159, %v3908, %v6531
        %v6697 = vsel %vm3159, %v3911, %v6533
        %v6698 = vsel %vm3159, %v3916, %v6535
        %v6699 = vsel %vm3159, %v3919, %v6537
        %v6700 = vsel %vm3159, %v3924, %v6539
        %v6701 = vsel %vm3159, %v3927, %v6541
        %vm6702 = vcmask 523264
        %v6703 = vsel %vm6702, %v6686, %v6575
        %v6704 = vsel %vm6702, %v6687, %v6577
        %v6705 = vsel %vm6702, %v6688, %v6579
        %v6706 = vsel %vm6702, %v6689, %v6581
        %v6707 = vsel %vm6702, %v6690, %v6583
        %v6708 = vsel %vm6702, %v6691, %v6585
        %v6709 = vsel %vm6702, %v6692, %v6587
        %v6710 = vsel %vm6702, %v6693, %v6589
        %v6711 = vsel %vm6702, %v6694, %v6591
        %v6712 = vsel %vm6702, %v6695, %v6593
        %v6713 = vsel %vm6702, %v6696, %v6595
        %v6714 = vsel %vm6702, %v6697, %v6597
        %v6715 = vsel %vm6702, %v6698, %v6599
        %v6716 = vsel %vm6702, %v6699, %v6601
        %v6717 = vsel %vm6702, %v6700, %v6603
        %v6718 = vsel %vm6702, %v6701, %v6605
        %vm6719 = vcmask 785408
        %v6720 = vsel %vm6719, %v6703, %v6639
        %v6721 = vsel %vm6719, %v6704, %v6641
        %v6722 = vsel %vm6719, %v6705, %v6643
        %v6723 = vsel %vm6719, %v6706, %v6645
        %v6724 = vsel %vm6719, %v6707, %v6647
        %v6725 = vsel %vm6719, %v6708, %v6649
        %v6726 = vsel %vm6719, %v6709, %v6651
        %v6727 = vsel %vm6719, %v6710, %v6653
        %v6728 = vsel %vm6719, %v6711, %v6655
        %v6729 = vsel %vm6719, %v6712, %v6657
        %v6730 = vsel %vm6719, %v6713, %v6659
        %v6731 = vsel %vm6719, %v6714, %v6661
        %v6732 = vsel %vm6719, %v6715, %v6663
        %v6733 = vsel %vm6719, %v6716, %v6665
        %v6734 = vsel %vm6719, %v6717, %v6667
        %v6735 = vsel %vm6719, %v6718, %v6669
        %v6736 = vld [vmem:[%s31] sm:$0xf]
        %v6737 = vld [vmem:[%s31 + $0x4] sm:$0xf]
        %v6738 = vld [vmem:[%s31 + $0x8] sm:$0xf]
        %v6739 = vld [vmem:[%s31 + $0xc] sm:$0xf]
        %v6740 = vld [vmem:[%s31 + $0x10] sm:$0xf]
        %v6741 = vld [vmem:[%s31 + $0x14] sm:$0xf]
        %v6742 = vld [vmem:[%s31 + $0x18] sm:$0xf]
        %v6743 = vld [vmem:[%s31 + $0x1c] sm:$0xf]
        %v6744 = vld [vmem:[%s31 + $0x20] sm:$0xf]
        %v6745 = vld [vmem:[%s31 + $0x24] sm:$0xf]
        %v6746 = vld [vmem:[%s31 + $0x28] sm:$0xf]
        %v6747 = vld [vmem:[%s31 + $0x2c] sm:$0xf]
        %v6748 = vld [vmem:[%s31 + $0x30] sm:$0xf]
        %v6749 = vld [vmem:[%s31 + $0x34] sm:$0xf]
        %v6750 = vld [vmem:[%s31 + $0x38] sm:$0xf]
        %v6751 = vld [vmem:[%s31 + $0x3c] sm:$0xf]
        %v6752 = vpack.c.bf16 %v6721, %v6720
        %v6753 = vpack.c.bf16 %v6723, %v6722
        %v6754 = vpack.c.bf16 %v6725, %v6724
        %v6755 = vpack.c.bf16 %v6727, %v6726
        %v6756 = vpack.c.bf16 %v6729, %v6728
        %v6757 = vpack.c.bf16 %v6731, %v6730
        %v6758 = vpack.c.bf16 %v6733, %v6732
        %v6759 = vpack.c.bf16 %v6735, %v6734
        %v6776 = vunpack.c.l.b16 %v6736
        %v6777 = vunpack.c.l.b16 %v6737
        %v6778 = vunpack.c.l.b16 %v6738
        %v6779 = vunpack.c.l.b16 %v6739
        %v6780 = vunpack.c.l.b16 %v6740
        %v6781 = vunpack.c.l.b16 %v6741
        %v6782 = vunpack.c.l.b16 %v6742
        %v6783 = vunpack.c.l.b16 %v6743
        %v6784 = vunpack.c.l.b16 %v6744
        %v6785 = vunpack.c.l.b16 %v6745
        %v6786 = vunpack.c.l.b16 %v6746
        %v6787 = vunpack.c.l.b16 %v6747
        %v6788 = vunpack.c.l.b16 %v6748
        %v6789 = vunpack.c.l.b16 %v6749
        %v6790 = vunpack.c.l.b16 %v6750
        %v6791 = vunpack.c.l.b16 %v6751
        %v6792 = vpack.c.b16 %v6777, %v6776
        %v6793 = vpack.c.b16 %v6779, %v6778
        %v6794 = vpack.c.b16 %v6781, %v6780
        %v6795 = vpack.c.b16 %v6783, %v6782
        %v6796 = vpack.c.b16 %v6785, %v6784
        %v6797 = vpack.c.b16 %v6787, %v6786
        %v6798 = vpack.c.b16 %v6789, %v6788
        %v6799 = vpack.c.b16 %v6791, %v6790
        %6808 = vmatprep.subr.bf16.mxu0 0
        %6809 = vmatpush1.bf16.msra.mxu0 %v6799
        %6810 = vmatprep.subr.bf16.mxu0 0
        %6811 = vmatpush1.bf16.msra.mxu0 %v6798
        %6812 = vmatprep.subr.bf16.mxu0 0
        %6813 = vmatpush1.bf16.msra.mxu0 %v6797
        %6814 = vmatprep.subr.bf16.mxu0 0
        %6815 = vmatpush1.bf16.msra.mxu0 %v6796
        %6816 = vmatprep.subr.bf16.mxu0 0
        %6817 = vmatpush1.bf16.msra.mxu0 %v6795
        %6818 = vmatprep.subr.bf16.mxu0 0
        %6819 = vmatpush1.bf16.msra.mxu0 %v6794
        %6820 = vmatprep.subr.bf16.mxu0 0
        %6821 = vmatpush1.bf16.msra.mxu0 %v6793
        %6822 = vmatprep.subr.bf16.mxu0 0
        %6823 = vmatpush1.bf16.msra.mxu0 %v6792
        %6824 = vmatprep.subr.bf16.mxu0 0
        %6825 = vmatpush2.bf16.msra.mxu0 0
        %6826 = vmatprep.subr.bf16.mxu0 0
        %6827 = vmatpush2.bf16.msra.mxu0 0
        %6828 = vmatprep.subr.bf16.mxu0 0
        %6829 = vmatpush2.bf16.msra.mxu0 0
        %6830 = vmatprep.subr.bf16.mxu0 0
        %6831 = vmatpush2.bf16.msra.mxu0 0
        %6832 = vmatprep.subr.bf16.mxu0 0
        %6833 = vmatpush2.bf16.msra.mxu0 0
        %6834 = vmatprep.subr.bf16.mxu0 0
        %6835 = vmatpush2.bf16.msra.mxu0 0
        %6836 = vmatprep.subr.bf16.mxu0 0
        %6837 = vmatpush2.bf16.msra.mxu0 0
        %6838 = vmatprep.subr.bf16.mxu0 0
        %6839 = vmatpush2.bf16.msra.mxu0 0
        %6840 = vmatprep.mubr.bf16.mxu0 0
        %6841 = vmatmul.mubr.bf16.gmra.mxu0 %v6752
        %v6842 = vpop.f32.mrf.mxu0
        %v6843 = vadd.f32 0.0, %v6842
        %v6844 = vpop.f32.mrf.mxu0
        %v6845 = vpop.f32.mrf.mxu0
        %v6846 = vadd.f32 0.0, %v6845
        %v6847 = vpop.f32.mrf.mxu0
        %6848 = vmatprep.mubr.bf16.mxu0 0
        %6849 = vmatmul.mubr.bf16.gmra.mxu0 %v6753
        %v6850 = vpop.f32.mrf.mxu0
        %v6851 = vadd.f32 0.0, %v6850
        %v6852 = vpop.f32.mrf.mxu0
        %v6853 = vpop.f32.mrf.mxu0
        %v6854 = vadd.f32 0.0, %v6853
        %v6855 = vpop.f32.mrf.mxu0
        %6856 = vmatprep.mubr.bf16.mxu0 0
        %6857 = vmatmul.mubr.bf16.gmra.mxu0 %v6754
        %v6858 = vpop.f32.mrf.mxu0
        %v6859 = vadd.f32 0.0, %v6858
        %v6860 = vpop.f32.mrf.mxu0
        %v6861 = vpop.f32.mrf.mxu0
        %v6862 = vadd.f32 0.0, %v6861
        %v6863 = vpop.f32.mrf.mxu0
        %6864 = vmatprep.mubr.bf16.mxu0 0
        %6865 = vmatmul.mubr.bf16.gmra.mxu0 %v6755
        %v6866 = vpop.f32.mrf.mxu0
        %v6867 = vadd.f32 0.0, %v6866
        %v6868 = vpop.f32.mrf.mxu0
        %v6869 = vpop.f32.mrf.mxu0
        %v6870 = vadd.f32 0.0, %v6869
        %v6871 = vpop.f32.mrf.mxu0
        %6872 = vmatprep.mubr.bf16.mxu0 0
        %6873 = vmatmul.mubr.bf16.gmra.mxu0 %v6756
        %v6874 = vpop.f32.mrf.mxu0
        %v6875 = vadd.f32 0.0, %v6874
        %v6876 = vpop.f32.mrf.mxu0
        %v6877 = vpop.f32.mrf.mxu0
        %v6878 = vadd.f32 0.0, %v6877
        %v6879 = vpop.f32.mrf.mxu0
        %6880 = vmatprep.mubr.bf16.mxu0 0
        %6881 = vmatmul.mubr.bf16.gmra.mxu0 %v6757
        %v6882 = vpop.f32.mrf.mxu0
        %v6883 = vadd.f32 0.0, %v6882
        %v6884 = vpop.f32.mrf.mxu0
        %v6885 = vpop.f32.mrf.mxu0
        %v6886 = vadd.f32 0.0, %v6885
        %v6887 = vpop.f32.mrf.mxu0
        %6888 = vmatprep.mubr.bf16.mxu0 0
        %6889 = vmatmul.mubr.bf16.gmra.mxu0 %v6758
        %v6890 = vpop.f32.mrf.mxu0
        %v6891 = vadd.f32 0.0, %v6890
        %v6892 = vpop.f32.mrf.mxu0
        %v6893 = vpop.f32.mrf.mxu0
        %v6894 = vadd.f32 0.0, %v6893
        %v6895 = vpop.f32.mrf.mxu0
        %6896 = vmatprep.mubr.bf16.mxu0 0
        %6897 = vmatmul.mubr.bf16.gmra.mxu0 %v6759
        %v6898 = vpop.f32.mrf.mxu0
        %v6899 = vadd.f32 0.0, %v6898
        %v6900 = vpop.f32.mrf.mxu0
        %v6901 = vpop.f32.mrf.mxu0
        %v6902 = vadd.f32 0.0, %v6901
        %v6903 = vpop.f32.mrf.mxu0
        %6904 = vdwg.mxu0
        %v6905 = vadd.f32 %v2298, %v6843
        %v6906 = vadd.f32 %v2299, %v6846
        %v6907 = vadd.f32 %v2300, %v6851
        %v6908 = vadd.f32 %v2301, %v6854
        %v6909 = vadd.f32 %v2302, %v6859
        %v6910 = vadd.f32 %v2303, %v6862
        %v6911 = vadd.f32 %v2304, %v6867
        %v6912 = vadd.f32 %v2305, %v6870
        %v6913 = vadd.f32 %v2306, %v6875
        %v6914 = vadd.f32 %v2307, %v6878
        %v6915 = vadd.f32 %v2308, %v6883
        %v6916 = vadd.f32 %v2309, %v6886
        %v6917 = vadd.f32 %v2310, %v6891
        %v6918 = vadd.f32 %v2311, %v6894
        %v6919 = vadd.f32 %v2312, %v6899
        %v6920 = vadd.f32 %v2313, %v6902
        %v6921 = vld [vmem:[%s33] sm:$0x1]
        %v6923 = vlaneseq
        %v6924 = vshrl.u32 %v6923, 7
        %v6925 = vsub.s32 0, %v6924
        %v6926 = vrot.slane %v6921, %v6925
        %v6928 = vadd.f32 %v6905, %v6926
        %v6929 = vadd.f32 %v6906, %v6926
        %v6930 = vadd.f32 %v6907, %v6926
        %v6931 = vadd.f32 %v6908, %v6926
        %v6932 = vadd.f32 %v6909, %v6926
        %v6933 = vadd.f32 %v6910, %v6926
        %v6934 = vadd.f32 %v6911, %v6926
        %v6935 = vadd.f32 %v6912, %v6926
        %v6936 = vadd.f32 %v6913, %v6926
        %v6937 = vadd.f32 %v6914, %v6926
        %v6938 = vadd.f32 %v6915, %v6926
        %v6939 = vadd.f32 %v6916, %v6926
        %v6940 = vadd.f32 %v6917, %v6926
        %v6941 = vadd.f32 %v6918, %v6926
        %v6942 = vadd.f32 %v6919, %v6926
        %v6943 = vadd.f32 %v6920, %v6926
        %v6944 = vld [vmem:[%s35] sm:$0x1]
        %v6945 = vld [vmem:[%s37] sm:$0x1]
        %6946 = vadd.xlane.f32.xlu0 %v6928
        %v6947 = vpop.xlane.xlu0 %6946
        %6948 = vadd.xlane.f32.xlu0 %v6929
        %v6949 = vpop.xlane.xlu0 %6948
        %6950 = vadd.xlane.f32.xlu0 %v6930
        %v6951 = vpop.xlane.xlu0 %6950
        %6952 = vadd.xlane.f32.xlu0 %v6931
        %v6953 = vpop.xlane.xlu0 %6952
        %6954 = vadd.xlane.f32.xlu0 %v6932
        %v6955 = vpop.xlane.xlu0 %6954
        %6956 = vadd.xlane.f32.xlu0 %v6933
        %v6957 = vpop.xlane.xlu0 %6956
        %6958 = vadd.xlane.f32.xlu0 %v6934
        %v6959 = vpop.xlane.xlu0 %6958
        %6960 = vadd.xlane.f32.xlu0 %v6935
        %v6961 = vpop.xlane.xlu0 %6960
        %6962 = vadd.xlane.f32.xlu0 %v6936
        %v6963 = vpop.xlane.xlu0 %6962
        %6964 = vadd.xlane.f32.xlu0 %v6937
        %v6965 = vpop.xlane.xlu0 %6964
        %6966 = vadd.xlane.f32.xlu0 %v6938
        %v6967 = vpop.xlane.xlu0 %6966
        %6968 = vadd.xlane.f32.xlu0 %v6939
        %v6969 = vpop.xlane.xlu0 %6968
        %6970 = vadd.xlane.f32.xlu0 %v6940
        %v6971 = vpop.xlane.xlu0 %6970
        %6972 = vadd.xlane.f32.xlu0 %v6941
        %v6973 = vpop.xlane.xlu0 %6972
        %6974 = vadd.xlane.f32.xlu0 %v6942
        %v6975 = vpop.xlane.xlu0 %6974
        %6976 = vadd.xlane.f32.xlu0 %v6943
        %v6977 = vpop.xlane.xlu0 %6976
        %v6978 = vmul.f32 %v6947, %v1173
        %v6979 = vmul.f32 %v6949, %v1173
        %v6980 = vmul.f32 %v6951, %v1173
        %v6981 = vmul.f32 %v6953, %v1173
        %v6982 = vmul.f32 %v6955, %v1173
        %v6983 = vmul.f32 %v6957, %v1173
        %v6984 = vmul.f32 %v6959, %v1173
        %v6985 = vmul.f32 %v6961, %v1173
        %v6986 = vmul.f32 %v6963, %v1173
        %v6987 = vmul.f32 %v6965, %v1173
        %v6988 = vmul.f32 %v6967, %v1173
        %v6989 = vmul.f32 %v6969, %v1173
        %v6990 = vmul.f32 %v6971, %v1173
        %v6991 = vmul.f32 %v6973, %v1173
        %v6992 = vmul.f32 %v6975, %v1173
        %v6993 = vmul.f32 %v6977, %v1173
        %v6994 = vsub.f32 %v6928, %v6978
        %v6995 = vsub.f32 %v6929, %v6979
        %v6996 = vsub.f32 %v6930, %v6980
        %v6997 = vsub.f32 %v6931, %v6981
        %v6998 = vsub.f32 %v6932, %v6982
        %v6999 = vsub.f32 %v6933, %v6983
        %v7000 = vsub.f32 %v6934, %v6984
        %v7001 = vsub.f32 %v6935, %v6985
        %v7002 = vsub.f32 %v6936, %v6986
        %v7003 = vsub.f32 %v6937, %v6987
        %v7004 = vsub.f32 %v6938, %v6988
        %v7005 = vsub.f32 %v6939, %v6989
        %v7006 = vsub.f32 %v6940, %v6990
        %v7007 = vsub.f32 %v6941, %v6991
        %v7008 = vsub.f32 %v6942, %v6992
        %v7009 = vsub.f32 %v6943, %v6993
        %v7010 = vmul.f32 %v6994, %v6994
        %v7011 = vmul.f32 %v6995, %v6995
        %v7012 = vmul.f32 %v6996, %v6996
        %v7013 = vmul.f32 %v6997, %v6997
        %v7014 = vmul.f32 %v6998, %v6998
        %v7015 = vmul.f32 %v6999, %v6999
        %v7016 = vmul.f32 %v7000, %v7000
        %v7017 = vmul.f32 %v7001, %v7001
        %v7018 = vmul.f32 %v7002, %v7002
        %v7019 = vmul.f32 %v7003, %v7003
        %v7020 = vmul.f32 %v7004, %v7004
        %v7021 = vmul.f32 %v7005, %v7005
        %v7022 = vmul.f32 %v7006, %v7006
        %v7023 = vmul.f32 %v7007, %v7007
        %v7024 = vmul.f32 %v7008, %v7008
        %v7025 = vmul.f32 %v7009, %v7009
        %7026 = vadd.xlane.f32.xlu0 %v7010
        %v7027 = vpop.xlane.xlu0 %7026
        %7028 = vadd.xlane.f32.xlu0 %v7011
        %v7029 = vpop.xlane.xlu0 %7028
        %7030 = vadd.xlane.f32.xlu0 %v7012
        %v7031 = vpop.xlane.xlu0 %7030
        %7032 = vadd.xlane.f32.xlu0 %v7013
        %v7033 = vpop.xlane.xlu0 %7032
        %7034 = vadd.xlane.f32.xlu0 %v7014
        %v7035 = vpop.xlane.xlu0 %7034
        %7036 = vadd.xlane.f32.xlu0 %v7015
        %v7037 = vpop.xlane.xlu0 %7036
        %7038 = vadd.xlane.f32.xlu0 %v7016
        %v7039 = vpop.xlane.xlu0 %7038
        %7040 = vadd.xlane.f32.xlu0 %v7017
        %v7041 = vpop.xlane.xlu0 %7040
        %7042 = vadd.xlane.f32.xlu0 %v7018
        %v7043 = vpop.xlane.xlu0 %7042
        %7044 = vadd.xlane.f32.xlu0 %v7019
        %v7045 = vpop.xlane.xlu0 %7044
        %7046 = vadd.xlane.f32.xlu0 %v7020
        %v7047 = vpop.xlane.xlu0 %7046
        %7048 = vadd.xlane.f32.xlu0 %v7021
        %v7049 = vpop.xlane.xlu0 %7048
        %7050 = vadd.xlane.f32.xlu0 %v7022
        %v7051 = vpop.xlane.xlu0 %7050
        %7052 = vadd.xlane.f32.xlu0 %v7023
        %v7053 = vpop.xlane.xlu0 %7052
        %7054 = vadd.xlane.f32.xlu0 %v7024
        %v7055 = vpop.xlane.xlu0 %7054
        %7056 = vadd.xlane.f32.xlu0 %v7025
        %v7057 = vpop.xlane.xlu0 %7056
        %v7058 = vmul.f32 %v7027, %v1173
        %v7059 = vmul.f32 %v7029, %v1173
        %v7060 = vmul.f32 %v7031, %v1173
        %v7061 = vmul.f32 %v7033, %v1173
        %v7062 = vmul.f32 %v7035, %v1173
        %v7063 = vmul.f32 %v7037, %v1173
        %v7064 = vmul.f32 %v7039, %v1173
        %v7065 = vmul.f32 %v7041, %v1173
        %v7066 = vmul.f32 %v7043, %v1173
        %v7067 = vmul.f32 %v7045, %v1173
        %v7068 = vmul.f32 %v7047, %v1173
        %v7069 = vmul.f32 %v7049, %v1173
        %v7070 = vmul.f32 %v7051, %v1173
        %v7071 = vmul.f32 %v7053, %v1173
        %v7072 = vmul.f32 %v7055, %v1173
        %v7073 = vmul.f32 %v7057, %v1173
        %v7074 = vadd.f32 %v7058, 1e-05
        %v7075 = vadd.f32 %v7059, 1e-05
        %v7076 = vadd.f32 %v7060, 1e-05
        %v7077 = vadd.f32 %v7061, 1e-05
        %v7078 = vadd.f32 %v7062, 1e-05
        %v7079 = vadd.f32 %v7063, 1e-05
        %v7080 = vadd.f32 %v7064, 1e-05
        %v7081 = vadd.f32 %v7065, 1e-05
        %v7082 = vadd.f32 %v7066, 1e-05
        %v7083 = vadd.f32 %v7067, 1e-05
        %v7084 = vadd.f32 %v7068, 1e-05
        %v7085 = vadd.f32 %v7069, 1e-05
        %v7086 = vadd.f32 %v7070, 1e-05
        %v7087 = vadd.f32 %v7071, 1e-05
        %v7088 = vadd.f32 %v7072, 1e-05
        %v7089 = vadd.f32 %v7073, 1e-05
        %v7090 = vrsqrt.pop %v7074
        %v7091 = vrsqrt.pop %v7075
        %v7092 = vrsqrt.pop %v7076
        %v7093 = vrsqrt.pop %v7077
        %v7094 = vrsqrt.pop %v7078
        %v7095 = vrsqrt.pop %v7079
        %v7096 = vrsqrt.pop %v7080
        %v7097 = vrsqrt.pop %v7081
        %v7098 = vrsqrt.pop %v7082
        %v7099 = vrsqrt.pop %v7083
        %v7100 = vrsqrt.pop %v7084
        %v7101 = vrsqrt.pop %v7085
        %v7102 = vrsqrt.pop %v7086
        %v7103 = vrsqrt.pop %v7087
        %v7104 = vrsqrt.pop %v7088
        %v7105 = vrsqrt.pop %v7089
        %v7106 = vmul.f32 %v6994, %v7090
        %v7107 = vmul.f32 %v6995, %v7091
        %v7108 = vmul.f32 %v6996, %v7092
        %v7109 = vmul.f32 %v6997, %v7093
        %v7110 = vmul.f32 %v6998, %v7094
        %v7111 = vmul.f32 %v6999, %v7095
        %v7112 = vmul.f32 %v7000, %v7096
        %v7113 = vmul.f32 %v7001, %v7097
        %v7114 = vmul.f32 %v7002, %v7098
        %v7115 = vmul.f32 %v7003, %v7099
        %v7116 = vmul.f32 %v7004, %v7100
        %v7117 = vmul.f32 %v7005, %v7101
        %v7118 = vmul.f32 %v7006, %v7102
        %v7119 = vmul.f32 %v7007, %v7103
        %v7120 = vmul.f32 %v7008, %v7104
        %v7121 = vmul.f32 %v7009, %v7105
        %v7123 = vlaneseq
        %v7124 = vshrl.u32 %v7123, 7
        %v7125 = vsub.s32 0, %v7124
        %v7126 = vrot.slane %v6944, %v7125
        %v7128 = vmul.f32 %v7106, %v7126
        %v7129 = vmul.f32 %v7107, %v7126
        %v7130 = vmul.f32 %v7108, %v7126
        %v7131 = vmul.f32 %v7109, %v7126
        %v7132 = vmul.f32 %v7110, %v7126
        %v7133 = vmul.f32 %v7111, %v7126
        %v7134 = vmul.f32 %v7112, %v7126
        %v7135 = vmul.f32 %v7113, %v7126
        %v7136 = vmul.f32 %v7114, %v7126
        %v7137 = vmul.f32 %v7115, %v7126
        %v7138 = vmul.f32 %v7116, %v7126
        %v7139 = vmul.f32 %v7117, %v7126
        %v7140 = vmul.f32 %v7118, %v7126
        %v7141 = vmul.f32 %v7119, %v7126
        %v7142 = vmul.f32 %v7120, %v7126
        %v7143 = vmul.f32 %v7121, %v7126
        %v7145 = vlaneseq
        %v7146 = vshrl.u32 %v7145, 7
        %v7147 = vsub.s32 0, %v7146
        %v7148 = vrot.slane %v6945, %v7147
        %v7150 = vadd.f32 %v7128, %v7148
        %v7151 = vadd.f32 %v7129, %v7148
        %v7152 = vadd.f32 %v7130, %v7148
        %v7153 = vadd.f32 %v7131, %v7148
        %v7154 = vadd.f32 %v7132, %v7148
        %v7155 = vadd.f32 %v7133, %v7148
        %v7156 = vadd.f32 %v7134, %v7148
        %v7157 = vadd.f32 %v7135, %v7148
        %v7158 = vadd.f32 %v7136, %v7148
        %v7159 = vadd.f32 %v7137, %v7148
        %v7160 = vadd.f32 %v7138, %v7148
        %v7161 = vadd.f32 %v7139, %v7148
        %v7162 = vadd.f32 %v7140, %v7148
        %v7163 = vadd.f32 %v7141, %v7148
        %v7164 = vadd.f32 %v7142, %v7148
        %v7165 = vadd.f32 %v7143, %v7148
        %v7166 = vld [vmem:[%s39] sm:$0xff]
        %v7167 = vld [vmem:[%s39 + $0x8] sm:$0xff]
        %v7168 = vld [vmem:[%s39 + $0x10] sm:$0xff]
        %v7169 = vld [vmem:[%s39 + $0x18] sm:$0xff]
        %v7170 = vld [vmem:[%s39 + $0x20] sm:$0xff]
        %v7171 = vld [vmem:[%s39 + $0x28] sm:$0xff]
        %v7172 = vld [vmem:[%s39 + $0x30] sm:$0xff]
        %v7173 = vld [vmem:[%s39 + $0x38] sm:$0xff]
        %v7174 = vld [vmem:[%s39 + $0x40] sm:$0xff]
        %v7175 = vld [vmem:[%s39 + $0x48] sm:$0xff]
        %v7176 = vld [vmem:[%s39 + $0x50] sm:$0xff]
        %v7177 = vld [vmem:[%s39 + $0x58] sm:$0xff]
        %v7178 = vld [vmem:[%s39 + $0x60] sm:$0xff]
        %v7179 = vld [vmem:[%s39 + $0x68] sm:$0xff]
        %v7180 = vld [vmem:[%s39 + $0x70] sm:$0xff]
        %v7181 = vld [vmem:[%s39 + $0x78] sm:$0xff]
        %v7182 = vpack.c.bf16 %v7151, %v7150
        %v7183 = vpack.c.bf16 %v7153, %v7152
        %v7184 = vpack.c.bf16 %v7155, %v7154
        %v7185 = vpack.c.bf16 %v7157, %v7156
        %v7186 = vpack.c.bf16 %v7159, %v7158
        %v7187 = vpack.c.bf16 %v7161, %v7160
        %v7188 = vpack.c.bf16 %v7163, %v7162
        %v7189 = vpack.c.bf16 %v7165, %v7164
        %v7190 = vld [vmem:[%s41] sm:$0x3]
        %v7192 = vlaneseq
        %v7193 = vshrl.u32 %v7192, 7
        %v7194 = vsub.s32 0, %v7193
        %v7195 = vrot.slane %v7190, %v7194
        %v7196 = vlaneseq
        %v7197 = vshrl.u32 %v7196, 7
        %v7198 = vsub.s32 1, %v7197
        %v7199 = vrot.slane %v7190, %v7198
        %v7218 = vunpack.c.l.b16 %v7166
        %v7219 = vunpack.c.h.b16 %v7166
        %v7220 = vunpack.c.l.b16 %v7167
        %v7221 = vunpack.c.h.b16 %v7167
        %v7222 = vunpack.c.l.b16 %v7168
        %v7223 = vunpack.c.h.b16 %v7168
        %v7224 = vunpack.c.l.b16 %v7169
        %v7225 = vunpack.c.h.b16 %v7169
        %v7226 = vunpack.c.l.b16 %v7170
        %v7227 = vunpack.c.h.b16 %v7170
        %v7228 = vunpack.c.l.b16 %v7171
        %v7229 = vunpack.c.h.b16 %v7171
        %v7230 = vunpack.c.l.b16 %v7172
        %v7231 = vunpack.c.h.b16 %v7172
        %v7232 = vunpack.c.l.b16 %v7173
        %v7233 = vunpack.c.h.b16 %v7173
        %v7234 = vunpack.c.l.b16 %v7174
        %v7235 = vunpack.c.h.b16 %v7174
        %v7236 = vunpack.c.l.b16 %v7175
        %v7237 = vunpack.c.h.b16 %v7175
        %v7238 = vunpack.c.l.b16 %v7176
        %v7239 = vunpack.c.h.b16 %v7176
        %v7240 = vunpack.c.l.b16 %v7177
        %v7241 = vunpack.c.h.b16 %v7177
        %v7242 = vunpack.c.l.b16 %v7178
        %v7243 = vunpack.c.h.b16 %v7178
        %v7244 = vunpack.c.l.b16 %v7179
        %v7245 = vunpack.c.h.b16 %v7179
        %v7246 = vunpack.c.l.b16 %v7180
        %v7247 = vunpack.c.h.b16 %v7180
        %v7248 = vunpack.c.l.b16 %v7181
        %v7249 = vunpack.c.h.b16 %v7181
        %v7250 = vpack.c.b16 %v7220, %v7218
        %v7251 = vpack.c.b16 %v7221, %v7219
        %v7252 = vpack.c.b16 %v7224, %v7222
        %v7253 = vpack.c.b16 %v7225, %v7223
        %v7254 = vpack.c.b16 %v7228, %v7226
        %v7255 = vpack.c.b16 %v7229, %v7227
        %v7256 = vpack.c.b16 %v7232, %v7230
        %v7257 = vpack.c.b16 %v7233, %v7231
        %v7258 = vpack.c.b16 %v7236, %v7234
        %v7259 = vpack.c.b16 %v7237, %v7235
        %v7260 = vpack.c.b16 %v7240, %v7238
        %v7261 = vpack.c.b16 %v7241, %v7239
        %v7262 = vpack.c.b16 %v7244, %v7242
        %v7263 = vpack.c.b16 %v7245, %v7243
        %v7264 = vpack.c.b16 %v7248, %v7246
        %v7265 = vpack.c.b16 %v7249, %v7247
        %7282 = vmatprep.subr.bf16.mxu0 %v7265
        %7283 = vmatpush1.bf16.msra.mxu0 %v7264
        %7284 = vmatprep.subr.bf16.mxu0 %v7263
        %7285 = vmatpush1.bf16.msra.mxu0 %v7262
        %7286 = vmatprep.subr.bf16.mxu0 %v7261
        %7287 = vmatpush1.bf16.msra.mxu0 %v7260
        %7288 = vmatprep.subr.bf16.mxu0 %v7259
        %7289 = vmatpush1.bf16.msra.mxu0 %v7258
        %7290 = vmatprep.subr.bf16.mxu0 %v7257
        %7291 = vmatpush1.bf16.msra.mxu0 %v7256
        %7292 = vmatprep.subr.bf16.mxu0 %v7255
        %7293 = vmatpush1.bf16.msra.mxu0 %v7254
        %7294 = vmatprep.subr.bf16.mxu0 %v7253
        %7295 = vmatpush1.bf16.msra.mxu0 %v7252
        %7296 = vmatprep.subr.bf16.mxu0 %v7251
        %7297 = vmatpush1.bf16.msra.mxu0 %v7250
        %7298 = vmatprep.subr.bf16.mxu0 0
        %7299 = vmatpush2.bf16.msra.mxu0 0
        %7300 = vmatprep.subr.bf16.mxu0 0
        %7301 = vmatpush2.bf16.msra.mxu0 0
        %7302 = vmatprep.subr.bf16.mxu0 0
        %7303 = vmatpush2.bf16.msra.mxu0 0
        %7304 = vmatprep.subr.bf16.mxu0 0
        %7305 = vmatpush2.bf16.msra.mxu0 0
        %7306 = vmatprep.subr.bf16.mxu0 0
        %7307 = vmatpush2.bf16.msra.mxu0 0
        %7308 = vmatprep.subr.bf16.mxu0 0
        %7309 = vmatpush2.bf16.msra.mxu0 0
        %7310 = vmatprep.subr.bf16.mxu0 0
        %7311 = vmatpush2.bf16.msra.mxu0 0
        %7312 = vmatprep.subr.bf16.mxu0 0
        %7313 = vmatpush2.bf16.msra.mxu0 0
        %7314 = vmatprep.mubr.bf16.mxu0 0
        %7315 = vmatmul.mubr.bf16.gmra.mxu0 %v7182
        %v7316 = vpop.f32.mrf.mxu0
        %v7317 = vadd.f32 %v7195, %v7316
        %v7318 = vpop.f32.mrf.mxu0
        %v7319 = vadd.f32 %v7199, %v7318
        %v7320 = vpop.f32.mrf.mxu0
        %v7321 = vadd.f32 %v7195, %v7320
        %v7322 = vpop.f32.mrf.mxu0
        %v7323 = vadd.f32 %v7199, %v7322
        %7324 = vmatprep.mubr.bf16.mxu0 0
        %7325 = vmatmul.mubr.bf16.gmra.mxu0 %v7183
        %v7326 = vpop.f32.mrf.mxu0
        %v7327 = vadd.f32 %v7195, %v7326
        %v7328 = vpop.f32.mrf.mxu0
        %v7329 = vadd.f32 %v7199, %v7328
        %v7330 = vpop.f32.mrf.mxu0
        %v7331 = vadd.f32 %v7195, %v7330
        %v7332 = vpop.f32.mrf.mxu0
        %v7333 = vadd.f32 %v7199, %v7332
        %7334 = vmatprep.mubr.bf16.mxu0 0
        %7335 = vmatmul.mubr.bf16.gmra.mxu0 %v7184
        %v7336 = vpop.f32.mrf.mxu0
        %v7337 = vadd.f32 %v7195, %v7336
        %v7338 = vpop.f32.mrf.mxu0
        %v7339 = vadd.f32 %v7199, %v7338
        %v7340 = vpop.f32.mrf.mxu0
        %v7341 = vadd.f32 %v7195, %v7340
        %v7342 = vpop.f32.mrf.mxu0
        %v7343 = vadd.f32 %v7199, %v7342
        %7344 = vmatprep.mubr.bf16.mxu0 0
        %7345 = vmatmul.mubr.bf16.gmra.mxu0 %v7185
        %v7346 = vpop.f32.mrf.mxu0
        %v7347 = vadd.f32 %v7195, %v7346
        %v7348 = vpop.f32.mrf.mxu0
        %v7349 = vadd.f32 %v7199, %v7348
        %v7350 = vpop.f32.mrf.mxu0
        %v7351 = vadd.f32 %v7195, %v7350
        %v7352 = vpop.f32.mrf.mxu0
        %v7353 = vadd.f32 %v7199, %v7352
        %7354 = vmatprep.mubr.bf16.mxu0 0
        %7355 = vmatmul.mubr.bf16.gmra.mxu0 %v7186
        %v7356 = vpop.f32.mrf.mxu0
        %v7357 = vadd.f32 %v7195, %v7356
        %v7358 = vpop.f32.mrf.mxu0
        %v7359 = vadd.f32 %v7199, %v7358
        %v7360 = vpop.f32.mrf.mxu0
        %v7361 = vadd.f32 %v7195, %v7360
        %v7362 = vpop.f32.mrf.mxu0
        %v7363 = vadd.f32 %v7199, %v7362
        %7364 = vmatprep.mubr.bf16.mxu0 0
        %7365 = vmatmul.mubr.bf16.gmra.mxu0 %v7187
        %v7366 = vpop.f32.mrf.mxu0
        %v7367 = vadd.f32 %v7195, %v7366
        %v7368 = vpop.f32.mrf.mxu0
        %v7369 = vadd.f32 %v7199, %v7368
        %v7370 = vpop.f32.mrf.mxu0
        %v7371 = vadd.f32 %v7195, %v7370
        %v7372 = vpop.f32.mrf.mxu0
        %v7373 = vadd.f32 %v7199, %v7372
        %7374 = vmatprep.mubr.bf16.mxu0 0
        %7375 = vmatmul.mubr.bf16.gmra.mxu0 %v7188
        %v7376 = vpop.f32.mrf.mxu0
        %v7377 = vadd.f32 %v7195, %v7376
        %v7378 = vpop.f32.mrf.mxu0
        %v7379 = vadd.f32 %v7199, %v7378
        %v7380 = vpop.f32.mrf.mxu0
        %v7381 = vadd.f32 %v7195, %v7380
        %v7382 = vpop.f32.mrf.mxu0
        %v7383 = vadd.f32 %v7199, %v7382
        %7384 = vmatprep.mubr.bf16.mxu0 0
        %7385 = vmatmul.mubr.bf16.gmra.mxu0 %v7189
        %v7386 = vpop.f32.mrf.mxu0
        %v7387 = vadd.f32 %v7195, %v7386
        %v7388 = vpop.f32.mrf.mxu0
        %v7389 = vadd.f32 %v7199, %v7388
        %v7390 = vpop.f32.mrf.mxu0
        %v7391 = vadd.f32 %v7195, %v7390
        %v7392 = vpop.f32.mrf.mxu0
        %v7393 = vadd.f32 %v7199, %v7392
        %7394 = vdwg.mxu0
        %v7395 = vxor.u32 %v7319, 2147483648
        %v7396 = vxor.u32 %v7323, 2147483648
        %v7397 = vxor.u32 %v7329, 2147483648
        %v7398 = vxor.u32 %v7333, 2147483648
        %v7399 = vxor.u32 %v7339, 2147483648
        %v7400 = vxor.u32 %v7343, 2147483648
        %v7401 = vxor.u32 %v7349, 2147483648
        %v7402 = vxor.u32 %v7353, 2147483648
        %v7403 = vxor.u32 %v7359, 2147483648
        %v7404 = vxor.u32 %v7363, 2147483648
        %v7405 = vxor.u32 %v7369, 2147483648
        %v7406 = vxor.u32 %v7373, 2147483648
        %v7407 = vxor.u32 %v7379, 2147483648
        %v7408 = vxor.u32 %v7383, 2147483648
        %v7409 = vxor.u32 %v7389, 2147483648
        %v7410 = vxor.u32 %v7393, 2147483648
        %v7411 = vmul.f32 %v7395, 1.442695
        %v7412 = vpow.pop %v7411
        %v7413 = vmul.f32 %v7396, 1.442695
        %v7414 = vpow.pop %v7413
        %v7415 = vmul.f32 %v7397, 1.442695
        %v7416 = vpow.pop %v7415
        %v7417 = vmul.f32 %v7398, 1.442695
        %v7418 = vpow.pop %v7417
        %v7419 = vmul.f32 %v7399, 1.442695
        %v7420 = vpow.pop %v7419
        %v7421 = vmul.f32 %v7400, 1.442695
        %v7422 = vpow.pop %v7421
        %v7423 = vmul.f32 %v7401, 1.442695
        %v7424 = vpow.pop %v7423
        %v7425 = vmul.f32 %v7402, 1.442695
        %v7426 = vpow.pop %v7425
        %v7427 = vmul.f32 %v7403, 1.442695
        %v7428 = vpow.pop %v7427
        %v7429 = vmul.f32 %v7404, 1.442695
        %v7430 = vpow.pop %v7429
        %v7431 = vmul.f32 %v7405, 1.442695
        %v7432 = vpow.pop %v7431
        %v7433 = vmul.f32 %v7406, 1.442695
        %v7434 = vpow.pop %v7433
        %v7435 = vmul.f32 %v7407, 1.442695
        %v7436 = vpow.pop %v7435
        %v7437 = vmul.f32 %v7408, 1.442695
        %v7438 = vpow.pop %v7437
        %v7439 = vmul.f32 %v7409, 1.442695
        %v7440 = vpow.pop %v7439
        %v7441 = vmul.f32 %v7410, 1.442695
        %v7442 = vpow.pop %v7441
        %v7443 = vadd.f32 %v7412, 1.0
        %v7444 = vadd.f32 %v7414, 1.0
        %v7445 = vadd.f32 %v7416, 1.0
        %v7446 = vadd.f32 %v7418, 1.0
        %v7447 = vadd.f32 %v7420, 1.0
        %v7448 = vadd.f32 %v7422, 1.0
        %v7449 = vadd.f32 %v7424, 1.0
        %v7450 = vadd.f32 %v7426, 1.0
        %v7451 = vadd.f32 %v7428, 1.0
        %v7452 = vadd.f32 %v7430, 1.0
        %v7453 = vadd.f32 %v7432, 1.0
        %v7454 = vadd.f32 %v7434, 1.0
        %v7455 = vadd.f32 %v7436, 1.0
        %v7456 = vadd.f32 %v7438, 1.0
        %v7457 = vadd.f32 %v7440, 1.0
        %v7458 = vadd.f32 %v7442, 1.0
        %v7459 = vrcp.pop %v7443
        %v7460 = vmul.f32 1.0, %v7459
        %v7461 = vrcp.pop %v7444
        %v7462 = vmul.f32 1.0, %v7461
        %v7463 = vrcp.pop %v7445
        %v7464 = vmul.f32 1.0, %v7463
        %v7465 = vrcp.pop %v7446
        %v7466 = vmul.f32 1.0, %v7465
        %v7467 = vrcp.pop %v7447
        %v7468 = vmul.f32 1.0, %v7467
        %v7469 = vrcp.pop %v7448
        %v7470 = vmul.f32 1.0, %v7469
        %v7471 = vrcp.pop %v7449
        %v7472 = vmul.f32 1.0, %v7471
        %v7473 = vrcp.pop %v7450
        %v7474 = vmul.f32 1.0, %v7473
        %v7475 = vrcp.pop %v7451
        %v7476 = vmul.f32 1.0, %v7475
        %v7477 = vrcp.pop %v7452
        %v7478 = vmul.f32 1.0, %v7477
        %v7479 = vrcp.pop %v7453
        %v7480 = vmul.f32 1.0, %v7479
        %v7481 = vrcp.pop %v7454
        %v7482 = vmul.f32 1.0, %v7481
        %v7483 = vrcp.pop %v7455
        %v7484 = vmul.f32 1.0, %v7483
        %v7485 = vrcp.pop %v7456
        %v7486 = vmul.f32 1.0, %v7485
        %v7487 = vrcp.pop %v7457
        %v7488 = vmul.f32 1.0, %v7487
        %v7489 = vrcp.pop %v7458
        %v7490 = vmul.f32 1.0, %v7489
        %v7491 = vmul.f32 %v7317, %v7460
        %v7492 = vmul.f32 %v7321, %v7462
        %v7493 = vmul.f32 %v7327, %v7464
        %v7494 = vmul.f32 %v7331, %v7466
        %v7495 = vmul.f32 %v7337, %v7468
        %v7496 = vmul.f32 %v7341, %v7470
        %v7497 = vmul.f32 %v7347, %v7472
        %v7498 = vmul.f32 %v7351, %v7474
        %v7499 = vmul.f32 %v7357, %v7476
        %v7500 = vmul.f32 %v7361, %v7478
        %v7501 = vmul.f32 %v7367, %v7480
        %v7502 = vmul.f32 %v7371, %v7482
        %v7503 = vmul.f32 %v7377, %v7484
        %v7504 = vmul.f32 %v7381, %v7486
        %v7505 = vmul.f32 %v7387, %v7488
        %v7506 = vmul.f32 %v7391, %v7490
        %v7507 = vld [vmem:[%s43] sm:$0x7f]
        %v7508 = vlaneseq
        %v7509 = vshrl.u32 %v7508, 7
        %v7510 = vsub.s32 3, %v7509
        %v7511 = vrot.slane %v7507, %v7510
        %v7512 = vmul.f32 %v7491, %v7511
        %v7513 = vmul.f32 %v7492, %v7511
        %v7514 = vmul.f32 %v7493, %v7511
        %v7515 = vmul.f32 %v7494, %v7511
        %v7516 = vmul.f32 %v7495, %v7511
        %v7517 = vmul.f32 %v7496, %v7511
        %v7518 = vmul.f32 %v7497, %v7511
        %v7519 = vmul.f32 %v7498, %v7511
        %v7520 = vmul.f32 %v7499, %v7511
        %v7521 = vmul.f32 %v7500, %v7511
        %v7522 = vmul.f32 %v7501, %v7511
        %v7523 = vmul.f32 %v7502, %v7511
        %v7524 = vmul.f32 %v7503, %v7511
        %v7525 = vmul.f32 %v7504, %v7511
        %v7526 = vmul.f32 %v7505, %v7511
        %v7527 = vmul.f32 %v7506, %v7511
        %v7528 = vrot.slane %v7491, 5
        %v7529 = vrot.slane %v7492, 5
        %v7530 = vrot.slane %v7493, 5
        %v7531 = vrot.slane %v7494, 5
        %v7532 = vrot.slane %v7495, 5
        %v7533 = vrot.slane %v7496, 5
        %v7534 = vrot.slane %v7497, 5
        %v7535 = vrot.slane %v7498, 5
        %v7536 = vrot.slane %v7499, 5
        %v7537 = vrot.slane %v7500, 5
        %v7538 = vrot.slane %v7501, 5
        %v7539 = vrot.slane %v7502, 5
        %v7540 = vrot.slane %v7503, 5
        %v7541 = vrot.slane %v7504, 5
        %v7542 = vrot.slane %v7505, 5
        %v7543 = vrot.slane %v7506, 5
        %vm7544 = vcmp.lt.s32.totalorder %v2953, 3
        %v7545 = vsel %vm7544, %v7542, %v7543
        %v7546 = vsel %vm7544, %v7541, %v7542
        %v7547 = vsel %vm7544, %v7540, %v7541
        %v7548 = vsel %vm7544, %v7539, %v7540
        %v7549 = vsel %vm7544, %v7538, %v7539
        %v7550 = vsel %vm7544, %v7537, %v7538
        %v7551 = vsel %vm7544, %v7536, %v7537
        %v7552 = vsel %vm7544, %v7535, %v7536
        %v7553 = vsel %vm7544, %v7534, %v7535
        %v7554 = vsel %vm7544, %v7533, %v7534
        %v7555 = vsel %vm7544, %v7532, %v7533
        %v7556 = vsel %vm7544, %v7531, %v7532
        %v7557 = vsel %vm7544, %v7530, %v7531
        %v7558 = vsel %vm7544, %v7529, %v7530
        %v7559 = vsel %vm7544, %v7528, %v7529
        %v7560 = vsel %vm7544, %v7543, %v7528
        %vm7561 = vcmp.ge.s32.totalorder %v2953, 3
        %vm7562 = vcmp.ge.s32.totalorder %v2954, 3
        %vm7563 = vcmp.ge.s32.totalorder %v2955, 3
        %vm7564 = vcmp.ge.s32.totalorder %v2956, 3
        %vm7565 = vcmp.ge.s32.totalorder %v2957, 3
        %vm7566 = vcmp.ge.s32.totalorder %v2958, 3
        %vm7567 = vcmp.ge.s32.totalorder %v2959, 3
        %vm7568 = vcmp.ge.s32.totalorder %v2960, 3
        %vm7569 = vcmp.ge.s32.totalorder %v2961, 3
        %vm7570 = vcmp.ge.s32.totalorder %v2962, 3
        %vm7571 = vcmp.ge.s32.totalorder %v2963, 3
        %vm7572 = vcmp.ge.s32.totalorder %v2964, 3
        %vm7573 = vcmp.ge.s32.totalorder %v2965, 3
        %vm7574 = vcmp.ge.s32.totalorder %v2966, 3
        %vm7575 = vcmp.ge.s32.totalorder %v2967, 3
        %vm7576 = vcmp.ge.s32.totalorder %v2968, 3
        %v7577 = vsel %vm7561, 1, 0
        %v7578 = vsel %vm7562, 1, 0
        %v7579 = vsel %vm7563, 1, 0
        %v7580 = vsel %vm7564, 1, 0
        %v7581 = vsel %vm7565, 1, 0
        %v7582 = vsel %vm7566, 1, 0
        %v7583 = vsel %vm7567, 1, 0
        %v7584 = vsel %vm7568, 1, 0
        %v7585 = vsel %vm7569, 1, 0
        %v7586 = vsel %vm7570, 1, 0
        %v7587 = vsel %vm7571, 1, 0
        %v7588 = vsel %vm7572, 1, 0
        %v7589 = vsel %vm7573, 1, 0
        %v7590 = vsel %vm7574, 1, 0
        %v7591 = vsel %vm7575, 1, 0
        %v7592 = vsel %vm7576, 1, 0
        %vm7593 = vcmp.eq.s32.totalorder %v7577, 1
        %vm7594 = vcmp.eq.s32.totalorder %v7578, 1
        %vm7595 = vcmp.eq.s32.totalorder %v7579, 1
        %vm7596 = vcmp.eq.s32.totalorder %v7580, 1
        %vm7597 = vcmp.eq.s32.totalorder %v7581, 1
        %vm7598 = vcmp.eq.s32.totalorder %v7582, 1
        %vm7599 = vcmp.eq.s32.totalorder %v7583, 1
        %vm7600 = vcmp.eq.s32.totalorder %v7584, 1
        %vm7601 = vcmp.eq.s32.totalorder %v7585, 1
        %vm7602 = vcmp.eq.s32.totalorder %v7586, 1
        %vm7603 = vcmp.eq.s32.totalorder %v7587, 1
        %vm7604 = vcmp.eq.s32.totalorder %v7588, 1
        %vm7605 = vcmp.eq.s32.totalorder %v7589, 1
        %vm7606 = vcmp.eq.s32.totalorder %v7590, 1
        %vm7607 = vcmp.eq.s32.totalorder %v7591, 1
        %vm7608 = vcmp.eq.s32.totalorder %v7592, 1
        %v7609 = vsel %vm7593, %v7560, 0.0
        %v7610 = vsel %vm7594, %v7559, 0.0
        %v7611 = vsel %vm7595, %v7558, 0.0
        %v7612 = vsel %vm7596, %v7557, 0.0
        %v7613 = vsel %vm7597, %v7556, 0.0
        %v7614 = vsel %vm7598, %v7555, 0.0
        %v7615 = vsel %vm7599, %v7554, 0.0
        %v7616 = vsel %vm7600, %v7553, 0.0
        %v7617 = vsel %vm7601, %v7552, 0.0
        %v7618 = vsel %vm7602, %v7551, 0.0
        %v7619 = vsel %vm7603, %v7550, 0.0
        %v7620 = vsel %vm7604, %v7549, 0.0
        %v7621 = vsel %vm7605, %v7548, 0.0
        %v7622 = vsel %vm7606, %v7547, 0.0
        %v7623 = vsel %vm7607, %v7546, 0.0
        %v7624 = vsel %vm7608, %v7545, 0.0
        %v7625 = vlaneseq
        %v7626 = vshrl.u32 %v7625, 7
        %v7627 = vsub.s32 0, %v7626
        %v7628 = vrot.slane %v7507, %v7627
        %v7629 = vmul.f32 %v7609, %v7628
        %v7630 = vmul.f32 %v7610, %v7628
        %v7631 = vmul.f32 %v7611, %v7628
        %v7632 = vmul.f32 %v7612, %v7628
        %v7633 = vmul.f32 %v7613, %v7628
        %v7634 = vmul.f32 %v7614, %v7628
        %v7635 = vmul.f32 %v7615, %v7628
        %v7636 = vmul.f32 %v7616, %v7628
        %v7637 = vmul.f32 %v7617, %v7628
        %v7638 = vmul.f32 %v7618, %v7628
        %v7639 = vmul.f32 %v7619, %v7628
        %v7640 = vmul.f32 %v7620, %v7628
        %v7641 = vmul.f32 %v7621, %v7628
        %v7642 = vmul.f32 %v7622, %v7628
        %v7643 = vmul.f32 %v7623, %v7628
        %v7644 = vmul.f32 %v7624, %v7628
        %v7645 = vadd.f32 %v7512, %v7629
        %v7646 = vadd.f32 %v7513, %v7630
        %v7647 = vadd.f32 %v7514, %v7631
        %v7648 = vadd.f32 %v7515, %v7632
        %v7649 = vadd.f32 %v7516, %v7633
        %v7650 = vadd.f32 %v7517, %v7634
        %v7651 = vadd.f32 %v7518, %v7635
        %v7652 = vadd.f32 %v7519, %v7636
        %v7653 = vadd.f32 %v7520, %v7637
        %v7654 = vadd.f32 %v7521, %v7638
        %v7655 = vadd.f32 %v7522, %v7639
        %v7656 = vadd.f32 %v7523, %v7640
        %v7657 = vadd.f32 %v7524, %v7641
        %v7658 = vadd.f32 %v7525, %v7642
        %v7659 = vadd.f32 %v7526, %v7643
        %v7660 = vadd.f32 %v7527, %v7644
        %v7661 = vrot.slane %v7491, 6
        %v7662 = vrot.slane %v7492, 6
        %v7663 = vrot.slane %v7493, 6
        %v7664 = vrot.slane %v7494, 6
        %v7665 = vrot.slane %v7495, 6
        %v7666 = vrot.slane %v7496, 6
        %v7667 = vrot.slane %v7497, 6
        %v7668 = vrot.slane %v7498, 6
        %v7669 = vrot.slane %v7499, 6
        %v7670 = vrot.slane %v7500, 6
        %v7671 = vrot.slane %v7501, 6
        %v7672 = vrot.slane %v7502, 6
        %v7673 = vrot.slane %v7503, 6
        %v7674 = vrot.slane %v7504, 6
        %v7675 = vrot.slane %v7505, 6
        %v7676 = vrot.slane %v7506, 6
        %vm7677 = vcmp.lt.s32.totalorder %v2953, 2
        %v7678 = vsel %vm7677, %v7675, %v7676
        %v7679 = vsel %vm7677, %v7674, %v7675
        %v7680 = vsel %vm7677, %v7673, %v7674
        %v7681 = vsel %vm7677, %v7672, %v7673
        %v7682 = vsel %vm7677, %v7671, %v7672
        %v7683 = vsel %vm7677, %v7670, %v7671
        %v7684 = vsel %vm7677, %v7669, %v7670
        %v7685 = vsel %vm7677, %v7668, %v7669
        %v7686 = vsel %vm7677, %v7667, %v7668
        %v7687 = vsel %vm7677, %v7666, %v7667
        %v7688 = vsel %vm7677, %v7665, %v7666
        %v7689 = vsel %vm7677, %v7664, %v7665
        %v7690 = vsel %vm7677, %v7663, %v7664
        %v7691 = vsel %vm7677, %v7662, %v7663
        %v7692 = vsel %vm7677, %v7661, %v7662
        %v7693 = vsel %vm7677, %v7676, %v7661
        %vm7694 = vcmp.ge.s32.totalorder %v2953, 2
        %vm7695 = vcmp.ge.s32.totalorder %v2954, 2
        %vm7696 = vcmp.ge.s32.totalorder %v2955, 2
        %vm7697 = vcmp.ge.s32.totalorder %v2956, 2
        %vm7698 = vcmp.ge.s32.totalorder %v2957, 2
        %vm7699 = vcmp.ge.s32.totalorder %v2958, 2
        %vm7700 = vcmp.ge.s32.totalorder %v2959, 2
        %vm7701 = vcmp.ge.s32.totalorder %v2960, 2
        %vm7702 = vcmp.ge.s32.totalorder %v2961, 2
        %vm7703 = vcmp.ge.s32.totalorder %v2962, 2
        %vm7704 = vcmp.ge.s32.totalorder %v2963, 2
        %vm7705 = vcmp.ge.s32.totalorder %v2964, 2
        %vm7706 = vcmp.ge.s32.totalorder %v2965, 2
        %vm7707 = vcmp.ge.s32.totalorder %v2966, 2
        %vm7708 = vcmp.ge.s32.totalorder %v2967, 2
        %vm7709 = vcmp.ge.s32.totalorder %v2968, 2
        %v7710 = vsel %vm7694, 1, 0
        %v7711 = vsel %vm7695, 1, 0
        %v7712 = vsel %vm7696, 1, 0
        %v7713 = vsel %vm7697, 1, 0
        %v7714 = vsel %vm7698, 1, 0
        %v7715 = vsel %vm7699, 1, 0
        %v7716 = vsel %vm7700, 1, 0
        %v7717 = vsel %vm7701, 1, 0
        %v7718 = vsel %vm7702, 1, 0
        %v7719 = vsel %vm7703, 1, 0
        %v7720 = vsel %vm7704, 1, 0
        %v7721 = vsel %vm7705, 1, 0
        %v7722 = vsel %vm7706, 1, 0
        %v7723 = vsel %vm7707, 1, 0
        %v7724 = vsel %vm7708, 1, 0
        %v7725 = vsel %vm7709, 1, 0
        %vm7726 = vcmp.eq.s32.totalorder %v7710, 1
        %vm7727 = vcmp.eq.s32.totalorder %v7711, 1
        %vm7728 = vcmp.eq.s32.totalorder %v7712, 1
        %vm7729 = vcmp.eq.s32.totalorder %v7713, 1
        %vm7730 = vcmp.eq.s32.totalorder %v7714, 1
        %vm7731 = vcmp.eq.s32.totalorder %v7715, 1
        %vm7732 = vcmp.eq.s32.totalorder %v7716, 1
        %vm7733 = vcmp.eq.s32.totalorder %v7717, 1
        %vm7734 = vcmp.eq.s32.totalorder %v7718, 1
        %vm7735 = vcmp.eq.s32.totalorder %v7719, 1
        %vm7736 = vcmp.eq.s32.totalorder %v7720, 1
        %vm7737 = vcmp.eq.s32.totalorder %v7721, 1
        %vm7738 = vcmp.eq.s32.totalorder %v7722, 1
        %vm7739 = vcmp.eq.s32.totalorder %v7723, 1
        %vm7740 = vcmp.eq.s32.totalorder %v7724, 1
        %vm7741 = vcmp.eq.s32.totalorder %v7725, 1
        %v7742 = vsel %vm7726, %v7693, 0.0
        %v7743 = vsel %vm7727, %v7692, 0.0
        %v7744 = vsel %vm7728, %v7691, 0.0
        %v7745 = vsel %vm7729, %v7690, 0.0
        %v7746 = vsel %vm7730, %v7689, 0.0
        %v7747 = vsel %vm7731, %v7688, 0.0
        %v7748 = vsel %vm7732, %v7687, 0.0
        %v7749 = vsel %vm7733, %v7686, 0.0
        %v7750 = vsel %vm7734, %v7685, 0.0
        %v7751 = vsel %vm7735, %v7684, 0.0
        %v7752 = vsel %vm7736, %v7683, 0.0
        %v7753 = vsel %vm7737, %v7682, 0.0
        %v7754 = vsel %vm7738, %v7681, 0.0
        %v7755 = vsel %vm7739, %v7680, 0.0
        %v7756 = vsel %vm7740, %v7679, 0.0
        %v7757 = vsel %vm7741, %v7678, 0.0
        %v7758 = vlaneseq
        %v7759 = vshrl.u32 %v7758, 7
        %v7760 = vsub.s32 1, %v7759
        %v7761 = vrot.slane %v7507, %v7760
        %v7762 = vmul.f32 %v7742, %v7761
        %v7763 = vmul.f32 %v7743, %v7761
        %v7764 = vmul.f32 %v7744, %v7761
        %v7765 = vmul.f32 %v7745, %v7761
        %v7766 = vmul.f32 %v7746, %v7761
        %v7767 = vmul.f32 %v7747, %v7761
        %v7768 = vmul.f32 %v7748, %v7761
        %v7769 = vmul.f32 %v7749, %v7761
        %v7770 = vmul.f32 %v7750, %v7761
        %v7771 = vmul.f32 %v7751, %v7761
        %v7772 = vmul.f32 %v7752, %v7761
        %v7773 = vmul.f32 %v7753, %v7761
        %v7774 = vmul.f32 %v7754, %v7761
        %v7775 = vmul.f32 %v7755, %v7761
        %v7776 = vmul.f32 %v7756, %v7761
        %v7777 = vmul.f32 %v7757, %v7761
        %v7778 = vadd.f32 %v7645, %v7762
        %v7779 = vadd.f32 %v7646, %v7763
        %v7780 = vadd.f32 %v7647, %v7764
        %v7781 = vadd.f32 %v7648, %v7765
        %v7782 = vadd.f32 %v7649, %v7766
        %v7783 = vadd.f32 %v7650, %v7767
        %v7784 = vadd.f32 %v7651, %v7768
        %v7785 = vadd.f32 %v7652, %v7769
        %v7786 = vadd.f32 %v7653, %v7770
        %v7787 = vadd.f32 %v7654, %v7771
        %v7788 = vadd.f32 %v7655, %v7772
        %v7789 = vadd.f32 %v7656, %v7773
        %v7790 = vadd.f32 %v7657, %v7774
        %v7791 = vadd.f32 %v7658, %v7775
        %v7792 = vadd.f32 %v7659, %v7776
        %v7793 = vadd.f32 %v7660, %v7777
        %v7794 = vrot.slane %v7491, 7
        %v7795 = vrot.slane %v7492, 7
        %v7796 = vrot.slane %v7493, 7
        %v7797 = vrot.slane %v7494, 7
        %v7798 = vrot.slane %v7495, 7
        %v7799 = vrot.slane %v7496, 7
        %v7800 = vrot.slane %v7497, 7
        %v7801 = vrot.slane %v7498, 7
        %v7802 = vrot.slane %v7499, 7
        %v7803 = vrot.slane %v7500, 7
        %v7804 = vrot.slane %v7501, 7
        %v7805 = vrot.slane %v7502, 7
        %v7806 = vrot.slane %v7503, 7
        %v7807 = vrot.slane %v7504, 7
        %v7808 = vrot.slane %v7505, 7
        %v7809 = vrot.slane %v7506, 7
        %vm7810 = vcmp.lt.s32.totalorder %v2953, 1
        %v7811 = vsel %vm7810, %v7808, %v7809
        %v7812 = vsel %vm7810, %v7807, %v7808
        %v7813 = vsel %vm7810, %v7806, %v7807
        %v7814 = vsel %vm7810, %v7805, %v7806
        %v7815 = vsel %vm7810, %v7804, %v7805
        %v7816 = vsel %vm7810, %v7803, %v7804
        %v7817 = vsel %vm7810, %v7802, %v7803
        %v7818 = vsel %vm7810, %v7801, %v7802
        %v7819 = vsel %vm7810, %v7800, %v7801
        %v7820 = vsel %vm7810, %v7799, %v7800
        %v7821 = vsel %vm7810, %v7798, %v7799
        %v7822 = vsel %vm7810, %v7797, %v7798
        %v7823 = vsel %vm7810, %v7796, %v7797
        %v7824 = vsel %vm7810, %v7795, %v7796
        %v7825 = vsel %vm7810, %v7794, %v7795
        %v7826 = vsel %vm7810, %v7809, %v7794
        %vm7827 = vcmp.ge.s32.totalorder %v2953, 1
        %vm7828 = vcmp.ge.s32.totalorder %v2954, 1
        %vm7829 = vcmp.ge.s32.totalorder %v2955, 1
        %vm7830 = vcmp.ge.s32.totalorder %v2956, 1
        %vm7831 = vcmp.ge.s32.totalorder %v2957, 1
        %vm7832 = vcmp.ge.s32.totalorder %v2958, 1
        %vm7833 = vcmp.ge.s32.totalorder %v2959, 1
        %vm7834 = vcmp.ge.s32.totalorder %v2960, 1
        %vm7835 = vcmp.ge.s32.totalorder %v2961, 1
        %vm7836 = vcmp.ge.s32.totalorder %v2962, 1
        %vm7837 = vcmp.ge.s32.totalorder %v2963, 1
        %vm7838 = vcmp.ge.s32.totalorder %v2964, 1
        %vm7839 = vcmp.ge.s32.totalorder %v2965, 1
        %vm7840 = vcmp.ge.s32.totalorder %v2966, 1
        %vm7841 = vcmp.ge.s32.totalorder %v2967, 1
        %vm7842 = vcmp.ge.s32.totalorder %v2968, 1
        %v7843 = vsel %vm7827, 1, 0
        %v7844 = vsel %vm7828, 1, 0
        %v7845 = vsel %vm7829, 1, 0
        %v7846 = vsel %vm7830, 1, 0
        %v7847 = vsel %vm7831, 1, 0
        %v7848 = vsel %vm7832, 1, 0
        %v7849 = vsel %vm7833, 1, 0
        %v7850 = vsel %vm7834, 1, 0
        %v7851 = vsel %vm7835, 1, 0
        %v7852 = vsel %vm7836, 1, 0
        %v7853 = vsel %vm7837, 1, 0
        %v7854 = vsel %vm7838, 1, 0
        %v7855 = vsel %vm7839, 1, 0
        %v7856 = vsel %vm7840, 1, 0
        %v7857 = vsel %vm7841, 1, 0
        %v7858 = vsel %vm7842, 1, 0
        %vm7859 = vcmp.eq.s32.totalorder %v7843, 1
        %vm7860 = vcmp.eq.s32.totalorder %v7844, 1
        %vm7861 = vcmp.eq.s32.totalorder %v7845, 1
        %vm7862 = vcmp.eq.s32.totalorder %v7846, 1
        %vm7863 = vcmp.eq.s32.totalorder %v7847, 1
        %vm7864 = vcmp.eq.s32.totalorder %v7848, 1
        %vm7865 = vcmp.eq.s32.totalorder %v7849, 1
        %vm7866 = vcmp.eq.s32.totalorder %v7850, 1
        %vm7867 = vcmp.eq.s32.totalorder %v7851, 1
        %vm7868 = vcmp.eq.s32.totalorder %v7852, 1
        %vm7869 = vcmp.eq.s32.totalorder %v7853, 1
        %vm7870 = vcmp.eq.s32.totalorder %v7854, 1
        %vm7871 = vcmp.eq.s32.totalorder %v7855, 1
        %vm7872 = vcmp.eq.s32.totalorder %v7856, 1
        %vm7873 = vcmp.eq.s32.totalorder %v7857, 1
        %vm7874 = vcmp.eq.s32.totalorder %v7858, 1
        %v7875 = vsel %vm7859, %v7826, 0.0
        %v7876 = vsel %vm7860, %v7825, 0.0
        %v7877 = vsel %vm7861, %v7824, 0.0
        %v7878 = vsel %vm7862, %v7823, 0.0
        %v7879 = vsel %vm7863, %v7822, 0.0
        %v7880 = vsel %vm7864, %v7821, 0.0
        %v7881 = vsel %vm7865, %v7820, 0.0
        %v7882 = vsel %vm7866, %v7819, 0.0
        %v7883 = vsel %vm7867, %v7818, 0.0
        %v7884 = vsel %vm7868, %v7817, 0.0
        %v7885 = vsel %vm7869, %v7816, 0.0
        %v7886 = vsel %vm7870, %v7815, 0.0
        %v7887 = vsel %vm7871, %v7814, 0.0
        %v7888 = vsel %vm7872, %v7813, 0.0
        %v7889 = vsel %vm7873, %v7812, 0.0
        %v7890 = vsel %vm7874, %v7811, 0.0
        %v7891 = vlaneseq
        %v7892 = vshrl.u32 %v7891, 7
        %v7893 = vsub.s32 2, %v7892
        %v7894 = vrot.slane %v7507, %v7893
        %v7895 = vmul.f32 %v7875, %v7894
        %v7896 = vmul.f32 %v7876, %v7894
        %v7897 = vmul.f32 %v7877, %v7894
        %v7898 = vmul.f32 %v7878, %v7894
        %v7899 = vmul.f32 %v7879, %v7894
        %v7900 = vmul.f32 %v7880, %v7894
        %v7901 = vmul.f32 %v7881, %v7894
        %v7902 = vmul.f32 %v7882, %v7894
        %v7903 = vmul.f32 %v7883, %v7894
        %v7904 = vmul.f32 %v7884, %v7894
        %v7905 = vmul.f32 %v7885, %v7894
        %v7906 = vmul.f32 %v7886, %v7894
        %v7907 = vmul.f32 %v7887, %v7894
        %v7908 = vmul.f32 %v7888, %v7894
        %v7909 = vmul.f32 %v7889, %v7894
        %v7910 = vmul.f32 %v7890, %v7894
        %v7911 = vadd.f32 %v7778, %v7895
        %v7912 = vadd.f32 %v7779, %v7896
        %v7913 = vadd.f32 %v7780, %v7897
        %v7914 = vadd.f32 %v7781, %v7898
        %v7915 = vadd.f32 %v7782, %v7899
        %v7916 = vadd.f32 %v7783, %v7900
        %v7917 = vadd.f32 %v7784, %v7901
        %v7918 = vadd.f32 %v7785, %v7902
        %v7919 = vadd.f32 %v7786, %v7903
        %v7920 = vadd.f32 %v7787, %v7904
        %v7921 = vadd.f32 %v7788, %v7905
        %v7922 = vadd.f32 %v7789, %v7906
        %v7923 = vadd.f32 %v7790, %v7907
        %v7924 = vadd.f32 %v7791, %v7908
        %v7925 = vadd.f32 %v7792, %v7909
        %v7926 = vadd.f32 %v7793, %v7910
        %v7927 = vrot.slane %v7491, 1
        %v7928 = vrot.slane %v7492, 1
        %v7929 = vrot.slane %v7493, 1
        %v7930 = vrot.slane %v7494, 1
        %v7931 = vrot.slane %v7495, 1
        %v7932 = vrot.slane %v7496, 1
        %v7933 = vrot.slane %v7497, 1
        %v7934 = vrot.slane %v7498, 1
        %v7935 = vrot.slane %v7499, 1
        %v7936 = vrot.slane %v7500, 1
        %v7937 = vrot.slane %v7501, 1
        %v7938 = vrot.slane %v7502, 1
        %v7939 = vrot.slane %v7503, 1
        %v7940 = vrot.slane %v7504, 1
        %v7941 = vrot.slane %v7505, 1
        %v7942 = vrot.slane %v7506, 1
        %v7943 = vsel %vm3385, %v7941, %v7942
        %v7944 = vsel %vm3385, %v7940, %v7941
        %v7945 = vsel %vm3385, %v7939, %v7940
        %v7946 = vsel %vm3385, %v7938, %v7939
        %v7947 = vsel %vm3385, %v7937, %v7938
        %v7948 = vsel %vm3385, %v7936, %v7937
        %v7949 = vsel %vm3385, %v7935, %v7936
        %v7950 = vsel %vm3385, %v7934, %v7935
        %v7951 = vsel %vm3385, %v7933, %v7934
        %v7952 = vsel %vm3385, %v7932, %v7933
        %v7953 = vsel %vm3385, %v7931, %v7932
        %v7954 = vsel %vm3385, %v7930, %v7931
        %v7955 = vsel %vm3385, %v7929, %v7930
        %v7956 = vsel %vm3385, %v7928, %v7929
        %v7957 = vsel %vm3385, %v7927, %v7928
        %v7958 = vsel %vm3385, %v7942, %v7927
        %vm7959 = vcmp.lt.s32.totalorder %v2953, 127
        %vm7960 = vcmp.lt.s32.totalorder %v2954, 127
        %vm7961 = vcmp.lt.s32.totalorder %v2955, 127
        %vm7962 = vcmp.lt.s32.totalorder %v2956, 127
        %vm7963 = vcmp.lt.s32.totalorder %v2957, 127
        %vm7964 = vcmp.lt.s32.totalorder %v2958, 127
        %vm7965 = vcmp.lt.s32.totalorder %v2959, 127
        %vm7966 = vcmp.lt.s32.totalorder %v2960, 127
        %vm7967 = vcmp.lt.s32.totalorder %v2961, 127
        %vm7968 = vcmp.lt.s32.totalorder %v2962, 127
        %vm7969 = vcmp.lt.s32.totalorder %v2963, 127
        %vm7970 = vcmp.lt.s32.totalorder %v2964, 127
        %vm7971 = vcmp.lt.s32.totalorder %v2965, 127
        %vm7972 = vcmp.lt.s32.totalorder %v2966, 127
        %vm7973 = vcmp.lt.s32.totalorder %v2967, 127
        %vm7974 = vcmp.lt.s32.totalorder %v2968, 127
        %v7975 = vsel %vm7959, 1, 0
        %v7976 = vsel %vm7960, 1, 0
        %v7977 = vsel %vm7961, 1, 0
        %v7978 = vsel %vm7962, 1, 0
        %v7979 = vsel %vm7963, 1, 0
        %v7980 = vsel %vm7964, 1, 0
        %v7981 = vsel %vm7965, 1, 0
        %v7982 = vsel %vm7966, 1, 0
        %v7983 = vsel %vm7967, 1, 0
        %v7984 = vsel %vm7968, 1, 0
        %v7985 = vsel %vm7969, 1, 0
        %v7986 = vsel %vm7970, 1, 0
        %v7987 = vsel %vm7971, 1, 0
        %v7988 = vsel %vm7972, 1, 0
        %v7989 = vsel %vm7973, 1, 0
        %v7990 = vsel %vm7974, 1, 0
        %vm7991 = vcmp.eq.s32.totalorder %v7975, 1
        %vm7992 = vcmp.eq.s32.totalorder %v7976, 1
        %vm7993 = vcmp.eq.s32.totalorder %v7977, 1
        %vm7994 = vcmp.eq.s32.totalorder %v7978, 1
        %vm7995 = vcmp.eq.s32.totalorder %v7979, 1
        %vm7996 = vcmp.eq.s32.totalorder %v7980, 1
        %vm7997 = vcmp.eq.s32.totalorder %v7981, 1
        %vm7998 = vcmp.eq.s32.totalorder %v7982, 1
        %vm7999 = vcmp.eq.s32.totalorder %v7983, 1
        %vm8000 = vcmp.eq.s32.totalorder %v7984, 1
        %vm8001 = vcmp.eq.s32.totalorder %v7985, 1
        %vm8002 = vcmp.eq.s32.totalorder %v7986, 1
        %vm8003 = vcmp.eq.s32.totalorder %v7987, 1
        %vm8004 = vcmp.eq.s32.totalorder %v7988, 1
        %vm8005 = vcmp.eq.s32.totalorder %v7989, 1
        %vm8006 = vcmp.eq.s32.totalorder %v7990, 1
        %v8007 = vsel %vm7991, %v7957, 0.0
        %v8008 = vsel %vm7992, %v7956, 0.0
        %v8009 = vsel %vm7993, %v7955, 0.0
        %v8010 = vsel %vm7994, %v7954, 0.0
        %v8011 = vsel %vm7995, %v7953, 0.0
        %v8012 = vsel %vm7996, %v7952, 0.0
        %v8013 = vsel %vm7997, %v7951, 0.0
        %v8014 = vsel %vm7998, %v7950, 0.0
        %v8015 = vsel %vm7999, %v7949, 0.0
        %v8016 = vsel %vm8000, %v7948, 0.0
        %v8017 = vsel %vm8001, %v7947, 0.0
        %v8018 = vsel %vm8002, %v7946, 0.0
        %v8019 = vsel %vm8003, %v7945, 0.0
        %v8020 = vsel %vm8004, %v7944, 0.0
        %v8021 = vsel %vm8005, %v7943, 0.0
        %v8022 = vsel %vm8006, %v7958, 0.0
        %v8023 = vlaneseq
        %v8024 = vshrl.u32 %v8023, 7
        %v8025 = vsub.s32 4, %v8024
        %v8026 = vrot.slane %v7507, %v8025
        %v8027 = vmul.f32 %v8007, %v8026
        %v8028 = vmul.f32 %v8008, %v8026
        %v8029 = vmul.f32 %v8009, %v8026
        %v8030 = vmul.f32 %v8010, %v8026
        %v8031 = vmul.f32 %v8011, %v8026
        %v8032 = vmul.f32 %v8012, %v8026
        %v8033 = vmul.f32 %v8013, %v8026
        %v8034 = vmul.f32 %v8014, %v8026
        %v8035 = vmul.f32 %v8015, %v8026
        %v8036 = vmul.f32 %v8016, %v8026
        %v8037 = vmul.f32 %v8017, %v8026
        %v8038 = vmul.f32 %v8018, %v8026
        %v8039 = vmul.f32 %v8019, %v8026
        %v8040 = vmul.f32 %v8020, %v8026
        %v8041 = vmul.f32 %v8021, %v8026
        %v8042 = vmul.f32 %v8022, %v8026
        %v8043 = vadd.f32 %v7911, %v8027
        %v8044 = vadd.f32 %v7912, %v8028
        %v8045 = vadd.f32 %v7913, %v8029
        %v8046 = vadd.f32 %v7914, %v8030
        %v8047 = vadd.f32 %v7915, %v8031
        %v8048 = vadd.f32 %v7916, %v8032
        %v8049 = vadd.f32 %v7917, %v8033
        %v8050 = vadd.f32 %v7918, %v8034
        %v8051 = vadd.f32 %v7919, %v8035
        %v8052 = vadd.f32 %v7920, %v8036
        %v8053 = vadd.f32 %v7921, %v8037
        %v8054 = vadd.f32 %v7922, %v8038
        %v8055 = vadd.f32 %v7923, %v8039
        %v8056 = vadd.f32 %v7924, %v8040
        %v8057 = vadd.f32 %v7925, %v8041
        %v8058 = vadd.f32 %v7926, %v8042
        %v8059 = vrot.slane %v7491, 2
        %v8060 = vrot.slane %v7492, 2
        %v8061 = vrot.slane %v7493, 2
        %v8062 = vrot.slane %v7494, 2
        %v8063 = vrot.slane %v7495, 2
        %v8064 = vrot.slane %v7496, 2
        %v8065 = vrot.slane %v7497, 2
        %v8066 = vrot.slane %v7498, 2
        %v8067 = vrot.slane %v7499, 2
        %v8068 = vrot.slane %v7500, 2
        %v8069 = vrot.slane %v7501, 2
        %v8070 = vrot.slane %v7502, 2
        %v8071 = vrot.slane %v7503, 2
        %v8072 = vrot.slane %v7504, 2
        %v8073 = vrot.slane %v7505, 2
        %v8074 = vrot.slane %v7506, 2
        %vm8075 = vcmp.lt.s32.totalorder %v2953, 6
        %v8076 = vsel %vm8075, %v8073, %v8074
        %v8077 = vsel %vm8075, %v8072, %v8073
        %v8078 = vsel %vm8075, %v8071, %v8072
        %v8079 = vsel %vm8075, %v8070, %v8071
        %v8080 = vsel %vm8075, %v8069, %v8070
        %v8081 = vsel %vm8075, %v8068, %v8069
        %v8082 = vsel %vm8075, %v8067, %v8068
        %v8083 = vsel %vm8075, %v8066, %v8067
        %v8084 = vsel %vm8075, %v8065, %v8066
        %v8085 = vsel %vm8075, %v8064, %v8065
        %v8086 = vsel %vm8075, %v8063, %v8064
        %v8087 = vsel %vm8075, %v8062, %v8063
        %v8088 = vsel %vm8075, %v8061, %v8062
        %v8089 = vsel %vm8075, %v8060, %v8061
        %v8090 = vsel %vm8075, %v8059, %v8060
        %v8091 = vsel %vm8075, %v8074, %v8059
        %vm8092 = vcmp.lt.s32.totalorder %v2953, 126
        %vm8093 = vcmp.lt.s32.totalorder %v2954, 126
        %vm8094 = vcmp.lt.s32.totalorder %v2955, 126
        %vm8095 = vcmp.lt.s32.totalorder %v2956, 126
        %vm8096 = vcmp.lt.s32.totalorder %v2957, 126
        %vm8097 = vcmp.lt.s32.totalorder %v2958, 126
        %vm8098 = vcmp.lt.s32.totalorder %v2959, 126
        %vm8099 = vcmp.lt.s32.totalorder %v2960, 126
        %vm8100 = vcmp.lt.s32.totalorder %v2961, 126
        %vm8101 = vcmp.lt.s32.totalorder %v2962, 126
        %vm8102 = vcmp.lt.s32.totalorder %v2963, 126
        %vm8103 = vcmp.lt.s32.totalorder %v2964, 126
        %vm8104 = vcmp.lt.s32.totalorder %v2965, 126
        %vm8105 = vcmp.lt.s32.totalorder %v2966, 126
        %vm8106 = vcmp.lt.s32.totalorder %v2967, 126
        %vm8107 = vcmp.lt.s32.totalorder %v2968, 126
        %v8108 = vsel %vm8092, 1, 0
        %v8109 = vsel %vm8093, 1, 0
        %v8110 = vsel %vm8094, 1, 0
        %v8111 = vsel %vm8095, 1, 0
        %v8112 = vsel %vm8096, 1, 0
        %v8113 = vsel %vm8097, 1, 0
        %v8114 = vsel %vm8098, 1, 0
        %v8115 = vsel %vm8099, 1, 0
        %v8116 = vsel %vm8100, 1, 0
        %v8117 = vsel %vm8101, 1, 0
        %v8118 = vsel %vm8102, 1, 0
        %v8119 = vsel %vm8103, 1, 0
        %v8120 = vsel %vm8104, 1, 0
        %v8121 = vsel %vm8105, 1, 0
        %v8122 = vsel %vm8106, 1, 0
        %v8123 = vsel %vm8107, 1, 0
        %vm8124 = vcmp.eq.s32.totalorder %v8108, 1
        %vm8125 = vcmp.eq.s32.totalorder %v8109, 1
        %vm8126 = vcmp.eq.s32.totalorder %v8110, 1
        %vm8127 = vcmp.eq.s32.totalorder %v8111, 1
        %vm8128 = vcmp.eq.s32.totalorder %v8112, 1
        %vm8129 = vcmp.eq.s32.totalorder %v8113, 1
        %vm8130 = vcmp.eq.s32.totalorder %v8114, 1
        %vm8131 = vcmp.eq.s32.totalorder %v8115, 1
        %vm8132 = vcmp.eq.s32.totalorder %v8116, 1
        %vm8133 = vcmp.eq.s32.totalorder %v8117, 1
        %vm8134 = vcmp.eq.s32.totalorder %v8118, 1
        %vm8135 = vcmp.eq.s32.totalorder %v8119, 1
        %vm8136 = vcmp.eq.s32.totalorder %v8120, 1
        %vm8137 = vcmp.eq.s32.totalorder %v8121, 1
        %vm8138 = vcmp.eq.s32.totalorder %v8122, 1
        %vm8139 = vcmp.eq.s32.totalorder %v8123, 1
        %v8140 = vsel %vm8124, %v8090, 0.0
        %v8141 = vsel %vm8125, %v8089, 0.0
        %v8142 = vsel %vm8126, %v8088, 0.0
        %v8143 = vsel %vm8127, %v8087, 0.0
        %v8144 = vsel %vm8128, %v8086, 0.0
        %v8145 = vsel %vm8129, %v8085, 0.0
        %v8146 = vsel %vm8130, %v8084, 0.0
        %v8147 = vsel %vm8131, %v8083, 0.0
        %v8148 = vsel %vm8132, %v8082, 0.0
        %v8149 = vsel %vm8133, %v8081, 0.0
        %v8150 = vsel %vm8134, %v8080, 0.0
        %v8151 = vsel %vm8135, %v8079, 0.0
        %v8152 = vsel %vm8136, %v8078, 0.0
        %v8153 = vsel %vm8137, %v8077, 0.0
        %v8154 = vsel %vm8138, %v8076, 0.0
        %v8155 = vsel %vm8139, %v8091, 0.0
        %v8156 = vlaneseq
        %v8157 = vshrl.u32 %v8156, 7
        %v8158 = vsub.s32 5, %v8157
        %v8159 = vrot.slane %v7507, %v8158
        %v8160 = vmul.f32 %v8140, %v8159
        %v8161 = vmul.f32 %v8141, %v8159
        %v8162 = vmul.f32 %v8142, %v8159
        %v8163 = vmul.f32 %v8143, %v8159
        %v8164 = vmul.f32 %v8144, %v8159
        %v8165 = vmul.f32 %v8145, %v8159
        %v8166 = vmul.f32 %v8146, %v8159
        %v8167 = vmul.f32 %v8147, %v8159
        %v8168 = vmul.f32 %v8148, %v8159
        %v8169 = vmul.f32 %v8149, %v8159
        %v8170 = vmul.f32 %v8150, %v8159
        %v8171 = vmul.f32 %v8151, %v8159
        %v8172 = vmul.f32 %v8152, %v8159
        %v8173 = vmul.f32 %v8153, %v8159
        %v8174 = vmul.f32 %v8154, %v8159
        %v8175 = vmul.f32 %v8155, %v8159
        %v8176 = vadd.f32 %v8043, %v8160
        %v8177 = vadd.f32 %v8044, %v8161
        %v8178 = vadd.f32 %v8045, %v8162
        %v8179 = vadd.f32 %v8046, %v8163
        %v8180 = vadd.f32 %v8047, %v8164
        %v8181 = vadd.f32 %v8048, %v8165
        %v8182 = vadd.f32 %v8049, %v8166
        %v8183 = vadd.f32 %v8050, %v8167
        %v8184 = vadd.f32 %v8051, %v8168
        %v8185 = vadd.f32 %v8052, %v8169
        %v8186 = vadd.f32 %v8053, %v8170
        %v8187 = vadd.f32 %v8054, %v8171
        %v8188 = vadd.f32 %v8055, %v8172
        %v8189 = vadd.f32 %v8056, %v8173
        %v8190 = vadd.f32 %v8057, %v8174
        %v8191 = vadd.f32 %v8058, %v8175
        %v8192 = vrot.slane %v7491, 3
        %v8193 = vrot.slane %v7492, 3
        %v8194 = vrot.slane %v7493, 3
        %v8195 = vrot.slane %v7494, 3
        %v8196 = vrot.slane %v7495, 3
        %v8197 = vrot.slane %v7496, 3
        %v8198 = vrot.slane %v7497, 3
        %v8199 = vrot.slane %v7498, 3
        %v8200 = vrot.slane %v7499, 3
        %v8201 = vrot.slane %v7500, 3
        %v8202 = vrot.slane %v7501, 3
        %v8203 = vrot.slane %v7502, 3
        %v8204 = vrot.slane %v7503, 3
        %v8205 = vrot.slane %v7504, 3
        %v8206 = vrot.slane %v7505, 3
        %v8207 = vrot.slane %v7506, 3
        %vm8208 = vcmp.lt.s32.totalorder %v2953, 5
        %v8209 = vsel %vm8208, %v8206, %v8207
        %v8210 = vsel %vm8208, %v8205, %v8206
        %v8211 = vsel %vm8208, %v8204, %v8205
        %v8212 = vsel %vm8208, %v8203, %v8204
        %v8213 = vsel %vm8208, %v8202, %v8203
        %v8214 = vsel %vm8208, %v8201, %v8202
        %v8215 = vsel %vm8208, %v8200, %v8201
        %v8216 = vsel %vm8208, %v8199, %v8200
        %v8217 = vsel %vm8208, %v8198, %v8199
        %v8218 = vsel %vm8208, %v8197, %v8198
        %v8219 = vsel %vm8208, %v8196, %v8197
        %v8220 = vsel %vm8208, %v8195, %v8196
        %v8221 = vsel %vm8208, %v8194, %v8195
        %v8222 = vsel %vm8208, %v8193, %v8194
        %v8223 = vsel %vm8208, %v8192, %v8193
        %v8224 = vsel %vm8208, %v8207, %v8192
        %vm8225 = vcmp.lt.s32.totalorder %v2953, 125
        %vm8226 = vcmp.lt.s32.totalorder %v2954, 125
        %vm8227 = vcmp.lt.s32.totalorder %v2955, 125
        %vm8228 = vcmp.lt.s32.totalorder %v2956, 125
        %vm8229 = vcmp.lt.s32.totalorder %v2957, 125
        %vm8230 = vcmp.lt.s32.totalorder %v2958, 125
        %vm8231 = vcmp.lt.s32.totalorder %v2959, 125
        %vm8232 = vcmp.lt.s32.totalorder %v2960, 125
        %vm8233 = vcmp.lt.s32.totalorder %v2961, 125
        %vm8234 = vcmp.lt.s32.totalorder %v2962, 125
        %vm8235 = vcmp.lt.s32.totalorder %v2963, 125
        %vm8236 = vcmp.lt.s32.totalorder %v2964, 125
        %vm8237 = vcmp.lt.s32.totalorder %v2965, 125
        %vm8238 = vcmp.lt.s32.totalorder %v2966, 125
        %vm8239 = vcmp.lt.s32.totalorder %v2967, 125
        %vm8240 = vcmp.lt.s32.totalorder %v2968, 125
        %v8241 = vsel %vm8225, 1, 0
        %v8242 = vsel %vm8226, 1, 0
        %v8243 = vsel %vm8227, 1, 0
        %v8244 = vsel %vm8228, 1, 0
        %v8245 = vsel %vm8229, 1, 0
        %v8246 = vsel %vm8230, 1, 0
        %v8247 = vsel %vm8231, 1, 0
        %v8248 = vsel %vm8232, 1, 0
        %v8249 = vsel %vm8233, 1, 0
        %v8250 = vsel %vm8234, 1, 0
        %v8251 = vsel %vm8235, 1, 0
        %v8252 = vsel %vm8236, 1, 0
        %v8253 = vsel %vm8237, 1, 0
        %v8254 = vsel %vm8238, 1, 0
        %v8255 = vsel %vm8239, 1, 0
        %v8256 = vsel %vm8240, 1, 0
        %vm8257 = vcmp.eq.s32.totalorder %v8241, 1
        %vm8258 = vcmp.eq.s32.totalorder %v8242, 1
        %vm8259 = vcmp.eq.s32.totalorder %v8243, 1
        %vm8260 = vcmp.eq.s32.totalorder %v8244, 1
        %vm8261 = vcmp.eq.s32.totalorder %v8245, 1
        %vm8262 = vcmp.eq.s32.totalorder %v8246, 1
        %vm8263 = vcmp.eq.s32.totalorder %v8247, 1
        %vm8264 = vcmp.eq.s32.totalorder %v8248, 1
        %vm8265 = vcmp.eq.s32.totalorder %v8249, 1
        %vm8266 = vcmp.eq.s32.totalorder %v8250, 1
        %vm8267 = vcmp.eq.s32.totalorder %v8251, 1
        %vm8268 = vcmp.eq.s32.totalorder %v8252, 1
        %vm8269 = vcmp.eq.s32.totalorder %v8253, 1
        %vm8270 = vcmp.eq.s32.totalorder %v8254, 1
        %vm8271 = vcmp.eq.s32.totalorder %v8255, 1
        %vm8272 = vcmp.eq.s32.totalorder %v8256, 1
        %v8273 = vsel %vm8257, %v8223, 0.0
        %v8274 = vsel %vm8258, %v8222, 0.0
        %v8275 = vsel %vm8259, %v8221, 0.0
        %v8276 = vsel %vm8260, %v8220, 0.0
        %v8277 = vsel %vm8261, %v8219, 0.0
        %v8278 = vsel %vm8262, %v8218, 0.0
        %v8279 = vsel %vm8263, %v8217, 0.0
        %v8280 = vsel %vm8264, %v8216, 0.0
        %v8281 = vsel %vm8265, %v8215, 0.0
        %v8282 = vsel %vm8266, %v8214, 0.0
        %v8283 = vsel %vm8267, %v8213, 0.0
        %v8284 = vsel %vm8268, %v8212, 0.0
        %v8285 = vsel %vm8269, %v8211, 0.0
        %v8286 = vsel %vm8270, %v8210, 0.0
        %v8287 = vsel %vm8271, %v8209, 0.0
        %v8288 = vsel %vm8272, %v8224, 0.0
        %v8289 = vlaneseq
        %v8290 = vshrl.u32 %v8289, 7
        %v8291 = vsub.s32 6, %v8290
        %v8292 = vrot.slane %v7507, %v8291
        %v8293 = vmul.f32 %v8273, %v8292
        %v8294 = vmul.f32 %v8274, %v8292
        %v8295 = vmul.f32 %v8275, %v8292
        %v8296 = vmul.f32 %v8276, %v8292
        %v8297 = vmul.f32 %v8277, %v8292
        %v8298 = vmul.f32 %v8278, %v8292
        %v8299 = vmul.f32 %v8279, %v8292
        %v8300 = vmul.f32 %v8280, %v8292
        %v8301 = vmul.f32 %v8281, %v8292
        %v8302 = vmul.f32 %v8282, %v8292
        %v8303 = vmul.f32 %v8283, %v8292
        %v8304 = vmul.f32 %v8284, %v8292
        %v8305 = vmul.f32 %v8285, %v8292
        %v8306 = vmul.f32 %v8286, %v8292
        %v8307 = vmul.f32 %v8287, %v8292
        %v8308 = vmul.f32 %v8288, %v8292
        %v8309 = vadd.f32 %v8176, %v8293
        %v8310 = vadd.f32 %v8177, %v8294
        %v8311 = vadd.f32 %v8178, %v8295
        %v8312 = vadd.f32 %v8179, %v8296
        %v8313 = vadd.f32 %v8180, %v8297
        %v8314 = vadd.f32 %v8181, %v8298
        %v8315 = vadd.f32 %v8182, %v8299
        %v8316 = vadd.f32 %v8183, %v8300
        %v8317 = vadd.f32 %v8184, %v8301
        %v8318 = vadd.f32 %v8185, %v8302
        %v8319 = vadd.f32 %v8186, %v8303
        %v8320 = vadd.f32 %v8187, %v8304
        %v8321 = vadd.f32 %v8188, %v8305
        %v8322 = vadd.f32 %v8189, %v8306
        %v8323 = vadd.f32 %v8190, %v8307
        %v8324 = vadd.f32 %v8191, %v8308
        %v8325 = vld [vmem:[%s45] sm:$0x1]
        %v8327 = vlaneseq
        %v8328 = vshrl.u32 %v8327, 7
        %v8329 = vsub.s32 0, %v8328
        %v8330 = vrot.slane %v8325, %v8329
        %v8332 = vadd.f32 %v8309, %v8330
        %v8333 = vadd.f32 %v8310, %v8330
        %v8334 = vadd.f32 %v8311, %v8330
        %v8335 = vadd.f32 %v8312, %v8330
        %v8336 = vadd.f32 %v8313, %v8330
        %v8337 = vadd.f32 %v8314, %v8330
        %v8338 = vadd.f32 %v8315, %v8330
        %v8339 = vadd.f32 %v8316, %v8330
        %v8340 = vadd.f32 %v8317, %v8330
        %v8341 = vadd.f32 %v8318, %v8330
        %v8342 = vadd.f32 %v8319, %v8330
        %v8343 = vadd.f32 %v8320, %v8330
        %v8344 = vadd.f32 %v8321, %v8330
        %v8345 = vadd.f32 %v8322, %v8330
        %v8346 = vadd.f32 %v8323, %v8330
        %v8347 = vadd.f32 %v8324, %v8330
        %v8348 = vld [vmem:[%s47] sm:$0x1]
        %v8350 = vlaneseq
        %v8351 = vshrl.u32 %v8350, 7
        %v8352 = vsub.s32 0, %v8351
        %v8353 = vrot.slane %v8348, %v8352
        %v8355 = vmul.f32 %v8332, %v8353
        %v8356 = vmul.f32 %v8333, %v8353
        %v8357 = vmul.f32 %v8334, %v8353
        %v8358 = vmul.f32 %v8335, %v8353
        %v8359 = vmul.f32 %v8336, %v8353
        %v8360 = vmul.f32 %v8337, %v8353
        %v8361 = vmul.f32 %v8338, %v8353
        %v8362 = vmul.f32 %v8339, %v8353
        %v8363 = vmul.f32 %v8340, %v8353
        %v8364 = vmul.f32 %v8341, %v8353
        %v8365 = vmul.f32 %v8342, %v8353
        %v8366 = vmul.f32 %v8343, %v8353
        %v8367 = vmul.f32 %v8344, %v8353
        %v8368 = vmul.f32 %v8345, %v8353
        %v8369 = vmul.f32 %v8346, %v8353
        %v8370 = vmul.f32 %v8347, %v8353
        %v8371 = vld [vmem:[%s49] sm:$0x1]
        %v8373 = vlaneseq
        %v8374 = vshrl.u32 %v8373, 7
        %v8375 = vsub.s32 0, %v8374
        %v8376 = vrot.slane %v8371, %v8375
        %v8378 = vadd.f32 %v8355, %v8376
        %v8379 = vadd.f32 %v8356, %v8376
        %v8380 = vadd.f32 %v8357, %v8376
        %v8381 = vadd.f32 %v8358, %v8376
        %v8382 = vadd.f32 %v8359, %v8376
        %v8383 = vadd.f32 %v8360, %v8376
        %v8384 = vadd.f32 %v8361, %v8376
        %v8385 = vadd.f32 %v8362, %v8376
        %v8386 = vadd.f32 %v8363, %v8376
        %v8387 = vadd.f32 %v8364, %v8376
        %v8388 = vadd.f32 %v8365, %v8376
        %v8389 = vadd.f32 %v8366, %v8376
        %v8390 = vadd.f32 %v8367, %v8376
        %v8391 = vadd.f32 %v8368, %v8376
        %v8392 = vadd.f32 %v8369, %v8376
        %v8393 = vadd.f32 %v8370, %v8376
        %v8394 = vxor.u32 %v8378, 2147483648
        %v8395 = vxor.u32 %v8379, 2147483648
        %v8396 = vxor.u32 %v8380, 2147483648
        %v8397 = vxor.u32 %v8381, 2147483648
        %v8398 = vxor.u32 %v8382, 2147483648
        %v8399 = vxor.u32 %v8383, 2147483648
        %v8400 = vxor.u32 %v8384, 2147483648
        %v8401 = vxor.u32 %v8385, 2147483648
        %v8402 = vxor.u32 %v8386, 2147483648
        %v8403 = vxor.u32 %v8387, 2147483648
        %v8404 = vxor.u32 %v8388, 2147483648
        %v8405 = vxor.u32 %v8389, 2147483648
        %v8406 = vxor.u32 %v8390, 2147483648
        %v8407 = vxor.u32 %v8391, 2147483648
        %v8408 = vxor.u32 %v8392, 2147483648
        %v8409 = vxor.u32 %v8393, 2147483648
        %v8410 = vmul.f32 %v8394, 1.442695
        %v8411 = vpow.pop %v8410
        %v8412 = vmul.f32 %v8395, 1.442695
        %v8413 = vpow.pop %v8412
        %v8414 = vmul.f32 %v8396, 1.442695
        %v8415 = vpow.pop %v8414
        %v8416 = vmul.f32 %v8397, 1.442695
        %v8417 = vpow.pop %v8416
        %v8418 = vmul.f32 %v8398, 1.442695
        %v8419 = vpow.pop %v8418
        %v8420 = vmul.f32 %v8399, 1.442695
        %v8421 = vpow.pop %v8420
        %v8422 = vmul.f32 %v8400, 1.442695
        %v8423 = vpow.pop %v8422
        %v8424 = vmul.f32 %v8401, 1.442695
        %v8425 = vpow.pop %v8424
        %v8426 = vmul.f32 %v8402, 1.442695
        %v8427 = vpow.pop %v8426
        %v8428 = vmul.f32 %v8403, 1.442695
        %v8429 = vpow.pop %v8428
        %v8430 = vmul.f32 %v8404, 1.442695
        %v8431 = vpow.pop %v8430
        %v8432 = vmul.f32 %v8405, 1.442695
        %v8433 = vpow.pop %v8432
        %v8434 = vmul.f32 %v8406, 1.442695
        %v8435 = vpow.pop %v8434
        %v8436 = vmul.f32 %v8407, 1.442695
        %v8437 = vpow.pop %v8436
        %v8438 = vmul.f32 %v8408, 1.442695
        %v8439 = vpow.pop %v8438
        %v8440 = vmul.f32 %v8409, 1.442695
        %v8441 = vpow.pop %v8440
        %v8442 = vadd.f32 %v8411, 1.0
        %v8443 = vadd.f32 %v8413, 1.0
        %v8444 = vadd.f32 %v8415, 1.0
        %v8445 = vadd.f32 %v8417, 1.0
        %v8446 = vadd.f32 %v8419, 1.0
        %v8447 = vadd.f32 %v8421, 1.0
        %v8448 = vadd.f32 %v8423, 1.0
        %v8449 = vadd.f32 %v8425, 1.0
        %v8450 = vadd.f32 %v8427, 1.0
        %v8451 = vadd.f32 %v8429, 1.0
        %v8452 = vadd.f32 %v8431, 1.0
        %v8453 = vadd.f32 %v8433, 1.0
        %v8454 = vadd.f32 %v8435, 1.0
        %v8455 = vadd.f32 %v8437, 1.0
        %v8456 = vadd.f32 %v8439, 1.0
        %v8457 = vadd.f32 %v8441, 1.0
        %v8458 = vrcp.pop %v8442
        %v8459 = vmul.f32 1.0, %v8458
        %v8460 = vrcp.pop %v8443
        %v8461 = vmul.f32 1.0, %v8460
        %v8462 = vrcp.pop %v8444
        %v8463 = vmul.f32 1.0, %v8462
        %v8464 = vrcp.pop %v8445
        %v8465 = vmul.f32 1.0, %v8464
        %v8466 = vrcp.pop %v8446
        %v8467 = vmul.f32 1.0, %v8466
        %v8468 = vrcp.pop %v8447
        %v8469 = vmul.f32 1.0, %v8468
        %v8470 = vrcp.pop %v8448
        %v8471 = vmul.f32 1.0, %v8470
        %v8472 = vrcp.pop %v8449
        %v8473 = vmul.f32 1.0, %v8472
        %v8474 = vrcp.pop %v8450
        %v8475 = vmul.f32 1.0, %v8474
        %v8476 = vrcp.pop %v8451
        %v8477 = vmul.f32 1.0, %v8476
        %v8478 = vrcp.pop %v8452
        %v8479 = vmul.f32 1.0, %v8478
        %v8480 = vrcp.pop %v8453
        %v8481 = vmul.f32 1.0, %v8480
        %v8482 = vrcp.pop %v8454
        %v8483 = vmul.f32 1.0, %v8482
        %v8484 = vrcp.pop %v8455
        %v8485 = vmul.f32 1.0, %v8484
        %v8486 = vrcp.pop %v8456
        %v8487 = vmul.f32 1.0, %v8486
        %v8488 = vrcp.pop %v8457
        %v8489 = vmul.f32 1.0, %v8488
        %v8490 = vmul.f32 %v8378, %v8459
        %v8491 = vmul.f32 %v8379, %v8461
        %v8492 = vmul.f32 %v8380, %v8463
        %v8493 = vmul.f32 %v8381, %v8465
        %v8494 = vmul.f32 %v8382, %v8467
        %v8495 = vmul.f32 %v8383, %v8469
        %v8496 = vmul.f32 %v8384, %v8471
        %v8497 = vmul.f32 %v8385, %v8473
        %v8498 = vmul.f32 %v8386, %v8475
        %v8499 = vmul.f32 %v8387, %v8477
        %v8500 = vmul.f32 %v8388, %v8479
        %v8501 = vmul.f32 %v8389, %v8481
        %v8502 = vmul.f32 %v8390, %v8483
        %v8503 = vmul.f32 %v8391, %v8485
        %v8504 = vmul.f32 %v8392, %v8487
        %v8505 = vmul.f32 %v8393, %v8489
        %v8506 = vld [vmem:[%s51] sm:$0xf]
        %v8507 = vld [vmem:[%s51 + $0x4] sm:$0xf]
        %v8508 = vld [vmem:[%s51 + $0x8] sm:$0xf]
        %v8509 = vld [vmem:[%s51 + $0xc] sm:$0xf]
        %v8510 = vld [vmem:[%s51 + $0x10] sm:$0xf]
        %v8511 = vld [vmem:[%s51 + $0x14] sm:$0xf]
        %v8512 = vld [vmem:[%s51 + $0x18] sm:$0xf]
        %v8513 = vld [vmem:[%s51 + $0x1c] sm:$0xf]
        %v8514 = vld [vmem:[%s51 + $0x20] sm:$0xf]
        %v8515 = vld [vmem:[%s51 + $0x24] sm:$0xf]
        %v8516 = vld [vmem:[%s51 + $0x28] sm:$0xf]
        %v8517 = vld [vmem:[%s51 + $0x2c] sm:$0xf]
        %v8518 = vld [vmem:[%s51 + $0x30] sm:$0xf]
        %v8519 = vld [vmem:[%s51 + $0x34] sm:$0xf]
        %v8520 = vld [vmem:[%s51 + $0x38] sm:$0xf]
        %v8521 = vld [vmem:[%s51 + $0x3c] sm:$0xf]
        %v8522 = vpack.c.bf16 %v8491, %v8490
        %v8523 = vpack.c.bf16 %v8493, %v8492
        %v8524 = vpack.c.bf16 %v8495, %v8494
        %v8525 = vpack.c.bf16 %v8497, %v8496
        %v8526 = vpack.c.bf16 %v8499, %v8498
        %v8527 = vpack.c.bf16 %v8501, %v8500
        %v8528 = vpack.c.bf16 %v8503, %v8502
        %v8529 = vpack.c.bf16 %v8505, %v8504
        %v8546 = vunpack.c.l.b16 %v8506
        %v8547 = vunpack.c.l.b16 %v8507
        %v8548 = vunpack.c.l.b16 %v8508
        %v8549 = vunpack.c.l.b16 %v8509
        %v8550 = vunpack.c.l.b16 %v8510
        %v8551 = vunpack.c.l.b16 %v8511
        %v8552 = vunpack.c.l.b16 %v8512
        %v8553 = vunpack.c.l.b16 %v8513
        %v8554 = vunpack.c.l.b16 %v8514
        %v8555 = vunpack.c.l.b16 %v8515
        %v8556 = vunpack.c.l.b16 %v8516
        %v8557 = vunpack.c.l.b16 %v8517
        %v8558 = vunpack.c.l.b16 %v8518
        %v8559 = vunpack.c.l.b16 %v8519
        %v8560 = vunpack.c.l.b16 %v8520
        %v8561 = vunpack.c.l.b16 %v8521
        %v8562 = vpack.c.b16 %v8547, %v8546
        %v8563 = vpack.c.b16 %v8549, %v8548
        %v8564 = vpack.c.b16 %v8551, %v8550
        %v8565 = vpack.c.b16 %v8553, %v8552
        %v8566 = vpack.c.b16 %v8555, %v8554
        %v8567 = vpack.c.b16 %v8557, %v8556
        %v8568 = vpack.c.b16 %v8559, %v8558
        %v8569 = vpack.c.b16 %v8561, %v8560
        %8578 = vmatprep.subr.bf16.mxu0 0
        %8579 = vmatpush1.bf16.msra.mxu0 %v8569
        %8580 = vmatprep.subr.bf16.mxu0 0
        %8581 = vmatpush1.bf16.msra.mxu0 %v8568
        %8582 = vmatprep.subr.bf16.mxu0 0
        %8583 = vmatpush1.bf16.msra.mxu0 %v8567
        %8584 = vmatprep.subr.bf16.mxu0 0
        %8585 = vmatpush1.bf16.msra.mxu0 %v8566
        %8586 = vmatprep.subr.bf16.mxu0 0
        %8587 = vmatpush1.bf16.msra.mxu0 %v8565
        %8588 = vmatprep.subr.bf16.mxu0 0
        %8589 = vmatpush1.bf16.msra.mxu0 %v8564
        %8590 = vmatprep.subr.bf16.mxu0 0
        %8591 = vmatpush1.bf16.msra.mxu0 %v8563
        %8592 = vmatprep.subr.bf16.mxu0 0
        %8593 = vmatpush1.bf16.msra.mxu0 %v8562
        %8594 = vmatprep.subr.bf16.mxu0 0
        %8595 = vmatpush2.bf16.msra.mxu0 0
        %8596 = vmatprep.subr.bf16.mxu0 0
        %8597 = vmatpush2.bf16.msra.mxu0 0
        %8598 = vmatprep.subr.bf16.mxu0 0
        %8599 = vmatpush2.bf16.msra.mxu0 0
        %8600 = vmatprep.subr.bf16.mxu0 0
        %8601 = vmatpush2.bf16.msra.mxu0 0
        %8602 = vmatprep.subr.bf16.mxu0 0
        %8603 = vmatpush2.bf16.msra.mxu0 0
        %8604 = vmatprep.subr.bf16.mxu0 0
        %8605 = vmatpush2.bf16.msra.mxu0 0
        %8606 = vmatprep.subr.bf16.mxu0 0
        %8607 = vmatpush2.bf16.msra.mxu0 0
        %8608 = vmatprep.subr.bf16.mxu0 0
        %8609 = vmatpush2.bf16.msra.mxu0 0
        %8610 = vmatprep.mubr.bf16.mxu0 0
        %8611 = vmatmul.mubr.bf16.gmra.mxu0 %v8522
        %v8612 = vpop.f32.mrf.mxu0
        %v8613 = vadd.f32 0.0, %v8612
        %v8614 = vpop.f32.mrf.mxu0
        %v8615 = vpop.f32.mrf.mxu0
        %v8616 = vadd.f32 0.0, %v8615
        %v8617 = vpop.f32.mrf.mxu0
        %8618 = vmatprep.mubr.bf16.mxu0 0
        %8619 = vmatmul.mubr.bf16.gmra.mxu0 %v8523
        %v8620 = vpop.f32.mrf.mxu0
        %v8621 = vadd.f32 0.0, %v8620
        %v8622 = vpop.f32.mrf.mxu0
        %v8623 = vpop.f32.mrf.mxu0
        %v8624 = vadd.f32 0.0, %v8623
        %v8625 = vpop.f32.mrf.mxu0
        %8626 = vmatprep.mubr.bf16.mxu0 0
        %8627 = vmatmul.mubr.bf16.gmra.mxu0 %v8524
        %v8628 = vpop.f32.mrf.mxu0
        %v8629 = vadd.f32 0.0, %v8628
        %v8630 = vpop.f32.mrf.mxu0
        %v8631 = vpop.f32.mrf.mxu0
        %v8632 = vadd.f32 0.0, %v8631
        %v8633 = vpop.f32.mrf.mxu0
        %8634 = vmatprep.mubr.bf16.mxu0 0
        %8635 = vmatmul.mubr.bf16.gmra.mxu0 %v8525
        %v8636 = vpop.f32.mrf.mxu0
        %v8637 = vadd.f32 0.0, %v8636
        %v8638 = vpop.f32.mrf.mxu0
        %v8639 = vpop.f32.mrf.mxu0
        %v8640 = vadd.f32 0.0, %v8639
        %v8641 = vpop.f32.mrf.mxu0
        %8642 = vmatprep.mubr.bf16.mxu0 0
        %8643 = vmatmul.mubr.bf16.gmra.mxu0 %v8526
        %v8644 = vpop.f32.mrf.mxu0
        %v8645 = vadd.f32 0.0, %v8644
        %v8646 = vpop.f32.mrf.mxu0
        %v8647 = vpop.f32.mrf.mxu0
        %v8648 = vadd.f32 0.0, %v8647
        %v8649 = vpop.f32.mrf.mxu0
        %8650 = vmatprep.mubr.bf16.mxu0 0
        %8651 = vmatmul.mubr.bf16.gmra.mxu0 %v8527
        %v8652 = vpop.f32.mrf.mxu0
        %v8653 = vadd.f32 0.0, %v8652
        %v8654 = vpop.f32.mrf.mxu0
        %v8655 = vpop.f32.mrf.mxu0
        %v8656 = vadd.f32 0.0, %v8655
        %v8657 = vpop.f32.mrf.mxu0
        %8658 = vmatprep.mubr.bf16.mxu0 0
        %8659 = vmatmul.mubr.bf16.gmra.mxu0 %v8528
        %v8660 = vpop.f32.mrf.mxu0
        %v8661 = vadd.f32 0.0, %v8660
        %v8662 = vpop.f32.mrf.mxu0
        %v8663 = vpop.f32.mrf.mxu0
        %v8664 = vadd.f32 0.0, %v8663
        %v8665 = vpop.f32.mrf.mxu0
        %8666 = vmatprep.mubr.bf16.mxu0 0
        %8667 = vmatmul.mubr.bf16.gmra.mxu0 %v8529
        %v8668 = vpop.f32.mrf.mxu0
        %v8669 = vadd.f32 0.0, %v8668
        %v8670 = vpop.f32.mrf.mxu0
        %v8671 = vpop.f32.mrf.mxu0
        %v8672 = vadd.f32 0.0, %v8671
        %v8673 = vpop.f32.mrf.mxu0
        %8674 = vdwg.mxu0
        %v8675 = vadd.f32 %v6928, %v8613
        %v8676 = vadd.f32 %v6929, %v8616
        %v8677 = vadd.f32 %v6930, %v8621
        %v8678 = vadd.f32 %v6931, %v8624
        %v8679 = vadd.f32 %v6932, %v8629
        %v8680 = vadd.f32 %v6933, %v8632
        %v8681 = vadd.f32 %v6934, %v8637
        %v8682 = vadd.f32 %v6935, %v8640
        %v8683 = vadd.f32 %v6936, %v8645
        %v8684 = vadd.f32 %v6937, %v8648
        %v8685 = vadd.f32 %v6938, %v8653
        %v8686 = vadd.f32 %v6939, %v8656
        %v8687 = vadd.f32 %v6940, %v8661
        %v8688 = vadd.f32 %v6941, %v8664
        %v8689 = vadd.f32 %v6942, %v8669
        %v8690 = vadd.f32 %v6943, %v8672
        %v8691 = vld [vmem:[%s53] sm:$0x1]
        %v8693 = vlaneseq
        %v8694 = vshrl.u32 %v8693, 7
        %v8695 = vsub.s32 0, %v8694
        %v8696 = vrot.slane %v8691, %v8695
        %v8698 = vadd.f32 %v8675, %v8696
        %v8699 = vadd.f32 %v8676, %v8696
        %v8700 = vadd.f32 %v8677, %v8696
        %v8701 = vadd.f32 %v8678, %v8696
        %v8702 = vadd.f32 %v8679, %v8696
        %v8703 = vadd.f32 %v8680, %v8696
        %v8704 = vadd.f32 %v8681, %v8696
        %v8705 = vadd.f32 %v8682, %v8696
        %v8706 = vadd.f32 %v8683, %v8696
        %v8707 = vadd.f32 %v8684, %v8696
        %v8708 = vadd.f32 %v8685, %v8696
        %v8709 = vadd.f32 %v8686, %v8696
        %v8710 = vadd.f32 %v8687, %v8696
        %v8711 = vadd.f32 %v8688, %v8696
        %v8712 = vadd.f32 %v8689, %v8696
        %v8713 = vadd.f32 %v8690, %v8696
        %v8714 = vld [vmem:[%s55] sm:$0x1]
        %v8715 = vld [vmem:[%s57] sm:$0x1]
        %8716 = vadd.xlane.f32.xlu0 %v8698
        %v8717 = vpop.xlane.xlu0 %8716
        %8718 = vadd.xlane.f32.xlu0 %v8699
        %v8719 = vpop.xlane.xlu0 %8718
        %8720 = vadd.xlane.f32.xlu0 %v8700
        %v8721 = vpop.xlane.xlu0 %8720
        %8722 = vadd.xlane.f32.xlu0 %v8701
        %v8723 = vpop.xlane.xlu0 %8722
        %8724 = vadd.xlane.f32.xlu0 %v8702
        %v8725 = vpop.xlane.xlu0 %8724
        %8726 = vadd.xlane.f32.xlu0 %v8703
        %v8727 = vpop.xlane.xlu0 %8726
        %8728 = vadd.xlane.f32.xlu0 %v8704
        %v8729 = vpop.xlane.xlu0 %8728
        %8730 = vadd.xlane.f32.xlu0 %v8705
        %v8731 = vpop.xlane.xlu0 %8730
        %8732 = vadd.xlane.f32.xlu0 %v8706
        %v8733 = vpop.xlane.xlu0 %8732
        %8734 = vadd.xlane.f32.xlu0 %v8707
        %v8735 = vpop.xlane.xlu0 %8734
        %8736 = vadd.xlane.f32.xlu0 %v8708
        %v8737 = vpop.xlane.xlu0 %8736
        %8738 = vadd.xlane.f32.xlu0 %v8709
        %v8739 = vpop.xlane.xlu0 %8738
        %8740 = vadd.xlane.f32.xlu0 %v8710
        %v8741 = vpop.xlane.xlu0 %8740
        %8742 = vadd.xlane.f32.xlu0 %v8711
        %v8743 = vpop.xlane.xlu0 %8742
        %8744 = vadd.xlane.f32.xlu0 %v8712
        %v8745 = vpop.xlane.xlu0 %8744
        %8746 = vadd.xlane.f32.xlu0 %v8713
        %v8747 = vpop.xlane.xlu0 %8746
        %v8748 = vmul.f32 %v8717, %v1173
        %v8749 = vmul.f32 %v8719, %v1173
        %v8750 = vmul.f32 %v8721, %v1173
        %v8751 = vmul.f32 %v8723, %v1173
        %v8752 = vmul.f32 %v8725, %v1173
        %v8753 = vmul.f32 %v8727, %v1173
        %v8754 = vmul.f32 %v8729, %v1173
        %v8755 = vmul.f32 %v8731, %v1173
        %v8756 = vmul.f32 %v8733, %v1173
        %v8757 = vmul.f32 %v8735, %v1173
        %v8758 = vmul.f32 %v8737, %v1173
        %v8759 = vmul.f32 %v8739, %v1173
        %v8760 = vmul.f32 %v8741, %v1173
        %v8761 = vmul.f32 %v8743, %v1173
        %v8762 = vmul.f32 %v8745, %v1173
        %v8763 = vmul.f32 %v8747, %v1173
        %v8764 = vsub.f32 %v8698, %v8748
        %v8765 = vsub.f32 %v8699, %v8749
        %v8766 = vsub.f32 %v8700, %v8750
        %v8767 = vsub.f32 %v8701, %v8751
        %v8768 = vsub.f32 %v8702, %v8752
        %v8769 = vsub.f32 %v8703, %v8753
        %v8770 = vsub.f32 %v8704, %v8754
        %v8771 = vsub.f32 %v8705, %v8755
        %v8772 = vsub.f32 %v8706, %v8756
        %v8773 = vsub.f32 %v8707, %v8757
        %v8774 = vsub.f32 %v8708, %v8758
        %v8775 = vsub.f32 %v8709, %v8759
        %v8776 = vsub.f32 %v8710, %v8760
        %v8777 = vsub.f32 %v8711, %v8761
        %v8778 = vsub.f32 %v8712, %v8762
        %v8779 = vsub.f32 %v8713, %v8763
        %v8780 = vmul.f32 %v8764, %v8764
        %v8781 = vmul.f32 %v8765, %v8765
        %v8782 = vmul.f32 %v8766, %v8766
        %v8783 = vmul.f32 %v8767, %v8767
        %v8784 = vmul.f32 %v8768, %v8768
        %v8785 = vmul.f32 %v8769, %v8769
        %v8786 = vmul.f32 %v8770, %v8770
        %v8787 = vmul.f32 %v8771, %v8771
        %v8788 = vmul.f32 %v8772, %v8772
        %v8789 = vmul.f32 %v8773, %v8773
        %v8790 = vmul.f32 %v8774, %v8774
        %v8791 = vmul.f32 %v8775, %v8775
        %v8792 = vmul.f32 %v8776, %v8776
        %v8793 = vmul.f32 %v8777, %v8777
        %v8794 = vmul.f32 %v8778, %v8778
        %v8795 = vmul.f32 %v8779, %v8779
        %8796 = vadd.xlane.f32.xlu0 %v8780
        %v8797 = vpop.xlane.xlu0 %8796
        %8798 = vadd.xlane.f32.xlu0 %v8781
        %v8799 = vpop.xlane.xlu0 %8798
        %8800 = vadd.xlane.f32.xlu0 %v8782
        %v8801 = vpop.xlane.xlu0 %8800
        %8802 = vadd.xlane.f32.xlu0 %v8783
        %v8803 = vpop.xlane.xlu0 %8802
        %8804 = vadd.xlane.f32.xlu0 %v8784
        %v8805 = vpop.xlane.xlu0 %8804
        %8806 = vadd.xlane.f32.xlu0 %v8785
        %v8807 = vpop.xlane.xlu0 %8806
        %8808 = vadd.xlane.f32.xlu0 %v8786
        %v8809 = vpop.xlane.xlu0 %8808
        %8810 = vadd.xlane.f32.xlu0 %v8787
        %v8811 = vpop.xlane.xlu0 %8810
        %8812 = vadd.xlane.f32.xlu0 %v8788
        %v8813 = vpop.xlane.xlu0 %8812
        %8814 = vadd.xlane.f32.xlu0 %v8789
        %v8815 = vpop.xlane.xlu0 %8814
        %8816 = vadd.xlane.f32.xlu0 %v8790
        %v8817 = vpop.xlane.xlu0 %8816
        %8818 = vadd.xlane.f32.xlu0 %v8791
        %v8819 = vpop.xlane.xlu0 %8818
        %8820 = vadd.xlane.f32.xlu0 %v8792
        %v8821 = vpop.xlane.xlu0 %8820
        %8822 = vadd.xlane.f32.xlu0 %v8793
        %v8823 = vpop.xlane.xlu0 %8822
        %8824 = vadd.xlane.f32.xlu0 %v8794
        %v8825 = vpop.xlane.xlu0 %8824
        %8826 = vadd.xlane.f32.xlu0 %v8795
        %v8827 = vpop.xlane.xlu0 %8826
        %v8828 = vmul.f32 %v8797, %v1173
        %v8829 = vmul.f32 %v8799, %v1173
        %v8830 = vmul.f32 %v8801, %v1173
        %v8831 = vmul.f32 %v8803, %v1173
        %v8832 = vmul.f32 %v8805, %v1173
        %v8833 = vmul.f32 %v8807, %v1173
        %v8834 = vmul.f32 %v8809, %v1173
        %v8835 = vmul.f32 %v8811, %v1173
        %v8836 = vmul.f32 %v8813, %v1173
        %v8837 = vmul.f32 %v8815, %v1173
        %v8838 = vmul.f32 %v8817, %v1173
        %v8839 = vmul.f32 %v8819, %v1173
        %v8840 = vmul.f32 %v8821, %v1173
        %v8841 = vmul.f32 %v8823, %v1173
        %v8842 = vmul.f32 %v8825, %v1173
        %v8843 = vmul.f32 %v8827, %v1173
        %v8844 = vadd.f32 %v8828, 1e-05
        %v8845 = vadd.f32 %v8829, 1e-05
        %v8846 = vadd.f32 %v8830, 1e-05
        %v8847 = vadd.f32 %v8831, 1e-05
        %v8848 = vadd.f32 %v8832, 1e-05
        %v8849 = vadd.f32 %v8833, 1e-05
        %v8850 = vadd.f32 %v8834, 1e-05
        %v8851 = vadd.f32 %v8835, 1e-05
        %v8852 = vadd.f32 %v8836, 1e-05
        %v8853 = vadd.f32 %v8837, 1e-05
        %v8854 = vadd.f32 %v8838, 1e-05
        %v8855 = vadd.f32 %v8839, 1e-05
        %v8856 = vadd.f32 %v8840, 1e-05
        %v8857 = vadd.f32 %v8841, 1e-05
        %v8858 = vadd.f32 %v8842, 1e-05
        %v8859 = vadd.f32 %v8843, 1e-05
        %v8860 = vrsqrt.pop %v8844
        %v8861 = vrsqrt.pop %v8845
        %v8862 = vrsqrt.pop %v8846
        %v8863 = vrsqrt.pop %v8847
        %v8864 = vrsqrt.pop %v8848
        %v8865 = vrsqrt.pop %v8849
        %v8866 = vrsqrt.pop %v8850
        %v8867 = vrsqrt.pop %v8851
        %v8868 = vrsqrt.pop %v8852
        %v8869 = vrsqrt.pop %v8853
        %v8870 = vrsqrt.pop %v8854
        %v8871 = vrsqrt.pop %v8855
        %v8872 = vrsqrt.pop %v8856
        %v8873 = vrsqrt.pop %v8857
        %v8874 = vrsqrt.pop %v8858
        %v8875 = vrsqrt.pop %v8859
        %v8876 = vmul.f32 %v8764, %v8860
        %v8877 = vmul.f32 %v8765, %v8861
        %v8878 = vmul.f32 %v8766, %v8862
        %v8879 = vmul.f32 %v8767, %v8863
        %v8880 = vmul.f32 %v8768, %v8864
        %v8881 = vmul.f32 %v8769, %v8865
        %v8882 = vmul.f32 %v8770, %v8866
        %v8883 = vmul.f32 %v8771, %v8867
        %v8884 = vmul.f32 %v8772, %v8868
        %v8885 = vmul.f32 %v8773, %v8869
        %v8886 = vmul.f32 %v8774, %v8870
        %v8887 = vmul.f32 %v8775, %v8871
        %v8888 = vmul.f32 %v8776, %v8872
        %v8889 = vmul.f32 %v8777, %v8873
        %v8890 = vmul.f32 %v8778, %v8874
        %v8891 = vmul.f32 %v8779, %v8875
        %v8893 = vlaneseq
        %v8894 = vshrl.u32 %v8893, 7
        %v8895 = vsub.s32 0, %v8894
        %v8896 = vrot.slane %v8714, %v8895
        %v8898 = vmul.f32 %v8876, %v8896
        %v8899 = vmul.f32 %v8877, %v8896
        %v8900 = vmul.f32 %v8878, %v8896
        %v8901 = vmul.f32 %v8879, %v8896
        %v8902 = vmul.f32 %v8880, %v8896
        %v8903 = vmul.f32 %v8881, %v8896
        %v8904 = vmul.f32 %v8882, %v8896
        %v8905 = vmul.f32 %v8883, %v8896
        %v8906 = vmul.f32 %v8884, %v8896
        %v8907 = vmul.f32 %v8885, %v8896
        %v8908 = vmul.f32 %v8886, %v8896
        %v8909 = vmul.f32 %v8887, %v8896
        %v8910 = vmul.f32 %v8888, %v8896
        %v8911 = vmul.f32 %v8889, %v8896
        %v8912 = vmul.f32 %v8890, %v8896
        %v8913 = vmul.f32 %v8891, %v8896
        %v8915 = vlaneseq
        %v8916 = vshrl.u32 %v8915, 7
        %v8917 = vsub.s32 0, %v8916
        %v8918 = vrot.slane %v8715, %v8917
        %v8920 = vadd.f32 %v8898, %v8918
        %v8921 = vadd.f32 %v8899, %v8918
        %v8922 = vadd.f32 %v8900, %v8918
        %v8923 = vadd.f32 %v8901, %v8918
        %v8924 = vadd.f32 %v8902, %v8918
        %v8925 = vadd.f32 %v8903, %v8918
        %v8926 = vadd.f32 %v8904, %v8918
        %v8927 = vadd.f32 %v8905, %v8918
        %v8928 = vadd.f32 %v8906, %v8918
        %v8929 = vadd.f32 %v8907, %v8918
        %v8930 = vadd.f32 %v8908, %v8918
        %v8931 = vadd.f32 %v8909, %v8918
        %v8932 = vadd.f32 %v8910, %v8918
        %v8933 = vadd.f32 %v8911, %v8918
        %v8934 = vadd.f32 %v8912, %v8918
        %v8935 = vadd.f32 %v8913, %v8918
        %v8936 = vld [vmem:[%s59] sm:$0xff]
        %v8937 = vld [vmem:[%s59 + $0x8] sm:$0xff]
        %v8938 = vld [vmem:[%s59 + $0x10] sm:$0xff]
        %v8939 = vld [vmem:[%s59 + $0x18] sm:$0xff]
        %v8940 = vld [vmem:[%s59 + $0x20] sm:$0xff]
        %v8941 = vld [vmem:[%s59 + $0x28] sm:$0xff]
        %v8942 = vld [vmem:[%s59 + $0x30] sm:$0xff]
        %v8943 = vld [vmem:[%s59 + $0x38] sm:$0xff]
        %v8944 = vld [vmem:[%s59 + $0x40] sm:$0xff]
        %v8945 = vld [vmem:[%s59 + $0x48] sm:$0xff]
        %v8946 = vld [vmem:[%s59 + $0x50] sm:$0xff]
        %v8947 = vld [vmem:[%s59 + $0x58] sm:$0xff]
        %v8948 = vld [vmem:[%s59 + $0x60] sm:$0xff]
        %v8949 = vld [vmem:[%s59 + $0x68] sm:$0xff]
        %v8950 = vld [vmem:[%s59 + $0x70] sm:$0xff]
        %v8951 = vld [vmem:[%s59 + $0x78] sm:$0xff]
        %v8952 = vld [vmem:[%s59 + $0x80] sm:$0xff]
        %v8953 = vld [vmem:[%s59 + $0x88] sm:$0xff]
        %v8954 = vld [vmem:[%s59 + $0x90] sm:$0xff]
        %v8955 = vld [vmem:[%s59 + $0x98] sm:$0xff]
        %v8956 = vld [vmem:[%s59 + $0xa0] sm:$0xff]
        %v8957 = vld [vmem:[%s59 + $0xa8] sm:$0xff]
        %v8958 = vld [vmem:[%s59 + $0xb0] sm:$0xff]
        %v8959 = vld [vmem:[%s59 + $0xb8] sm:$0xff]
        %v8960 = vld [vmem:[%s59 + $0xc0] sm:$0xff]
        %v8961 = vld [vmem:[%s59 + $0xc8] sm:$0xff]
        %v8962 = vld [vmem:[%s59 + $0xd0] sm:$0xff]
        %v8963 = vld [vmem:[%s59 + $0xd8] sm:$0xff]
        %v8964 = vld [vmem:[%s59 + $0xe0] sm:$0xff]
        %v8965 = vld [vmem:[%s59 + $0xe8] sm:$0xff]
        %v8966 = vld [vmem:[%s59 + $0xf0] sm:$0xff]
        %v8967 = vld [vmem:[%s59 + $0xf8] sm:$0xff]
        %v8968 = vpack.c.bf16 %v8921, %v8920
        %v8969 = vpack.c.bf16 %v8923, %v8922
        %v8970 = vpack.c.bf16 %v8925, %v8924
        %v8971 = vpack.c.bf16 %v8927, %v8926
        %v8972 = vpack.c.bf16 %v8929, %v8928
        %v8973 = vpack.c.bf16 %v8931, %v8930
        %v8974 = vpack.c.bf16 %v8933, %v8932
        %v8975 = vpack.c.bf16 %v8935, %v8934
        %v8976 = vld [vmem:[%s61] sm:$0xf]
        %v8978 = vlaneseq
        %v8979 = vshrl.u32 %v8978, 7
        %v8980 = vsub.s32 0, %v8979
        %v8981 = vrot.slane %v8976, %v8980
        %v8982 = vlaneseq
        %v8983 = vshrl.u32 %v8982, 7
        %v8984 = vsub.s32 1, %v8983
        %v8985 = vrot.slane %v8976, %v8984
        %v8986 = vlaneseq
        %v8987 = vshrl.u32 %v8986, 7
        %v8988 = vsub.s32 2, %v8987
        %v8989 = vrot.slane %v8976, %v8988
        %v8990 = vlaneseq
        %v8991 = vshrl.u32 %v8990, 7
        %v8992 = vsub.s32 3, %v8991
        %v8993 = vrot.slane %v8976, %v8992
        %v9030 = vunpack.c.l.b16 %v8936
        %v9031 = vunpack.c.h.b16 %v8936
        %v9032 = vunpack.c.l.b16 %v8937
        %v9033 = vunpack.c.h.b16 %v8937
        %v9034 = vunpack.c.l.b16 %v8938
        %v9035 = vunpack.c.h.b16 %v8938
        %v9036 = vunpack.c.l.b16 %v8939
        %v9037 = vunpack.c.h.b16 %v8939
        %v9038 = vunpack.c.l.b16 %v8940
        %v9039 = vunpack.c.h.b16 %v8940
        %v9040 = vunpack.c.l.b16 %v8941
        %v9041 = vunpack.c.h.b16 %v8941
        %v9042 = vunpack.c.l.b16 %v8942
        %v9043 = vunpack.c.h.b16 %v8942
        %v9044 = vunpack.c.l.b16 %v8943
        %v9045 = vunpack.c.h.b16 %v8943
        %v9046 = vunpack.c.l.b16 %v8944
        %v9047 = vunpack.c.h.b16 %v8944
        %v9048 = vunpack.c.l.b16 %v8945
        %v9049 = vunpack.c.h.b16 %v8945
        %v9050 = vunpack.c.l.b16 %v8946
        %v9051 = vunpack.c.h.b16 %v8946
        %v9052 = vunpack.c.l.b16 %v8947
        %v9053 = vunpack.c.h.b16 %v8947
        %v9054 = vunpack.c.l.b16 %v8948
        %v9055 = vunpack.c.h.b16 %v8948
        %v9056 = vunpack.c.l.b16 %v8949
        %v9057 = vunpack.c.h.b16 %v8949
        %v9058 = vunpack.c.l.b16 %v8950
        %v9059 = vunpack.c.h.b16 %v8950
        %v9060 = vunpack.c.l.b16 %v8951
        %v9061 = vunpack.c.h.b16 %v8951
        %v9062 = vunpack.c.l.b16 %v8952
        %v9063 = vunpack.c.h.b16 %v8952
        %v9064 = vunpack.c.l.b16 %v8953
        %v9065 = vunpack.c.h.b16 %v8953
        %v9066 = vunpack.c.l.b16 %v8954
        %v9067 = vunpack.c.h.b16 %v8954
        %v9068 = vunpack.c.l.b16 %v8955
        %v9069 = vunpack.c.h.b16 %v8955
        %v9070 = vunpack.c.l.b16 %v8956
        %v9071 = vunpack.c.h.b16 %v8956
        %v9072 = vunpack.c.l.b16 %v8957
        %v9073 = vunpack.c.h.b16 %v8957
        %v9074 = vunpack.c.l.b16 %v8958
        %v9075 = vunpack.c.h.b16 %v8958
        %v9076 = vunpack.c.l.b16 %v8959
        %v9077 = vunpack.c.h.b16 %v8959
        %v9078 = vunpack.c.l.b16 %v8960
        %v9079 = vunpack.c.h.b16 %v8960
        %v9080 = vunpack.c.l.b16 %v8961
        %v9081 = vunpack.c.h.b16 %v8961
        %v9082 = vunpack.c.l.b16 %v8962
        %v9083 = vunpack.c.h.b16 %v8962
        %v9084 = vunpack.c.l.b16 %v8963
        %v9085 = vunpack.c.h.b16 %v8963
        %v9086 = vunpack.c.l.b16 %v8964
        %v9087 = vunpack.c.h.b16 %v8964
        %v9088 = vunpack.c.l.b16 %v8965
        %v9089 = vunpack.c.h.b16 %v8965
        %v9090 = vunpack.c.l.b16 %v8966
        %v9091 = vunpack.c.h.b16 %v8966
        %v9092 = vunpack.c.l.b16 %v8967
        %v9093 = vunpack.c.h.b16 %v8967
        %v9094 = vpack.c.b16 %v9034, %v9030
        %v9095 = vpack.c.b16 %v9035, %v9031
        %v9096 = vpack.c.b16 %v9036, %v9032
        %v9097 = vpack.c.b16 %v9037, %v9033
        %v9098 = vpack.c.b16 %v9042, %v9038
        %v9099 = vpack.c.b16 %v9043, %v9039
        %v9100 = vpack.c.b16 %v9044, %v9040
        %v9101 = vpack.c.b16 %v9045, %v9041
        %v9102 = vpack.c.b16 %v9050, %v9046
        %v9103 = vpack.c.b16 %v9051, %v9047
        %v9104 = vpack.c.b16 %v9052, %v9048
        %v9105 = vpack.c.b16 %v9053, %v9049
        %v9106 = vpack.c.b16 %v9058, %v9054
        %v9107 = vpack.c.b16 %v9059, %v9055
        %v9108 = vpack.c.b16 %v9060, %v9056
        %v9109 = vpack.c.b16 %v9061, %v9057
        %v9110 = vpack.c.b16 %v9066, %v9062
        %v9111 = vpack.c.b16 %v9067, %v9063
        %v9112 = vpack.c.b16 %v9068, %v9064
        %v9113 = vpack.c.b16 %v9069, %v9065
        %v9114 = vpack.c.b16 %v9074, %v9070
        %v9115 = vpack.c.b16 %v9075, %v9071
        %v9116 = vpack.c.b16 %v9076, %v9072
        %v9117 = vpack.c.b16 %v9077, %v9073
        %v9118 = vpack.c.b16 %v9082, %v9078
        %v9119 = vpack.c.b16 %v9083, %v9079
        %v9120 = vpack.c.b16 %v9084, %v9080
        %v9121 = vpack.c.b16 %v9085, %v9081
        %v9122 = vpack.c.b16 %v9090, %v9086
        %v9123 = vpack.c.b16 %v9091, %v9087
        %v9124 = vpack.c.b16 %v9092, %v9088
        %v9125 = vpack.c.b16 %v9093, %v9089
        %9158 = vmatprep.subr.bf16.mxu0 %v9123
        %9159 = vmatpush1.bf16.msra.mxu0 %v9122
        %9160 = vmatprep.subr.bf16.mxu0 %v9119
        %9161 = vmatpush1.bf16.msra.mxu0 %v9118
        %9162 = vmatprep.subr.bf16.mxu0 %v9115
        %9163 = vmatpush1.bf16.msra.mxu0 %v9114
        %9164 = vmatprep.subr.bf16.mxu0 %v9111
        %9165 = vmatpush1.bf16.msra.mxu0 %v9110
        %9166 = vmatprep.subr.bf16.mxu0 %v9107
        %9167 = vmatpush1.bf16.msra.mxu0 %v9106
        %9168 = vmatprep.subr.bf16.mxu0 %v9103
        %9169 = vmatpush1.bf16.msra.mxu0 %v9102
        %9170 = vmatprep.subr.bf16.mxu0 %v9099
        %9171 = vmatpush1.bf16.msra.mxu0 %v9098
        %9172 = vmatprep.subr.bf16.mxu0 %v9095
        %9173 = vmatpush1.bf16.msra.mxu0 %v9094
        %9174 = vmatprep.subr.bf16.mxu0 0
        %9175 = vmatpush2.bf16.msra.mxu0 0
        %9176 = vmatprep.subr.bf16.mxu0 0
        %9177 = vmatpush2.bf16.msra.mxu0 0
        %9178 = vmatprep.subr.bf16.mxu0 0
        %9179 = vmatpush2.bf16.msra.mxu0 0
        %9180 = vmatprep.subr.bf16.mxu0 0
        %9181 = vmatpush2.bf16.msra.mxu0 0
        %9182 = vmatprep.subr.bf16.mxu0 0
        %9183 = vmatpush2.bf16.msra.mxu0 0
        %9184 = vmatprep.subr.bf16.mxu0 0
        %9185 = vmatpush2.bf16.msra.mxu0 0
        %9186 = vmatprep.subr.bf16.mxu0 0
        %9187 = vmatpush2.bf16.msra.mxu0 0
        %9188 = vmatprep.subr.bf16.mxu0 0
        %9189 = vmatpush2.bf16.msra.mxu0 0
        %9190 = vmatprep.mubr.bf16.mxu0 0
        %9191 = vmatmul.mubr.bf16.gmra.mxu0 %v8968
        %v9192 = vpop.f32.mrf.mxu0
        %v9193 = vadd.f32 %v8981, %v9192
        %v9194 = vpop.f32.mrf.mxu0
        %v9195 = vadd.f32 %v8985, %v9194
        %v9196 = vpop.f32.mrf.mxu0
        %v9197 = vadd.f32 %v8981, %v9196
        %v9198 = vpop.f32.mrf.mxu0
        %v9199 = vadd.f32 %v8985, %v9198
        %9200 = vmatprep.mubr.bf16.mxu0 0
        %9201 = vmatmul.mubr.bf16.gmra.mxu0 %v8969
        %v9202 = vpop.f32.mrf.mxu0
        %v9203 = vadd.f32 %v8981, %v9202
        %v9204 = vpop.f32.mrf.mxu0
        %v9205 = vadd.f32 %v8985, %v9204
        %v9206 = vpop.f32.mrf.mxu0
        %v9207 = vadd.f32 %v8981, %v9206
        %v9208 = vpop.f32.mrf.mxu0
        %v9209 = vadd.f32 %v8985, %v9208
        %9210 = vmatprep.mubr.bf16.mxu0 0
        %9211 = vmatmul.mubr.bf16.gmra.mxu0 %v8970
        %v9212 = vpop.f32.mrf.mxu0
        %v9213 = vadd.f32 %v8981, %v9212
        %v9214 = vpop.f32.mrf.mxu0
        %v9215 = vadd.f32 %v8985, %v9214
        %v9216 = vpop.f32.mrf.mxu0
        %v9217 = vadd.f32 %v8981, %v9216
        %v9218 = vpop.f32.mrf.mxu0
        %v9219 = vadd.f32 %v8985, %v9218
        %9220 = vmatprep.mubr.bf16.mxu0 0
        %9221 = vmatmul.mubr.bf16.gmra.mxu0 %v8971
        %v9222 = vpop.f32.mrf.mxu0
        %v9223 = vadd.f32 %v8981, %v9222
        %v9224 = vpop.f32.mrf.mxu0
        %v9225 = vadd.f32 %v8985, %v9224
        %v9226 = vpop.f32.mrf.mxu0
        %v9227 = vadd.f32 %v8981, %v9226
        %v9228 = vpop.f32.mrf.mxu0
        %v9229 = vadd.f32 %v8985, %v9228
        %9230 = vmatprep.mubr.bf16.mxu0 0
        %9231 = vmatmul.mubr.bf16.gmra.mxu0 %v8972
        %v9232 = vpop.f32.mrf.mxu0
        %v9233 = vadd.f32 %v8981, %v9232
        %v9234 = vpop.f32.mrf.mxu0
        %v9235 = vadd.f32 %v8985, %v9234
        %v9236 = vpop.f32.mrf.mxu0
        %v9237 = vadd.f32 %v8981, %v9236
        %v9238 = vpop.f32.mrf.mxu0
        %v9239 = vadd.f32 %v8985, %v9238
        %9240 = vmatprep.mubr.bf16.mxu0 0
        %9241 = vmatmul.mubr.bf16.gmra.mxu0 %v8973
        %v9242 = vpop.f32.mrf.mxu0
        %v9243 = vadd.f32 %v8981, %v9242
        %v9244 = vpop.f32.mrf.mxu0
        %v9245 = vadd.f32 %v8985, %v9244
        %v9246 = vpop.f32.mrf.mxu0
        %v9247 = vadd.f32 %v8981, %v9246
        %v9248 = vpop.f32.mrf.mxu0
        %v9249 = vadd.f32 %v8985, %v9248
        %9250 = vmatprep.mubr.bf16.mxu0 0
        %9251 = vmatmul.mubr.bf16.gmra.mxu0 %v8974
        %v9252 = vpop.f32.mrf.mxu0
        %v9253 = vadd.f32 %v8981, %v9252
        %v9254 = vpop.f32.mrf.mxu0
        %v9255 = vadd.f32 %v8985, %v9254
        %v9256 = vpop.f32.mrf.mxu0
        %v9257 = vadd.f32 %v8981, %v9256
        %v9258 = vpop.f32.mrf.mxu0
        %v9259 = vadd.f32 %v8985, %v9258
        %9260 = vmatprep.mubr.bf16.mxu0 0
        %9261 = vmatmul.mubr.bf16.gmra.mxu0 %v8975
        %v9262 = vpop.f32.mrf.mxu0
        %v9263 = vadd.f32 %v8981, %v9262
        %v9264 = vpop.f32.mrf.mxu0
        %v9265 = vadd.f32 %v8985, %v9264
        %v9266 = vpop.f32.mrf.mxu0
        %v9267 = vadd.f32 %v8981, %v9266
        %v9268 = vpop.f32.mrf.mxu0
        %v9269 = vadd.f32 %v8985, %v9268
        %9270 = vdwg.mxu0
        %9271 = vmatprep.subr.bf16.mxu0 %v9125
        %9272 = vmatpush1.bf16.msra.mxu0 %v9124
        %9273 = vmatprep.subr.bf16.mxu0 %v9121
        %9274 = vmatpush1.bf16.msra.mxu0 %v9120
        %9275 = vmatprep.subr.bf16.mxu0 %v9117
        %9276 = vmatpush1.bf16.msra.mxu0 %v9116
        %9277 = vmatprep.subr.bf16.mxu0 %v9113
        %9278 = vmatpush1.bf16.msra.mxu0 %v9112
        %9279 = vmatprep.subr.bf16.mxu0 %v9109
        %9280 = vmatpush1.bf16.msra.mxu0 %v9108
        %9281 = vmatprep.subr.bf16.mxu0 %v9105
        %9282 = vmatpush1.bf16.msra.mxu0 %v9104
        %9283 = vmatprep.subr.bf16.mxu0 %v9101
        %9284 = vmatpush1.bf16.msra.mxu0 %v9100
        %9285 = vmatprep.subr.bf16.mxu0 %v9097
        %9286 = vmatpush1.bf16.msra.mxu0 %v9096
        %9287 = vmatprep.subr.bf16.mxu0 0
        %9288 = vmatpush2.bf16.msra.mxu0 0
        %9289 = vmatprep.subr.bf16.mxu0 0
        %9290 = vmatpush2.bf16.msra.mxu0 0
        %9291 = vmatprep.subr.bf16.mxu0 0
        %9292 = vmatpush2.bf16.msra.mxu0 0
        %9293 = vmatprep.subr.bf16.mxu0 0
        %9294 = vmatpush2.bf16.msra.mxu0 0
        %9295 = vmatprep.subr.bf16.mxu0 0
        %9296 = vmatpush2.bf16.msra.mxu0 0
        %9297 = vmatprep.subr.bf16.mxu0 0
        %9298 = vmatpush2.bf16.msra.mxu0 0
        %9299 = vmatprep.subr.bf16.mxu0 0
        %9300 = vmatpush2.bf16.msra.mxu0 0
        %9301 = vmatprep.subr.bf16.mxu0 0
        %9302 = vmatpush2.bf16.msra.mxu0 0
        %9303 = vmatprep.mubr.bf16.mxu0 0
        %9304 = vmatmul.mubr.bf16.gmra.mxu0 %v8968
        %v9305 = vpop.f32.mrf.mxu0
        %v9306 = vadd.f32 %v8989, %v9305
        %v9307 = vpop.f32.mrf.mxu0
        %v9308 = vadd.f32 %v8993, %v9307
        %v9309 = vpop.f32.mrf.mxu0
        %v9310 = vadd.f32 %v8989, %v9309
        %v9311 = vpop.f32.mrf.mxu0
        %v9312 = vadd.f32 %v8993, %v9311
        %9313 = vmatprep.mubr.bf16.mxu0 0
        %9314 = vmatmul.mubr.bf16.gmra.mxu0 %v8969
        %v9315 = vpop.f32.mrf.mxu0
        %v9316 = vadd.f32 %v8989, %v9315
        %v9317 = vpop.f32.mrf.mxu0
        %v9318 = vadd.f32 %v8993, %v9317
        %v9319 = vpop.f32.mrf.mxu0
        %v9320 = vadd.f32 %v8989, %v9319
        %v9321 = vpop.f32.mrf.mxu0
        %v9322 = vadd.f32 %v8993, %v9321
        %9323 = vmatprep.mubr.bf16.mxu0 0
        %9324 = vmatmul.mubr.bf16.gmra.mxu0 %v8970
        %v9325 = vpop.f32.mrf.mxu0
        %v9326 = vadd.f32 %v8989, %v9325
        %v9327 = vpop.f32.mrf.mxu0
        %v9328 = vadd.f32 %v8993, %v9327
        %v9329 = vpop.f32.mrf.mxu0
        %v9330 = vadd.f32 %v8989, %v9329
        %v9331 = vpop.f32.mrf.mxu0
        %v9332 = vadd.f32 %v8993, %v9331
        %9333 = vmatprep.mubr.bf16.mxu0 0
        %9334 = vmatmul.mubr.bf16.gmra.mxu0 %v8971
        %v9335 = vpop.f32.mrf.mxu0
        %v9336 = vadd.f32 %v8989, %v9335
        %v9337 = vpop.f32.mrf.mxu0
        %v9338 = vadd.f32 %v8993, %v9337
        %v9339 = vpop.f32.mrf.mxu0
        %v9340 = vadd.f32 %v8989, %v9339
        %v9341 = vpop.f32.mrf.mxu0
        %v9342 = vadd.f32 %v8993, %v9341
        %9343 = vmatprep.mubr.bf16.mxu0 0
        %9344 = vmatmul.mubr.bf16.gmra.mxu0 %v8972
        %v9345 = vpop.f32.mrf.mxu0
        %v9346 = vadd.f32 %v8989, %v9345
        %v9347 = vpop.f32.mrf.mxu0
        %v9348 = vadd.f32 %v8993, %v9347
        %v9349 = vpop.f32.mrf.mxu0
        %v9350 = vadd.f32 %v8989, %v9349
        %v9351 = vpop.f32.mrf.mxu0
        %v9352 = vadd.f32 %v8993, %v9351
        %9353 = vmatprep.mubr.bf16.mxu0 0
        %9354 = vmatmul.mubr.bf16.gmra.mxu0 %v8973
        %v9355 = vpop.f32.mrf.mxu0
        %v9356 = vadd.f32 %v8989, %v9355
        %v9357 = vpop.f32.mrf.mxu0
        %v9358 = vadd.f32 %v8993, %v9357
        %v9359 = vpop.f32.mrf.mxu0
        %v9360 = vadd.f32 %v8989, %v9359
        %v9361 = vpop.f32.mrf.mxu0
        %v9362 = vadd.f32 %v8993, %v9361
        %9363 = vmatprep.mubr.bf16.mxu0 0
        %9364 = vmatmul.mubr.bf16.gmra.mxu0 %v8974
        %v9365 = vpop.f32.mrf.mxu0
        %v9366 = vadd.f32 %v8989, %v9365
        %v9367 = vpop.f32.mrf.mxu0
        %v9368 = vadd.f32 %v8993, %v9367
        %v9369 = vpop.f32.mrf.mxu0
        %v9370 = vadd.f32 %v8989, %v9369
        %v9371 = vpop.f32.mrf.mxu0
        %v9372 = vadd.f32 %v8993, %v9371
        %9373 = vmatprep.mubr.bf16.mxu0 0
        %9374 = vmatmul.mubr.bf16.gmra.mxu0 %v8975
        %v9375 = vpop.f32.mrf.mxu0
        %v9376 = vadd.f32 %v8989, %v9375
        %v9377 = vpop.f32.mrf.mxu0
        %v9378 = vadd.f32 %v8993, %v9377
        %v9379 = vpop.f32.mrf.mxu0
        %v9380 = vadd.f32 %v8989, %v9379
        %v9381 = vpop.f32.mrf.mxu0
        %v9382 = vadd.f32 %v8993, %v9381
        %9383 = vdwg.mxu0
        %v9384 = vxor.u32 %v9306, 2147483648
        %v9385 = vxor.u32 %v9308, 2147483648
        %v9386 = vxor.u32 %v9310, 2147483648
        %v9387 = vxor.u32 %v9312, 2147483648
        %v9388 = vxor.u32 %v9316, 2147483648
        %v9389 = vxor.u32 %v9318, 2147483648
        %v9390 = vxor.u32 %v9320, 2147483648
        %v9391 = vxor.u32 %v9322, 2147483648
        %v9392 = vxor.u32 %v9326, 2147483648
        %v9393 = vxor.u32 %v9328, 2147483648
        %v9394 = vxor.u32 %v9330, 2147483648
        %v9395 = vxor.u32 %v9332, 2147483648
        %v9396 = vxor.u32 %v9336, 2147483648
        %v9397 = vxor.u32 %v9338, 2147483648
        %v9398 = vxor.u32 %v9340, 2147483648
        %v9399 = vxor.u32 %v9342, 2147483648
        %v9400 = vxor.u32 %v9346, 2147483648
        %v9401 = vxor.u32 %v9348, 2147483648
        %v9402 = vxor.u32 %v9350, 2147483648
        %v9403 = vxor.u32 %v9352, 2147483648
        %v9404 = vxor.u32 %v9356, 2147483648
        %v9405 = vxor.u32 %v9358, 2147483648
        %v9406 = vxor.u32 %v9360, 2147483648
        %v9407 = vxor.u32 %v9362, 2147483648
        %v9408 = vxor.u32 %v9366, 2147483648
        %v9409 = vxor.u32 %v9368, 2147483648
        %v9410 = vxor.u32 %v9370, 2147483648
        %v9411 = vxor.u32 %v9372, 2147483648
        %v9412 = vxor.u32 %v9376, 2147483648
        %v9413 = vxor.u32 %v9378, 2147483648
        %v9414 = vxor.u32 %v9380, 2147483648
        %v9415 = vxor.u32 %v9382, 2147483648
        %v9416 = vmul.f32 %v9384, 1.442695
        %v9417 = vpow.pop %v9416
        %v9418 = vmul.f32 %v9385, 1.442695
        %v9419 = vpow.pop %v9418
        %v9420 = vmul.f32 %v9386, 1.442695
        %v9421 = vpow.pop %v9420
        %v9422 = vmul.f32 %v9387, 1.442695
        %v9423 = vpow.pop %v9422
        %v9424 = vmul.f32 %v9388, 1.442695
        %v9425 = vpow.pop %v9424
        %v9426 = vmul.f32 %v9389, 1.442695
        %v9427 = vpow.pop %v9426
        %v9428 = vmul.f32 %v9390, 1.442695
        %v9429 = vpow.pop %v9428
        %v9430 = vmul.f32 %v9391, 1.442695
        %v9431 = vpow.pop %v9430
        %v9432 = vmul.f32 %v9392, 1.442695
        %v9433 = vpow.pop %v9432
        %v9434 = vmul.f32 %v9393, 1.442695
        %v9435 = vpow.pop %v9434
        %v9436 = vmul.f32 %v9394, 1.442695
        %v9437 = vpow.pop %v9436
        %v9438 = vmul.f32 %v9395, 1.442695
        %v9439 = vpow.pop %v9438
        %v9440 = vmul.f32 %v9396, 1.442695
        %v9441 = vpow.pop %v9440
        %v9442 = vmul.f32 %v9397, 1.442695
        %v9443 = vpow.pop %v9442
        %v9444 = vmul.f32 %v9398, 1.442695
        %v9445 = vpow.pop %v9444
        %v9446 = vmul.f32 %v9399, 1.442695
        %v9447 = vpow.pop %v9446
        %v9448 = vmul.f32 %v9400, 1.442695
        %v9449 = vpow.pop %v9448
        %v9450 = vmul.f32 %v9401, 1.442695
        %v9451 = vpow.pop %v9450
        %v9452 = vmul.f32 %v9402, 1.442695
        %v9453 = vpow.pop %v9452
        %v9454 = vmul.f32 %v9403, 1.442695
        %v9455 = vpow.pop %v9454
        %v9456 = vmul.f32 %v9404, 1.442695
        %v9457 = vpow.pop %v9456
        %v9458 = vmul.f32 %v9405, 1.442695
        %v9459 = vpow.pop %v9458
        %v9460 = vmul.f32 %v9406, 1.442695
        %v9461 = vpow.pop %v9460
        %v9462 = vmul.f32 %v9407, 1.442695
        %v9463 = vpow.pop %v9462
        %v9464 = vmul.f32 %v9408, 1.442695
        %v9465 = vpow.pop %v9464
        %v9466 = vmul.f32 %v9409, 1.442695
        %v9467 = vpow.pop %v9466
        %v9468 = vmul.f32 %v9410, 1.442695
        %v9469 = vpow.pop %v9468
        %v9470 = vmul.f32 %v9411, 1.442695
        %v9471 = vpow.pop %v9470
        %v9472 = vmul.f32 %v9412, 1.442695
        %v9473 = vpow.pop %v9472
        %v9474 = vmul.f32 %v9413, 1.442695
        %v9475 = vpow.pop %v9474
        %v9476 = vmul.f32 %v9414, 1.442695
        %v9477 = vpow.pop %v9476
        %v9478 = vmul.f32 %v9415, 1.442695
        %v9479 = vpow.pop %v9478
        %v9480 = vadd.f32 %v9417, 1.0
        %v9481 = vadd.f32 %v9419, 1.0
        %v9482 = vadd.f32 %v9421, 1.0
        %v9483 = vadd.f32 %v9423, 1.0
        %v9484 = vadd.f32 %v9425, 1.0
        %v9485 = vadd.f32 %v9427, 1.0
        %v9486 = vadd.f32 %v9429, 1.0
        %v9487 = vadd.f32 %v9431, 1.0
        %v9488 = vadd.f32 %v9433, 1.0
        %v9489 = vadd.f32 %v9435, 1.0
        %v9490 = vadd.f32 %v9437, 1.0
        %v9491 = vadd.f32 %v9439, 1.0
        %v9492 = vadd.f32 %v9441, 1.0
        %v9493 = vadd.f32 %v9443, 1.0
        %v9494 = vadd.f32 %v9445, 1.0
        %v9495 = vadd.f32 %v9447, 1.0
        %v9496 = vadd.f32 %v9449, 1.0
        %v9497 = vadd.f32 %v9451, 1.0
        %v9498 = vadd.f32 %v9453, 1.0
        %v9499 = vadd.f32 %v9455, 1.0
        %v9500 = vadd.f32 %v9457, 1.0
        %v9501 = vadd.f32 %v9459, 1.0
        %v9502 = vadd.f32 %v9461, 1.0
        %v9503 = vadd.f32 %v9463, 1.0
        %v9504 = vadd.f32 %v9465, 1.0
        %v9505 = vadd.f32 %v9467, 1.0
        %v9506 = vadd.f32 %v9469, 1.0
        %v9507 = vadd.f32 %v9471, 1.0
        %v9508 = vadd.f32 %v9473, 1.0
        %v9509 = vadd.f32 %v9475, 1.0
        %v9510 = vadd.f32 %v9477, 1.0
        %v9511 = vadd.f32 %v9479, 1.0
        %v9512 = vrcp.pop %v9480
        %v9513 = vmul.f32 1.0, %v9512
        %v9514 = vrcp.pop %v9481
        %v9515 = vmul.f32 1.0, %v9514
        %v9516 = vrcp.pop %v9482
        %v9517 = vmul.f32 1.0, %v9516
        %v9518 = vrcp.pop %v9483
        %v9519 = vmul.f32 1.0, %v9518
        %v9520 = vrcp.pop %v9484
        %v9521 = vmul.f32 1.0, %v9520
        %v9522 = vrcp.pop %v9485
        %v9523 = vmul.f32 1.0, %v9522
        %v9524 = vrcp.pop %v9486
        %v9525 = vmul.f32 1.0, %v9524
        %v9526 = vrcp.pop %v9487
        %v9527 = vmul.f32 1.0, %v9526
        %v9528 = vrcp.pop %v9488
        %v9529 = vmul.f32 1.0, %v9528
        %v9530 = vrcp.pop %v9489
        %v9531 = vmul.f32 1.0, %v9530
        %v9532 = vrcp.pop %v9490
        %v9533 = vmul.f32 1.0, %v9532
        %v9534 = vrcp.pop %v9491
        %v9535 = vmul.f32 1.0, %v9534
        %v9536 = vrcp.pop %v9492
        %v9537 = vmul.f32 1.0, %v9536
        %v9538 = vrcp.pop %v9493
        %v9539 = vmul.f32 1.0, %v9538
        %v9540 = vrcp.pop %v9494
        %v9541 = vmul.f32 1.0, %v9540
        %v9542 = vrcp.pop %v9495
        %v9543 = vmul.f32 1.0, %v9542
        %v9544 = vrcp.pop %v9496
        %v9545 = vmul.f32 1.0, %v9544
        %v9546 = vrcp.pop %v9497
        %v9547 = vmul.f32 1.0, %v9546
        %v9548 = vrcp.pop %v9498
        %v9549 = vmul.f32 1.0, %v9548
        %v9550 = vrcp.pop %v9499
        %v9551 = vmul.f32 1.0, %v9550
        %v9552 = vrcp.pop %v9500
        %v9553 = vmul.f32 1.0, %v9552
        %v9554 = vrcp.pop %v9501
        %v9555 = vmul.f32 1.0, %v9554
        %v9556 = vrcp.pop %v9502
        %v9557 = vmul.f32 1.0, %v9556
        %v9558 = vrcp.pop %v9503
        %v9559 = vmul.f32 1.0, %v9558
        %v9560 = vrcp.pop %v9504
        %v9561 = vmul.f32 1.0, %v9560
        %v9562 = vrcp.pop %v9505
        %v9563 = vmul.f32 1.0, %v9562
        %v9564 = vrcp.pop %v9506
        %v9565 = vmul.f32 1.0, %v9564
        %v9566 = vrcp.pop %v9507
        %v9567 = vmul.f32 1.0, %v9566
        %v9568 = vrcp.pop %v9508
        %v9569 = vmul.f32 1.0, %v9568
        %v9570 = vrcp.pop %v9509
        %v9571 = vmul.f32 1.0, %v9570
        %v9572 = vrcp.pop %v9510
        %v9573 = vmul.f32 1.0, %v9572
        %v9574 = vrcp.pop %v9511
        %v9575 = vmul.f32 1.0, %v9574
        %v9576 = vmul.f32 %v9193, %v9513
        %v9577 = vmul.f32 %v9195, %v9515
        %v9578 = vmul.f32 %v9197, %v9517
        %v9579 = vmul.f32 %v9199, %v9519
        %v9580 = vmul.f32 %v9203, %v9521
        %v9581 = vmul.f32 %v9205, %v9523
        %v9582 = vmul.f32 %v9207, %v9525
        %v9583 = vmul.f32 %v9209, %v9527
        %v9584 = vmul.f32 %v9213, %v9529
        %v9585 = vmul.f32 %v9215, %v9531
        %v9586 = vmul.f32 %v9217, %v9533
        %v9587 = vmul.f32 %v9219, %v9535
        %v9588 = vmul.f32 %v9223, %v9537
        %v9589 = vmul.f32 %v9225, %v9539
        %v9590 = vmul.f32 %v9227, %v9541
        %v9591 = vmul.f32 %v9229, %v9543
        %v9592 = vmul.f32 %v9233, %v9545
        %v9593 = vmul.f32 %v9235, %v9547
        %v9594 = vmul.f32 %v9237, %v9549
        %v9595 = vmul.f32 %v9239, %v9551
        %v9596 = vmul.f32 %v9243, %v9553
        %v9597 = vmul.f32 %v9245, %v9555
        %v9598 = vmul.f32 %v9247, %v9557
        %v9599 = vmul.f32 %v9249, %v9559
        %v9600 = vmul.f32 %v9253, %v9561
        %v9601 = vmul.f32 %v9255, %v9563
        %v9602 = vmul.f32 %v9257, %v9565
        %v9603 = vmul.f32 %v9259, %v9567
        %v9604 = vmul.f32 %v9263, %v9569
        %v9605 = vmul.f32 %v9265, %v9571
        %v9606 = vmul.f32 %v9267, %v9573
        %v9607 = vmul.f32 %v9269, %v9575
        %v9608 = vld [vmem:[%s63] sm:$0xf]
        %v9609 = vld [vmem:[%s63 + $0x4] sm:$0xf]
        %v9610 = vld [vmem:[%s63 + $0x8] sm:$0xf]
        %v9611 = vld [vmem:[%s63 + $0xc] sm:$0xf]
        %v9612 = vld [vmem:[%s63 + $0x10] sm:$0xf]
        %v9613 = vld [vmem:[%s63 + $0x14] sm:$0xf]
        %v9614 = vld [vmem:[%s63 + $0x18] sm:$0xf]
        %v9615 = vld [vmem:[%s63 + $0x1c] sm:$0xf]
        %v9616 = vld [vmem:[%s63 + $0x20] sm:$0xf]
        %v9617 = vld [vmem:[%s63 + $0x24] sm:$0xf]
        %v9618 = vld [vmem:[%s63 + $0x28] sm:$0xf]
        %v9619 = vld [vmem:[%s63 + $0x2c] sm:$0xf]
        %v9620 = vld [vmem:[%s63 + $0x30] sm:$0xf]
        %v9621 = vld [vmem:[%s63 + $0x34] sm:$0xf]
        %v9622 = vld [vmem:[%s63 + $0x38] sm:$0xf]
        %v9623 = vld [vmem:[%s63 + $0x3c] sm:$0xf]
        %v9624 = vld [vmem:[%s63 + $0x40] sm:$0xf]
        %v9625 = vld [vmem:[%s63 + $0x44] sm:$0xf]
        %v9626 = vld [vmem:[%s63 + $0x48] sm:$0xf]
        %v9627 = vld [vmem:[%s63 + $0x4c] sm:$0xf]
        %v9628 = vld [vmem:[%s63 + $0x50] sm:$0xf]
        %v9629 = vld [vmem:[%s63 + $0x54] sm:$0xf]
        %v9630 = vld [vmem:[%s63 + $0x58] sm:$0xf]
        %v9631 = vld [vmem:[%s63 + $0x5c] sm:$0xf]
        %v9632 = vld [vmem:[%s63 + $0x60] sm:$0xf]
        %v9633 = vld [vmem:[%s63 + $0x64] sm:$0xf]
        %v9634 = vld [vmem:[%s63 + $0x68] sm:$0xf]
        %v9635 = vld [vmem:[%s63 + $0x6c] sm:$0xf]
        %v9636 = vld [vmem:[%s63 + $0x70] sm:$0xf]
        %v9637 = vld [vmem:[%s63 + $0x74] sm:$0xf]
        %v9638 = vld [vmem:[%s63 + $0x78] sm:$0xf]
        %v9639 = vld [vmem:[%s63 + $0x7c] sm:$0xf]
        %v9640 = vpack.c.bf16 %v9578, %v9576
        %v9641 = vpack.c.bf16 %v9579, %v9577
        %v9642 = vpack.c.bf16 %v9582, %v9580
        %v9643 = vpack.c.bf16 %v9583, %v9581
        %v9644 = vpack.c.bf16 %v9586, %v9584
        %v9645 = vpack.c.bf16 %v9587, %v9585
        %v9646 = vpack.c.bf16 %v9590, %v9588
        %v9647 = vpack.c.bf16 %v9591, %v9589
        %v9648 = vpack.c.bf16 %v9594, %v9592
        %v9649 = vpack.c.bf16 %v9595, %v9593
        %v9650 = vpack.c.bf16 %v9598, %v9596
        %v9651 = vpack.c.bf16 %v9599, %v9597
        %v9652 = vpack.c.bf16 %v9602, %v9600
        %v9653 = vpack.c.bf16 %v9603, %v9601
        %v9654 = vpack.c.bf16 %v9606, %v9604
        %v9655 = vpack.c.bf16 %v9607, %v9605
        %v9688 = vunpack.c.l.b16 %v9608
        %v9689 = vunpack.c.l.b16 %v9609
        %v9690 = vunpack.c.l.b16 %v9610
        %v9691 = vunpack.c.l.b16 %v9611
        %v9692 = vunpack.c.l.b16 %v9612
        %v9693 = vunpack.c.l.b16 %v9613
        %v9694 = vunpack.c.l.b16 %v9614
        %v9695 = vunpack.c.l.b16 %v9615
        %v9696 = vunpack.c.l.b16 %v9616
        %v9697 = vunpack.c.l.b16 %v9617
        %v9698 = vunpack.c.l.b16 %v9618
        %v9699 = vunpack.c.l.b16 %v9619
        %v9700 = vunpack.c.l.b16 %v9620
        %v9701 = vunpack.c.l.b16 %v9621
        %v9702 = vunpack.c.l.b16 %v9622
        %v9703 = vunpack.c.l.b16 %v9623
        %v9704 = vunpack.c.l.b16 %v9624
        %v9705 = vunpack.c.l.b16 %v9625
        %v9706 = vunpack.c.l.b16 %v9626
        %v9707 = vunpack.c.l.b16 %v9627
        %v9708 = vunpack.c.l.b16 %v9628
        %v9709 = vunpack.c.l.b16 %v9629
        %v9710 = vunpack.c.l.b16 %v9630
        %v9711 = vunpack.c.l.b16 %v9631
        %v9712 = vunpack.c.l.b16 %v9632
        %v9713 = vunpack.c.l.b16 %v9633
        %v9714 = vunpack.c.l.b16 %v9634
        %v9715 = vunpack.c.l.b16 %v9635
        %v9716 = vunpack.c.l.b16 %v9636
        %v9717 = vunpack.c.l.b16 %v9637
        %v9718 = vunpack.c.l.b16 %v9638
        %v9719 = vunpack.c.l.b16 %v9639
        %v9720 = vpack.c.b16 %v9689, %v9688
        %v9721 = vpack.c.b16 %v9691, %v9690
        %v9722 = vpack.c.b16 %v9693, %v9692
        %v9723 = vpack.c.b16 %v9695, %v9694
        %v9724 = vpack.c.b16 %v9697, %v9696
        %v9725 = vpack.c.b16 %v9699, %v9698
        %v9726 = vpack.c.b16 %v9701, %v9700
        %v9727 = vpack.c.b16 %v9703, %v9702
        %v9728 = vpack.c.b16 %v9705, %v9704
        %v9729 = vpack.c.b16 %v9707, %v9706
        %v9730 = vpack.c.b16 %v9709, %v9708
        %v9731 = vpack.c.b16 %v9711, %v9710
        %v9732 = vpack.c.b16 %v9713, %v9712
        %v9733 = vpack.c.b16 %v9715, %v9714
        %v9734 = vpack.c.b16 %v9717, %v9716
        %v9735 = vpack.c.b16 %v9719, %v9718
        %9752 = vmatprep.subr.bf16.mxu0 0
        %9753 = vmatpush1.bf16.msra.mxu0 %v9727
        %9754 = vmatprep.subr.bf16.mxu0 0
        %9755 = vmatpush1.bf16.msra.mxu0 %v9726
        %9756 = vmatprep.subr.bf16.mxu0 0
        %9757 = vmatpush1.bf16.msra.mxu0 %v9725
        %9758 = vmatprep.subr.bf16.mxu0 0
        %9759 = vmatpush1.bf16.msra.mxu0 %v9724
        %9760 = vmatprep.subr.bf16.mxu0 0
        %9761 = vmatpush1.bf16.msra.mxu0 %v9723
        %9762 = vmatprep.subr.bf16.mxu0 0
        %9763 = vmatpush1.bf16.msra.mxu0 %v9722
        %9764 = vmatprep.subr.bf16.mxu0 0
        %9765 = vmatpush1.bf16.msra.mxu0 %v9721
        %9766 = vmatprep.subr.bf16.mxu0 0
        %9767 = vmatpush1.bf16.msra.mxu0 %v9720
        %9768 = vmatprep.subr.bf16.mxu0 0
        %9769 = vmatpush2.bf16.msra.mxu0 %v9735
        %9770 = vmatprep.subr.bf16.mxu0 0
        %9771 = vmatpush2.bf16.msra.mxu0 %v9734
        %9772 = vmatprep.subr.bf16.mxu0 0
        %9773 = vmatpush2.bf16.msra.mxu0 %v9733
        %9774 = vmatprep.subr.bf16.mxu0 0
        %9775 = vmatpush2.bf16.msra.mxu0 %v9732
        %9776 = vmatprep.subr.bf16.mxu0 0
        %9777 = vmatpush2.bf16.msra.mxu0 %v9731
        %9778 = vmatprep.subr.bf16.mxu0 0
        %9779 = vmatpush2.bf16.msra.mxu0 %v9730
        %9780 = vmatprep.subr.bf16.mxu0 0
        %9781 = vmatpush2.bf16.msra.mxu0 %v9729
        %9782 = vmatprep.subr.bf16.mxu0 0
        %9783 = vmatpush2.bf16.msra.mxu0 %v9728
        %9784 = vmatprep.mubr.bf16.mxu0 %v9641
        %9785 = vmatmul.mubr.bf16.gmra.mxu0 %v9640
        %v9786 = vpop.f32.mrf.mxu0
        %v9787 = vadd.f32 0.0, %v9786
        %v9788 = vpop.f32.mrf.mxu0
        %v9789 = vpop.f32.mrf.mxu0
        %v9790 = vadd.f32 0.0, %v9789
        %v9791 = vpop.f32.mrf.mxu0
        %9792 = vmatprep.mubr.bf16.mxu0 %v9643
        %9793 = vmatmul.mubr.bf16.gmra.mxu0 %v9642
        %v9794 = vpop.f32.mrf.mxu0
        %v9795 = vadd.f32 0.0, %v9794
        %v9796 = vpop.f32.mrf.mxu0
        %v9797 = vpop.f32.mrf.mxu0
        %v9798 = vadd.f32 0.0, %v9797
        %v9799 = vpop.f32.mrf.mxu0
        %9800 = vmatprep.mubr.bf16.mxu0 %v9645
        %9801 = vmatmul.mubr.bf16.gmra.mxu0 %v9644
        %v9802 = vpop.f32.mrf.mxu0
        %v9803 = vadd.f32 0.0, %v9802
        %v9804 = vpop.f32.mrf.mxu0
        %v9805 = vpop.f32.mrf.mxu0
        %v9806 = vadd.f32 0.0, %v9805
        %v9807 = vpop.f32.mrf.mxu0
        %9808 = vmatprep.mubr.bf16.mxu0 %v9647
        %9809 = vmatmul.mubr.bf16.gmra.mxu0 %v9646
        %v9810 = vpop.f32.mrf.mxu0
        %v9811 = vadd.f32 0.0, %v9810
        %v9812 = vpop.f32.mrf.mxu0
        %v9813 = vpop.f32.mrf.mxu0
        %v9814 = vadd.f32 0.0, %v9813
        %v9815 = vpop.f32.mrf.mxu0
        %9816 = vmatprep.mubr.bf16.mxu0 %v9649
        %9817 = vmatmul.mubr.bf16.gmra.mxu0 %v9648
        %v9818 = vpop.f32.mrf.mxu0
        %v9819 = vadd.f32 0.0, %v9818
        %v9820 = vpop.f32.mrf.mxu0
        %v9821 = vpop.f32.mrf.mxu0
        %v9822 = vadd.f32 0.0, %v9821
        %v9823 = vpop.f32.mrf.mxu0
        %9824 = vmatprep.mubr.bf16.mxu0 %v9651
        %9825 = vmatmul.mubr.bf16.gmra.mxu0 %v9650
        %v9826 = vpop.f32.mrf.mxu0
        %v9827 = vadd.f32 0.0, %v9826
        %v9828 = vpop.f32.mrf.mxu0
        %v9829 = vpop.f32.mrf.mxu0
        %v9830 = vadd.f32 0.0, %v9829
        %v9831 = vpop.f32.mrf.mxu0
        %9832 = vmatprep.mubr.bf16.mxu0 %v9653
        %9833 = vmatmul.mubr.bf16.gmra.mxu0 %v9652
        %v9834 = vpop.f32.mrf.mxu0
        %v9835 = vadd.f32 0.0, %v9834
        %v9836 = vpop.f32.mrf.mxu0
        %v9837 = vpop.f32.mrf.mxu0
        %v9838 = vadd.f32 0.0, %v9837
        %v9839 = vpop.f32.mrf.mxu0
        %9840 = vmatprep.mubr.bf16.mxu0 %v9655
        %9841 = vmatmul.mubr.bf16.gmra.mxu0 %v9654
        %v9842 = vpop.f32.mrf.mxu0
        %v9843 = vadd.f32 0.0, %v9842
        %v9844 = vpop.f32.mrf.mxu0
        %v9845 = vpop.f32.mrf.mxu0
        %v9846 = vadd.f32 0.0, %v9845
        %v9847 = vpop.f32.mrf.mxu0
        %9848 = vdwg.mxu0
        %v9849 = vadd.f32 %v8698, %v9787
        %v9850 = vadd.f32 %v8699, %v9790
        %v9851 = vadd.f32 %v8700, %v9795
        %v9852 = vadd.f32 %v8701, %v9798
        %v9853 = vadd.f32 %v8702, %v9803
        %v9854 = vadd.f32 %v8703, %v9806
        %v9855 = vadd.f32 %v8704, %v9811
        %v9856 = vadd.f32 %v8705, %v9814
        %v9857 = vadd.f32 %v8706, %v9819
        %v9858 = vadd.f32 %v8707, %v9822
        %v9859 = vadd.f32 %v8708, %v9827
        %v9860 = vadd.f32 %v8709, %v9830
        %v9861 = vadd.f32 %v8710, %v9835
        %v9862 = vadd.f32 %v8711, %v9838
        %v9863 = vadd.f32 %v8712, %v9843
        %v9864 = vadd.f32 %v8713, %v9846
        %v9865 = vld [vmem:[%s65] sm:$0x1]
        %v9867 = vlaneseq
        %v9868 = vshrl.u32 %v9867, 7
        %v9869 = vsub.s32 0, %v9868
        %v9870 = vrot.slane %v9865, %v9869
        %v9872 = vadd.f32 %v9849, %v9870
        %v9873 = vadd.f32 %v9850, %v9870
        %v9874 = vadd.f32 %v9851, %v9870
        %v9875 = vadd.f32 %v9852, %v9870
        %v9876 = vadd.f32 %v9853, %v9870
        %v9877 = vadd.f32 %v9854, %v9870
        %v9878 = vadd.f32 %v9855, %v9870
        %v9879 = vadd.f32 %v9856, %v9870
        %v9880 = vadd.f32 %v9857, %v9870
        %v9881 = vadd.f32 %v9858, %v9870
        %v9882 = vadd.f32 %v9859, %v9870
        %v9883 = vadd.f32 %v9860, %v9870
        %v9884 = vadd.f32 %v9861, %v9870
        %v9885 = vadd.f32 %v9862, %v9870
        %v9886 = vadd.f32 %v9863, %v9870
        %v9887 = vadd.f32 %v9864, %v9870
        %v9888 = vld [vmem:[%s67] sm:$0x1]
        %v9889 = vld [vmem:[%s69] sm:$0x1]
        %9890 = vadd.xlane.f32.xlu0 %v9872
        %v9891 = vpop.xlane.xlu0 %9890
        %9892 = vadd.xlane.f32.xlu0 %v9873
        %v9893 = vpop.xlane.xlu0 %9892
        %9894 = vadd.xlane.f32.xlu0 %v9874
        %v9895 = vpop.xlane.xlu0 %9894
        %9896 = vadd.xlane.f32.xlu0 %v9875
        %v9897 = vpop.xlane.xlu0 %9896
        %9898 = vadd.xlane.f32.xlu0 %v9876
        %v9899 = vpop.xlane.xlu0 %9898
        %9900 = vadd.xlane.f32.xlu0 %v9877
        %v9901 = vpop.xlane.xlu0 %9900
        %9902 = vadd.xlane.f32.xlu0 %v9878
        %v9903 = vpop.xlane.xlu0 %9902
        %9904 = vadd.xlane.f32.xlu0 %v9879
        %v9905 = vpop.xlane.xlu0 %9904
        %9906 = vadd.xlane.f32.xlu0 %v9880
        %v9907 = vpop.xlane.xlu0 %9906
        %9908 = vadd.xlane.f32.xlu0 %v9881
        %v9909 = vpop.xlane.xlu0 %9908
        %9910 = vadd.xlane.f32.xlu0 %v9882
        %v9911 = vpop.xlane.xlu0 %9910
        %9912 = vadd.xlane.f32.xlu0 %v9883
        %v9913 = vpop.xlane.xlu0 %9912
        %9914 = vadd.xlane.f32.xlu0 %v9884
        %v9915 = vpop.xlane.xlu0 %9914
        %9916 = vadd.xlane.f32.xlu0 %v9885
        %v9917 = vpop.xlane.xlu0 %9916
        %9918 = vadd.xlane.f32.xlu0 %v9886
        %v9919 = vpop.xlane.xlu0 %9918
        %9920 = vadd.xlane.f32.xlu0 %v9887
        %v9921 = vpop.xlane.xlu0 %9920
        %v9922 = vmul.f32 %v9891, %v1173
        %v9923 = vmul.f32 %v9893, %v1173
        %v9924 = vmul.f32 %v9895, %v1173
        %v9925 = vmul.f32 %v9897, %v1173
        %v9926 = vmul.f32 %v9899, %v1173
        %v9927 = vmul.f32 %v9901, %v1173
        %v9928 = vmul.f32 %v9903, %v1173
        %v9929 = vmul.f32 %v9905, %v1173
        %v9930 = vmul.f32 %v9907, %v1173
        %v9931 = vmul.f32 %v9909, %v1173
        %v9932 = vmul.f32 %v9911, %v1173
        %v9933 = vmul.f32 %v9913, %v1173
        %v9934 = vmul.f32 %v9915, %v1173
        %v9935 = vmul.f32 %v9917, %v1173
        %v9936 = vmul.f32 %v9919, %v1173
        %v9937 = vmul.f32 %v9921, %v1173
        %v9938 = vsub.f32 %v9872, %v9922
        %v9939 = vsub.f32 %v9873, %v9923
        %v9940 = vsub.f32 %v9874, %v9924
        %v9941 = vsub.f32 %v9875, %v9925
        %v9942 = vsub.f32 %v9876, %v9926
        %v9943 = vsub.f32 %v9877, %v9927
        %v9944 = vsub.f32 %v9878, %v9928
        %v9945 = vsub.f32 %v9879, %v9929
        %v9946 = vsub.f32 %v9880, %v9930
        %v9947 = vsub.f32 %v9881, %v9931
        %v9948 = vsub.f32 %v9882, %v9932
        %v9949 = vsub.f32 %v9883, %v9933
        %v9950 = vsub.f32 %v9884, %v9934
        %v9951 = vsub.f32 %v9885, %v9935
        %v9952 = vsub.f32 %v9886, %v9936
        %v9953 = vsub.f32 %v9887, %v9937
        %v9954 = vmul.f32 %v9938, %v9938
        %v9955 = vmul.f32 %v9939, %v9939
        %v9956 = vmul.f32 %v9940, %v9940
        %v9957 = vmul.f32 %v9941, %v9941
        %v9958 = vmul.f32 %v9942, %v9942
        %v9959 = vmul.f32 %v9943, %v9943
        %v9960 = vmul.f32 %v9944, %v9944
        %v9961 = vmul.f32 %v9945, %v9945
        %v9962 = vmul.f32 %v9946, %v9946
        %v9963 = vmul.f32 %v9947, %v9947
        %v9964 = vmul.f32 %v9948, %v9948
        %v9965 = vmul.f32 %v9949, %v9949
        %v9966 = vmul.f32 %v9950, %v9950
        %v9967 = vmul.f32 %v9951, %v9951
        %v9968 = vmul.f32 %v9952, %v9952
        %v9969 = vmul.f32 %v9953, %v9953
        %9970 = vadd.xlane.f32.xlu0 %v9954
        %v9971 = vpop.xlane.xlu0 %9970
        %9972 = vadd.xlane.f32.xlu0 %v9955
        %v9973 = vpop.xlane.xlu0 %9972
        %9974 = vadd.xlane.f32.xlu0 %v9956
        %v9975 = vpop.xlane.xlu0 %9974
        %9976 = vadd.xlane.f32.xlu0 %v9957
        %v9977 = vpop.xlane.xlu0 %9976
        %9978 = vadd.xlane.f32.xlu0 %v9958
        %v9979 = vpop.xlane.xlu0 %9978
        %9980 = vadd.xlane.f32.xlu0 %v9959
        %v9981 = vpop.xlane.xlu0 %9980
        %9982 = vadd.xlane.f32.xlu0 %v9960
        %v9983 = vpop.xlane.xlu0 %9982
        %9984 = vadd.xlane.f32.xlu0 %v9961
        %v9985 = vpop.xlane.xlu0 %9984
        %9986 = vadd.xlane.f32.xlu0 %v9962
        %v9987 = vpop.xlane.xlu0 %9986
        %9988 = vadd.xlane.f32.xlu0 %v9963
        %v9989 = vpop.xlane.xlu0 %9988
        %9990 = vadd.xlane.f32.xlu0 %v9964
        %v9991 = vpop.xlane.xlu0 %9990
        %9992 = vadd.xlane.f32.xlu0 %v9965
        %v9993 = vpop.xlane.xlu0 %9992
        %9994 = vadd.xlane.f32.xlu0 %v9966
        %v9995 = vpop.xlane.xlu0 %9994
        %9996 = vadd.xlane.f32.xlu0 %v9967
        %v9997 = vpop.xlane.xlu0 %9996
        %9998 = vadd.xlane.f32.xlu0 %v9968
        %v9999 = vpop.xlane.xlu0 %9998
        %10000 = vadd.xlane.f32.xlu0 %v9969
        %v10001 = vpop.xlane.xlu0 %10000
        %v10002 = vmul.f32 %v9971, %v1173
        %v10003 = vmul.f32 %v9973, %v1173
        %v10004 = vmul.f32 %v9975, %v1173
        %v10005 = vmul.f32 %v9977, %v1173
        %v10006 = vmul.f32 %v9979, %v1173
        %v10007 = vmul.f32 %v9981, %v1173
        %v10008 = vmul.f32 %v9983, %v1173
        %v10009 = vmul.f32 %v9985, %v1173
        %v10010 = vmul.f32 %v9987, %v1173
        %v10011 = vmul.f32 %v9989, %v1173
        %v10012 = vmul.f32 %v9991, %v1173
        %v10013 = vmul.f32 %v9993, %v1173
        %v10014 = vmul.f32 %v9995, %v1173
        %v10015 = vmul.f32 %v9997, %v1173
        %v10016 = vmul.f32 %v9999, %v1173
        %v10017 = vmul.f32 %v10001, %v1173
        %v10018 = vadd.f32 %v10002, 1e-05
        %v10019 = vadd.f32 %v10003, 1e-05
        %v10020 = vadd.f32 %v10004, 1e-05
        %v10021 = vadd.f32 %v10005, 1e-05
        %v10022 = vadd.f32 %v10006, 1e-05
        %v10023 = vadd.f32 %v10007, 1e-05
        %v10024 = vadd.f32 %v10008, 1e-05
        %v10025 = vadd.f32 %v10009, 1e-05
        %v10026 = vadd.f32 %v10010, 1e-05
        %v10027 = vadd.f32 %v10011, 1e-05
        %v10028 = vadd.f32 %v10012, 1e-05
        %v10029 = vadd.f32 %v10013, 1e-05
        %v10030 = vadd.f32 %v10014, 1e-05
        %v10031 = vadd.f32 %v10015, 1e-05
        %v10032 = vadd.f32 %v10016, 1e-05
        %v10033 = vadd.f32 %v10017, 1e-05
        %v10034 = vrsqrt.pop %v10018
        %v10035 = vrsqrt.pop %v10019
        %v10036 = vrsqrt.pop %v10020
        %v10037 = vrsqrt.pop %v10021
        %v10038 = vrsqrt.pop %v10022
        %v10039 = vrsqrt.pop %v10023
        %v10040 = vrsqrt.pop %v10024
        %v10041 = vrsqrt.pop %v10025
        %v10042 = vrsqrt.pop %v10026
        %v10043 = vrsqrt.pop %v10027
        %v10044 = vrsqrt.pop %v10028
        %v10045 = vrsqrt.pop %v10029
        %v10046 = vrsqrt.pop %v10030
        %v10047 = vrsqrt.pop %v10031
        %v10048 = vrsqrt.pop %v10032
        %v10049 = vrsqrt.pop %v10033
        %v10050 = vmul.f32 %v9938, %v10034
        %v10051 = vmul.f32 %v9939, %v10035
        %v10052 = vmul.f32 %v9940, %v10036
        %v10053 = vmul.f32 %v9941, %v10037
        %v10054 = vmul.f32 %v9942, %v10038
        %v10055 = vmul.f32 %v9943, %v10039
        %v10056 = vmul.f32 %v9944, %v10040
        %v10057 = vmul.f32 %v9945, %v10041
        %v10058 = vmul.f32 %v9946, %v10042
        %v10059 = vmul.f32 %v9947, %v10043
        %v10060 = vmul.f32 %v9948, %v10044
        %v10061 = vmul.f32 %v9949, %v10045
        %v10062 = vmul.f32 %v9950, %v10046
        %v10063 = vmul.f32 %v9951, %v10047
        %v10064 = vmul.f32 %v9952, %v10048
        %v10065 = vmul.f32 %v9953, %v10049
        %v10067 = vlaneseq
        %v10068 = vshrl.u32 %v10067, 7
        %v10069 = vsub.s32 0, %v10068
        %v10070 = vrot.slane %v9888, %v10069
        %v10072 = vmul.f32 %v10050, %v10070
        %v10073 = vmul.f32 %v10051, %v10070
        %v10074 = vmul.f32 %v10052, %v10070
        %v10075 = vmul.f32 %v10053, %v10070
        %v10076 = vmul.f32 %v10054, %v10070
        %v10077 = vmul.f32 %v10055, %v10070
        %v10078 = vmul.f32 %v10056, %v10070
        %v10079 = vmul.f32 %v10057, %v10070
        %v10080 = vmul.f32 %v10058, %v10070
        %v10081 = vmul.f32 %v10059, %v10070
        %v10082 = vmul.f32 %v10060, %v10070
        %v10083 = vmul.f32 %v10061, %v10070
        %v10084 = vmul.f32 %v10062, %v10070
        %v10085 = vmul.f32 %v10063, %v10070
        %v10086 = vmul.f32 %v10064, %v10070
        %v10087 = vmul.f32 %v10065, %v10070
        %v10089 = vlaneseq
        %v10090 = vshrl.u32 %v10089, 7
        %v10091 = vsub.s32 0, %v10090
        %v10092 = vrot.slane %v9889, %v10091
        %v10094 = vadd.f32 %v10072, %v10092
        %v10095 = vadd.f32 %v10073, %v10092
        %v10096 = vadd.f32 %v10074, %v10092
        %v10097 = vadd.f32 %v10075, %v10092
        %v10098 = vadd.f32 %v10076, %v10092
        %v10099 = vadd.f32 %v10077, %v10092
        %v10100 = vadd.f32 %v10078, %v10092
        %v10101 = vadd.f32 %v10079, %v10092
        %v10102 = vadd.f32 %v10080, %v10092
        %v10103 = vadd.f32 %v10081, %v10092
        %v10104 = vadd.f32 %v10082, %v10092
        %v10105 = vadd.f32 %v10083, %v10092
        %v10106 = vadd.f32 %v10084, %v10092
        %v10107 = vadd.f32 %v10085, %v10092
        %v10108 = vadd.f32 %v10086, %v10092
        %v10109 = vadd.f32 %v10087, %v10092
        %10110 = vst [vmem:[%s1106] sm:$0xff] %v10094
        %10111 = vst [vmem:[%s1106 + $0x8] sm:$0xff] %v10095
        %10112 = vst [vmem:[%s1106 + $0x10] sm:$0xff] %v10096
        %10113 = vst [vmem:[%s1106 + $0x18] sm:$0xff] %v10097
        %10114 = vst [vmem:[%s1106 + $0x20] sm:$0xff] %v10098
        %10115 = vst [vmem:[%s1106 + $0x28] sm:$0xff] %v10099
        %10116 = vst [vmem:[%s1106 + $0x30] sm:$0xff] %v10100
        %10117 = vst [vmem:[%s1106 + $0x38] sm:$0xff] %v10101
        %10118 = vst [vmem:[%s1106 + $0x40] sm:$0xff] %v10102
        %10119 = vst [vmem:[%s1106 + $0x48] sm:$0xff] %v10103
        %10120 = vst [vmem:[%s1106 + $0x50] sm:$0xff] %v10104
        %10121 = vst [vmem:[%s1106 + $0x58] sm:$0xff] %v10105
        %10122 = vst [vmem:[%s1106 + $0x60] sm:$0xff] %v10106
        %10123 = vst [vmem:[%s1106 + $0x68] sm:$0xff] %v10107
        %10124 = vst [vmem:[%s1106 + $0x70] sm:$0xff] %v10108
        %10125 = vst [vmem:[%s1106 + $0x78] sm:$0xff] %v10109
        %s10126 = sand.u32 %s844, 1
        %s10127 = scalar_lea.sflag [#allocation3], %s10126
        %s10128 = sand.u32 %s844, 1
        %s10129 = smul.addr %s10128, 128
        %s10130 = scalar_lea.vmem [#allocation2], %s10129
        %s10131 = sand.u32 %s870, 1
        %s10132 = scalar_lea.sflag [#allocation5], %s10131
        %s10133 = sand.u32 %s870, 1
        %s10134 = smul.addr %s10133, 256
        %s10135 = scalar_lea.vmem [#allocation4], %s10134
        // Predicated region
        $region161: #{_lambda_.1} parent=159 // pred_check
          %p10136 = pneg %p854
        $region162: #{_lambda_.1} parent=159 // pred_check_branch
          %10138 = sbr.rel (%p10136) target = $region164
        $region163: #{_lambda_.1} parent=159 // pred_region
          %s10140 = ssub.s32 2048, 2048
          %10141 = vsyncadd %s10127, %s10140
          %s10142 = smul.addr %s91, 16
          %s10143 = smul.addr %s10142, 128
          %s10144 = scalar_lea.hbm %s71, %s10143
          %s10145 = sshll.u32 %s10130, 4
          %s10146 = int_to_ptr.vmem [resolvable:$true] %s10145
          %10151 = dma.vmem_to_hbm [thread:$0]  %s10146, 2048, %s10144, %s10127, 128, 128, 8
        $region164: #{_lambda_.1} parent=159 // pred_fallthru
          _
        // Predicated region
        $region165: #{_lambda_.1} parent=159 // pred_check
          %p10152 = pneg %p880
        $region166: #{_lambda_.1} parent=159 // pred_check_branch
          %10154 = sbr.rel (%p10152) target = $region168
        $region167: #{_lambda_.1} parent=159 // pred_region
          %s10156 = ssub.s32 4096, 4096
          %10157 = vsyncadd %s10132, %s10156
          %s10158 = smul.addr %s91, 64
          %s10159 = smul.addr %s10158, 64
          %s10160 = scalar_lea.hbm %s73, %s10159
          %s10161 = sshll.u32 %s10135, 4
          %s10162 = int_to_ptr.vmem [resolvable:$true] %s10161
          %10167 = dma.vmem_to_hbm [thread:$0]  %s10162, 4096, %s10160, %s10132, 64, 64, 4
        $region168: #{_lambda_.1} parent=159 // pred_fallthru
          _
      $region160: #{_lambda_.1} parent=5 // pred_fallthru
        _
      %p10168 = scmp.le.s32.totalorder 2, %s86
      // Predicated region
      $region169: #{_lambda_.1} parent=5 // pred_check
        %p10169 = pneg %p10168
      $region170: #{_lambda_.1} parent=5 // pred_check_branch
        %10171 = sbr.rel (%p10169) target = $region172
      $region171: #{_lambda_.1} parent=5 // pred_region
        %s10172 = ssub.s32 %s86, 2
        // Predicated region
        $region173: #{_lambda_.1} parent=171 // pred_check
          %p10173 = pneg %p860
        $region174: #{_lambda_.1} parent=171 // pred_check_branch
          %10175 = sbr.rel (%p10173) target = $region176
        $region175: #{_lambda_.1} parent=171 // pred_region
          %s10176 = sand.u32 %s845, 1
          %s10177 = scalar_lea.sflag [#allocation3], %s10176
          %s10178 = sand.u32 %s845, 1
          %s10179 = smul.addr %s10178, 128
          %s10180 = scalar_lea.vmem [#allocation2], %s10179
          %10181 = dma.done %s10177, 2048
        $region176: #{_lambda_.1} parent=171 // pred_fallthru
          _
        // Predicated region
        $region177: #{_lambda_.1} parent=171 // pred_check
          %p10182 = pneg %p886
        $region178: #{_lambda_.1} parent=171 // pred_check_branch
          %10184 = sbr.rel (%p10182) target = $region180
        $region179: #{_lambda_.1} parent=171 // pred_region
          %s10185 = sand.u32 %s871, 1
          %s10186 = scalar_lea.sflag [#allocation5], %s10185
          %s10187 = sand.u32 %s871, 1
          %s10188 = smul.addr %s10187, 256
          %s10189 = scalar_lea.vmem [#allocation4], %s10188
          %10190 = dma.done %s10186, 4096
        $region180: #{_lambda_.1} parent=171 // pred_fallthru
          _
      $region172: #{_lambda_.1} parent=5 // pred_fallthru
        _
    $region6: #{_lambda_.1} parent=1 // loop_footer
      %s90 = sadd.s32 1, %s86
    $region7: #{_lambda_.1} parent=1 // loop_footer_branch
      %85 = sbr.rel target = $region3
    $region8: #{_lambda_.1} parent=1 // loop_exit
      _
    %10191 = vsyncpa [#allocation3], 1
    %s10192 = scalar_lea.sflag [#allocation3], 1
    %10193 = vsyncpa %s10192, 1
    %10194 = vsyncpa [#allocation5], 1
    %s10195 = scalar_lea.sflag [#allocation5], 1
    %10196 = vsyncpa %s10195, 1

</llo_original>
